<compile_context>
chip_gen: v5e
topology: v5e:2x2
jax: 0.10.0
libtpu: 0.0.40
codegen_flags: <defaults>
</compile_context>

<pallas_src>
import functools

import jax
import jax.numpy as jnp
from jax import lax
from jax.experimental import pallas as pl
from jax.experimental.pallas import tpu as pltpu

LANE = 128                      # channel dims are zero-padded to a multiple of this
_H_CHUNK = 8                    # output rows per depthwise accumulation chunk
_VMEM_LIMIT = 48 * 1024 * 1024  # below physical VMEM on v5e/v6e (128MiB) and v7x (64MiB)


# ---------------------------------------------------------------------------
# Kernels
# ---------------------------------------------------------------------------

def _sepconv_bn_kernel(x_ref, wdw_ref, wpw_ref, scale_ref, shift_ref, o_ref,
                       dw_ref, *, K, Hout, Wout, pre_relu, post_relu,
                       pool_mean, mxu_dtype):
    """Fused [ReLU] -> depthwise KxK (input spatially pre-padded) -> 1x1 conv
    (MXU matmul) -> folded BN -> [ReLU] -> [global mean].

    Grid: (batch, Cout_tile).  The depthwise result is computed once per batch
    element (at Cout-tile 0) into the f32 VMEM scratch `dw_ref` and reused for
    every Cout tile.
    """
    j = pl.program_id(1)
    cp = x_ref.shape[-1]

    @pl.when(j == 0)
    def _():
        wdw = wdw_ref[...]                                    # (K, K, Cp)
        # Chunk output rows so the live input window + f32 accumulator stay
        # within the vreg budget even when Cp is 128+.
        for h0 in range(0, Hout, _H_CHUNK):
            hh = min(_H_CHUNK, Hout - h0)
            acc = jnp.zeros((hh, Wout, cp), jnp.float32)
            # Shift along W (the sublane axis) only once per kj; the K slices
            # along H are free (H is not a vreg axis).
            for kj in range(K):
                xj = x_ref[0, h0:h0 + hh + K - 1, kj:kj + Wout, :]
                if pre_relu:
                    xj = jnp.maximum(xj, 0)                   # ReLU commutes with 0-pad
                for ki in range(K):
                    acc = acc + xj[ki:ki + hh] * wdw[ki, kj]
            # Wout is kept a multiple of 8 by the test config, so this reshape
            # is a pure relabeling (no (8,128) tile-boundary crossing).
            dw_ref[h0 * Wout:(h0 + hh) * Wout, :] = acc.reshape(hh * Wout, cp)

    # Pointwise 1x1 conv == lane-dense matmul on the MXU.  Operands go in at
    # the model dtype (bf16 stays bf16); accumulation is f32.
    out = jnp.dot(dw_ref[...].astype(mxu_dtype), wpw_ref[...],
                  preferred_element_type=jnp.float32)          # (M, TN)
    out = out * scale_ref[0] + shift_ref[0]                    # folded BatchNorm
    if post_relu:
        out = jnp.maximum(out, 0.0)
    if pool_mean:
        out = jnp.mean(out, axis=0, keepdims=True)             # AdaptiveAvgPool2d((1,1))
    o_ref[0] = out.astype(o_ref.dtype)


def _matmul_bn_kernel(x_ref, w_ref, scale_ref, shift_ref, o_ref):
    """1x1 conv (stride handled by the wrapper's subsample) + folded BN."""
    out = jnp.dot(x_ref[0], w_ref[...], preferred_element_type=jnp.float32)
    out = out * scale_ref[0] + shift_ref[0]
    o_ref[0] = out.astype(o_ref.dtype)


def _maxpool_add_kernel(ee_ref, eo_ref, oe_ref, oo_ref, s_ref, o_ref, *, Hp, Wp):
    """MaxPool2d(3, stride=2, padding=1) of the residual branch fused with the
    residual + shortcut add.  The wrapper pre-splits the (-inf padded)
    residual into the four (row, col) parity planes so every slice below has a
    static 0/+1 offset."""
    ee = ee_ref[0]   # rows 2i,   cols 2j
    eo = eo_ref[0]   # rows 2i,   cols 2j+1
    oe = oe_ref[0]   # rows 2i+1, cols 2j
    oo = oo_ref[0]   # rows 2i+1, cols 2j+1
    m = ee[0:Hp, 0:Wp]
    m = jnp.maximum(m, ee[0:Hp, 1:Wp + 1])
    m = jnp.maximum(m, ee[1:Hp + 1, 0:Wp])
    m = jnp.maximum(m, ee[1:Hp + 1, 1:Wp + 1])
    m = jnp.maximum(m, eo[0:Hp, 0:Wp])
    m = jnp.maximum(m, eo[1:Hp + 1, 0:Wp])
    m = jnp.maximum(m, oe[0:Hp, 0:Wp])
    m = jnp.maximum(m, oe[0:Hp, 1:Wp + 1])
    m = jnp.maximum(m, oo[0:Hp, 0:Wp])
    o_ref[0] = (m + s_ref[0]).astype(o_ref.dtype)


# ---------------------------------------------------------------------------
# Wrappers around pallas_call
# ---------------------------------------------------------------------------

def _pick_tn(cout_p):
    for tn in (512, 256, 128):
        if cout_p % tn == 0:
            return tn
    return cout_p


def _pad_lane(a, axis):
    pad = (-a.shape[axis]) % LANE
    if pad == 0:
        return a
    widths = [(0, 0)] * a.ndim
    widths[axis] = (0, pad)
    return jnp.pad(a, widths)


def _fold_bn(gamma, beta, mean, var, eps=1e-5):
    scale = gamma / jnp.sqrt(var + eps)
    shift = beta - mean * scale
    return scale, shift


def _sepconv_bn(x_nhwc, wdw, wpw, scale, shift, *, pre_relu, post_relu,
                pool_mean, out_dtype):
    """x_nhwc: (N, Hin, Win, Cp) spatially pre-padded (pad=1), channel-padded."""
    N, Hin, Win, Cp = x_nhwc.shape
    K = wdw.shape[0]
    Hout, Wout = Hin - K + 1, Win - K + 1
    M = Hout * Wout
    Cout_p = wpw.shape[1]
    TN = _pick_tn(Cout_p)          # weight tile (Cp, TN) keeps VMEM bounded at real widths
    num_j = Cout_p // TN
    Mout = 1 if pool_mean else M

    kernel = functools.partial(
        _sepconv_bn_kernel, K=K, Hout=Hout, Wout=Wout, pre_relu=pre_relu,
        post_relu=post_relu, pool_mean=pool_mean, mxu_dtype=wpw.dtype)

    out_itemsize = jnp.dtype(out_dtype).itemsize
    cost = pl.CostEstimate(
        flops=2 * N * M * Cp * (Cout_p + K * K),
        transcendentals=0,
        bytes_accessed=int(x_nhwc.size * x_nhwc.dtype.itemsize
                           + wdw.size * wdw.dtype.itemsize
                           + wpw.size * wpw.dtype.itemsize
                           + N * Mout * Cout_p * out_itemsize))

    return pl.pallas_call(
        kernel,
        out_shape=jax.ShapeDtypeStruct((N, Mout, Cout_p), out_dtype),
        grid=(N, num_j),
        in_specs=[
            pl.BlockSpec((1, Hin, Win, Cp), lambda n, j: (n, 0, 0, 0)),
            pl.BlockSpec((K, K, Cp), lambda n, j: (0, 0, 0)),
            pl.BlockSpec((Cp, TN), lambda n, j: (0, j)),
            pl.BlockSpec((1, TN), lambda n, j: (0, j)),
            pl.BlockSpec((1, TN), lambda n, j: (0, j)),
        ],
        out_specs=pl.BlockSpec((1, Mout, TN), lambda n, j: (n, 0, j)),
        scratch_shapes=[pltpu.VMEM((M, Cp), jnp.float32)],
        compiler_params=pltpu.CompilerParams(
            dimension_semantics=("parallel", "arbitrary"),
            vmem_limit_bytes=_VMEM_LIMIT),
        cost_estimate=cost,
    )(x_nhwc, wdw, wpw, scale, shift)


def _pointwise_bn(x_flat, w, scale, shift, *, out_dtype):
    """(N, M, Cp) @ (Cp, Cout_p) 1x1 conv + folded BN (shortcut branch)."""
    N, M, Cp = x_flat.shape
    Cout_p = w.shape[1]
    TN = _pick_tn(Cout_p)
    num_j = Cout_p // TN
    cost = pl.CostEstimate(
        flops=2 * N * M * Cp * Cout_p,
        transcendentals=0,
        bytes_accessed=int(x_flat.size * x_flat.dtype.itemsize
                           + w.size * w.dtype.itemsize
                           + N * M * Cout_p * jnp.dtype(out_dtype).itemsize))
    return pl.pallas_call(
        _matmul_bn_kernel,
        out_shape=jax.ShapeDtypeStruct((N, M, Cout_p), out_dtype),
        grid=(N, num_j),
        in_specs=[
            pl.BlockSpec((1, M, Cp), lambda n, j: (n, 0, 0)),
            pl.BlockSpec((Cp, TN), lambda n, j: (0, j)),
            pl.BlockSpec((1, TN), lambda n, j: (0, j)),
            pl.BlockSpec((1, TN), lambda n, j: (0, j)),
        ],
        out_specs=pl.BlockSpec((1, M, TN), lambda n, j: (n, 0, j)),
        compiler_params=pltpu.CompilerParams(
            dimension_semantics=("parallel", "arbitrary"),
            vmem_limit_bytes=_VMEM_LIMIT),
        cost_estimate=cost,
    )(x_flat, w, scale, shift)


def _maxpool3x3s2p1_add(residual_nhwc, shortcut_nhwc):
    """MaxPool2d(3, stride=2, padding=1)(residual) + shortcut, fused."""
    N, H, W, Cp = residual_nhwc.shape
    Hp, Wp = (H - 1) // 2 + 1, (W - 1) // 2 + 1
    assert shortcut_nhwc.shape == (N, Hp, Wp, Cp)
    # -inf spatial padding (max-pool ignores padding); pad 2 on the bottom /
    # right so every parity plane has at least Hp+1 / Wp+1 extent.
    xp = jnp.pad(residual_nhwc, ((0, 0), (1, 2), (1, 2), (0, 0)),
                 constant_values=-jnp.inf)
    ee = xp[:, 0::2, 0::2, :]
    eo = xp[:, 0::2, 1::2, :]
    oe = xp[:, 1::2, 0::2, :]
    oo = xp[:, 1::2, 1::2, :]

    kernel = functools.partial(_maxpool_add_kernel, Hp=Hp, Wp=Wp)

    def _spec(a):
        return pl.BlockSpec((1,) + a.shape[1:], lambda n: (n, 0, 0, 0))

    return pl.pallas_call(
        kernel,
        out_shape=jax.ShapeDtypeStruct((N, Hp, Wp, Cp), residual_nhwc.dtype),
        grid=(N,),
        in_specs=[_spec(ee), _spec(eo), _spec(oe), _spec(oo),
                  _spec(shortcut_nhwc)],
        out_specs=pl.BlockSpec((1, Hp, Wp, Cp), lambda n: (n, 0, 0, 0)),
        compiler_params=pltpu.CompilerParams(
            dimension_semantics=("parallel",),
            vmem_limit_bytes=_VMEM_LIMIT),
    )(ee, eo, oe, oo, shortcut_nhwc)


# ---------------------------------------------------------------------------
# Full ExitFlow forward
# ---------------------------------------------------------------------------

def _prep_sepconv(dw, pw, bn):
    """dw: (Cin,1,K,K), pw: (Cout,Cin,1,1) (PyTorch layout), bn: (g,b,mean,var)."""
    wdw = _pad_lane(jnp.transpose(dw[:, 0], (1, 2, 0)), 2)            # (K,K,Cin_p)
    wpw = _pad_lane(_pad_lane(jnp.transpose(pw[:, :, 0, 0]), 0), 1)   # (Cin_p,Cout_p)
    scale, shift = _fold_bn(*bn)
    scale = _pad_lane(scale, 0)[None, :]                              # (1, Cout_p)
    shift = _pad_lane(shift, 0)[None, :]
    return wdw, wpw, scale, shift


def exit_flow(x_nchw, params):
    """Pallas ExitFlow.forward.  Returns (N, Cout, 1, 1) in NCHW."""
    N, _, H, W = x_nchw.shape
    dt = x_nchw.dtype

    sep1 = _prep_sepconv(params["dw1"], params["pw1"], params["bn1"])
    sep2 = _prep_sepconv(params["dw2"], params["pw2"], params["bn2"])
    sep3 = _prep_sepconv(params["dw3"], params["pw3"], params["bn3"])
    sep4 = _prep_sepconv(params["dw4"], params["pw4"], params["bn4"])
    w_sc = _pad_lane(_pad_lane(jnp.transpose(params["w_sc"][:, :, 0, 0]), 0), 1)
    sc_scale, sc_shift = _fold_bn(*params["bn_sc"])
    sc_scale = _pad_lane(sc_scale, 0)[None, :]
    sc_shift = _pad_lane(sc_shift, 0)[None, :]
    c_out = params["pw4"].shape[0]

    # NCHW -> NHWC (channels on the 128-wide lane axis), zero-pad channels.
    x = _pad_lane(jnp.transpose(x_nchw, (0, 2, 3, 1)), 3)             # (N,H,W,C0p)

    def _spatial_pad(a):                                              # conv padding=1
        return jnp.pad(a, ((0, 0), (1, 1), (1, 1), (0, 0)))

    # ---- residual: ReLU -> SepConv -> BN -> ReLU -> SepConv -> BN ----
    r = _sepconv_bn(_spatial_pad(x), *sep1, pre_relu=True, post_relu=True,
                    pool_mean=False, out_dtype=dt)
    r = r.reshape(N, H, W, -1)
    r = _sepconv_bn(_spatial_pad(r), *sep2, pre_relu=False, post_relu=False,
                    pool_mean=False, out_dtype=dt)
    r = r.reshape(N, H, W, -1)

    # ---- shortcut: 1x1 stride-2 conv -> BN (subsample is wrapper glue) ----
    xs = x[:, ::2, ::2, :]
    Hp, Wp = xs.shape[1], xs.shape[2]
    s = _pointwise_bn(xs.reshape(N, Hp * Wp, -1), w_sc, sc_scale, sc_shift,
                      out_dtype=dt)
    s = s.reshape(N, Hp, Wp, -1)

    # ---- MaxPool(3, s=2, p=1)(residual) + shortcut ----
    y = _maxpool3x3s2p1_add(r, s)                                     # (N,Hp,Wp,C2p)

    # ---- flow: SepConv -> BN -> ReLU -> SepConv -> BN -> ReLU -> AvgPool ----
    y = _sepconv_bn(_spatial_pad(y), *sep3, pre_relu=False, post_relu=True,
                    pool_mean=False, out_dtype=dt)
    y = y.reshape(N, Hp, Wp, -1)
    y = _sepconv_bn(_spatial_pad(y), *sep4, pre_relu=False, post_relu=True,
                    pool_mean=True, out_dtype=dt)                     # (N,1,C4p)

    # Drop lane padding, return NCHW (N, Cout, 1, 1).
    return y[:, 0, :c_out][:, :, None, None]


# ---------------------------------------------------------------------------
# Pure-JAX reference (mirrors PyTorch eval-mode forward)
# ---------------------------------------------------------------------------

def _bn_nchw(x, bn, eps=1e-5):
    gamma, beta, mean, var = bn
    scale = gamma / jnp.sqrt(var + eps)
    shift = beta - mean * scale
    return x * scale[None, :, None, None] + shift[None, :, None, None]


def _sepconv_nchw(x, dw, pw):
    c = x.shape[1]
    y = lax.conv_general_dilated(
        x, dw, window_strides=(1, 1), padding=((1, 1), (1, 1)),
        dimension_numbers=("NCHW", "OIHW", "NCHW"), feature_group_count=c)
    return lax.conv_general_dilated(
        y, pw, window_strides=(1, 1), padding="VALID",
        dimension_numbers=("NCHW", "OIHW", "NCHW"))


def _exit_flow_reference(x, p):
    r = jnp.maximum(x, 0.0)
    r = _bn_nchw(_sepconv_nchw(r, p["dw1"], p["pw1"]), p["bn1"])
    r = jnp.maximum(r, 0.0)
    r = _bn_nchw(_sepconv_nchw(r, p["dw2"], p["pw2"]), p["bn2"])
    r = lax.reduce_window(r, -jnp.inf, lax.max, (1, 1, 3, 3), (1, 1, 2, 2),
                          ((0, 0), (0, 0), (1, 1), (1, 1)))
    s = lax.conv_general_dilated(
        x, p["w_sc"], window_strides=(2, 2), padding="VALID",
        dimension_numbers=("NCHW", "OIHW", "NCHW"))
    s = _bn_nchw(s, p["bn_sc"])
    y = r + s
    y = _bn_nchw(_sepconv_nchw(y, p["dw3"], p["pw3"]), p["bn3"])
    y = jnp.maximum(y, 0.0)
    y = _bn_nchw(_sepconv_nchw(y, p["dw4"], p["pw4"]), p["bn4"])
    y = jnp.maximum(y, 0.0)
    return jnp.mean(y, axis=(2, 3), keepdims=True)                    # AdaptiveAvgPool2d((1,1))


if __name__ == "__main__":
    # Real ExitFlow widths are (728, 728, 1024, 1536, 2048).  The self-test
    # uses scaled-down widths (the kernels pad channels to 128 lanes either
    # way) and a small 16x16 spatial size so it runs in seconds.
    N, H, W = 2, 16, 16
    C0, C1, C2, C3, C4 = 8, 8, 16, 24, 32

    key = jax.random.PRNGKey(0)
    kit = iter(jax.random.split(key, 32))

    def nrm(shape, s=0.1):
        return jax.random.normal(next(kit), shape, jnp.float32) * s

    def bn_params(c):
        return (1.0 + 0.1 * jax.random.normal(next(kit), (c,), jnp.float32),   # gamma
                0.1 * jax.random.normal(next(kit), (c,), jnp.float32),         # beta
                0.1 * jax.random.normal(next(kit), (c,), jnp.float32),         # running_mean
                jax.random.uniform(next(kit), (c,), jnp.float32, 0.5, 1.5))    # running_var

    x = jax.random.normal(next(kit), (N, C0, H, W), jnp.float32)
    params = dict(
        dw1=nrm((C0, 1, 3, 3)), pw1=nrm((C1, C0, 1, 1)), bn1=bn_params(C1),
        dw2=nrm((C1, 1, 3, 3)), pw2=nrm((C2, C1, 1, 1)), bn2=bn_params(C2),
        w_sc=nrm((C2, C0, 1, 1)), bn_sc=bn_params(C2),
        dw3=nrm((C2, 1, 3, 3)), pw3=nrm((C3, C2, 1, 1)), bn3=bn_params(C3),
        dw4=nrm((C3, 1, 3, 3)), pw4=nrm((C4, C3, 1, 1)), bn4=bn_params(C4),
    )

    out = jax.block_until_ready(jax.jit(exit_flow)(x, params))
    ref = jax.block_until_ready(jax.jit(_exit_flow_reference)(x, params))

    assert out.shape == ref.shape == (N, C4, 1, 1), (out.shape, ref.shape)
    max_err = float(jnp.max(jnp.abs(out - ref)))
    assert jnp.allclose(out, ref, atol=1e-3, rtol=1e-3), f"mismatch, max_err={max_err}"

    print("KERNEL_OK")
</pallas_src>

<mosaic_0001>
module attributes {stable_mosaic.version = 11 : i64} {
  func.func @_matmul_bn_kernel(%arg0: i32, %arg1: i32, %arg2: memref<1x64x128xf32, #tpu.memory_space<vmem>>, %arg3: memref<128x128xf32, #tpu.memory_space<vmem>>, %arg4: memref<1x128xf32, #tpu.memory_space<vmem>>, %arg5: memref<1x128xf32, #tpu.memory_space<vmem>>, %arg6: memref<1x64x128xf32, #tpu.memory_space<vmem>>) attributes {dimension_semantics = [#tpu.dimension_semantics<parallel>, #tpu.dimension_semantics<arbitrary>], iteration_bounds = array<i64: 2, 1>, scalar_prefetch = 0 : i64, scratch_operands = 0 : i64, tpu.core_type = #tpu.core_type<tc>, window_params = [{transform_indices = @transform_0, window_bounds = array<i64: 1, 64, 128>}, {transform_indices = @transform_1, window_bounds = array<i64: 128, 128>}, {transform_indices = @transform_2, window_bounds = array<i64: 1, 128>}, {transform_indices = @transform_3, window_bounds = array<i64: 1, 128>}, {transform_indices = @transform_4, window_bounds = array<i64: 1, 64, 128>}]} {
    %c0 = arith.constant 0 : index
    %c0_0 = arith.constant 0 : index
    %c0_1 = arith.constant 0 : index
    %0 = vector.load %arg2[%c0, %c0_0, %c0_1] : memref<1x64x128xf32, #tpu.memory_space<vmem>>, vector<1x64x128xf32>
    %1 = vector.shape_cast %0 : vector<1x64x128xf32> to vector<64x128xf32>
    %c0_2 = arith.constant 0 : index
    %c0_3 = arith.constant 0 : index
    %2 = vector.load %arg3[%c0_2, %c0_3] : memref<128x128xf32, #tpu.memory_space<vmem>>, vector<128x128xf32>
    %cst = arith.constant dense<0.000000e+00> : vector<64x128xf32>
    %3 = tpu.matmul %1, %2, %cst {dimension_numbers = #tpu.dot_dimension_numbers<[1], [0], [0], [1], [0, 0, 1, 1], [], []>} : vector<64x128xf32>, vector<128x128xf32>, vector<64x128xf32> -> vector<64x128xf32>
    %c0_4 = arith.constant 0 : index
    %c0_5 = arith.constant 0 : index
    %4 = vector.load %arg4[%c0_4, %c0_5] : memref<1x128xf32, #tpu.memory_space<vmem>>, vector<1x128xf32>
    %5 = vector.shape_cast %4 : vector<1x128xf32> to vector<128xf32>
    %6 = vector.shape_cast %5 : vector<128xf32> to vector<1x128xf32>
    %7 = vector.broadcast %6 : vector<1x128xf32> to vector<64x128xf32>
    %8 = arith.mulf %3, %7 : vector<64x128xf32>
    %c0_6 = arith.constant 0 : index
    %c0_7 = arith.constant 0 : index
    %9 = vector.load %arg5[%c0_6, %c0_7] : memref<1x128xf32, #tpu.memory_space<vmem>>, vector<1x128xf32>
    %10 = vector.shape_cast %9 : vector<1x128xf32> to vector<128xf32>
    %11 = vector.shape_cast %10 : vector<128xf32> to vector<1x128xf32>
    %12 = vector.broadcast %11 : vector<1x128xf32> to vector<64x128xf32>
    %13 = arith.addf %8, %12 : vector<64x128xf32>
    %c0_8 = arith.constant 0 : index
    %c0_9 = arith.constant 0 : index
    %c0_10 = arith.constant 0 : index
    %14 = vector.load %arg6[%c0_8, %c0_9, %c0_10] : memref<1x64x128xf32, #tpu.memory_space<vmem>>, vector<1x64x128xf32>
    %15 = vector.shape_cast %14 : vector<1x64x128xf32> to vector<64x128xf32>
    %16 = vector.shape_cast %13 : vector<64x128xf32> to vector<1x64x128xf32>
    tpu.vector_store %arg6[%c0_8, %c0_9, %c0_10], %16 {strides = array<i32>} : memref<1x64x128xf32, #tpu.memory_space<vmem>>, vector<1x64x128xf32>,
    return
  }
  func.func @transform_0(%arg0: i32, %arg1: i32) -> (i32, i32, i32) {
    %c0_i32 = arith.constant 0 : i32
    %c0_i32_0 = arith.constant 0 : i32
    %c0_i32_1 = arith.constant 0 : i32
    return %arg0, %c0_i32, %c0_i32_0 : i32, i32, i32
  }
  func.func @transform_1(%arg0: i32, %arg1: i32) -> (i32, i32) {
    %c0_i32 = arith.constant 0 : i32
    %c0_i32_0 = arith.constant 0 : i32
    return %c0_i32, %arg1 : i32, i32
  }
  func.func @transform_2(%arg0: i32, %arg1: i32) -> (i32, i32) {
    %c0_i32 = arith.constant 0 : i32
    %c0_i32_0 = arith.constant 0 : i32
    return %c0_i32, %arg1 : i32, i32
  }
  func.func @transform_3(%arg0: i32, %arg1: i32) -> (i32, i32) {
    %c0_i32 = arith.constant 0 : i32
    %c0_i32_0 = arith.constant 0 : i32
    return %c0_i32, %arg1 : i32, i32
  }
  func.func @transform_4(%arg0: i32, %arg1: i32) -> (i32, i32, i32) {
    %c0_i32 = arith.constant 0 : i32
    %c0_i32_0 = arith.constant 0 : i32
    return %arg0, %c0_i32, %arg1 : i32, i32, i32
  }
}

module attributes {stable_mosaic.version = 11 : i64} {
  func.func @_sepconv_bn_kernel(%arg0: i32, %arg1: i32, %arg2: memref<1x18x18x128xf32, #tpu.memory_space<vmem>>, %arg3: memref<3x3x128xf32, #tpu.memory_space<vmem>>, %arg4: memref<128x128xf32, #tpu.memory_space<vmem>>, %arg5: memref<1x128xf32, #tpu.memory_space<vmem>>, %arg6: memref<1x128xf32, #tpu.memory_space<vmem>>, %arg7: memref<1x256x128xf32, #tpu.memory_space<vmem>>, %arg8: memref<256x128xf32, #tpu.memory_space<vmem>>) attributes {dimension_semantics = [#tpu.dimension_semantics<parallel>, #tpu.dimension_semantics<arbitrary>], iteration_bounds = array<i64: 2, 1>, scalar_prefetch = 0 : i64, scratch_operands = 1 : i64, tpu.core_type = #tpu.core_type<tc>, window_params = [{transform_indices = @transform_0, window_bounds = array<i64: 1, 18, 18, 128>}, {pipeline_mode = #tpu.pipeline_mode<synchronous>, transform_indices = @transform_1, window_bounds = array<i64: 3, 3, 128>}, {transform_indices = @transform_2, window_bounds = array<i64: 128, 128>}, {transform_indices = @transform_3, window_bounds = array<i64: 1, 128>}, {transform_indices = @transform_4, window_bounds = array<i64: 1, 128>}, {transform_indices = @transform_5, window_bounds = array<i64: 1, 256, 128>}]} {
    %c0_i32 = arith.constant 0 : i32
    %0 = arith.cmpi eq, %arg1, %c0_i32 : i32
    %1 = arith.extui %0 : i1 to i32
    %c0_i32_0 = arith.constant 0 : i32
    %2 = arith.cmpi ne, %1, %c0_i32_0 : i32
    scf.if %2 {
      %c0_12 = arith.constant 0 : index
      %c0_13 = arith.constant 0 : index
      %c0_14 = arith.constant 0 : index
      %21 = vector.load %arg3[%c0_12, %c0_13, %c0_14] : memref<3x3x128xf32, #tpu.memory_space<vmem>>, vector<3x3x128xf32>
      %cst_15 = arith.constant 0.000000e+00 : f32
      %22 = vector.broadcast %cst_15 : f32 to vector<8x16x128xf32>
      %c0_16 = arith.constant 0 : index
      %c0_17 = arith.constant 0 : index
      %c0_18 = arith.constant 0 : index
      %c0_19 = arith.constant 0 : index
      %23 = vector.load %arg2[%c0_16, %c0_17, %c0_18, %c0_19] : memref<1x18x18x128xf32, #tpu.memory_space<vmem>>, vector<1x10x16x128xf32>
      %24 = vector.shape_cast %23 : vector<1x10x16x128xf32> to vector<10x16x128xf32>
      %cst_20 = arith.constant 0.000000e+00 : f32
      %25 = vector.broadcast %cst_20 : f32 to vector<10x16x128xf32>
      %26 = arith.maximumf %24, %25 : vector<10x16x128xf32>
      %27 = vector.extract_strided_slice %26 {offsets = [0, 0, 0], sizes = [8, 16, 128], strides = [1, 1, 1]} : vector<10x16x128xf32> to vector<8x16x128xf32>
      %28 = vector.extract_strided_slice %21 {offsets = [0, 0, 0], sizes = [1, 1, 128], strides = [1, 1, 1]} : vector<3x3x128xf32> to vector<1x1x128xf32>
      %29 = vector.shape_cast %28 : vector<1x1x128xf32> to vector<128xf32>
      %30 = vector.shape_cast %29 : vector<128xf32> to vector<1x1x128xf32>
      %31 = vector.broadcast %30 : vector<1x1x128xf32> to vector<8x16x128xf32>
      %32 = arith.mulf %27, %31 : vector<8x16x128xf32>
      %33 = arith.addf %22, %32 : vector<8x16x128xf32>
      %34 = vector.extract_strided_slice %26 {offsets = [1, 0, 0], sizes = [8, 16, 128], strides = [1, 1, 1]} : vector<10x16x128xf32> to vector<8x16x128xf32>
      %35 = vector.extract_strided_slice %21 {offsets = [1, 0, 0], sizes = [1, 1, 128], strides = [1, 1, 1]} : vector<3x3x128xf32> to vector<1x1x128xf32>
      %36 = vector.shape_cast %35 : vector<1x1x128xf32> to vector<128xf32>
      %37 = vector.shape_cast %36 : vector<128xf32> to vector<1x1x128xf32>
      %38 = vector.broadcast %37 : vector<1x1x128xf32> to vector<8x16x128xf32>
      %39 = arith.mulf %34, %38 : vector<8x16x128xf32>
      %40 = arith.addf %33, %39 : vector<8x16x128xf32>
      %41 = vector.extract_strided_slice %26 {offsets = [2, 0, 0], sizes = [8, 16, 128], strides = [1, 1, 1]} : vector<10x16x128xf32> to vector<8x16x128xf32>
      %42 = vector.extract_strided_slice %21 {offsets = [2, 0, 0], sizes = [1, 1, 128], strides = [1, 1, 1]} : vector<3x3x128xf32> to vector<1x1x128xf32>
      %43 = vector.shape_cast %42 : vector<1x1x128xf32> to vector<128xf32>
      %44 = vector.shape_cast %43 : vector<128xf32> to vector<1x1x128xf32>
      %45 = vector.broadcast %44 : vector<1x1x128xf32> to vector<8x16x128xf32>
      %46 = arith.mulf %41, %45 : vector<8x16x128xf32>
      %47 = arith.addf %40, %46 : vector<8x16x128xf32>
      %c0_21 = arith.constant 0 : index
      %c0_22 = arith.constant 0 : index
      %c1 = arith.constant 1 : index
      %c0_23 = arith.constant 0 : index
      %48 = vector.load %arg2[%c0_21, %c0_22, %c1, %c0_23] : memref<1x18x18x128xf32, #tpu.memory_space<vmem>>, vector<1x10x16x128xf32>
      %49 = vector.shape_cast %48 : vector<1x10x16x128xf32> to vector<10x16x128xf32>
      %cst_24 = arith.constant 0.000000e+00 : f32
      %50 = vector.broadcast %cst_24 : f32 to vector<10x16x128xf32>
      %51 = arith.maximumf %49, %50 : vector<10x16x128xf32>
      %52 = vector.extract_strided_slice %51 {offsets = [0, 0, 0], sizes = [8, 16, 128], strides = [1, 1, 1]} : vector<10x16x128xf32> to vector<8x16x128xf32>
      %53 = vector.extract_strided_slice %21 {offsets = [0, 1, 0], sizes = [1, 1, 128], strides = [1, 1, 1]} : vector<3x3x128xf32> to vector<1x1x128xf32>
      %54 = vector.shape_cast %53 : vector<1x1x128xf32> to vector<128xf32>
      %55 = vector.shape_cast %54 : vector<128xf32> to vector<1x1x128xf32>
      %56 = vector.broadcast %55 : vector<1x1x128xf32> to vector<8x16x128xf32>
      %57 = arith.mulf %52, %56 : vector<8x16x128xf32>
      %58 = arith.addf %47, %57 : vector<8x16x128xf32>
      %59 = vector.extract_strided_slice %51 {offsets = [1, 0, 0], sizes = [8, 16, 128], strides = [1, 1, 1]} : vector<10x16x128xf32> to vector<8x16x128xf32>
      %60 = vector.extract_strided_slice %21 {offsets = [1, 1, 0], sizes = [1, 1, 128], strides = [1, 1, 1]} : vector<3x3x128xf32> to vector<1x1x128xf32>
      %61 = vector.shape_cast %60 : vector<1x1x128xf32> to vector<128xf32>
      %62 = vector.shape_cast %61 : vector<128xf32> to vector<1x1x128xf32>
      %63 = vector.broadcast %62 : vector<1x1x128xf32> to vector<8x16x128xf32>
      %64 = arith.mulf %59, %63 : vector<8x16x128xf32>
      %65 = arith.addf %58, %64 : vector<8x16x128xf32>
      %66 = vector.extract_strided_slice %51 {offsets = [2, 0, 0], sizes = [8, 16, 128], strides = [1, 1, 1]} : vector<10x16x128xf32> to vector<8x16x128xf32>
      %67 = vector.extract_strided_slice %21 {offsets = [2, 1, 0], sizes = [1, 1, 128], strides = [1, 1, 1]} : vector<3x3x128xf32> to vector<1x1x128xf32>
      %68 = vector.shape_cast %67 : vector<1x1x128xf32> to vector<128xf32>
      %69 = vector.shape_cast %68 : vector<128xf32> to vector<1x1x128xf32>
      %70 = vector.broadcast %69 : vector<1x1x128xf32> to vector<8x16x128xf32>
      %71 = arith.mulf %66, %70 : vector<8x16x128xf32>
      %72 = arith.addf %65, %71 : vector<8x16x128xf32>
      %c0_25 = arith.constant 0 : index
      %c0_26 = arith.constant 0 : index
      %c2 = arith.constant 2 : index
      %c0_27 = arith.constant 0 : index
      %73 = vector.load %arg2[%c0_25, %c0_26, %c2, %c0_27] : memref<1x18x18x128xf32, #tpu.memory_space<vmem>>, vector<1x10x16x128xf32>
      %74 = vector.shape_cast %73 : vector<1x10x16x128xf32> to vector<10x16x128xf32>
      %cst_28 = arith.constant 0.000000e+00 : f32
      %75 = vector.broadcast %cst_28 : f32 to vector<10x16x128xf32>
      %76 = arith.maximumf %74, %75 : vector<10x16x128xf32>
      %77 = vector.extract_strided_slice %76 {offsets = [0, 0, 0], sizes = [8, 16, 128], strides = [1, 1, 1]} : vector<10x16x128xf32> to vector<8x16x128xf32>
      %78 = vector.extract_strided_slice %21 {offsets = [0, 2, 0], sizes = [1, 1, 128], strides = [1, 1, 1]} : vector<3x3x128xf32> to vector<1x1x128xf32>
      %79 = vector.shape_cast %78 : vector<1x1x128xf32> to vector<128xf32>
      %80 = vector.shape_cast %79 : vector<128xf32> to vector<1x1x128xf32>
      %81 = vector.broadcast %80 : vector<1x1x128xf32> to vector<8x16x128xf32>
      %82 = arith.mulf %77, %81 : vector<8x16x128xf32>
      %83 = arith.addf %72, %82 : vector<8x16x128xf32>
      %84 = vector.extract_strided_slice %76 {offsets = [1, 0, 0], sizes = [8, 16, 128], strides = [1, 1, 1]} : vector<10x16x128xf32> to vector<8x16x128xf32>
      %85 = vector.extract_strided_slice %21 {offsets = [1, 2, 0], sizes = [1, 1, 128], strides = [1, 1, 1]} : vector<3x3x128xf32> to vector<1x1x128xf32>
      %86 = vector.shape_cast %85 : vector<1x1x128xf32> to vector<128xf32>
      %87 = vector.shape_cast %86 : vector<128xf32> to vector<1x1x128xf32>
      %88 = vector.broadcast %87 : vector<1x1x128xf32> to vector<8x16x128xf32>
      %89 = arith.mulf %84, %88 : vector<8x16x128xf32>
      %90 = arith.addf %83, %89 : vector<8x16x128xf32>
      %91 = vector.extract_strided_slice %76 {offsets = [2, 0, 0], sizes = [8, 16, 128], strides = [1, 1, 1]} : vector<10x16x128xf32> to vector<8x16x128xf32>
      %92 = vector.extract_strided_slice %21 {offsets = [2, 2, 0], sizes = [1, 1, 128], strides = [1, 1, 1]} : vector<3x3x128xf32> to vector<1x1x128xf32>
      %93 = vector.shape_cast %92 : vector<1x1x128xf32> to vector<128xf32>
      %94 = vector.shape_cast %93 : vector<128xf32> to vector<1x1x128xf32>
      %95 = vector.broadcast %94 : vector<1x1x128xf32> to vector<8x16x128xf32>
      %96 = arith.mulf %91, %95 : vector<8x16x128xf32>
      %97 = arith.addf %90, %96 : vector<8x16x128xf32>
      %98 = vector.shape_cast %97 : vector<8x16x128xf32> to vector<128x128xf32>
      %c0_29 = arith.constant 0 : index
      %c0_30 = arith.constant 0 : index
      %99 = vector.load %arg8[%c0_29, %c0_30] : memref<256x128xf32, #tpu.memory_space<vmem>>, vector<128x128xf32>
      tpu.vector_store %arg8[%c0_29, %c0_30], %98 {strides = array<i32>} : memref<256x128xf32, #tpu.memory_space<vmem>>, vector<128x128xf32>,
      %cst_31 = arith.constant 0.000000e+00 : f32
      %100 = vector.broadcast %cst_31 : f32 to vector<8x16x128xf32>
      %c0_32 = arith.constant 0 : index
      %c8 = arith.constant 8 : index
      %c0_33 = arith.constant 0 : index
      %c0_34 = arith.constant 0 : index
      %101 = vector.load %arg2[%c0_32, %c8, %c0_33, %c0_34] : memref<1x18x18x128xf32, #tpu.memory_space<vmem>>, vector<1x10x16x128xf32>
      %102 = vector.shape_cast %101 : vector<1x10x16x128xf32> to vector<10x16x128xf32>
      %cst_35 = arith.constant 0.000000e+00 : f32
      %103 = vector.broadcast %cst_35 : f32 to vector<10x16x128xf32>
      %104 = arith.maximumf %102, %103 : vector<10x16x128xf32>
      %105 = vector.extract_strided_slice %104 {offsets = [0, 0, 0], sizes = [8, 16, 128], strides = [1, 1, 1]} : vector<10x16x128xf32> to vector<8x16x128xf32>
      %106 = vector.extract_strided_slice %21 {offsets = [0, 0, 0], sizes = [1, 1, 128], strides = [1, 1, 1]} : vector<3x3x128xf32> to vector<1x1x128xf32>
      %107 = vector.shape_cast %106 : vector<1x1x128xf32> to vector<128xf32>
      %108 = vector.shape_cast %107 : vector<128xf32> to vector<1x1x128xf32>
      %109 = vector.broadcast %108 : vector<1x1x128xf32> to vector<8x16x128xf32>
      %110 = arith.mulf %105, %109 : vector<8x16x128xf32>
      %111 = arith.addf %100, %110 : vector<8x16x128xf32>
      %112 = vector.extract_strided_slice %104 {offsets = [1, 0, 0], sizes = [8, 16, 128], strides = [1, 1, 1]} : vector<10x16x128xf32> to vector<8x16x128xf32>
      %113 = vector.extract_strided_slice %21 {offsets = [1, 0, 0], sizes = [1, 1, 128], strides = [1, 1, 1]} : vector<3x3x128xf32> to vector<1x1x128xf32>
      %114 = vector.shape_cast %113 : vector<1x1x128xf32> to vector<128xf32>
      %115 = vector.shape_cast %114 : vector<128xf32> to vector<1x1x128xf32>
      %116 = vector.broadcast %115 : vector<1x1x128xf32> to vector<8x16x128xf32>
      %117 = arith.mulf %112, %116 : vector<8x16x128xf32>
      %118 = arith.addf %111, %117 : vector<8x16x128xf32>
      %119 = vector.extract_strided_slice %104 {offsets = [2, 0, 0], sizes = [8, 16, 128], strides = [1, 1, 1]} : vector<10x16x128xf32> to vector<8x16x128xf32>
      %120 = vector.extract_strided_slice %21 {offsets = [2, 0, 0], sizes = [1, 1, 128], strides = [1, 1, 1]} : vector<3x3x128xf32> to vector<1x1x128xf32>
      %121 = vector.shape_cast %120 : vector<1x1x128xf32> to vector<128xf32>
      %122 = vector.shape_cast %121 : vector<128xf32> to vector<1x1x128xf32>
      %123 = vector.broadcast %122 : vector<1x1x128xf32> to vector<8x16x128xf32>
      %124 = arith.mulf %119, %123 : vector<8x16x128xf32>
      %125 = arith.addf %118, %124 : vector<8x16x128xf32>
      %c0_36 = arith.constant 0 : index
      %c8_37 = arith.constant 8 : index
      %c1_38 = arith.constant 1 : index
      %c0_39 = arith.constant 0 : index
      %126 = vector.load %arg2[%c0_36, %c8_37, %c1_38, %c0_39] : memref<1x18x18x128xf32, #tpu.memory_space<vmem>>, vector<1x10x16x128xf32>
      %127 = vector.shape_cast %126 : vector<1x10x16x128xf32> to vector<10x16x128xf32>
      %cst_40 = arith.constant 0.000000e+00 : f32
      %128 = vector.broadcast %cst_40 : f32 to vector<10x16x128xf32>
      %129 = arith.maximumf %127, %128 : vector<10x16x128xf32>
      %130 = vector.extract_strided_slice %129 {offsets = [0, 0, 0], sizes = [8, 16, 128], strides = [1, 1, 1]} : vector<10x16x128xf32> to vector<8x16x128xf32>
      %131 = vector.extract_strided_slice %21 {offsets = [0, 1, 0], sizes = [1, 1, 128], strides = [1, 1, 1]} : vector<3x3x128xf32> to vector<1x1x128xf32>
      %132 = vector.shape_cast %131 : vector<1x1x128xf32> to vector<128xf32>
      %133 = vector.shape_cast %132 : vector<128xf32> to vector<1x1x128xf32>
      %134 = vector.broadcast %133 : vector<1x1x128xf32> to vector<8x16x128xf32>
      %135 = arith.mulf %130, %134 : vector<8x16x128xf32>
      %136 = arith.addf %125, %135 : vector<8x16x128xf32>
      %137 = vector.extract_strided_slice %129 {offsets = [1, 0, 0], sizes = [8, 16, 128], strides = [1, 1, 1]} : vector<10x16x128xf32> to vector<8x16x128xf32>
      %138 = vector.extract_strided_slice %21 {offsets = [1, 1, 0], sizes = [1, 1, 128], strides = [1, 1, 1]} : vector<3x3x128xf32> to vector<1x1x128xf32>
      %139 = vector.shape_cast %138 : vector<1x1x128xf32> to vector<128xf32>
      %140 = vector.shape_cast %139 : vector<128xf32> to vector<1x1x128xf32>
      %141 = vector.broadcast %140 : vector<1x1x128xf32> to vector<8x16x128xf32>
      %142 = arith.mulf %137, %141 : vector<8x16x128xf32>
      %143 = arith.addf %136, %142 : vector<8x16x128xf32>
      %144 = vector.extract_strided_slice %129 {offsets = [2, 0, 0], sizes = [8, 16, 128], strides = [1, 1, 1]} : vector<10x16x128xf32> to vector<8x16x128xf32>
      %145 = vector.extract_strided_slice %21 {offsets = [2, 1, 0], sizes = [1, 1, 128], strides = [1, 1, 1]} : vector<3x3x128xf32> to vector<1x1x128xf32>
      %146 = vector.shape_cast %145 : vector<1x1x128xf32> to vector<128xf32>
      %147 = vector.shape_cast %146 : vector<128xf32> to vector<1x1x128xf32>
      %148 = vector.broadcast %147 : vector<1x1x128xf32> to vector<8x16x128xf32>
      %149 = arith.mulf %144, %148 : vector<8x16x128xf32>
      %150 = arith.addf %143, %149 : vector<8x16x128xf32>
      %c0_41 = arith.constant 0 : index
      %c8_42 = arith.constant 8 : index
      %c2_43 = arith.constant 2 : index
      %c0_44 = arith.constant 0 : index
      %151 = vector.load %arg2[%c0_41, %c8_42, %c2_43, %c0_44] : memref<1x18x18x128xf32, #tpu.memory_space<vmem>>, vector<1x10x16x128xf32>
      %152 = vector.shape_cast %151 : vector<1x10x16x128xf32> to vector<10x16x128xf32>
      %cst_45 = arith.constant 0.000000e+00 : f32
      %153 = vector.broadcast %cst_45 : f32 to vector<10x16x128xf32>
      %154 = arith.maximumf %152, %153 : vector<10x16x128xf32>
      %155 = vector.extract_strided_slice %154 {offsets = [0, 0, 0], sizes = [8, 16, 128], strides = [1, 1, 1]} : vector<10x16x128xf32> to vector<8x16x128xf32>
      %156 = vector.extract_strided_slice %21 {offsets = [0, 2, 0], sizes = [1, 1, 128], strides = [1, 1, 1]} : vector<3x3x128xf32> to vector<1x1x128xf32>
      %157 = vector.shape_cast %156 : vector<1x1x128xf32> to vector<128xf32>
      %158 = vector.shape_cast %157 : vector<128xf32> to vector<1x1x128xf32>
      %159 = vector.broadcast %158 : vector<1x1x128xf32> to vector<8x16x128xf32>
      %160 = arith.mulf %155, %159 : vector<8x16x128xf32>
      %161 = arith.addf %150, %160 : vector<8x16x128xf32>
      %162 = vector.extract_strided_slice %154 {offsets = [1, 0, 0], sizes = [8, 16, 128], strides = [1, 1, 1]} : vector<10x16x128xf32> to vector<8x16x128xf32>
      %163 = vector.extract_strided_slice %21 {offsets = [1, 2, 0], sizes = [1, 1, 128], strides = [1, 1, 1]} : vector<3x3x128xf32> to vector<1x1x128xf32>
      %164 = vector.shape_cast %163 : vector<1x1x128xf32> to vector<128xf32>
      %165 = vector.shape_cast %164 : vector<128xf32> to vector<1x1x128xf32>
      %166 = vector.broadcast %165 : vector<1x1x128xf32> to vector<8x16x128xf32>
      %167 = arith.mulf %162, %166 : vector<8x16x128xf32>
      %168 = arith.addf %161, %167 : vector<8x16x128xf32>
      %169 = vector.extract_strided_slice %154 {offsets = [2, 0, 0], sizes = [8, 16, 128], strides = [1, 1, 1]} : vector<10x16x128xf32> to vector<8x16x128xf32>
      %170 = vector.extract_strided_slice %21 {offsets = [2, 2, 0], sizes = [1, 1, 128], strides = [1, 1, 1]} : vector<3x3x128xf32> to vector<1x1x128xf32>
      %171 = vector.shape_cast %170 : vector<1x1x128xf32> to vector<128xf32>
      %172 = vector.shape_cast %171 : vector<128xf32> to vector<1x1x128xf32>
      %173 = vector.broadcast %172 : vector<1x1x128xf32> to vector<8x16x128xf32>
      %174 = arith.mulf %169, %173 : vector<8x16x128xf32>
      %175 = arith.addf %168, %174 : vector<8x16x128xf32>
      %176 = vector.shape_cast %175 : vector<8x16x128xf32> to vector<128x128xf32>
      %c128 = arith.constant 128 : index
      %c0_46 = arith.constant 0 : index
      %177 = vector.load %arg8[%c128, %c0_46] : memref<256x128xf32, #tpu.memory_space<vmem>>, vector<128x128xf32>
      tpu.vector_store %arg8[%c128, %c0_46], %176 {strides = array<i32>} : memref<256x128xf32, #tpu.memory_space<vmem>>, vector<128x128xf32>,
    } else {
    }
    %c0 = arith.constant 0 : index
    %c0_1 = arith.constant 0 : index
    %3 = vector.load %arg8[%c0, %c0_1] : memref<256x128xf32, #tpu.memory_space<vmem>>, vector<256x128xf32>
    %c0_2 = arith.constant 0 : index
    %c0_3 = arith.constant 0 : index
    %4 = vector.load %arg4[%c0_2, %c0_3] : memref<128x128xf32, #tpu.memory_space<vmem>>, vector<128x128xf32>
    %cst = arith.constant dense<0.000000e+00> : vector<256x128xf32>
    %5 = tpu.matmul %3, %4, %cst {dimension_numbers = #tpu.dot_dimension_numbers<[1], [0], [0], [1], [0, 0, 1, 1], [], []>} : vector<256x128xf32>, vector<128x128xf32>, vector<256x128xf32> -> vector<256x128xf32>
    %c0_4 = arith.constant 0 : index
    %c0_5 = arith.constant 0 : index
    %6 = vector.load %arg5[%c0_4, %c0_5] : memref<1x128xf32, #tpu.memory_space<vmem>>, vector<1x128xf32>
    %7 = vector.shape_cast %6 : vector<1x128xf32> to vector<128xf32>
    %8 = vector.shape_cast %7 : vector<128xf32> to vector<1x128xf32>
    %9 = vector.broadcast %8 : vector<1x128xf32> to vector<256x128xf32>
    %10 = arith.mulf %5, %9 : vector<256x128xf32>
    %c0_6 = arith.constant 0 : index
    %c0_7 = arith.constant 0 : index
    %11 = vector.load %arg6[%c0_6, %c0_7] : memref<1x128xf32, #tpu.memory_space<vmem>>, vector<1x128xf32>
    %12 = vector.shape_cast %11 : vector<1x128xf32> to vector<128xf32>
    %13 = vector.shape_cast %12 : vector<128xf32> to vector<1x128xf32>
    %14 = vector.broadcast %13 : vector<1x128xf32> to vector<256x128xf32>
    %15 = arith.addf %10, %14 : vector<256x128xf32>
    %cst_8 = arith.constant 0.000000e+00 : f32
    %16 = vector.broadcast %cst_8 : f32 to vector<256x128xf32>
    %17 = arith.maximumf %15, %16 : vector<256x128xf32>
    %c0_9 = arith.constant 0 : index
    %c0_10 = arith.constant 0 : index
    %c0_11 = arith.constant 0 : index
    %18 = vector.load %arg7[%c0_9, %c0_10, %c0_11] : memref<1x256x128xf32, #tpu.memory_space<vmem>>, vector<1x256x128xf32>
    %19 = vector.shape_cast %18 : vector<1x256x128xf32> to vector<256x128xf32>
    %20 = vector.shape_cast %17 : vector<256x128xf32> to vector<1x256x128xf32>
    tpu.vector_store %arg7[%c0_9, %c0_10, %c0_11], %20 {strides = array<i32>} : memref<1x256x128xf32, #tpu.memory_space<vmem>>, vector<1x256x128xf32>,
    return
  }
  func.func @transform_0(%arg0: i32, %arg1: i32) -> (i32, i32, i32, i32) {
    %c0_i32 = arith.constant 0 : i32
    %c0_i32_0 = arith.constant 0 : i32
    %c0_i32_1 = arith.constant 0 : i32
    %c0_i32_2 = arith.constant 0 : i32
    return %arg0, %c0_i32, %c0_i32_0, %c0_i32_1 : i32, i32, i32, i32
  }
  func.func @transform_1(%arg0: i32, %arg1: i32) -> (i32, i32, i32) {
    %c0_i32 = arith.constant 0 : i32
    %c0_i32_0 = arith.constant 0 : i32
    %c0_i32_1 = arith.constant 0 : i32
    %c0_i32_2 = arith.constant 0 : i32
    return %c0_i32, %c0_i32_0, %c0_i32_1 : i32, i32, i32
  }
  func.func @transform_2(%arg0: i32, %arg1: i32) -> (i32, i32) {
    %c0_i32 = arith.constant 0 : i32
    %c0_i32_0 = arith.constant 0 : i32
    return %c0_i32, %arg1 : i32, i32
  }
  func.func @transform_3(%arg0: i32, %arg1: i32) -> (i32, i32) {
    %c0_i32 = arith.constant 0 : i32
    %c0_i32_0 = arith.constant 0 : i32
    return %c0_i32, %arg1 : i32, i32
  }
  func.func @transform_4(%arg0: i32, %arg1: i32) -> (i32, i32) {
    %c0_i32 = arith.constant 0 : i32
    %c0_i32_0 = arith.constant 0 : i32
    return %c0_i32, %arg1 : i32, i32
  }
  func.func @transform_5(%arg0: i32, %arg1: i32) -> (i32, i32, i32) {
    %c0_i32 = arith.constant 0 : i32
    %c0_i32_0 = arith.constant 0 : i32
    return %arg0, %c0_i32, %arg1 : i32, i32, i32
  }
}

module attributes {stable_mosaic.version = 11 : i64} {
  func.func @_sepconv_bn_kernel(%arg0: i32, %arg1: i32, %arg2: memref<1x18x18x128xf32, #tpu.memory_space<vmem>>, %arg3: memref<3x3x128xf32, #tpu.memory_space<vmem>>, %arg4: memref<128x128xf32, #tpu.memory_space<vmem>>, %arg5: memref<1x128xf32, #tpu.memory_space<vmem>>, %arg6: memref<1x128xf32, #tpu.memory_space<vmem>>, %arg7: memref<1x256x128xf32, #tpu.memory_space<vmem>>, %arg8: memref<256x128xf32, #tpu.memory_space<vmem>>) attributes {dimension_semantics = [#tpu.dimension_semantics<parallel>, #tpu.dimension_semantics<arbitrary>], iteration_bounds = array<i64: 2, 1>, scalar_prefetch = 0 : i64, scratch_operands = 1 : i64, tpu.core_type = #tpu.core_type<tc>, window_params = [{transform_indices = @transform_0, window_bounds = array<i64: 1, 18, 18, 128>}, {pipeline_mode = #tpu.pipeline_mode<synchronous>, transform_indices = @transform_1, window_bounds = array<i64: 3, 3, 128>}, {transform_indices = @transform_2, window_bounds = array<i64: 128, 128>}, {transform_indices = @transform_3, window_bounds = array<i64: 1, 128>}, {transform_indices = @transform_4, window_bounds = array<i64: 1, 128>}, {transform_indices = @transform_5, window_bounds = array<i64: 1, 256, 128>}]} {
    %c0_i32 = arith.constant 0 : i32
    %0 = arith.cmpi eq, %arg1, %c0_i32 : i32
    %1 = arith.extui %0 : i1 to i32
    %c0_i32_0 = arith.constant 0 : i32
    %2 = arith.cmpi ne, %1, %c0_i32_0 : i32
    scf.if %2 {
      %c0_11 = arith.constant 0 : index
      %c0_12 = arith.constant 0 : index
      %c0_13 = arith.constant 0 : index
      %19 = vector.load %arg3[%c0_11, %c0_12, %c0_13] : memref<3x3x128xf32, #tpu.memory_space<vmem>>, vector<3x3x128xf32>
      %cst_14 = arith.constant 0.000000e+00 : f32
      %20 = vector.broadcast %cst_14 : f32 to vector<8x16x128xf32>
      %c0_15 = arith.constant 0 : index
      %c0_16 = arith.constant 0 : index
      %c0_17 = arith.constant 0 : index
      %c0_18 = arith.constant 0 : index
      %21 = vector.load %arg2[%c0_15, %c0_16, %c0_17, %c0_18] : memref<1x18x18x128xf32, #tpu.memory_space<vmem>>, vector<1x10x16x128xf32>
      %22 = vector.shape_cast %21 : vector<1x10x16x128xf32> to vector<10x16x128xf32>
      %23 = vector.extract_strided_slice %22 {offsets = [0, 0, 0], sizes = [8, 16, 128], strides = [1, 1, 1]} : vector<10x16x128xf32> to vector<8x16x128xf32>
      %24 = vector.extract_strided_slice %19 {offsets = [0, 0, 0], sizes = [1, 1, 128], strides = [1, 1, 1]} : vector<3x3x128xf32> to vector<1x1x128xf32>
      %25 = vector.shape_cast %24 : vector<1x1x128xf32> to vector<128xf32>
      %26 = vector.shape_cast %25 : vector<128xf32> to vector<1x1x128xf32>
      %27 = vector.broadcast %26 : vector<1x1x128xf32> to vector<8x16x128xf32>
      %28 = arith.mulf %23, %27 : vector<8x16x128xf32>
      %29 = arith.addf %20, %28 : vector<8x16x128xf32>
      %30 = vector.extract_strided_slice %22 {offsets = [1, 0, 0], sizes = [8, 16, 128], strides = [1, 1, 1]} : vector<10x16x128xf32> to vector<8x16x128xf32>
      %31 = vector.extract_strided_slice %19 {offsets = [1, 0, 0], sizes = [1, 1, 128], strides = [1, 1, 1]} : vector<3x3x128xf32> to vector<1x1x128xf32>
      %32 = vector.shape_cast %31 : vector<1x1x128xf32> to vector<128xf32>
      %33 = vector.shape_cast %32 : vector<128xf32> to vector<1x1x128xf32>
      %34 = vector.broadcast %33 : vector<1x1x128xf32> to vector<8x16x128xf32>
      %35 = arith.mulf %30, %34 : vector<8x16x128xf32>
      %36 = arith.addf %29, %35 : vector<8x16x128xf32>
      %37 = vector.extract_strided_slice %22 {offsets = [2, 0, 0], sizes = [8, 16, 128], strides = [1, 1, 1]} : vector<10x16x128xf32> to vector<8x16x128xf32>
      %38 = vector.extract_strided_slice %19 {offsets = [2, 0, 0], sizes = [1, 1, 128], strides = [1, 1, 1]} : vector<3x3x128xf32> to vector<1x1x128xf32>
      %39 = vector.shape_cast %38 : vector<1x1x128xf32> to vector<128xf32>
      %40 = vector.shape_cast %39 : vector<128xf32> to vector<1x1x128xf32>
      %41 = vector.broadcast %40 : vector<1x1x128xf32> to vector<8x16x128xf32>
      %42 = arith.mulf %37, %41 : vector<8x16x128xf32>
      %43 = arith.addf %36, %42 : vector<8x16x128xf32>
      %c0_19 = arith.constant 0 : index
      %c0_20 = arith.constant 0 : index
      %c1 = arith.constant 1 : index
      %c0_21 = arith.constant 0 : index
      %44 = vector.load %arg2[%c0_19, %c0_20, %c1, %c0_21] : memref<1x18x18x128xf32, #tpu.memory_space<vmem>>, vector<1x10x16x128xf32>
      %45 = vector.shape_cast %44 : vector<1x10x16x128xf32> to vector<10x16x128xf32>
      %46 = vector.extract_strided_slice %45 {offsets = [0, 0, 0], sizes = [8, 16, 128], strides = [1, 1, 1]} : vector<10x16x128xf32> to vector<8x16x128xf32>
      %47 = vector.extract_strided_slice %19 {offsets = [0, 1, 0], sizes = [1, 1, 128], strides = [1, 1, 1]} : vector<3x3x128xf32> to vector<1x1x128xf32>
      %48 = vector.shape_cast %47 : vector<1x1x128xf32> to vector<128xf32>
      %49 = vector.shape_cast %48 : vector<128xf32> to vector<1x1x128xf32>
      %50 = vector.broadcast %49 : vector<1x1x128xf32> to vector<8x16x128xf32>
      %51 = arith.mulf %46, %50 : vector<8x16x128xf32>
      %52 = arith.addf %43, %51 : vector<8x16x128xf32>
      %53 = vector.extract_strided_slice %45 {offsets = [1, 0, 0], sizes = [8, 16, 128], strides = [1, 1, 1]} : vector<10x16x128xf32> to vector<8x16x128xf32>
      %54 = vector.extract_strided_slice %19 {offsets = [1, 1, 0], sizes = [1, 1, 128], strides = [1, 1, 1]} : vector<3x3x128xf32> to vector<1x1x128xf32>
      %55 = vector.shape_cast %54 : vector<1x1x128xf32> to vector<128xf32>
      %56 = vector.shape_cast %55 : vector<128xf32> to vector<1x1x128xf32>
      %57 = vector.broadcast %56 : vector<1x1x128xf32> to vector<8x16x128xf32>
      %58 = arith.mulf %53, %57 : vector<8x16x128xf32>
      %59 = arith.addf %52, %58 : vector<8x16x128xf32>
      %60 = vector.extract_strided_slice %45 {offsets = [2, 0, 0], sizes = [8, 16, 128], strides = [1, 1, 1]} : vector<10x16x128xf32> to vector<8x16x128xf32>
      %61 = vector.extract_strided_slice %19 {offsets = [2, 1, 0], sizes = [1, 1, 128], strides = [1, 1, 1]} : vector<3x3x128xf32> to vector<1x1x128xf32>
      %62 = vector.shape_cast %61 : vector<1x1x128xf32> to vector<128xf32>
      %63 = vector.shape_cast %62 : vector<128xf32> to vector<1x1x128xf32>
      %64 = vector.broadcast %63 : vector<1x1x128xf32> to vector<8x16x128xf32>
      %65 = arith.mulf %60, %64 : vector<8x16x128xf32>
      %66 = arith.addf %59, %65 : vector<8x16x128xf32>
      %c0_22 = arith.constant 0 : index
      %c0_23 = arith.constant 0 : index
      %c2 = arith.constant 2 : index
      %c0_24 = arith.constant 0 : index
      %67 = vector.load %arg2[%c0_22, %c0_23, %c2, %c0_24] : memref<1x18x18x128xf32, #tpu.memory_space<vmem>>, vector<1x10x16x128xf32>
      %68 = vector.shape_cast %67 : vector<1x10x16x128xf32> to vector<10x16x128xf32>
      %69 = vector.extract_strided_slice %68 {offsets = [0, 0, 0], sizes = [8, 16, 128], strides = [1, 1, 1]} : vector<10x16x128xf32> to vector<8x16x128xf32>
      %70 = vector.extract_strided_slice %19 {offsets = [0, 2, 0], sizes = [1, 1, 128], strides = [1, 1, 1]} : vector<3x3x128xf32> to vector<1x1x128xf32>
      %71 = vector.shape_cast %70 : vector<1x1x128xf32> to vector<128xf32>
      %72 = vector.shape_cast %71 : vector<128xf32> to vector<1x1x128xf32>
      %73 = vector.broadcast %72 : vector<1x1x128xf32> to vector<8x16x128xf32>
      %74 = arith.mulf %69, %73 : vector<8x16x128xf32>
      %75 = arith.addf %66, %74 : vector<8x16x128xf32>
      %76 = vector.extract_strided_slice %68 {offsets = [1, 0, 0], sizes = [8, 16, 128], strides = [1, 1, 1]} : vector<10x16x128xf32> to vector<8x16x128xf32>
      %77 = vector.extract_strided_slice %19 {offsets = [1, 2, 0], sizes = [1, 1, 128], strides = [1, 1, 1]} : vector<3x3x128xf32> to vector<1x1x128xf32>
      %78 = vector.shape_cast %77 : vector<1x1x128xf32> to vector<128xf32>
      %79 = vector.shape_cast %78 : vector<128xf32> to vector<1x1x128xf32>
      %80 = vector.broadcast %79 : vector<1x1x128xf32> to vector<8x16x128xf32>
      %81 = arith.mulf %76, %80 : vector<8x16x128xf32>
      %82 = arith.addf %75, %81 : vector<8x16x128xf32>
      %83 = vector.extract_strided_slice %68 {offsets = [2, 0, 0], sizes = [8, 16, 128], strides = [1, 1, 1]} : vector<10x16x128xf32> to vector<8x16x128xf32>
      %84 = vector.extract_strided_slice %19 {offsets = [2, 2, 0], sizes = [1, 1, 128], strides = [1, 1, 1]} : vector<3x3x128xf32> to vector<1x1x128xf32>
      %85 = vector.shape_cast %84 : vector<1x1x128xf32> to vector<128xf32>
      %86 = vector.shape_cast %85 : vector<128xf32> to vector<1x1x128xf32>
      %87 = vector.broadcast %86 : vector<1x1x128xf32> to vector<8x16x128xf32>
      %88 = arith.mulf %83, %87 : vector<8x16x128xf32>
      %89 = arith.addf %82, %88 : vector<8x16x128xf32>
      %90 = vector.shape_cast %89 : vector<8x16x128xf32> to vector<128x128xf32>
      %c0_25 = arith.constant 0 : index
      %c0_26 = arith.constant 0 : index
      %91 = vector.load %arg8[%c0_25, %c0_26] : memref<256x128xf32, #tpu.memory_space<vmem>>, vector<128x128xf32>
      tpu.vector_store %arg8[%c0_25, %c0_26], %90 {strides = array<i32>} : memref<256x128xf32, #tpu.memory_space<vmem>>, vector<128x128xf32>,
      %cst_27 = arith.constant 0.000000e+00 : f32
      %92 = vector.broadcast %cst_27 : f32 to vector<8x16x128xf32>
      %c0_28 = arith.constant 0 : index
      %c8 = arith.constant 8 : index
      %c0_29 = arith.constant 0 : index
      %c0_30 = arith.constant 0 : index
      %93 = vector.load %arg2[%c0_28, %c8, %c0_29, %c0_30] : memref<1x18x18x128xf32, #tpu.memory_space<vmem>>, vector<1x10x16x128xf32>
      %94 = vector.shape_cast %93 : vector<1x10x16x128xf32> to vector<10x16x128xf32>
      %95 = vector.extract_strided_slice %94 {offsets = [0, 0, 0], sizes = [8, 16, 128], strides = [1, 1, 1]} : vector<10x16x128xf32> to vector<8x16x128xf32>
      %96 = vector.extract_strided_slice %19 {offsets = [0, 0, 0], sizes = [1, 1, 128], strides = [1, 1, 1]} : vector<3x3x128xf32> to vector<1x1x128xf32>
      %97 = vector.shape_cast %96 : vector<1x1x128xf32> to vector<128xf32>
      %98 = vector.shape_cast %97 : vector<128xf32> to vector<1x1x128xf32>
      %99 = vector.broadcast %98 : vector<1x1x128xf32> to vector<8x16x128xf32>
      %100 = arith.mulf %95, %99 : vector<8x16x128xf32>
      %101 = arith.addf %92, %100 : vector<8x16x128xf32>
      %102 = vector.extract_strided_slice %94 {offsets = [1, 0, 0], sizes = [8, 16, 128], strides = [1, 1, 1]} : vector<10x16x128xf32> to vector<8x16x128xf32>
      %103 = vector.extract_strided_slice %19 {offsets = [1, 0, 0], sizes = [1, 1, 128], strides = [1, 1, 1]} : vector<3x3x128xf32> to vector<1x1x128xf32>
      %104 = vector.shape_cast %103 : vector<1x1x128xf32> to vector<128xf32>
      %105 = vector.shape_cast %104 : vector<128xf32> to vector<1x1x128xf32>
      %106 = vector.broadcast %105 : vector<1x1x128xf32> to vector<8x16x128xf32>
      %107 = arith.mulf %102, %106 : vector<8x16x128xf32>
      %108 = arith.addf %101, %107 : vector<8x16x128xf32>
      %109 = vector.extract_strided_slice %94 {offsets = [2, 0, 0], sizes = [8, 16, 128], strides = [1, 1, 1]} : vector<10x16x128xf32> to vector<8x16x128xf32>
      %110 = vector.extract_strided_slice %19 {offsets = [2, 0, 0], sizes = [1, 1, 128], strides = [1, 1, 1]} : vector<3x3x128xf32> to vector<1x1x128xf32>
      %111 = vector.shape_cast %110 : vector<1x1x128xf32> to vector<128xf32>
      %112 = vector.shape_cast %111 : vector<128xf32> to vector<1x1x128xf32>
      %113 = vector.broadcast %112 : vector<1x1x128xf32> to vector<8x16x128xf32>
      %114 = arith.mulf %109, %113 : vector<8x16x128xf32>
      %115 = arith.addf %108, %114 : vector<8x16x128xf32>
      %c0_31 = arith.constant 0 : index
      %c8_32 = arith.constant 8 : index
      %c1_33 = arith.constant 1 : index
      %c0_34 = arith.constant 0 : index
      %116 = vector.load %arg2[%c0_31, %c8_32, %c1_33, %c0_34] : memref<1x18x18x128xf32, #tpu.memory_space<vmem>>, vector<1x10x16x128xf32>
      %117 = vector.shape_cast %116 : vector<1x10x16x128xf32> to vector<10x16x128xf32>
      %118 = vector.extract_strided_slice %117 {offsets = [0, 0, 0], sizes = [8, 16, 128], strides = [1, 1, 1]} : vector<10x16x128xf32> to vector<8x16x128xf32>
      %119 = vector.extract_strided_slice %19 {offsets = [0, 1, 0], sizes = [1, 1, 128], strides = [1, 1, 1]} : vector<3x3x128xf32> to vector<1x1x128xf32>
      %120 = vector.shape_cast %119 : vector<1x1x128xf32> to vector<128xf32>
      %121 = vector.shape_cast %120 : vector<128xf32> to vector<1x1x128xf32>
      %122 = vector.broadcast %121 : vector<1x1x128xf32> to vector<8x16x128xf32>
      %123 = arith.mulf %118, %122 : vector<8x16x128xf32>
      %124 = arith.addf %115, %123 : vector<8x16x128xf32>
      %125 = vector.extract_strided_slice %117 {offsets = [1, 0, 0], sizes = [8, 16, 128], strides = [1, 1, 1]} : vector<10x16x128xf32> to vector<8x16x128xf32>
      %126 = vector.extract_strided_slice %19 {offsets = [1, 1, 0], sizes = [1, 1, 128], strides = [1, 1, 1]} : vector<3x3x128xf32> to vector<1x1x128xf32>
      %127 = vector.shape_cast %126 : vector<1x1x128xf32> to vector<128xf32>
      %128 = vector.shape_cast %127 : vector<128xf32> to vector<1x1x128xf32>
      %129 = vector.broadcast %128 : vector<1x1x128xf32> to vector<8x16x128xf32>
      %130 = arith.mulf %125, %129 : vector<8x16x128xf32>
      %131 = arith.addf %124, %130 : vector<8x16x128xf32>
      %132 = vector.extract_strided_slice %117 {offsets = [2, 0, 0], sizes = [8, 16, 128], strides = [1, 1, 1]} : vector<10x16x128xf32> to vector<8x16x128xf32>
      %133 = vector.extract_strided_slice %19 {offsets = [2, 1, 0], sizes = [1, 1, 128], strides = [1, 1, 1]} : vector<3x3x128xf32> to vector<1x1x128xf32>
      %134 = vector.shape_cast %133 : vector<1x1x128xf32> to vector<128xf32>
      %135 = vector.shape_cast %134 : vector<128xf32> to vector<1x1x128xf32>
      %136 = vector.broadcast %135 : vector<1x1x128xf32> to vector<8x16x128xf32>
      %137 = arith.mulf %132, %136 : vector<8x16x128xf32>
      %138 = arith.addf %131, %137 : vector<8x16x128xf32>
      %c0_35 = arith.constant 0 : index
      %c8_36 = arith.constant 8 : index
      %c2_37 = arith.constant 2 : index
      %c0_38 = arith.constant 0 : index
      %139 = vector.load %arg2[%c0_35, %c8_36, %c2_37, %c0_38] : memref<1x18x18x128xf32, #tpu.memory_space<vmem>>, vector<1x10x16x128xf32>
      %140 = vector.shape_cast %139 : vector<1x10x16x128xf32> to vector<10x16x128xf32>
      %141 = vector.extract_strided_slice %140 {offsets = [0, 0, 0], sizes = [8, 16, 128], strides = [1, 1, 1]} : vector<10x16x128xf32> to vector<8x16x128xf32>
      %142 = vector.extract_strided_slice %19 {offsets = [0, 2, 0], sizes = [1, 1, 128], strides = [1, 1, 1]} : vector<3x3x128xf32> to vector<1x1x128xf32>
      %143 = vector.shape_cast %142 : vector<1x1x128xf32> to vector<128xf32>
      %144 = vector.shape_cast %143 : vector<128xf32> to vector<1x1x128xf32>
      %145 = vector.broadcast %144 : vector<1x1x128xf32> to vector<8x16x128xf32>
      %146 = arith.mulf %141, %145 : vector<8x16x128xf32>
      %147 = arith.addf %138, %146 : vector<8x16x128xf32>
      %148 = vector.extract_strided_slice %140 {offsets = [1, 0, 0], sizes = [8, 16, 128], strides = [1, 1, 1]} : vector<10x16x128xf32> to vector<8x16x128xf32>
      %149 = vector.extract_strided_slice %19 {offsets = [1, 2, 0], sizes = [1, 1, 128], strides = [1, 1, 1]} : vector<3x3x128xf32> to vector<1x1x128xf32>
      %150 = vector.shape_cast %149 : vector<1x1x128xf32> to vector<128xf32>
      %151 = vector.shape_cast %150 : vector<128xf32> to vector<1x1x128xf32>
      %152 = vector.broadcast %151 : vector<1x1x128xf32> to vector<8x16x128xf32>
      %153 = arith.mulf %148, %152 : vector<8x16x128xf32>
      %154 = arith.addf %147, %153 : vector<8x16x128xf32>
      %155 = vector.extract_strided_slice %140 {offsets = [2, 0, 0], sizes = [8, 16, 128], strides = [1, 1, 1]} : vector<10x16x128xf32> to vector<8x16x128xf32>
      %156 = vector.extract_strided_slice %19 {offsets = [2, 2, 0], sizes = [1, 1, 128], strides = [1, 1, 1]} : vector<3x3x128xf32> to vector<1x1x128xf32>
      %157 = vector.shape_cast %156 : vector<1x1x128xf32> to vector<128xf32>
      %158 = vector.shape_cast %157 : vector<128xf32> to vector<1x1x128xf32>
      %159 = vector.broadcast %158 : vector<1x1x128xf32> to vector<8x16x128xf32>
      %160 = arith.mulf %155, %159 : vector<8x16x128xf32>
      %161 = arith.addf %154, %160 : vector<8x16x128xf32>
      %162 = vector.shape_cast %161 : vector<8x16x128xf32> to vector<128x128xf32>
      %c128 = arith.constant 128 : index
      %c0_39 = arith.constant 0 : index
      %163 = vector.load %arg8[%c128, %c0_39] : memref<256x128xf32, #tpu.memory_space<vmem>>, vector<128x128xf32>
      tpu.vector_store %arg8[%c128, %c0_39], %162 {strides = array<i32>} : memref<256x128xf32, #tpu.memory_space<vmem>>, vector<128x128xf32>,
    } else {
    }
    %c0 = arith.constant 0 : index
    %c0_1 = arith.constant 0 : index
    %3 = vector.load %arg8[%c0, %c0_1] : memref<256x128xf32, #tpu.memory_space<vmem>>, vector<256x128xf32>
    %c0_2 = arith.constant 0 : index
    %c0_3 = arith.constant 0 : index
    %4 = vector.load %arg4[%c0_2, %c0_3] : memref<128x128xf32, #tpu.memory_space<vmem>>, vector<128x128xf32>
    %cst = arith.constant dense<0.000000e+00> : vector<256x128xf32>
    %5 = tpu.matmul %3, %4, %cst {dimension_numbers = #tpu.dot_dimension_numbers<[1], [0], [0], [1], [0, 0, 1, 1], [], []>} : vector<256x128xf32>, vector<128x128xf32>, vector<256x128xf32> -> vector<256x128xf32>
    %c0_4 = arith.constant 0 : index
    %c0_5 = arith.constant 0 : index
    %6 = vector.load %arg5[%c0_4, %c0_5] : memref<1x128xf32, #tpu.memory_space<vmem>>, vector<1x128xf32>
    %7 = vector.shape_cast %6 : vector<1x128xf32> to vector<128xf32>
    %8 = vector.shape_cast %7 : vector<128xf32> to vector<1x128xf32>
    %9 = vector.broadcast %8 : vector<1x128xf32> to vector<256x128xf32>
    %10 = arith.mulf %5, %9 : vector<256x128xf32>
    %c0_6 = arith.constant 0 : index
    %c0_7 = arith.constant 0 : index
    %11 = vector.load %arg6[%c0_6, %c0_7] : memref<1x128xf32, #tpu.memory_space<vmem>>, vector<1x128xf32>
    %12 = vector.shape_cast %11 : vector<1x128xf32> to vector<128xf32>
    %13 = vector.shape_cast %12 : vector<128xf32> to vector<1x128xf32>
    %14 = vector.broadcast %13 : vector<1x128xf32> to vector<256x128xf32>
    %15 = arith.addf %10, %14 : vector<256x128xf32>
    %c0_8 = arith.constant 0 : index
    %c0_9 = arith.constant 0 : index
    %c0_10 = arith.constant 0 : index
    %16 = vector.load %arg7[%c0_8, %c0_9, %c0_10] : memref<1x256x128xf32, #tpu.memory_space<vmem>>, vector<1x256x128xf32>
    %17 = vector.shape_cast %16 : vector<1x256x128xf32> to vector<256x128xf32>
    %18 = vector.shape_cast %15 : vector<256x128xf32> to vector<1x256x128xf32>
    tpu.vector_store %arg7[%c0_8, %c0_9, %c0_10], %18 {strides = array<i32>} : memref<1x256x128xf32, #tpu.memory_space<vmem>>, vector<1x256x128xf32>,
    return
  }
  func.func @transform_0(%arg0: i32, %arg1: i32) -> (i32, i32, i32, i32) {
    %c0_i32 = arith.constant 0 : i32
    %c0_i32_0 = arith.constant 0 : i32
    %c0_i32_1 = arith.constant 0 : i32
    %c0_i32_2 = arith.constant 0 : i32
    return %arg0, %c0_i32, %c0_i32_0, %c0_i32_1 : i32, i32, i32, i32
  }
  func.func @transform_1(%arg0: i32, %arg1: i32) -> (i32, i32, i32) {
    %c0_i32 = arith.constant 0 : i32
    %c0_i32_0 = arith.constant 0 : i32
    %c0_i32_1 = arith.constant 0 : i32
    %c0_i32_2 = arith.constant 0 : i32
    return %c0_i32, %c0_i32_0, %c0_i32_1 : i32, i32, i32
  }
  func.func @transform_2(%arg0: i32, %arg1: i32) -> (i32, i32) {
    %c0_i32 = arith.constant 0 : i32
    %c0_i32_0 = arith.constant 0 : i32
    return %c0_i32, %arg1 : i32, i32
  }
  func.func @transform_3(%arg0: i32, %arg1: i32) -> (i32, i32) {
    %c0_i32 = arith.constant 0 : i32
    %c0_i32_0 = arith.constant 0 : i32
    return %c0_i32, %arg1 : i32, i32
  }
  func.func @transform_4(%arg0: i32, %arg1: i32) -> (i32, i32) {
    %c0_i32 = arith.constant 0 : i32
    %c0_i32_0 = arith.constant 0 : i32
    return %c0_i32, %arg1 : i32, i32
  }
  func.func @transform_5(%arg0: i32, %arg1: i32) -> (i32, i32, i32) {
    %c0_i32 = arith.constant 0 : i32
    %c0_i32_0 = arith.constant 0 : i32
    return %arg0, %c0_i32, %arg1 : i32, i32, i32
  }
}

module attributes {stable_mosaic.version = 11 : i64} {
  func.func @_maxpool_add_kernel(%arg0: i32, %arg1: memref<1x10x10x128xf32, #tpu.memory_space<vmem>>, %arg2: memref<1x10x9x128xf32, #tpu.memory_space<vmem>>, %arg3: memref<1x9x10x128xf32, #tpu.memory_space<vmem>>, %arg4: memref<1x9x9x128xf32, #tpu.memory_space<vmem>>, %arg5: memref<1x8x8x128xf32, #tpu.memory_space<vmem>>, %arg6: memref<1x8x8x128xf32, #tpu.memory_space<vmem>>) attributes {dimension_semantics = [#tpu.dimension_semantics<parallel>], iteration_bounds = array<i64: 2>, scalar_prefetch = 0 : i64, scratch_operands = 0 : i64, tpu.core_type = #tpu.core_type<tc>, window_params = [{transform_indices = @transform_0, window_bounds = array<i64: 1, 10, 10, 128>}, {transform_indices = @transform_1, window_bounds = array<i64: 1, 10, 9, 128>}, {transform_indices = @transform_2, window_bounds = array<i64: 1, 9, 10, 128>}, {transform_indices = @transform_3, window_bounds = array<i64: 1, 9, 9, 128>}, {transform_indices = @transform_4, window_bounds = array<i64: 1, 8, 8, 128>}, {transform_indices = @transform_5, window_bounds = array<i64: 1, 8, 8, 128>}]} {
    %c0 = arith.constant 0 : index
    %c0_0 = arith.constant 0 : index
    %c0_1 = arith.constant 0 : index
    %c0_2 = arith.constant 0 : index
    %0 = vector.load %arg1[%c0, %c0_0, %c0_1, %c0_2] : memref<1x10x10x128xf32, #tpu.memory_space<vmem>>, vector<1x10x10x128xf32>
    %1 = vector.shape_cast %0 : vector<1x10x10x128xf32> to vector<10x10x128xf32>
    %c0_3 = arith.constant 0 : index
    %c0_4 = arith.constant 0 : index
    %c0_5 = arith.constant 0 : index
    %c0_6 = arith.constant 0 : index
    %2 = vector.load %arg2[%c0_3, %c0_4, %c0_5, %c0_6] : memref<1x10x9x128xf32, #tpu.memory_space<vmem>>, vector<1x10x9x128xf32>
    %3 = vector.shape_cast %2 : vector<1x10x9x128xf32> to vector<10x9x128xf32>
    %c0_7 = arith.constant 0 : index
    %c0_8 = arith.constant 0 : index
    %c0_9 = arith.constant 0 : index
    %c0_10 = arith.constant 0 : index
    %4 = vector.load %arg3[%c0_7, %c0_8, %c0_9, %c0_10] : memref<1x9x10x128xf32, #tpu.memory_space<vmem>>, vector<1x9x10x128xf32>
    %5 = vector.shape_cast %4 : vector<1x9x10x128xf32> to vector<9x10x128xf32>
    %c0_11 = arith.constant 0 : index
    %c0_12 = arith.constant 0 : index
    %c0_13 = arith.constant 0 : index
    %c0_14 = arith.constant 0 : index
    %6 = vector.load %arg4[%c0_11, %c0_12, %c0_13, %c0_14] : memref<1x9x9x128xf32, #tpu.memory_space<vmem>>, vector<1x9x9x128xf32>
    %7 = vector.shape_cast %6 : vector<1x9x9x128xf32> to vector<9x9x128xf32>
    %8 = vector.extract_strided_slice %1 {offsets = [0, 0, 0], sizes = [8, 8, 128], strides = [1, 1, 1]} : vector<10x10x128xf32> to vector<8x8x128xf32>
    %9 = vector.extract_strided_slice %1 {offsets = [0, 1, 0], sizes = [8, 8, 128], strides = [1, 1, 1]} : vector<10x10x128xf32> to vector<8x8x128xf32>
    %10 = arith.maximumf %8, %9 : vector<8x8x128xf32>
    %11 = vector.extract_strided_slice %1 {offsets = [1, 0, 0], sizes = [8, 8, 128], strides = [1, 1, 1]} : vector<10x10x128xf32> to vector<8x8x128xf32>
    %12 = arith.maximumf %10, %11 : vector<8x8x128xf32>
    %13 = vector.extract_strided_slice %1 {offsets = [1, 1, 0], sizes = [8, 8, 128], strides = [1, 1, 1]} : vector<10x10x128xf32> to vector<8x8x128xf32>
    %14 = arith.maximumf %12, %13 : vector<8x8x128xf32>
    %15 = vector.extract_strided_slice %3 {offsets = [0, 0, 0], sizes = [8, 8, 128], strides = [1, 1, 1]} : vector<10x9x128xf32> to vector<8x8x128xf32>
    %16 = arith.maximumf %14, %15 : vector<8x8x128xf32>
    %17 = vector.extract_strided_slice %3 {offsets = [1, 0, 0], sizes = [8, 8, 128], strides = [1, 1, 1]} : vector<10x9x128xf32> to vector<8x8x128xf32>
    %18 = arith.maximumf %16, %17 : vector<8x8x128xf32>
    %19 = vector.extract_strided_slice %5 {offsets = [0, 0, 0], sizes = [8, 8, 128], strides = [1, 1, 1]} : vector<9x10x128xf32> to vector<8x8x128xf32>
    %20 = arith.maximumf %18, %19 : vector<8x8x128xf32>
    %21 = vector.extract_strided_slice %5 {offsets = [0, 1, 0], sizes = [8, 8, 128], strides = [1, 1, 1]} : vector<9x10x128xf32> to vector<8x8x128xf32>
    %22 = arith.maximumf %20, %21 : vector<8x8x128xf32>
    %23 = vector.extract_strided_slice %7 {offsets = [0, 0, 0], sizes = [8, 8, 128], strides = [1, 1, 1]} : vector<9x9x128xf32> to vector<8x8x128xf32>
    %24 = arith.maximumf %22, %23 : vector<8x8x128xf32>
    %c0_15 = arith.constant 0 : index
    %c0_16 = arith.constant 0 : index
    %c0_17 = arith.constant 0 : index
    %c0_18 = arith.constant 0 : index
    %25 = vector.load %arg5[%c0_15, %c0_16, %c0_17, %c0_18] : memref<1x8x8x128xf32, #tpu.memory_space<vmem>>, vector<1x8x8x128xf32>
    %26 = vector.shape_cast %25 : vector<1x8x8x128xf32> to vector<8x8x128xf32>
    %27 = arith.addf %24, %26 : vector<8x8x128xf32>
    %c0_19 = arith.constant 0 : index
    %c0_20 = arith.constant 0 : index
    %c0_21 = arith.constant 0 : index
    %c0_22 = arith.constant 0 : index
    %28 = vector.load %arg6[%c0_19, %c0_20, %c0_21, %c0_22] : memref<1x8x8x128xf32, #tpu.memory_space<vmem>>, vector<1x8x8x128xf32>
    %29 = vector.shape_cast %28 : vector<1x8x8x128xf32> to vector<8x8x128xf32>
    %30 = vector.shape_cast %27 : vector<8x8x128xf32> to vector<1x8x8x128xf32>
    tpu.vector_store %arg6[%c0_19, %c0_20, %c0_21, %c0_22], %30 {strides = array<i32>} : memref<1x8x8x128xf32, #tpu.memory_space<vmem>>, vector<1x8x8x128xf32>,
    return
  }
  func.func @transform_0(%arg0: i32) -> (i32, i32, i32, i32) {
    %c0_i32 = arith.constant 0 : i32
    %c0_i32_0 = arith.constant 0 : i32
    %c0_i32_1 = arith.constant 0 : i32
    %c0_i32_2 = arith.constant 0 : i32
    return %arg0, %c0_i32, %c0_i32_0, %c0_i32_1 : i32, i32, i32, i32
  }
  func.func @transform_1(%arg0: i32) -> (i32, i32, i32, i32) {
    %c0_i32 = arith.constant 0 : i32
    %c0_i32_0 = arith.constant 0 : i32
    %c0_i32_1 = arith.constant 0 : i32
    %c0_i32_2 = arith.constant 0 : i32
    return %arg0, %c0_i32, %c0_i32_0, %c0_i32_1 : i32, i32, i32, i32
  }
  func.func @transform_2(%arg0: i32) -> (i32, i32, i32, i32) {
    %c0_i32 = arith.constant 0 : i32
    %c0_i32_0 = arith.constant 0 : i32
    %c0_i32_1 = arith.constant 0 : i32
    %c0_i32_2 = arith.constant 0 : i32
    return %arg0, %c0_i32, %c0_i32_0, %c0_i32_1 : i32, i32, i32, i32
  }
  func.func @transform_3(%arg0: i32) -> (i32, i32, i32, i32) {
    %c0_i32 = arith.constant 0 : i32
    %c0_i32_0 = arith.constant 0 : i32
    %c0_i32_1 = arith.constant 0 : i32
    %c0_i32_2 = arith.constant 0 : i32
    return %arg0, %c0_i32, %c0_i32_0, %c0_i32_1 : i32, i32, i32, i32
  }
  func.func @transform_4(%arg0: i32) -> (i32, i32, i32, i32) {
    %c0_i32 = arith.constant 0 : i32
    %c0_i32_0 = arith.constant 0 : i32
    %c0_i32_1 = arith.constant 0 : i32
    %c0_i32_2 = arith.constant 0 : i32
    return %arg0, %c0_i32, %c0_i32_0, %c0_i32_1 : i32, i32, i32, i32
  }
  func.func @transform_5(%arg0: i32) -> (i32, i32, i32, i32) {
    %c0_i32 = arith.constant 0 : i32
    %c0_i32_0 = arith.constant 0 : i32
    %c0_i32_1 = arith.constant 0 : i32
    %c0_i32_2 = arith.constant 0 : i32
    return %arg0, %c0_i32, %c0_i32_0, %c0_i32_1 : i32, i32, i32, i32
  }
}

module attributes {stable_mosaic.version = 11 : i64} {
  func.func @_sepconv_bn_kernel(%arg0: i32, %arg1: i32, %arg2: memref<1x10x10x128xf32, #tpu.memory_space<vmem>>, %arg3: memref<3x3x128xf32, #tpu.memory_space<vmem>>, %arg4: memref<128x128xf32, #tpu.memory_space<vmem>>, %arg5: memref<1x128xf32, #tpu.memory_space<vmem>>, %arg6: memref<1x128xf32, #tpu.memory_space<vmem>>, %arg7: memref<1x64x128xf32, #tpu.memory_space<vmem>>, %arg8: memref<64x128xf32, #tpu.memory_space<vmem>>) attributes {dimension_semantics = [#tpu.dimension_semantics<parallel>, #tpu.dimension_semantics<arbitrary>], iteration_bounds = array<i64: 2, 1>, scalar_prefetch = 0 : i64, scratch_operands = 1 : i64, tpu.core_type = #tpu.core_type<tc>, window_params = [{transform_indices = @transform_0, window_bounds = array<i64: 1, 10, 10, 128>}, {pipeline_mode = #tpu.pipeline_mode<synchronous>, transform_indices = @transform_1, window_bounds = array<i64: 3, 3, 128>}, {transform_indices = @transform_2, window_bounds = array<i64: 128, 128>}, {transform_indices = @transform_3, window_bounds = array<i64: 1, 128>}, {transform_indices = @transform_4, window_bounds = array<i64: 1, 128>}, {transform_indices = @transform_5, window_bounds = array<i64: 1, 64, 128>}]} {
    %c0_i32 = arith.constant 0 : i32
    %0 = arith.cmpi eq, %arg1, %c0_i32 : i32
    %1 = arith.extui %0 : i1 to i32
    %c0_i32_0 = arith.constant 0 : i32
    %2 = arith.cmpi ne, %1, %c0_i32_0 : i32
    scf.if %2 {
      %c0_12 = arith.constant 0 : index
      %c0_13 = arith.constant 0 : index
      %c0_14 = arith.constant 0 : index
      %21 = vector.load %arg3[%c0_12, %c0_13, %c0_14] : memref<3x3x128xf32, #tpu.memory_space<vmem>>, vector<3x3x128xf32>
      %cst_15 = arith.constant 0.000000e+00 : f32
      %22 = vector.broadcast %cst_15 : f32 to vector<8x8x128xf32>
      %c0_16 = arith.constant 0 : index
      %c0_17 = arith.constant 0 : index
      %c0_18 = arith.constant 0 : index
      %c0_19 = arith.constant 0 : index
      %23 = vector.load %arg2[%c0_16, %c0_17, %c0_18, %c0_19] : memref<1x10x10x128xf32, #tpu.memory_space<vmem>>, vector<1x10x8x128xf32>
      %24 = vector.shape_cast %23 : vector<1x10x8x128xf32> to vector<10x8x128xf32>
      %25 = vector.extract_strided_slice %24 {offsets = [0, 0, 0], sizes = [8, 8, 128], strides = [1, 1, 1]} : vector<10x8x128xf32> to vector<8x8x128xf32>
      %26 = vector.extract_strided_slice %21 {offsets = [0, 0, 0], sizes = [1, 1, 128], strides = [1, 1, 1]} : vector<3x3x128xf32> to vector<1x1x128xf32>
      %27 = vector.shape_cast %26 : vector<1x1x128xf32> to vector<128xf32>
      %28 = vector.shape_cast %27 : vector<128xf32> to vector<1x1x128xf32>
      %29 = vector.broadcast %28 : vector<1x1x128xf32> to vector<8x8x128xf32>
      %30 = arith.mulf %25, %29 : vector<8x8x128xf32>
      %31 = arith.addf %22, %30 : vector<8x8x128xf32>
      %32 = vector.extract_strided_slice %24 {offsets = [1, 0, 0], sizes = [8, 8, 128], strides = [1, 1, 1]} : vector<10x8x128xf32> to vector<8x8x128xf32>
      %33 = vector.extract_strided_slice %21 {offsets = [1, 0, 0], sizes = [1, 1, 128], strides = [1, 1, 1]} : vector<3x3x128xf32> to vector<1x1x128xf32>
      %34 = vector.shape_cast %33 : vector<1x1x128xf32> to vector<128xf32>
      %35 = vector.shape_cast %34 : vector<128xf32> to vector<1x1x128xf32>
      %36 = vector.broadcast %35 : vector<1x1x128xf32> to vector<8x8x128xf32>
      %37 = arith.mulf %32, %36 : vector<8x8x128xf32>
      %38 = arith.addf %31, %37 : vector<8x8x128xf32>
      %39 = vector.extract_strided_slice %24 {offsets = [2, 0, 0], sizes = [8, 8, 128], strides = [1, 1, 1]} : vector<10x8x128xf32> to vector<8x8x128xf32>
      %40 = vector.extract_strided_slice %21 {offsets = [2, 0, 0], sizes = [1, 1, 128], strides = [1, 1, 1]} : vector<3x3x128xf32> to vector<1x1x128xf32>
      %41 = vector.shape_cast %40 : vector<1x1x128xf32> to vector<128xf32>
      %42 = vector.shape_cast %41 : vector<128xf32> to vector<1x1x128xf32>
      %43 = vector.broadcast %42 : vector<1x1x128xf32> to vector<8x8x128xf32>
      %44 = arith.mulf %39, %43 : vector<8x8x128xf32>
      %45 = arith.addf %38, %44 : vector<8x8x128xf32>
      %c0_20 = arith.constant 0 : index
      %c0_21 = arith.constant 0 : index
      %c1 = arith.constant 1 : index
      %c0_22 = arith.constant 0 : index
      %46 = vector.load %arg2[%c0_20, %c0_21, %c1, %c0_22] : memref<1x10x10x128xf32, #tpu.memory_space<vmem>>, vector<1x10x8x128xf32>
      %47 = vector.shape_cast %46 : vector<1x10x8x128xf32> to vector<10x8x128xf32>
      %48 = vector.extract_strided_slice %47 {offsets = [0, 0, 0], sizes = [8, 8, 128], strides = [1, 1, 1]} : vector<10x8x128xf32> to vector<8x8x128xf32>
      %49 = vector.extract_strided_slice %21 {offsets = [0, 1, 0], sizes = [1, 1, 128], strides = [1, 1, 1]} : vector<3x3x128xf32> to vector<1x1x128xf32>
      %50 = vector.shape_cast %49 : vector<1x1x128xf32> to vector<128xf32>
      %51 = vector.shape_cast %50 : vector<128xf32> to vector<1x1x128xf32>
      %52 = vector.broadcast %51 : vector<1x1x128xf32> to vector<8x8x128xf32>
      %53 = arith.mulf %48, %52 : vector<8x8x128xf32>
      %54 = arith.addf %45, %53 : vector<8x8x128xf32>
      %55 = vector.extract_strided_slice %47 {offsets = [1, 0, 0], sizes = [8, 8, 128], strides = [1, 1, 1]} : vector<10x8x128xf32> to vector<8x8x128xf32>
      %56 = vector.extract_strided_slice %21 {offsets = [1, 1, 0], sizes = [1, 1, 128], strides = [1, 1, 1]} : vector<3x3x128xf32> to vector<1x1x128xf32>
      %57 = vector.shape_cast %56 : vector<1x1x128xf32> to vector<128xf32>
      %58 = vector.shape_cast %57 : vector<128xf32> to vector<1x1x128xf32>
      %59 = vector.broadcast %58 : vector<1x1x128xf32> to vector<8x8x128xf32>
      %60 = arith.mulf %55, %59 : vector<8x8x128xf32>
      %61 = arith.addf %54, %60 : vector<8x8x128xf32>
      %62 = vector.extract_strided_slice %47 {offsets = [2, 0, 0], sizes = [8, 8, 128], strides = [1, 1, 1]} : vector<10x8x128xf32> to vector<8x8x128xf32>
      %63 = vector.extract_strided_slice %21 {offsets = [2, 1, 0], sizes = [1, 1, 128], strides = [1, 1, 1]} : vector<3x3x128xf32> to vector<1x1x128xf32>
      %64 = vector.shape_cast %63 : vector<1x1x128xf32> to vector<128xf32>
      %65 = vector.shape_cast %64 : vector<128xf32> to vector<1x1x128xf32>
      %66 = vector.broadcast %65 : vector<1x1x128xf32> to vector<8x8x128xf32>
      %67 = arith.mulf %62, %66 : vector<8x8x128xf32>
      %68 = arith.addf %61, %67 : vector<8x8x128xf32>
      %c0_23 = arith.constant 0 : index
      %c0_24 = arith.constant 0 : index
      %c2 = arith.constant 2 : index
      %c0_25 = arith.constant 0 : index
      %69 = vector.load %arg2[%c0_23, %c0_24, %c2, %c0_25] : memref<1x10x10x128xf32, #tpu.memory_space<vmem>>, vector<1x10x8x128xf32>
      %70 = vector.shape_cast %69 : vector<1x10x8x128xf32> to vector<10x8x128xf32>
      %71 = vector.extract_strided_slice %70 {offsets = [0, 0, 0], sizes = [8, 8, 128], strides = [1, 1, 1]} : vector<10x8x128xf32> to vector<8x8x128xf32>
      %72 = vector.extract_strided_slice %21 {offsets = [0, 2, 0], sizes = [1, 1, 128], strides = [1, 1, 1]} : vector<3x3x128xf32> to vector<1x1x128xf32>
      %73 = vector.shape_cast %72 : vector<1x1x128xf32> to vector<128xf32>
      %74 = vector.shape_cast %73 : vector<128xf32> to vector<1x1x128xf32>
      %75 = vector.broadcast %74 : vector<1x1x128xf32> to vector<8x8x128xf32>
      %76 = arith.mulf %71, %75 : vector<8x8x128xf32>
      %77 = arith.addf %68, %76 : vector<8x8x128xf32>
      %78 = vector.extract_strided_slice %70 {offsets = [1, 0, 0], sizes = [8, 8, 128], strides = [1, 1, 1]} : vector<10x8x128xf32> to vector<8x8x128xf32>
      %79 = vector.extract_strided_slice %21 {offsets = [1, 2, 0], sizes = [1, 1, 128], strides = [1, 1, 1]} : vector<3x3x128xf32> to vector<1x1x128xf32>
      %80 = vector.shape_cast %79 : vector<1x1x128xf32> to vector<128xf32>
      %81 = vector.shape_cast %80 : vector<128xf32> to vector<1x1x128xf32>
      %82 = vector.broadcast %81 : vector<1x1x128xf32> to vector<8x8x128xf32>
      %83 = arith.mulf %78, %82 : vector<8x8x128xf32>
      %84 = arith.addf %77, %83 : vector<8x8x128xf32>
      %85 = vector.extract_strided_slice %70 {offsets = [2, 0, 0], sizes = [8, 8, 128], strides = [1, 1, 1]} : vector<10x8x128xf32> to vector<8x8x128xf32>
      %86 = vector.extract_strided_slice %21 {offsets = [2, 2, 0], sizes = [1, 1, 128], strides = [1, 1, 1]} : vector<3x3x128xf32> to vector<1x1x128xf32>
      %87 = vector.shape_cast %86 : vector<1x1x128xf32> to vector<128xf32>
      %88 = vector.shape_cast %87 : vector<128xf32> to vector<1x1x128xf32>
      %89 = vector.broadcast %88 : vector<1x1x128xf32> to vector<8x8x128xf32>
      %90 = arith.mulf %85, %89 : vector<8x8x128xf32>
      %91 = arith.addf %84, %90 : vector<8x8x128xf32>
      %92 = vector.shape_cast %91 : vector<8x8x128xf32> to vector<64x128xf32>
      %c0_26 = arith.constant 0 : index
      %c0_27 = arith.constant 0 : index
      %93 = vector.load %arg8[%c0_26, %c0_27] : memref<64x128xf32, #tpu.memory_space<vmem>>, vector<64x128xf32>
      tpu.vector_store %arg8[%c0_26, %c0_27], %92 {strides = array<i32>} : memref<64x128xf32, #tpu.memory_space<vmem>>, vector<64x128xf32>,
    } else {
    }
    %c0 = arith.constant 0 : index
    %c0_1 = arith.constant 0 : index
    %3 = vector.load %arg8[%c0, %c0_1] : memref<64x128xf32, #tpu.memory_space<vmem>>, vector<64x128xf32>
    %c0_2 = arith.constant 0 : index
    %c0_3 = arith.constant 0 : index
    %4 = vector.load %arg4[%c0_2, %c0_3] : memref<128x128xf32, #tpu.memory_space<vmem>>, vector<128x128xf32>
    %cst = arith.constant dense<0.000000e+00> : vector<64x128xf32>
    %5 = tpu.matmul %3, %4, %cst {dimension_numbers = #tpu.dot_dimension_numbers<[1], [0], [0], [1], [0, 0, 1, 1], [], []>} : vector<64x128xf32>, vector<128x128xf32>, vector<64x128xf32> -> vector<64x128xf32>
    %c0_4 = arith.constant 0 : index
    %c0_5 = arith.constant 0 : index
    %6 = vector.load %arg5[%c0_4, %c0_5] : memref<1x128xf32, #tpu.memory_space<vmem>>, vector<1x128xf32>
    %7 = vector.shape_cast %6 : vector<1x128xf32> to vector<128xf32>
    %8 = vector.shape_cast %7 : vector<128xf32> to vector<1x128xf32>
    %9 = vector.broadcast %8 : vector<1x128xf32> to vector<64x128xf32>
    %10 = arith.mulf %5, %9 : vector<64x128xf32>
    %c0_6 = arith.constant 0 : index
    %c0_7 = arith.constant 0 : index
    %11 = vector.load %arg6[%c0_6, %c0_7] : memref<1x128xf32, #tpu.memory_space<vmem>>, vector<1x128xf32>
    %12 = vector.shape_cast %11 : vector<1x128xf32> to vector<128xf32>
    %13 = vector.shape_cast %12 : vector<128xf32> to vector<1x128xf32>
    %14 = vector.broadcast %13 : vector<1x128xf32> to vector<64x128xf32>
    %15 = arith.addf %10, %14 : vector<64x128xf32>
    %cst_8 = arith.constant 0.000000e+00 : f32
    %16 = vector.broadcast %cst_8 : f32 to vector<64x128xf32>
    %17 = arith.maximumf %15, %16 : vector<64x128xf32>
    %c0_9 = arith.constant 0 : index
    %c0_10 = arith.constant 0 : index
    %c0_11 = arith.constant 0 : index
    %18 = vector.load %arg7[%c0_9, %c0_10, %c0_11] : memref<1x64x128xf32, #tpu.memory_space<vmem>>, vector<1x64x128xf32>
    %19 = vector.shape_cast %18 : vector<1x64x128xf32> to vector<64x128xf32>
    %20 = vector.shape_cast %17 : vector<64x128xf32> to vector<1x64x128xf32>
    tpu.vector_store %arg7[%c0_9, %c0_10, %c0_11], %20 {strides = array<i32>} : memref<1x64x128xf32, #tpu.memory_space<vmem>>, vector<1x64x128xf32>,
    return
  }
  func.func @transform_0(%arg0: i32, %arg1: i32) -> (i32, i32, i32, i32) {
    %c0_i32 = arith.constant 0 : i32
    %c0_i32_0 = arith.constant 0 : i32
    %c0_i32_1 = arith.constant 0 : i32
    %c0_i32_2 = arith.constant 0 : i32
    return %arg0, %c0_i32, %c0_i32_0, %c0_i32_1 : i32, i32, i32, i32
  }
  func.func @transform_1(%arg0: i32, %arg1: i32) -> (i32, i32, i32) {
    %c0_i32 = arith.constant 0 : i32
    %c0_i32_0 = arith.constant 0 : i32
    %c0_i32_1 = arith.constant 0 : i32
    %c0_i32_2 = arith.constant 0 : i32
    return %c0_i32, %c0_i32_0, %c0_i32_1 : i32, i32, i32
  }
  func.func @transform_2(%arg0: i32, %arg1: i32) -> (i32, i32) {
    %c0_i32 = arith.constant 0 : i32
    %c0_i32_0 = arith.constant 0 : i32
    return %c0_i32, %arg1 : i32, i32
  }
  func.func @transform_3(%arg0: i32, %arg1: i32) -> (i32, i32) {
    %c0_i32 = arith.constant 0 : i32
    %c0_i32_0 = arith.constant 0 : i32
    return %c0_i32, %arg1 : i32, i32
  }
  func.func @transform_4(%arg0: i32, %arg1: i32) -> (i32, i32) {
    %c0_i32 = arith.constant 0 : i32
    %c0_i32_0 = arith.constant 0 : i32
    return %c0_i32, %arg1 : i32, i32
  }
  func.func @transform_5(%arg0: i32, %arg1: i32) -> (i32, i32, i32) {
    %c0_i32 = arith.constant 0 : i32
    %c0_i32_0 = arith.constant 0 : i32
    return %arg0, %c0_i32, %arg1 : i32, i32, i32
  }
}

module attributes {stable_mosaic.version = 11 : i64} {
  func.func @_sepconv_bn_kernel(%arg0: i32, %arg1: i32, %arg2: memref<1x10x10x128xf32, #tpu.memory_space<vmem>>, %arg3: memref<3x3x128xf32, #tpu.memory_space<vmem>>, %arg4: memref<128x128xf32, #tpu.memory_space<vmem>>, %arg5: memref<1x128xf32, #tpu.memory_space<vmem>>, %arg6: memref<1x128xf32, #tpu.memory_space<vmem>>, %arg7: memref<1x1x128xf32, #tpu.memory_space<vmem>>, %arg8: memref<64x128xf32, #tpu.memory_space<vmem>>) attributes {dimension_semantics = [#tpu.dimension_semantics<parallel>, #tpu.dimension_semantics<arbitrary>], iteration_bounds = array<i64: 2, 1>, scalar_prefetch = 0 : i64, scratch_operands = 1 : i64, tpu.core_type = #tpu.core_type<tc>, window_params = [{transform_indices = @transform_0, window_bounds = array<i64: 1, 10, 10, 128>}, {pipeline_mode = #tpu.pipeline_mode<synchronous>, transform_indices = @transform_1, window_bounds = array<i64: 3, 3, 128>}, {transform_indices = @transform_2, window_bounds = array<i64: 128, 128>}, {transform_indices = @transform_3, window_bounds = array<i64: 1, 128>}, {transform_indices = @transform_4, window_bounds = array<i64: 1, 128>}, {transform_indices = @transform_5, window_bounds = array<i64: 1, 1, 128>}]} {
    %c0_i32 = arith.constant 0 : i32
    %0 = arith.cmpi eq, %arg1, %c0_i32 : i32
    %1 = arith.extui %0 : i1 to i32
    %c0_i32_0 = arith.constant 0 : i32
    %2 = arith.cmpi ne, %1, %c0_i32_0 : i32
    scf.if %2 {
      %c0_14 = arith.constant 0 : index
      %c0_15 = arith.constant 0 : index
      %c0_16 = arith.constant 0 : index
      %25 = vector.load %arg3[%c0_14, %c0_15, %c0_16] : memref<3x3x128xf32, #tpu.memory_space<vmem>>, vector<3x3x128xf32>
      %cst_17 = arith.constant 0.000000e+00 : f32
      %26 = vector.broadcast %cst_17 : f32 to vector<8x8x128xf32>
      %c0_18 = arith.constant 0 : index
      %c0_19 = arith.constant 0 : index
      %c0_20 = arith.constant 0 : index
      %c0_21 = arith.constant 0 : index
      %27 = vector.load %arg2[%c0_18, %c0_19, %c0_20, %c0_21] : memref<1x10x10x128xf32, #tpu.memory_space<vmem>>, vector<1x10x8x128xf32>
      %28 = vector.shape_cast %27 : vector<1x10x8x128xf32> to vector<10x8x128xf32>
      %29 = vector.extract_strided_slice %28 {offsets = [0, 0, 0], sizes = [8, 8, 128], strides = [1, 1, 1]} : vector<10x8x128xf32> to vector<8x8x128xf32>
      %30 = vector.extract_strided_slice %25 {offsets = [0, 0, 0], sizes = [1, 1, 128], strides = [1, 1, 1]} : vector<3x3x128xf32> to vector<1x1x128xf32>
      %31 = vector.shape_cast %30 : vector<1x1x128xf32> to vector<128xf32>
      %32 = vector.shape_cast %31 : vector<128xf32> to vector<1x1x128xf32>
      %33 = vector.broadcast %32 : vector<1x1x128xf32> to vector<8x8x128xf32>
      %34 = arith.mulf %29, %33 : vector<8x8x128xf32>
      %35 = arith.addf %26, %34 : vector<8x8x128xf32>
      %36 = vector.extract_strided_slice %28 {offsets = [1, 0, 0], sizes = [8, 8, 128], strides = [1, 1, 1]} : vector<10x8x128xf32> to vector<8x8x128xf32>
      %37 = vector.extract_strided_slice %25 {offsets = [1, 0, 0], sizes = [1, 1, 128], strides = [1, 1, 1]} : vector<3x3x128xf32> to vector<1x1x128xf32>
      %38 = vector.shape_cast %37 : vector<1x1x128xf32> to vector<128xf32>
      %39 = vector.shape_cast %38 : vector<128xf32> to vector<1x1x128xf32>
      %40 = vector.broadcast %39 : vector<1x1x128xf32> to vector<8x8x128xf32>
      %41 = arith.mulf %36, %40 : vector<8x8x128xf32>
      %42 = arith.addf %35, %41 : vector<8x8x128xf32>
      %43 = vector.extract_strided_slice %28 {offsets = [2, 0, 0], sizes = [8, 8, 128], strides = [1, 1, 1]} : vector<10x8x128xf32> to vector<8x8x128xf32>
      %44 = vector.extract_strided_slice %25 {offsets = [2, 0, 0], sizes = [1, 1, 128], strides = [1, 1, 1]} : vector<3x3x128xf32> to vector<1x1x128xf32>
      %45 = vector.shape_cast %44 : vector<1x1x128xf32> to vector<128xf32>
      %46 = vector.shape_cast %45 : vector<128xf32> to vector<1x1x128xf32>
      %47 = vector.broadcast %46 : vector<1x1x128xf32> to vector<8x8x128xf32>
      %48 = arith.mulf %43, %47 : vector<8x8x128xf32>
      %49 = arith.addf %42, %48 : vector<8x8x128xf32>
      %c0_22 = arith.constant 0 : index
      %c0_23 = arith.constant 0 : index
      %c1 = arith.constant 1 : index
      %c0_24 = arith.constant 0 : index
      %50 = vector.load %arg2[%c0_22, %c0_23, %c1, %c0_24] : memref<1x10x10x128xf32, #tpu.memory_space<vmem>>, vector<1x10x8x128xf32>
      %51 = vector.shape_cast %50 : vector<1x10x8x128xf32> to vector<10x8x128xf32>
      %52 = vector.extract_strided_slice %51 {offsets = [0, 0, 0], sizes = [8, 8, 128], strides = [1, 1, 1]} : vector<10x8x128xf32> to vector<8x8x128xf32>
      %53 = vector.extract_strided_slice %25 {offsets = [0, 1, 0], sizes = [1, 1, 128], strides = [1, 1, 1]} : vector<3x3x128xf32> to vector<1x1x128xf32>
      %54 = vector.shape_cast %53 : vector<1x1x128xf32> to vector<128xf32>
      %55 = vector.shape_cast %54 : vector<128xf32> to vector<1x1x128xf32>
      %56 = vector.broadcast %55 : vector<1x1x128xf32> to vector<8x8x128xf32>
      %57 = arith.mulf %52, %56 : vector<8x8x128xf32>
      %58 = arith.addf %49, %57 : vector<8x8x128xf32>
      %59 = vector.extract_strided_slice %51 {offsets = [1, 0, 0], sizes = [8, 8, 128], strides = [1, 1, 1]} : vector<10x8x128xf32> to vector<8x8x128xf32>
      %60 = vector.extract_strided_slice %25 {offsets = [1, 1, 0], sizes = [1, 1, 128], strides = [1, 1, 1]} : vector<3x3x128xf32> to vector<1x1x128xf32>
      %61 = vector.shape_cast %60 : vector<1x1x128xf32> to vector<128xf32>
      %62 = vector.shape_cast %61 : vector<128xf32> to vector<1x1x128xf32>
      %63 = vector.broadcast %62 : vector<1x1x128xf32> to vector<8x8x128xf32>
      %64 = arith.mulf %59, %63 : vector<8x8x128xf32>
      %65 = arith.addf %58, %64 : vector<8x8x128xf32>
      %66 = vector.extract_strided_slice %51 {offsets = [2, 0, 0], sizes = [8, 8, 128], strides = [1, 1, 1]} : vector<10x8x128xf32> to vector<8x8x128xf32>
      %67 = vector.extract_strided_slice %25 {offsets = [2, 1, 0], sizes = [1, 1, 128], strides = [1, 1, 1]} : vector<3x3x128xf32> to vector<1x1x128xf32>
      %68 = vector.shape_cast %67 : vector<1x1x128xf32> to vector<128xf32>
      %69 = vector.shape_cast %68 : vector<128xf32> to vector<1x1x128xf32>
      %70 = vector.broadcast %69 : vector<1x1x128xf32> to vector<8x8x128xf32>
      %71 = arith.mulf %66, %70 : vector<8x8x128xf32>
      %72 = arith.addf %65, %71 : vector<8x8x128xf32>
      %c0_25 = arith.constant 0 : index
      %c0_26 = arith.constant 0 : index
      %c2 = arith.constant 2 : index
      %c0_27 = arith.constant 0 : index
      %73 = vector.load %arg2[%c0_25, %c0_26, %c2, %c0_27] : memref<1x10x10x128xf32, #tpu.memory_space<vmem>>, vector<1x10x8x128xf32>
      %74 = vector.shape_cast %73 : vector<1x10x8x128xf32> to vector<10x8x128xf32>
      %75 = vector.extract_strided_slice %74 {offsets = [0, 0, 0], sizes = [8, 8, 128], strides = [1, 1, 1]} : vector<10x8x128xf32> to vector<8x8x128xf32>
      %76 = vector.extract_strided_slice %25 {offsets = [0, 2, 0], sizes = [1, 1, 128], strides = [1, 1, 1]} : vector<3x3x128xf32> to vector<1x1x128xf32>
      %77 = vector.shape_cast %76 : vector<1x1x128xf32> to vector<128xf32>
      %78 = vector.shape_cast %77 : vector<128xf32> to vector<1x1x128xf32>
      %79 = vector.broadcast %78 : vector<1x1x128xf32> to vector<8x8x128xf32>
      %80 = arith.mulf %75, %79 : vector<8x8x128xf32>
      %81 = arith.addf %72, %80 : vector<8x8x128xf32>
      %82 = vector.extract_strided_slice %74 {offsets = [1, 0, 0], sizes = [8, 8, 128], strides = [1, 1, 1]} : vector<10x8x128xf32> to vector<8x8x128xf32>
      %83 = vector.extract_strided_slice %25 {offsets = [1, 2, 0], sizes = [1, 1, 128], strides = [1, 1, 1]} : vector<3x3x128xf32> to vector<1x1x128xf32>
      %84 = vector.shape_cast %83 : vector<1x1x128xf32> to vector<128xf32>
      %85 = vector.shape_cast %84 : vector<128xf32> to vector<1x1x128xf32>
      %86 = vector.broadcast %85 : vector<1x1x128xf32> to vector<8x8x128xf32>
      %87 = arith.mulf %82, %86 : vector<8x8x128xf32>
      %88 = arith.addf %81, %87 : vector<8x8x128xf32>
      %89 = vector.extract_strided_slice %74 {offsets = [2, 0, 0], sizes = [8, 8, 128], strides = [1, 1, 1]} : vector<10x8x128xf32> to vector<8x8x128xf32>
      %90 = vector.extract_strided_slice %25 {offsets = [2, 2, 0], sizes = [1, 1, 128], strides = [1, 1, 1]} : vector<3x3x128xf32> to vector<1x1x128xf32>
      %91 = vector.shape_cast %90 : vector<1x1x128xf32> to vector<128xf32>
      %92 = vector.shape_cast %91 : vector<128xf32> to vector<1x1x128xf32>
      %93 = vector.broadcast %92 : vector<1x1x128xf32> to vector<8x8x128xf32>
      %94 = arith.mulf %89, %93 : vector<8x8x128xf32>
      %95 = arith.addf %88, %94 : vector<8x8x128xf32>
      %96 = vector.shape_cast %95 : vector<8x8x128xf32> to vector<64x128xf32>
      %c0_28 = arith.constant 0 : index
      %c0_29 = arith.constant 0 : index
      %97 = vector.load %arg8[%c0_28, %c0_29] : memref<64x128xf32, #tpu.memory_space<vmem>>, vector<64x128xf32>
      tpu.vector_store %arg8[%c0_28, %c0_29], %96 {strides = array<i32>} : memref<64x128xf32, #tpu.memory_space<vmem>>, vector<64x128xf32>,
    } else {
    }
    %c0 = arith.constant 0 : index
    %c0_1 = arith.constant 0 : index
    %3 = vector.load %arg8[%c0, %c0_1] : memref<64x128xf32, #tpu.memory_space<vmem>>, vector<64x128xf32>
    %c0_2 = arith.constant 0 : index
    %c0_3 = arith.constant 0 : index
    %4 = vector.load %arg4[%c0_2, %c0_3] : memref<128x128xf32, #tpu.memory_space<vmem>>, vector<128x128xf32>
    %cst = arith.constant dense<0.000000e+00> : vector<64x128xf32>
    %5 = tpu.matmul %3, %4, %cst {dimension_numbers = #tpu.dot_dimension_numbers<[1], [0], [0], [1], [0, 0, 1, 1], [], []>} : vector<64x128xf32>, vector<128x128xf32>, vector<64x128xf32> -> vector<64x128xf32>
    %c0_4 = arith.constant 0 : index
    %c0_5 = arith.constant 0 : index
    %6 = vector.load %arg5[%c0_4, %c0_5] : memref<1x128xf32, #tpu.memory_space<vmem>>, vector<1x128xf32>
    %7 = vector.shape_cast %6 : vector<1x128xf32> to vector<128xf32>
    %8 = vector.shape_cast %7 : vector<128xf32> to vector<1x128xf32>
    %9 = vector.broadcast %8 : vector<1x128xf32> to vector<64x128xf32>
    %10 = arith.mulf %5, %9 : vector<64x128xf32>
    %c0_6 = arith.constant 0 : index
    %c0_7 = arith.constant 0 : index
    %11 = vector.load %arg6[%c0_6, %c0_7] : memref<1x128xf32, #tpu.memory_space<vmem>>, vector<1x128xf32>
    %12 = vector.shape_cast %11 : vector<1x128xf32> to vector<128xf32>
    %13 = vector.shape_cast %12 : vector<128xf32> to vector<1x128xf32>
    %14 = vector.broadcast %13 : vector<1x128xf32> to vector<64x128xf32>
    %15 = arith.addf %10, %14 : vector<64x128xf32>
    %cst_8 = arith.constant 0.000000e+00 : f32
    %16 = vector.broadcast %cst_8 : f32 to vector<64x128xf32>
    %17 = arith.maximumf %15, %16 : vector<64x128xf32>
    %cst_9 = arith.constant dense<0.000000e+00> : vector<128xf32>
    %18 = vector.multi_reduction <add>, %17, %cst_9 [0] : vector<64x128xf32> to vector<128xf32>
    %19 = vector.shape_cast %18 : vector<128xf32> to vector<1x128xf32>
    %cst_10 = arith.constant 6.400000e+01 : f32
    %20 = vector.broadcast %cst_10 : f32 to vector<1x128xf32>
    %21 = arith.divf %19, %20 : vector<1x128xf32>
    %c0_11 = arith.constant 0 : index
    %c0_12 = arith.constant 0 : index
    %c0_13 = arith.constant 0 : index
    %22 = vector.load %arg7[%c0_11, %c0_12, %c0_13] : memref<1x1x128xf32, #tpu.memory_space<vmem>>, vector<1x1x128xf32>
    %23 = vector.shape_cast %22 : vector<1x1x128xf32> to vector<1x128xf32>
    %24 = vector.shape_cast %21 : vector<1x128xf32> to vector<1x1x128xf32>
    tpu.vector_store %arg7[%c0_11, %c0_12, %c0_13], %24 {strides = array<i32>} : memref<1x1x128xf32, #tpu.memory_space<vmem>>, vector<1x1x128xf32>,
    return
  }
  func.func @transform_0(%arg0: i32, %arg1: i32) -> (i32, i32, i32, i32) {
    %c0_i32 = arith.constant 0 : i32
    %c0_i32_0 = arith.constant 0 : i32
    %c0_i32_1 = arith.constant 0 : i32
    %c0_i32_2 = arith.constant 0 : i32
    return %arg0, %c0_i32, %c0_i32_0, %c0_i32_1 : i32, i32, i32, i32
  }
  func.func @transform_1(%arg0: i32, %arg1: i32) -> (i32, i32, i32) {
    %c0_i32 = arith.constant 0 : i32
    %c0_i32_0 = arith.constant 0 : i32
    %c0_i32_1 = arith.constant 0 : i32
    %c0_i32_2 = arith.constant 0 : i32
    return %c0_i32, %c0_i32_0, %c0_i32_1 : i32, i32, i32
  }
  func.func @transform_2(%arg0: i32, %arg1: i32) -> (i32, i32) {
    %c0_i32 = arith.constant 0 : i32
    %c0_i32_0 = arith.constant 0 : i32
    return %c0_i32, %arg1 : i32, i32
  }
  func.func @transform_3(%arg0: i32, %arg1: i32) -> (i32, i32) {
    %c0_i32 = arith.constant 0 : i32
    %c0_i32_0 = arith.constant 0 : i32
    return %c0_i32, %arg1 : i32, i32
  }
  func.func @transform_4(%arg0: i32, %arg1: i32) -> (i32, i32) {
    %c0_i32 = arith.constant 0 : i32
    %c0_i32_0 = arith.constant 0 : i32
    return %c0_i32, %arg1 : i32, i32
  }
  func.func @transform_5(%arg0: i32, %arg1: i32) -> (i32, i32, i32) {
    %c0_i32 = arith.constant 0 : i32
    %c0_i32_0 = arith.constant 0 : i32
    return %arg0, %c0_i32, %arg1 : i32, i32, i32
  }
}

</mosaic_0001>

<llo_original>
// kernel: exit_flow.8
$region0: #{exit_flow.8}
  #allocation0 [shape = 'u32[]', space=smem, size = 0x4, offset = 0x4, fixed_abs, tag = 'smem constant byte address 0x4 - core index']
  #allocation1 [shape = 'u32[72,128]{1,0:T(1,128)}', space=vmem, size = 0x9000, scoped, tag = 'internal scratch']
  %s0 = inlined_call_operand.vmem [shape: f32[2,64,128], index: 0, kind: input, shape index: {}]
  %s1 = inlined_call_operand.vmem [shape: f32[128,128], index: 1, kind: input, shape index: {}]
  %s2 = inlined_call_operand.vmem [shape: f32[1,128], index: 2, kind: input, shape index: {}]
  %s3 = inlined_call_operand.vmem [shape: f32[1,128], index: 3, kind: input, shape index: {}]
  %s4 = inlined_call_operand.vmem [shape: f32[2,64,128], index: 4, kind: output, shape index: {}]
  %s5 = sld [smem:[#allocation0]]
  $region49: #{exit_flow.8} parent=0
    _
  %s7 = ssub.s32 1, %s5
  %s8 = scalar_select 0, %s7, %s5
  loop: start=0, step=1, limit=4
  $region2: #{exit_flow.8} parent=0 // loop_pre_header
    _
  $region3: #{exit_flow.8} parent=0 // loop_header
    %s10 = sphi 0, %s14
    %p11 = scmp.ge.s32.totalorder %s10, 4
    %s17 = sphi 0, %s29
    %s18 = sphi 0, %s25
    %s19 = sphi 0, %s17
    %s20 = sphi 0, %s18
    %s21 = sphi 0, %s19
    %s22 = sphi 0, %s20
    %s32 = sphi 0, %s34
    %s35 = sphi 0, %s32
    %s36 = sphi 0, %s35
    %s52 = sphi 0, %s36
    %s58 = sphi 0, %s60
    %s61 = sphi 0, %s58
    %s62 = sphi 0, %s61
    %s78 = sphi 0, %s62
    %s84 = sphi 0, %s86
    %s87 = sphi 0, %s84
    %s88 = sphi 0, %s87
    %s104 = sphi 0, %s88
    %s110 = sphi 0, %s112
    %s113 = sphi 0, %s110
    %s114 = sphi 0, %s113
    %s130 = sphi 0, %s114
    %s138 = sphi 0, %s140
    %s141 = sphi 0, %s138
    %s142 = sphi 0, %s141
    %s158 = sphi 0, %s142
  $region4: #{exit_flow.8} parent=0 // loop_header_branch
    %13 = sbr.rel (%p11) target = $region8
  $region5: #{exit_flow.8} parent=0 // loop_body
    %s15 = ssub.s32 %s10, 1
    %s16 = ssub.s32 %s10, 2
    %s23 = sadd.s32 1, %s18
    %p24 = scmp.ge.s32.totalorder %s23, 1
    %s25 = scalar_select %p24, 0, %s23
    %s26 = sadd.s32 1, %s17
    %s27 = scalar_select %p24, %s26, %s17
    %p28 = scmp.ge.s32.totalorder %s27, 2
    %s29 = scalar_select %p28, 0, %s27
    %s30 = ssub.s32 %s17, %s29
    %p31 = scmp.eq.s32.totalorder %s30, 0
    %s33 = sadd.s32 %s32, 1
    %s34 = scalar_select %p31, %s32, %s33
    %p37 = pneg %p31
    %p38 = scmp.eq.s32.totalorder %s10, 1
    %p39 = por %p37, %p38
    %p40 = scmp.ne.s32.totalorder %s32, %s35
    %p41 = scmp.eq.s32.totalorder %s10, 0
    %p42 = por %p40, %p41
    %p43 = scmp.ne.s32.totalorder %s32, %s35
    %p44 = scmp.eq.s32.totalorder %s15, 1
    %p45 = por %p43, %p44
    %p46 = scmp.ne.s32.totalorder %s35, %s36
    %p47 = scmp.eq.s32.totalorder %s15, 0
    %p48 = por %p46, %p47
    %p49 = scmp.ne.s32.totalorder %s35, %s36
    %p50 = scmp.eq.s32.totalorder %s16, 1
    %p51 = por %p49, %p50
    %p53 = scmp.ne.s32.totalorder %s36, %s52
    %p54 = scmp.eq.s32.totalorder %s16, 0
    %p55 = por %p53, %p54
    %s56 = ssub.s32 %s18, %s25
    %p57 = scmp.eq.s32.totalorder %s56, 0
    %s59 = sadd.s32 %s58, 1
    %s60 = scalar_select %p57, %s58, %s59
    %p63 = pneg %p57
    %p64 = scmp.eq.s32.totalorder %s10, 1
    %p65 = por %p63, %p64
    %p66 = scmp.ne.s32.totalorder %s58, %s61
    %p67 = scmp.eq.s32.totalorder %s10, 0
    %p68 = por %p66, %p67
    %p69 = scmp.ne.s32.totalorder %s58, %s61
    %p70 = scmp.eq.s32.totalorder %s15, 1
    %p71 = por %p69, %p70
    %p72 = scmp.ne.s32.totalorder %s61, %s62
    %p73 = scmp.eq.s32.totalorder %s15, 0
    %p74 = por %p72, %p73
    %p75 = scmp.ne.s32.totalorder %s61, %s62
    %p76 = scmp.eq.s32.totalorder %s16, 1
    %p77 = por %p75, %p76
    %p79 = scmp.ne.s32.totalorder %s62, %s78
    %p80 = scmp.eq.s32.totalorder %s16, 0
    %p81 = por %p79, %p80
    %s82 = ssub.s32 %s18, %s25
    %p83 = scmp.eq.s32.totalorder %s82, 0
    %s85 = sadd.s32 %s84, 1
    %s86 = scalar_select %p83, %s84, %s85
    %p89 = pneg %p83
    %p90 = scmp.eq.s32.totalorder %s10, 1
    %p91 = por %p89, %p90
    %p92 = scmp.ne.s32.totalorder %s84, %s87
    %p93 = scmp.eq.s32.totalorder %s10, 0
    %p94 = por %p92, %p93
    %p95 = scmp.ne.s32.totalorder %s84, %s87
    %p96 = scmp.eq.s32.totalorder %s15, 1
    %p97 = por %p95, %p96
    %p98 = scmp.ne.s32.totalorder %s87, %s88
    %p99 = scmp.eq.s32.totalorder %s15, 0
    %p100 = por %p98, %p99
    %p101 = scmp.ne.s32.totalorder %s87, %s88
    %p102 = scmp.eq.s32.totalorder %s16, 1
    %p103 = por %p101, %p102
    %p105 = scmp.ne.s32.totalorder %s88, %s104
    %p106 = scmp.eq.s32.totalorder %s16, 0
    %p107 = por %p105, %p106
    %s108 = ssub.s32 %s18, %s25
    %p109 = scmp.eq.s32.totalorder %s108, 0
    %s111 = sadd.s32 %s110, 1
    %s112 = scalar_select %p109, %s110, %s111
    %p115 = pneg %p109
    %p116 = scmp.eq.s32.totalorder %s10, 1
    %p117 = por %p115, %p116
    %p118 = scmp.ne.s32.totalorder %s110, %s113
    %p119 = scmp.eq.s32.totalorder %s10, 0
    %p120 = por %p118, %p119
    %p121 = scmp.ne.s32.totalorder %s110, %s113
    %p122 = scmp.eq.s32.totalorder %s15, 1
    %p123 = por %p121, %p122
    %p124 = scmp.ne.s32.totalorder %s113, %s114
    %p125 = scmp.eq.s32.totalorder %s15, 0
    %p126 = por %p124, %p125
    %p127 = scmp.ne.s32.totalorder %s113, %s114
    %p128 = scmp.eq.s32.totalorder %s16, 1
    %p129 = por %p127, %p128
    %p131 = scmp.ne.s32.totalorder %s114, %s130
    %p132 = scmp.eq.s32.totalorder %s16, 0
    %p133 = por %p131, %p132
    %s134 = ssub.s32 %s17, %s29
    %s135 = ssub.s32 %s18, %s25
    %s136 = sor.u32 %s134, %s135
    %p137 = scmp.eq.s32.totalorder %s136, 0
    %s139 = sadd.s32 %s138, 1
    %s140 = scalar_select %p137, %s138, %s139
    %p143 = pneg %p137
    %p144 = scmp.eq.s32.totalorder %s10, 1
    %p145 = por %p143, %p144
    %p146 = scmp.ne.s32.totalorder %s138, %s141
    %p147 = scmp.eq.s32.totalorder %s10, 0
    %p148 = por %p146, %p147
    %p149 = scmp.ne.s32.totalorder %s138, %s141
    %p150 = scmp.eq.s32.totalorder %s15, 1
    %p151 = por %p149, %p150
    %p152 = scmp.ne.s32.totalorder %s141, %s142
    %p153 = scmp.eq.s32.totalorder %s15, 0
    %p154 = por %p152, %p153
    %p155 = scmp.ne.s32.totalorder %s141, %s142
    %p156 = scmp.eq.s32.totalorder %s16, 1
    %p157 = por %p155, %p156
    %p159 = scmp.ne.s32.totalorder %s142, %s158
    %p160 = scmp.eq.s32.totalorder %s16, 0
    %p161 = por %p159, %p160
    %p162 = scmp.le.s32.totalorder 1, %s10
    %p163 = scmp.lt.s32.totalorder %s10, 3
    %p164 = pnand %p162, %p163
    %p165 = pneg %p164
    // Predicated region
    $region9: #{exit_flow.8} parent=5 // pred_check
      _
    $region10: #{exit_flow.8} parent=5 // pred_check_branch
      %167 = sbr.rel (%p164) target = $region12
    $region11: #{exit_flow.8} parent=5 // pred_region
      %s168 = ssub.s32 %s10, 1
      // Predicated region
      $region13: #{exit_flow.8} parent=11 // pred_check
        %p169 = pneg %p74
      $region14: #{exit_flow.8} parent=11 // pred_check_branch
        %171 = sbr.rel (%p169) target = $region16
      $region15: #{exit_flow.8} parent=11 // pred_region
        %p172 = scmp.lt.s32.totalorder %s20, 0
        %s173 = scalar_select %p172, %s20, 0
        %s174 = smul.addr %s173, 8
        %s175 = scalar_lea.vmem %s1, %s174
      $region16: #{exit_flow.8} parent=11 // pred_fallthru
        _
      // Predicated region
      $region17: #{exit_flow.8} parent=11 // pred_check
        %p176 = pneg %p100
      $region18: #{exit_flow.8} parent=11 // pred_check_branch
        %178 = sbr.rel (%p176) target = $region20
      $region19: #{exit_flow.8} parent=11 // pred_region
        %p179 = scmp.lt.s32.totalorder %s20, 0
        %s180 = scalar_select %p179, %s20, 0
        %s181 = scalar_lea.vmem %s2, %s180
      $region20: #{exit_flow.8} parent=11 // pred_fallthru
        _
      // Predicated region
      $region21: #{exit_flow.8} parent=11 // pred_check
        %p182 = pneg %p126
      $region22: #{exit_flow.8} parent=11 // pred_check_branch
        %184 = sbr.rel (%p182) target = $region24
      $region23: #{exit_flow.8} parent=11 // pred_region
        %p185 = scmp.lt.s32.totalorder %s20, 0
        %s186 = scalar_select %p185, %s20, 0
        %s187 = scalar_lea.vmem %s3, %s186
      $region24: #{exit_flow.8} parent=11 // pred_fallthru
        _
    $region12: #{exit_flow.8} parent=5 // pred_fallthru
      _
    %p188 = scmp.lt.s32.totalorder %s10, 2
    // Predicated region
    $region25: #{exit_flow.8} parent=5 // pred_check
      %p189 = pneg %p188
    $region26: #{exit_flow.8} parent=5 // pred_check_branch
      %191 = sbr.rel (%p189) target = $region28
    $region27: #{exit_flow.8} parent=5 // pred_region
      // Predicated region
      $region29: #{exit_flow.8} parent=27 // pred_check
        %p192 = pneg %p42
      $region30: #{exit_flow.8} parent=27 // pred_check_branch
        %194 = sbr.rel (%p192) target = $region32
      $region31: #{exit_flow.8} parent=27 // pred_region
        %p195 = scmp.lt.s32.totalorder %s17, 1
        %s196 = scalar_select %p195, %s17, 1
        %s197 = smul.addr %s196, 8
        %s198 = smul.addr %s197, 8
        %s199 = scalar_lea.vmem %s0, %s198
      $region32: #{exit_flow.8} parent=27 // pred_fallthru
        _
    $region28: #{exit_flow.8} parent=5 // pred_fallthru
      _
    %p200 = scmp.le.s32.totalorder 1, %s10
    %p201 = scmp.lt.s32.totalorder %s10, 3
    %p202 = pnand %p200, %p201
    %p203 = pneg %p202
    // Predicated region
    $region33: #{exit_flow.8} parent=5 // pred_check
      _
    $region34: #{exit_flow.8} parent=5 // pred_check_branch
      %205 = sbr.rel (%p202) target = $region36
    $region35: #{exit_flow.8} parent=5 // pred_region
      %s206 = ssub.s32 %s10, 1
      %p207 = scmp.lt.s32.totalorder %s19, 1
      %s208 = scalar_select %p207, %s19, 1
      %s209 = smul.addr %s208, 8
      %s210 = smul.addr %s209, 8
      %s211 = scalar_lea.vmem %s0, %s210
      %p212 = pneg %p48
      %p213 = pneg %p45
      %p214 = scmp.lt.s32.totalorder %s20, 0
      %s215 = scalar_select %p214, %s20, 0
      %s216 = smul.addr %s215, 8
      %s217 = scalar_lea.vmem %s1, %s216
      %p218 = pneg %p74
      %p219 = pneg %p71
      %p220 = scmp.lt.s32.totalorder %s20, 0
      %s221 = scalar_select %p220, %s20, 0
      %s222 = scalar_lea.vmem %s2, %s221
      %p223 = pneg %p100
      %p224 = pneg %p97
      %p225 = scmp.lt.s32.totalorder %s20, 0
      %s226 = scalar_select %p225, %s20, 0
      %s227 = scalar_lea.vmem %s3, %s226
      %p228 = pneg %p126
      %p229 = pneg %p123
      %p230 = pneg %p154
      %p231 = pneg %p151
      %p232 = scmp.lt.s32.totalorder %s19, 1
      %s233 = scalar_select %p232, %s19, 1
      %p234 = scmp.lt.s32.totalorder %s20, 0
      %s235 = scalar_select %p234, %s20, 0
      %s236 = smul.addr %s233, 8
      %s237 = sadd.s32 %s235, %s236
      %s238 = smul.addr %s237, 8
      %s239 = scalar_lea.vmem %s4, %s238
      %p240 = scmp.lt.s32.totalorder %s19, 1
      %s241 = scalar_select %p240, %s19, 1
      %s242 = smul.addr %s241, 8
      %s243 = smul.addr %s242, 8
      %s244 = scalar_lea.vmem %s0, %s243
      %p245 = scmp.lt.s32.totalorder %s20, 0
      %s246 = scalar_select %p245, %s20, 0
      %s247 = smul.addr %s246, 8
      %s248 = scalar_lea.vmem %s1, %s247
      %p249 = scmp.lt.s32.totalorder %s20, 0
      %s250 = scalar_select %p249, %s20, 0
      %s251 = scalar_lea.vmem %s2, %s250
      %p252 = scmp.lt.s32.totalorder %s20, 0
      %s253 = scalar_select %p252, %s20, 0
      %s254 = scalar_lea.vmem %s3, %s253
      %p255 = scmp.lt.s32.totalorder %s19, 1
      %s256 = scalar_select %p255, %s19, 1
      %p257 = scmp.lt.s32.totalorder %s20, 0
      %s258 = scalar_select %p257, %s20, 0
      %s259 = smul.addr %s256, 8
      %s260 = sadd.s32 %s258, %s259
      %s261 = smul.addr %s260, 8
      %s262 = scalar_lea.vmem %s4, %s261
      %v263 = vld [vmem:[%s244] sm:$0xff]
      %v264 = vld [vmem:[%s244 + $0x8] sm:$0xff]
      %v265 = vld [vmem:[%s244 + $0x10] sm:$0xff]
      %v266 = vld [vmem:[%s244 + $0x18] sm:$0xff]
      %v267 = vld [vmem:[%s244 + $0x20] sm:$0xff]
      %v268 = vld [vmem:[%s244 + $0x28] sm:$0xff]
      %v269 = vld [vmem:[%s244 + $0x30] sm:$0xff]
      %v270 = vld [vmem:[%s244 + $0x38] sm:$0xff]
      %v271 = vld [vmem:[%s248] sm:$0xff]
      %v272 = vld [vmem:[%s248 + $0x8] sm:$0xff]
      %v273 = vld [vmem:[%s248 + $0x10] sm:$0xff]
      %v274 = vld [vmem:[%s248 + $0x18] sm:$0xff]
      %v275 = vld [vmem:[%s248 + $0x20] sm:$0xff]
      %v276 = vld [vmem:[%s248 + $0x28] sm:$0xff]
      %v277 = vld [vmem:[%s248 + $0x30] sm:$0xff]
      %v278 = vld [vmem:[%s248 + $0x38] sm:$0xff]
      %v279 = vld [vmem:[%s248 + $0x40] sm:$0xff]
      %v280 = vld [vmem:[%s248 + $0x48] sm:$0xff]
      %v281 = vld [vmem:[%s248 + $0x50] sm:$0xff]
      %v282 = vld [vmem:[%s248 + $0x58] sm:$0xff]
      %v283 = vld [vmem:[%s248 + $0x60] sm:$0xff]
      %v284 = vld [vmem:[%s248 + $0x68] sm:$0xff]
      %v285 = vld [vmem:[%s248 + $0x70] sm:$0xff]
      %v286 = vld [vmem:[%s248 + $0x78] sm:$0xff]
      %287 = vmatpush.msra.mxu0 %v286
      %288 = vmatpush.msra.mxu0 %v285
      %289 = vmatpush.msra.mxu0 %v284
      %290 = vmatpush.msra.mxu0 %v283
      %291 = vmatpush.msra.mxu0 %v282
      %292 = vmatpush.msra.mxu0 %v281
      %293 = vmatpush.msra.mxu0 %v280
      %294 = vmatpush.msra.mxu0 %v279
      %295 = vmatpush.msra.mxu0 %v278
      %296 = vmatpush.msra.mxu0 %v277
      %297 = vmatpush.msra.mxu0 %v276
      %298 = vmatpush.msra.mxu0 %v275
      %299 = vmatpush.msra.mxu0 %v274
      %300 = vmatpush.msra.mxu0 %v273
      %301 = vmatpush.msra.mxu0 %v272
      %302 = vmatpush.msra.mxu0 %v271
      %303 = vmatmul.f32.gmra.mxu0 %v263
      %v304 = vpop.f32.mrf.mxu0
      %v305 = vadd.f32 0.0, %v304
      %306 = vmatmul.f32.gmra.mxu0 %v264
      %v307 = vpop.f32.mrf.mxu0
      %v308 = vadd.f32 0.0, %v307
      %309 = vmatmul.f32.gmra.mxu0 %v265
      %v310 = vpop.f32.mrf.mxu0
      %v311 = vadd.f32 0.0, %v310
      %312 = vmatmul.f32.gmra.mxu0 %v266
      %v313 = vpop.f32.mrf.mxu0
      %v314 = vadd.f32 0.0, %v313
      %315 = vmatmul.f32.gmra.mxu0 %v267
      %v316 = vpop.f32.mrf.mxu0
      %v317 = vadd.f32 0.0, %v316
      %318 = vmatmul.f32.gmra.mxu0 %v268
      %v319 = vpop.f32.mrf.mxu0
      %v320 = vadd.f32 0.0, %v319
      %321 = vmatmul.f32.gmra.mxu0 %v269
      %v322 = vpop.f32.mrf.mxu0
      %v323 = vadd.f32 0.0, %v322
      %324 = vmatmul.f32.gmra.mxu0 %v270
      %v325 = vpop.f32.mrf.mxu0
      %v326 = vadd.f32 0.0, %v325
      %327 = vdwg.mxu0
      %v328 = vld [vmem:[%s251] sm:$0x1]
      %v330 = vperm.slane %v328, 0
      %v332 = vmul.f32 %v305, %v330
      %v333 = vmul.f32 %v308, %v330
      %v334 = vmul.f32 %v311, %v330
      %v335 = vmul.f32 %v314, %v330
      %v336 = vmul.f32 %v317, %v330
      %v337 = vmul.f32 %v320, %v330
      %v338 = vmul.f32 %v323, %v330
      %v339 = vmul.f32 %v326, %v330
      %v340 = vld [vmem:[%s254] sm:$0x1]
      %v342 = vperm.slane %v340, 0
      %v344 = vadd.f32 %v332, %v342
      %v345 = vadd.f32 %v333, %v342
      %v346 = vadd.f32 %v334, %v342
      %v347 = vadd.f32 %v335, %v342
      %v348 = vadd.f32 %v336, %v342
      %v349 = vadd.f32 %v337, %v342
      %v350 = vadd.f32 %v338, %v342
      %v351 = vadd.f32 %v339, %v342
      %352 = vst [vmem:[%s262] sm:$0xff] %v344
      %353 = vst [vmem:[%s262 + $0x8] sm:$0xff] %v345
      %354 = vst [vmem:[%s262 + $0x10] sm:$0xff] %v346
      %355 = vst [vmem:[%s262 + $0x18] sm:$0xff] %v347
      %356 = vst [vmem:[%s262 + $0x20] sm:$0xff] %v348
      %357 = vst [vmem:[%s262 + $0x28] sm:$0xff] %v349
      %358 = vst [vmem:[%s262 + $0x30] sm:$0xff] %v350
      %359 = vst [vmem:[%s262 + $0x38] sm:$0xff] %v351
      %p360 = scmp.lt.s32.totalorder %s19, 1
      %s361 = scalar_select %p360, %s19, 1
      %p362 = scmp.lt.s32.totalorder %s20, 0
      %s363 = scalar_select %p362, %s20, 0
      %s364 = smul.addr %s361, 8
      %s365 = sadd.s32 %s363, %s364
      %s366 = smul.addr %s365, 8
      %s367 = scalar_lea.vmem %s4, %s366
      // Predicated region
      $region37: #{exit_flow.8} parent=35 // pred_check
        %p368 = pneg %p151
      $region38: #{exit_flow.8} parent=35 // pred_check_branch
        %370 = sbr.rel (%p368) target = $region40
      $region39: #{exit_flow.8} parent=35 // pred_region
        _
      $region40: #{exit_flow.8} parent=35 // pred_fallthru
        _
    $region36: #{exit_flow.8} parent=5 // pred_fallthru
      _
    %p371 = scmp.le.s32.totalorder 2, %s10
    // Predicated region
    $region41: #{exit_flow.8} parent=5 // pred_check
      %p372 = pneg %p371
    $region42: #{exit_flow.8} parent=5 // pred_check_branch
      %374 = sbr.rel (%p372) target = $region44
    $region43: #{exit_flow.8} parent=5 // pred_region
      %s375 = ssub.s32 %s10, 2
      // Predicated region
      $region45: #{exit_flow.8} parent=43 // pred_check
        %p376 = pneg %p157
      $region46: #{exit_flow.8} parent=43 // pred_check_branch
        %378 = sbr.rel (%p376) target = $region48
      $region47: #{exit_flow.8} parent=43 // pred_region
        %p379 = scmp.lt.s32.totalorder %s21, 1
        %s380 = scalar_select %p379, %s21, 1
        %p381 = scmp.lt.s32.totalorder %s22, 0
        %s382 = scalar_select %p381, %s22, 0
        %s383 = smul.addr %s380, 8
        %s384 = sadd.s32 %s382, %s383
        %s385 = smul.addr %s384, 8
        %s386 = scalar_lea.vmem %s4, %s385
      $region48: #{exit_flow.8} parent=43 // pred_fallthru
        _
    $region44: #{exit_flow.8} parent=5 // pred_fallthru
      _
  $region6: #{exit_flow.8} parent=0 // loop_footer
    %s14 = sadd.s32 1, %s10
  $region7: #{exit_flow.8} parent=0 // loop_footer_branch
    %9 = sbr.rel target = $region3
  $region8: #{exit_flow.8} parent=0 // loop_exit
    _

// kernel: exit_flow.7
$region0: #{exit_flow.7}
  #allocation0 [shape = 'u32[]', space=smem, size = 0x4, offset = 0x4, fixed_abs, tag = 'smem constant byte address 0x4 - core index']
  #allocation1 [shape = 'u32[72,128]{1,0:T(1,128)}', space=vmem, size = 0x9000, scoped, tag = 'internal scratch']
  #allocation2 [shape = 'f32[256,128]{1,0:T(8,128)}', space=vmem, size = 0x20000, scoped, tag = 'scratch operand']
  %s0 = inlined_call_operand.vmem [shape: f32[2,18,18,128], index: 0, kind: input, shape index: {}]
  %s1 = inlined_call_operand.vmem [shape: f32[3,3,128], index: 1, kind: input, shape index: {}]
  %s2 = inlined_call_operand.vmem [shape: f32[128,128], index: 2, kind: input, shape index: {}]
  %s3 = inlined_call_operand.vmem [shape: f32[1,128], index: 3, kind: input, shape index: {}]
  %s4 = inlined_call_operand.vmem [shape: f32[1,128], index: 4, kind: input, shape index: {}]
  %s5 = inlined_call_operand.vmem [shape: f32[2,256,128], index: 5, kind: output, shape index: {}]
  %s6 = sld [smem:[#allocation0]]
  $region57: #{exit_flow.7} parent=0
    _
  %s8 = ssub.s32 1, %s6
  %s9 = scalar_select 0, %s8, %s6
  loop: start=0, step=1, limit=4
  $region2: #{exit_flow.7} parent=0 // loop_pre_header
    _
  $region3: #{exit_flow.7} parent=0 // loop_header
    %s11 = sphi 0, %s15
    %p12 = scmp.ge.s32.totalorder %s11, 4
    %s18 = sphi 0, %s30
    %s19 = sphi 0, %s26
    %s20 = sphi 0, %s18
    %s21 = sphi 0, %s19
    %s22 = sphi 0, %s20
    %s23 = sphi 0, %s21
    %s33 = sphi 0, %s35
    %s36 = sphi 0, %s33
    %s37 = sphi 0, %s36
    %s53 = sphi 0, %s37
    %s57 = sphi 0, %s57
    %s59 = sphi 0, %s57
    %s60 = sphi 0, %s59
    %s74 = sphi 0, %s60
    %s80 = sphi 0, %s82
    %s83 = sphi 0, %s80
    %s84 = sphi 0, %s83
    %s100 = sphi 0, %s84
    %s106 = sphi 0, %s108
    %s109 = sphi 0, %s106
    %s110 = sphi 0, %s109
    %s126 = sphi 0, %s110
    %s132 = sphi 0, %s134
    %s135 = sphi 0, %s132
    %s136 = sphi 0, %s135
    %s152 = sphi 0, %s136
    %s160 = sphi 0, %s162
    %s163 = sphi 0, %s160
    %s164 = sphi 0, %s163
    %s180 = sphi 0, %s164
  $region4: #{exit_flow.7} parent=0 // loop_header_branch
    %14 = sbr.rel (%p12) target = $region8
  $region5: #{exit_flow.7} parent=0 // loop_body
    %s16 = ssub.s32 %s11, 1
    %s17 = ssub.s32 %s11, 2
    %s24 = sadd.s32 1, %s19
    %p25 = scmp.ge.s32.totalorder %s24, 1
    %s26 = scalar_select %p25, 0, %s24
    %s27 = sadd.s32 1, %s18
    %s28 = scalar_select %p25, %s27, %s18
    %p29 = scmp.ge.s32.totalorder %s28, 2
    %s30 = scalar_select %p29, 0, %s28
    %s31 = ssub.s32 %s18, %s30
    %p32 = scmp.eq.s32.totalorder %s31, 0
    %s34 = sadd.s32 %s33, 1
    %s35 = scalar_select %p32, %s33, %s34
    %p38 = pneg %p32
    %p39 = scmp.eq.s32.totalorder %s11, 1
    %p40 = por %p38, %p39
    %p41 = scmp.ne.s32.totalorder %s33, %s36
    %p42 = scmp.eq.s32.totalorder %s11, 0
    %p43 = por %p41, %p42
    %p44 = scmp.ne.s32.totalorder %s33, %s36
    %p45 = scmp.eq.s32.totalorder %s16, 1
    %p46 = por %p44, %p45
    %p47 = scmp.ne.s32.totalorder %s36, %s37
    %p48 = scmp.eq.s32.totalorder %s16, 0
    %p49 = por %p47, %p48
    %p50 = scmp.ne.s32.totalorder %s36, %s37
    %p51 = scmp.eq.s32.totalorder %s17, 1
    %p52 = por %p50, %p51
    %p54 = scmp.ne.s32.totalorder %s37, %s53
    %p55 = scmp.eq.s32.totalorder %s17, 0
    %p56 = por %p54, %p55
    %s58 = sadd.s32 %s57, 1
    %p61 = scmp.eq.s32.totalorder %s11, 1
    %p62 = scmp.ne.s32.totalorder %s57, %s59
    %p63 = scmp.eq.s32.totalorder %s11, 0
    %p64 = por %p62, %p63
    %p65 = scmp.ne.s32.totalorder %s57, %s59
    %p66 = scmp.eq.s32.totalorder %s16, 1
    %p67 = por %p65, %p66
    %p68 = scmp.ne.s32.totalorder %s59, %s60
    %p69 = scmp.eq.s32.totalorder %s16, 0
    %p70 = por %p68, %p69
    %p71 = scmp.ne.s32.totalorder %s59, %s60
    %p72 = scmp.eq.s32.totalorder %s17, 1
    %p73 = por %p71, %p72
    %p75 = scmp.ne.s32.totalorder %s60, %s74
    %p76 = scmp.eq.s32.totalorder %s17, 0
    %p77 = por %p75, %p76
    %s78 = ssub.s32 %s19, %s26
    %p79 = scmp.eq.s32.totalorder %s78, 0
    %s81 = sadd.s32 %s80, 1
    %s82 = scalar_select %p79, %s80, %s81
    %p85 = pneg %p79
    %p86 = scmp.eq.s32.totalorder %s11, 1
    %p87 = por %p85, %p86
    %p88 = scmp.ne.s32.totalorder %s80, %s83
    %p89 = scmp.eq.s32.totalorder %s11, 0
    %p90 = por %p88, %p89
    %p91 = scmp.ne.s32.totalorder %s80, %s83
    %p92 = scmp.eq.s32.totalorder %s16, 1
    %p93 = por %p91, %p92
    %p94 = scmp.ne.s32.totalorder %s83, %s84
    %p95 = scmp.eq.s32.totalorder %s16, 0
    %p96 = por %p94, %p95
    %p97 = scmp.ne.s32.totalorder %s83, %s84
    %p98 = scmp.eq.s32.totalorder %s17, 1
    %p99 = por %p97, %p98
    %p101 = scmp.ne.s32.totalorder %s84, %s100
    %p102 = scmp.eq.s32.totalorder %s17, 0
    %p103 = por %p101, %p102
    %s104 = ssub.s32 %s19, %s26
    %p105 = scmp.eq.s32.totalorder %s104, 0
    %s107 = sadd.s32 %s106, 1
    %s108 = scalar_select %p105, %s106, %s107
    %p111 = pneg %p105
    %p112 = scmp.eq.s32.totalorder %s11, 1
    %p113 = por %p111, %p112
    %p114 = scmp.ne.s32.totalorder %s106, %s109
    %p115 = scmp.eq.s32.totalorder %s11, 0
    %p116 = por %p114, %p115
    %p117 = scmp.ne.s32.totalorder %s106, %s109
    %p118 = scmp.eq.s32.totalorder %s16, 1
    %p119 = por %p117, %p118
    %p120 = scmp.ne.s32.totalorder %s109, %s110
    %p121 = scmp.eq.s32.totalorder %s16, 0
    %p122 = por %p120, %p121
    %p123 = scmp.ne.s32.totalorder %s109, %s110
    %p124 = scmp.eq.s32.totalorder %s17, 1
    %p125 = por %p123, %p124
    %p127 = scmp.ne.s32.totalorder %s110, %s126
    %p128 = scmp.eq.s32.totalorder %s17, 0
    %p129 = por %p127, %p128
    %s130 = ssub.s32 %s19, %s26
    %p131 = scmp.eq.s32.totalorder %s130, 0
    %s133 = sadd.s32 %s132, 1
    %s134 = scalar_select %p131, %s132, %s133
    %p137 = pneg %p131
    %p138 = scmp.eq.s32.totalorder %s11, 1
    %p139 = por %p137, %p138
    %p140 = scmp.ne.s32.totalorder %s132, %s135
    %p141 = scmp.eq.s32.totalorder %s11, 0
    %p142 = por %p140, %p141
    %p143 = scmp.ne.s32.totalorder %s132, %s135
    %p144 = scmp.eq.s32.totalorder %s16, 1
    %p145 = por %p143, %p144
    %p146 = scmp.ne.s32.totalorder %s135, %s136
    %p147 = scmp.eq.s32.totalorder %s16, 0
    %p148 = por %p146, %p147
    %p149 = scmp.ne.s32.totalorder %s135, %s136
    %p150 = scmp.eq.s32.totalorder %s17, 1
    %p151 = por %p149, %p150
    %p153 = scmp.ne.s32.totalorder %s136, %s152
    %p154 = scmp.eq.s32.totalorder %s17, 0
    %p155 = por %p153, %p154
    %s156 = ssub.s32 %s18, %s30
    %s157 = ssub.s32 %s19, %s26
    %s158 = sor.u32 %s156, %s157
    %p159 = scmp.eq.s32.totalorder %s158, 0
    %s161 = sadd.s32 %s160, 1
    %s162 = scalar_select %p159, %s160, %s161
    %p165 = pneg %p159
    %p166 = scmp.eq.s32.totalorder %s11, 1
    %p167 = por %p165, %p166
    %p168 = scmp.ne.s32.totalorder %s160, %s163
    %p169 = scmp.eq.s32.totalorder %s11, 0
    %p170 = por %p168, %p169
    %p171 = scmp.ne.s32.totalorder %s160, %s163
    %p172 = scmp.eq.s32.totalorder %s16, 1
    %p173 = por %p171, %p172
    %p174 = scmp.ne.s32.totalorder %s163, %s164
    %p175 = scmp.eq.s32.totalorder %s16, 0
    %p176 = por %p174, %p175
    %p177 = scmp.ne.s32.totalorder %s163, %s164
    %p178 = scmp.eq.s32.totalorder %s17, 1
    %p179 = por %p177, %p178
    %p181 = scmp.ne.s32.totalorder %s164, %s180
    %p182 = scmp.eq.s32.totalorder %s17, 0
    %p183 = por %p181, %p182
    %p184 = scmp.le.s32.totalorder 1, %s11
    %p185 = scmp.lt.s32.totalorder %s11, 3
    %p186 = pnand %p184, %p185
    %p187 = pneg %p186
    // Predicated region
    $region9: #{exit_flow.7} parent=5 // pred_check
      _
    $region10: #{exit_flow.7} parent=5 // pred_check_branch
      %189 = sbr.rel (%p186) target = $region12
    $region11: #{exit_flow.7} parent=5 // pred_region
      %s190 = ssub.s32 %s11, 1
      // Predicated region
      $region13: #{exit_flow.7} parent=11 // pred_check
        %p191 = pneg %p70
      $region14: #{exit_flow.7} parent=11 // pred_check_branch
        %193 = sbr.rel (%p191) target = $region16
      $region15: #{exit_flow.7} parent=11 // pred_region
        _
      $region16: #{exit_flow.7} parent=11 // pred_fallthru
        _
      // Predicated region
      $region17: #{exit_flow.7} parent=11 // pred_check
        %p194 = pneg %p96
      $region18: #{exit_flow.7} parent=11 // pred_check_branch
        %196 = sbr.rel (%p194) target = $region20
      $region19: #{exit_flow.7} parent=11 // pred_region
        %p197 = scmp.lt.s32.totalorder %s21, 0
        %s198 = scalar_select %p197, %s21, 0
        %s199 = smul.addr %s198, 8
        %s200 = scalar_lea.vmem %s2, %s199
      $region20: #{exit_flow.7} parent=11 // pred_fallthru
        _
      // Predicated region
      $region21: #{exit_flow.7} parent=11 // pred_check
        %p201 = pneg %p122
      $region22: #{exit_flow.7} parent=11 // pred_check_branch
        %203 = sbr.rel (%p201) target = $region24
      $region23: #{exit_flow.7} parent=11 // pred_region
        %p204 = scmp.lt.s32.totalorder %s21, 0
        %s205 = scalar_select %p204, %s21, 0
        %s206 = scalar_lea.vmem %s3, %s205
      $region24: #{exit_flow.7} parent=11 // pred_fallthru
        _
      // Predicated region
      $region25: #{exit_flow.7} parent=11 // pred_check
        %p207 = pneg %p148
      $region26: #{exit_flow.7} parent=11 // pred_check_branch
        %209 = sbr.rel (%p207) target = $region28
      $region27: #{exit_flow.7} parent=11 // pred_region
        %p210 = scmp.lt.s32.totalorder %s21, 0
        %s211 = scalar_select %p210, %s21, 0
        %s212 = scalar_lea.vmem %s4, %s211
      $region28: #{exit_flow.7} parent=11 // pred_fallthru
        _
    $region12: #{exit_flow.7} parent=5 // pred_fallthru
      _
    %p213 = scmp.lt.s32.totalorder %s11, 2
    // Predicated region
    $region29: #{exit_flow.7} parent=5 // pred_check
      %p214 = pneg %p213
    $region30: #{exit_flow.7} parent=5 // pred_check_branch
      %216 = sbr.rel (%p214) target = $region32
    $region31: #{exit_flow.7} parent=5 // pred_region
      // Predicated region
      $region33: #{exit_flow.7} parent=31 // pred_check
        %p217 = pneg %p43
      $region34: #{exit_flow.7} parent=31 // pred_check_branch
        %219 = sbr.rel (%p217) target = $region36
      $region35: #{exit_flow.7} parent=31 // pred_region
        %p220 = scmp.lt.s32.totalorder %s18, 1
        %s221 = scalar_select %p220, %s18, 1
        %s222 = smul.addr %s221, 54
        %s223 = smul.addr %s222, 8
        %s224 = scalar_lea.vmem %s0, %s223
      $region36: #{exit_flow.7} parent=31 // pred_fallthru
        _
    $region32: #{exit_flow.7} parent=5 // pred_fallthru
      _
    %p225 = scmp.le.s32.totalorder 1, %s11
    %p226 = scmp.lt.s32.totalorder %s11, 3
    %p227 = pnand %p225, %p226
    %p228 = pneg %p227
    // Predicated region
    $region37: #{exit_flow.7} parent=5 // pred_check
      _
    $region38: #{exit_flow.7} parent=5 // pred_check_branch
      %230 = sbr.rel (%p227) target = $region40
    $region39: #{exit_flow.7} parent=5 // pred_region
      %s231 = ssub.s32 %s11, 1
      %p232 = scmp.lt.s32.totalorder %s20, 1
      %s233 = scalar_select %p232, %s20, 1
      %s234 = smul.addr %s233, 54
      %s235 = smul.addr %s234, 8
      %s236 = scalar_lea.vmem %s0, %s235
      %p237 = pneg %p49
      %p238 = pneg %p46
      %p239 = pneg %p70
      %p240 = pneg %p67
      %p241 = scmp.lt.s32.totalorder %s21, 0
      %s242 = scalar_select %p241, %s21, 0
      %s243 = smul.addr %s242, 8
      %s244 = scalar_lea.vmem %s2, %s243
      %p245 = pneg %p96
      %p246 = pneg %p93
      %p247 = scmp.lt.s32.totalorder %s21, 0
      %s248 = scalar_select %p247, %s21, 0
      %s249 = scalar_lea.vmem %s3, %s248
      %p250 = pneg %p122
      %p251 = pneg %p119
      %p252 = scmp.lt.s32.totalorder %s21, 0
      %s253 = scalar_select %p252, %s21, 0
      %s254 = scalar_lea.vmem %s4, %s253
      %p255 = pneg %p148
      %p256 = pneg %p145
      %p257 = pneg %p176
      %p258 = pneg %p173
      %p259 = scmp.lt.s32.totalorder %s20, 1
      %s260 = scalar_select %p259, %s20, 1
      %p261 = scmp.lt.s32.totalorder %s21, 0
      %s262 = scalar_select %p261, %s21, 0
      %s263 = smul.addr %s260, 32
      %s264 = sadd.s32 %s262, %s263
      %s265 = smul.addr %s264, 8
      %s266 = scalar_lea.vmem %s5, %s265
      %p267 = scmp.lt.s32.totalorder %s20, 1
      %s268 = scalar_select %p267, %s20, 1
      %s269 = smul.addr %s268, 54
      %s270 = smul.addr %s269, 8
      %s271 = scalar_lea.vmem %s0, %s270
      %p272 = scmp.lt.s32.totalorder %s21, 0
      %s273 = scalar_select %p272, %s21, 0
      %s274 = smul.addr %s273, 8
      %s275 = scalar_lea.vmem %s2, %s274
      %p276 = scmp.lt.s32.totalorder %s21, 0
      %s277 = scalar_select %p276, %s21, 0
      %s278 = scalar_lea.vmem %s3, %s277
      %p279 = scmp.lt.s32.totalorder %s21, 0
      %s280 = scalar_select %p279, %s21, 0
      %s281 = scalar_lea.vmem %s4, %s280
      %p282 = scmp.lt.s32.totalorder %s20, 1
      %s283 = scalar_select %p282, %s20, 1
      %p284 = scmp.lt.s32.totalorder %s21, 0
      %s285 = scalar_select %p284, %s21, 0
      %s286 = smul.addr %s283, 32
      %s287 = sadd.s32 %s285, %s286
      %s288 = smul.addr %s287, 8
      %s289 = scalar_lea.vmem %s5, %s288
      %p290 = scmp.eq.s32.totalorder %s21, 0
      // Predicated region
      $region41: #{exit_flow.7} parent=39 // pred_check
        %p291 = pneg %p290
      $region42: #{exit_flow.7} parent=39 // pred_check_branch
        %293 = sbr.rel (%p291) target = $region44
      $region43: #{exit_flow.7} parent=39 // pred_region
        %v294 = vld [vmem:[%s1] sm:$0x7]
        %v295 = vld [vmem:[%s1 + $0x4] sm:$0x7]
        %v296 = vld [vmem:[%s1 + $0x8] sm:$0x7]
        %v297 = vld [vmem:[%s271] sm:$0xff]
        %v298 = vld [vmem:[%s271 + $0x8] sm:$0xff]
        %v299 = vld [vmem:[%s271 + $0x18] sm:$0xff]
        %v300 = vld [vmem:[%s271 + $0x20] sm:$0xff]
        %v301 = vld [vmem:[%s271 + $0x30] sm:$0xff]
        %v302 = vld [vmem:[%s271 + $0x38] sm:$0xff]
        %v303 = vld [vmem:[%s271 + $0x48] sm:$0xff]
        %v304 = vld [vmem:[%s271 + $0x50] sm:$0xff]
        %v305 = vld [vmem:[%s271 + $0x60] sm:$0xff]
        %v306 = vld [vmem:[%s271 + $0x68] sm:$0xff]
        %v307 = vld [vmem:[%s271 + $0x78] sm:$0xff]
        %v308 = vld [vmem:[%s271 + $0x80] sm:$0xff]
        %v309 = vld [vmem:[%s271 + $0x90] sm:$0xff]
        %v310 = vld [vmem:[%s271 + $0x98] sm:$0xff]
        %v311 = vld [vmem:[%s271 + $0xa8] sm:$0xff]
        %v312 = vld [vmem:[%s271 + $0xb0] sm:$0xff]
        %v313 = vld [vmem:[%s271 + $0xc0] sm:$0xff]
        %v314 = vld [vmem:[%s271 + $0xc8] sm:$0xff]
        %v315 = vld [vmem:[%s271 + $0xd8] sm:$0xff]
        %v316 = vld [vmem:[%s271 + $0xe0] sm:$0xff]
        %v317 = vperm.slane %v294, 0
        %v318 = vmul.f32 %v297, %v317
        %v319 = vmul.f32 %v298, %v317
        %v320 = vmul.f32 %v299, %v317
        %v321 = vmul.f32 %v300, %v317
        %v322 = vmul.f32 %v301, %v317
        %v323 = vmul.f32 %v302, %v317
        %v324 = vmul.f32 %v303, %v317
        %v325 = vmul.f32 %v304, %v317
        %v326 = vmul.f32 %v305, %v317
        %v327 = vmul.f32 %v306, %v317
        %v328 = vmul.f32 %v307, %v317
        %v329 = vmul.f32 %v308, %v317
        %v330 = vmul.f32 %v309, %v317
        %v331 = vmul.f32 %v310, %v317
        %v332 = vmul.f32 %v311, %v317
        %v333 = vmul.f32 %v312, %v317
        %v334 = vadd.f32 %v318, 0.0
        %v335 = vadd.f32 %v319, 0.0
        %v336 = vadd.f32 %v320, 0.0
        %v337 = vadd.f32 %v321, 0.0
        %v338 = vadd.f32 %v322, 0.0
        %v339 = vadd.f32 %v323, 0.0
        %v340 = vadd.f32 %v324, 0.0
        %v341 = vadd.f32 %v325, 0.0
        %v342 = vadd.f32 %v326, 0.0
        %v343 = vadd.f32 %v327, 0.0
        %v344 = vadd.f32 %v328, 0.0
        %v345 = vadd.f32 %v329, 0.0
        %v346 = vadd.f32 %v330, 0.0
        %v347 = vadd.f32 %v331, 0.0
        %v348 = vadd.f32 %v332, 0.0
        %v349 = vadd.f32 %v333, 0.0
        %v350 = vperm.slane %v295, 0
        %v351 = vmul.f32 %v299, %v350
        %v352 = vmul.f32 %v300, %v350
        %v353 = vmul.f32 %v301, %v350
        %v354 = vmul.f32 %v302, %v350
        %v355 = vmul.f32 %v303, %v350
        %v356 = vmul.f32 %v304, %v350
        %v357 = vmul.f32 %v305, %v350
        %v358 = vmul.f32 %v306, %v350
        %v359 = vmul.f32 %v307, %v350
        %v360 = vmul.f32 %v308, %v350
        %v361 = vmul.f32 %v309, %v350
        %v362 = vmul.f32 %v310, %v350
        %v363 = vmul.f32 %v311, %v350
        %v364 = vmul.f32 %v312, %v350
        %v365 = vmul.f32 %v313, %v350
        %v366 = vmul.f32 %v314, %v350
        %v367 = vadd.f32 %v334, %v351
        %v368 = vadd.f32 %v335, %v352
        %v369 = vadd.f32 %v336, %v353
        %v370 = vadd.f32 %v337, %v354
        %v371 = vadd.f32 %v338, %v355
        %v372 = vadd.f32 %v339, %v356
        %v373 = vadd.f32 %v340, %v357
        %v374 = vadd.f32 %v341, %v358
        %v375 = vadd.f32 %v342, %v359
        %v376 = vadd.f32 %v343, %v360
        %v377 = vadd.f32 %v344, %v361
        %v378 = vadd.f32 %v345, %v362
        %v379 = vadd.f32 %v346, %v363
        %v380 = vadd.f32 %v347, %v364
        %v381 = vadd.f32 %v348, %v365
        %v382 = vadd.f32 %v349, %v366
        %v383 = vperm.slane %v296, 0
        %v384 = vmul.f32 %v301, %v383
        %v385 = vmul.f32 %v302, %v383
        %v386 = vmul.f32 %v303, %v383
        %v387 = vmul.f32 %v304, %v383
        %v388 = vmul.f32 %v305, %v383
        %v389 = vmul.f32 %v306, %v383
        %v390 = vmul.f32 %v307, %v383
        %v391 = vmul.f32 %v308, %v383
        %v392 = vmul.f32 %v309, %v383
        %v393 = vmul.f32 %v310, %v383
        %v394 = vmul.f32 %v311, %v383
        %v395 = vmul.f32 %v312, %v383
        %v396 = vmul.f32 %v313, %v383
        %v397 = vmul.f32 %v314, %v383
        %v398 = vmul.f32 %v315, %v383
        %v399 = vmul.f32 %v316, %v383
        %v400 = vadd.f32 %v367, %v384
        %v401 = vadd.f32 %v368, %v385
        %v402 = vadd.f32 %v369, %v386
        %v403 = vadd.f32 %v370, %v387
        %v404 = vadd.f32 %v371, %v388
        %v405 = vadd.f32 %v372, %v389
        %v406 = vadd.f32 %v373, %v390
        %v407 = vadd.f32 %v374, %v391
        %v408 = vadd.f32 %v375, %v392
        %v409 = vadd.f32 %v376, %v393
        %v410 = vadd.f32 %v377, %v394
        %v411 = vadd.f32 %v378, %v395
        %v412 = vadd.f32 %v379, %v396
        %v413 = vadd.f32 %v380, %v397
        %v414 = vadd.f32 %v381, %v398
        %v415 = vadd.f32 %v382, %v399
        %v416 = vld [vmem:[%s271 + $0x1] sm:$0xff]
        %v417 = vld [vmem:[%s271 + $0x9] sm:$0xff]
        %v418 = vld [vmem:[%s271 + $0x19] sm:$0xff]
        %v419 = vld [vmem:[%s271 + $0x21] sm:$0xff]
        %v420 = vld [vmem:[%s271 + $0x31] sm:$0xff]
        %v421 = vld [vmem:[%s271 + $0x39] sm:$0xff]
        %v422 = vld [vmem:[%s271 + $0x49] sm:$0xff]
        %v423 = vld [vmem:[%s271 + $0x51] sm:$0xff]
        %v424 = vld [vmem:[%s271 + $0x61] sm:$0xff]
        %v425 = vld [vmem:[%s271 + $0x69] sm:$0xff]
        %v426 = vld [vmem:[%s271 + $0x79] sm:$0xff]
        %v427 = vld [vmem:[%s271 + $0x81] sm:$0xff]
        %v428 = vld [vmem:[%s271 + $0x91] sm:$0xff]
        %v429 = vld [vmem:[%s271 + $0x99] sm:$0xff]
        %v430 = vld [vmem:[%s271 + $0xa9] sm:$0xff]
        %v431 = vld [vmem:[%s271 + $0xb1] sm:$0xff]
        %v432 = vld [vmem:[%s271 + $0xc1] sm:$0xff]
        %v433 = vld [vmem:[%s271 + $0xc9] sm:$0xff]
        %v434 = vld [vmem:[%s271 + $0xd9] sm:$0xff]
        %v435 = vld [vmem:[%s271 + $0xe1] sm:$0xff]
        %v436 = vperm.slane %v294, 1
        %v437 = vmul.f32 %v416, %v436
        %v438 = vmul.f32 %v417, %v436
        %v439 = vmul.f32 %v418, %v436
        %v440 = vmul.f32 %v419, %v436
        %v441 = vmul.f32 %v420, %v436
        %v442 = vmul.f32 %v421, %v436
        %v443 = vmul.f32 %v422, %v436
        %v444 = vmul.f32 %v423, %v436
        %v445 = vmul.f32 %v424, %v436
        %v446 = vmul.f32 %v425, %v436
        %v447 = vmul.f32 %v426, %v436
        %v448 = vmul.f32 %v427, %v436
        %v449 = vmul.f32 %v428, %v436
        %v450 = vmul.f32 %v429, %v436
        %v451 = vmul.f32 %v430, %v436
        %v452 = vmul.f32 %v431, %v436
        %v453 = vadd.f32 %v400, %v437
        %v454 = vadd.f32 %v401, %v438
        %v455 = vadd.f32 %v402, %v439
        %v456 = vadd.f32 %v403, %v440
        %v457 = vadd.f32 %v404, %v441
        %v458 = vadd.f32 %v405, %v442
        %v459 = vadd.f32 %v406, %v443
        %v460 = vadd.f32 %v407, %v444
        %v461 = vadd.f32 %v408, %v445
        %v462 = vadd.f32 %v409, %v446
        %v463 = vadd.f32 %v410, %v447
        %v464 = vadd.f32 %v411, %v448
        %v465 = vadd.f32 %v412, %v449
        %v466 = vadd.f32 %v413, %v450
        %v467 = vadd.f32 %v414, %v451
        %v468 = vadd.f32 %v415, %v452
        %v469 = vperm.slane %v295, 1
        %v470 = vmul.f32 %v418, %v469
        %v471 = vmul.f32 %v419, %v469
        %v472 = vmul.f32 %v420, %v469
        %v473 = vmul.f32 %v421, %v469
        %v474 = vmul.f32 %v422, %v469
        %v475 = vmul.f32 %v423, %v469
        %v476 = vmul.f32 %v424, %v469
        %v477 = vmul.f32 %v425, %v469
        %v478 = vmul.f32 %v426, %v469
        %v479 = vmul.f32 %v427, %v469
        %v480 = vmul.f32 %v428, %v469
        %v481 = vmul.f32 %v429, %v469
        %v482 = vmul.f32 %v430, %v469
        %v483 = vmul.f32 %v431, %v469
        %v484 = vmul.f32 %v432, %v469
        %v485 = vmul.f32 %v433, %v469
        %v486 = vadd.f32 %v453, %v470
        %v487 = vadd.f32 %v454, %v471
        %v488 = vadd.f32 %v455, %v472
        %v489 = vadd.f32 %v456, %v473
        %v490 = vadd.f32 %v457, %v474
        %v491 = vadd.f32 %v458, %v475
        %v492 = vadd.f32 %v459, %v476
        %v493 = vadd.f32 %v460, %v477
        %v494 = vadd.f32 %v461, %v478
        %v495 = vadd.f32 %v462, %v479
        %v496 = vadd.f32 %v463, %v480
        %v497 = vadd.f32 %v464, %v481
        %v498 = vadd.f32 %v465, %v482
        %v499 = vadd.f32 %v466, %v483
        %v500 = vadd.f32 %v467, %v484
        %v501 = vadd.f32 %v468, %v485
        %v502 = vperm.slane %v296, 1
        %v503 = vmul.f32 %v420, %v502
        %v504 = vmul.f32 %v421, %v502
        %v505 = vmul.f32 %v422, %v502
        %v506 = vmul.f32 %v423, %v502
        %v507 = vmul.f32 %v424, %v502
        %v508 = vmul.f32 %v425, %v502
        %v509 = vmul.f32 %v426, %v502
        %v510 = vmul.f32 %v427, %v502
        %v511 = vmul.f32 %v428, %v502
        %v512 = vmul.f32 %v429, %v502
        %v513 = vmul.f32 %v430, %v502
        %v514 = vmul.f32 %v431, %v502
        %v515 = vmul.f32 %v432, %v502
        %v516 = vmul.f32 %v433, %v502
        %v517 = vmul.f32 %v434, %v502
        %v518 = vmul.f32 %v435, %v502
        %v519 = vadd.f32 %v486, %v503
        %v520 = vadd.f32 %v487, %v504
        %v521 = vadd.f32 %v488, %v505
        %v522 = vadd.f32 %v489, %v506
        %v523 = vadd.f32 %v490, %v507
        %v524 = vadd.f32 %v491, %v508
        %v525 = vadd.f32 %v492, %v509
        %v526 = vadd.f32 %v493, %v510
        %v527 = vadd.f32 %v494, %v511
        %v528 = vadd.f32 %v495, %v512
        %v529 = vadd.f32 %v496, %v513
        %v530 = vadd.f32 %v497, %v514
        %v531 = vadd.f32 %v498, %v515
        %v532 = vadd.f32 %v499, %v516
        %v533 = vadd.f32 %v500, %v517
        %v534 = vadd.f32 %v501, %v518
        %v535 = vld [vmem:[%s271 + $0x2] sm:$0xff]
        %v536 = vld [vmem:[%s271 + $0xa] sm:$0xff]
        %v537 = vld [vmem:[%s271 + $0x1a] sm:$0xff]
        %v538 = vld [vmem:[%s271 + $0x22] sm:$0xff]
        %v539 = vld [vmem:[%s271 + $0x32] sm:$0xff]
        %v540 = vld [vmem:[%s271 + $0x3a] sm:$0xff]
        %v541 = vld [vmem:[%s271 + $0x4a] sm:$0xff]
        %v542 = vld [vmem:[%s271 + $0x52] sm:$0xff]
        %v543 = vld [vmem:[%s271 + $0x62] sm:$0xff]
        %v544 = vld [vmem:[%s271 + $0x6a] sm:$0xff]
        %v545 = vld [vmem:[%s271 + $0x7a] sm:$0xff]
        %v546 = vld [vmem:[%s271 + $0x82] sm:$0xff]
        %v547 = vld [vmem:[%s271 + $0x92] sm:$0xff]
        %v548 = vld [vmem:[%s271 + $0x9a] sm:$0xff]
        %v549 = vld [vmem:[%s271 + $0xaa] sm:$0xff]
        %v550 = vld [vmem:[%s271 + $0xb2] sm:$0xff]
        %v551 = vld [vmem:[%s271 + $0xc2] sm:$0xff]
        %v552 = vld [vmem:[%s271 + $0xca] sm:$0xff]
        %v553 = vld [vmem:[%s271 + $0xda] sm:$0xff]
        %v554 = vld [vmem:[%s271 + $0xe2] sm:$0xff]
        %v555 = vperm.slane %v294, 2
        %v556 = vmul.f32 %v535, %v555
        %v557 = vmul.f32 %v536, %v555
        %v558 = vmul.f32 %v537, %v555
        %v559 = vmul.f32 %v538, %v555
        %v560 = vmul.f32 %v539, %v555
        %v561 = vmul.f32 %v540, %v555
        %v562 = vmul.f32 %v541, %v555
        %v563 = vmul.f32 %v542, %v555
        %v564 = vmul.f32 %v543, %v555
        %v565 = vmul.f32 %v544, %v555
        %v566 = vmul.f32 %v545, %v555
        %v567 = vmul.f32 %v546, %v555
        %v568 = vmul.f32 %v547, %v555
        %v569 = vmul.f32 %v548, %v555
        %v570 = vmul.f32 %v549, %v555
        %v571 = vmul.f32 %v550, %v555
        %v572 = vadd.f32 %v519, %v556
        %v573 = vadd.f32 %v520, %v557
        %v574 = vadd.f32 %v521, %v558
        %v575 = vadd.f32 %v522, %v559
        %v576 = vadd.f32 %v523, %v560
        %v577 = vadd.f32 %v524, %v561
        %v578 = vadd.f32 %v525, %v562
        %v579 = vadd.f32 %v526, %v563
        %v580 = vadd.f32 %v527, %v564
        %v581 = vadd.f32 %v528, %v565
        %v582 = vadd.f32 %v529, %v566
        %v583 = vadd.f32 %v530, %v567
        %v584 = vadd.f32 %v531, %v568
        %v585 = vadd.f32 %v532, %v569
        %v586 = vadd.f32 %v533, %v570
        %v587 = vadd.f32 %v534, %v571
        %v588 = vperm.slane %v295, 2
        %v589 = vmul.f32 %v537, %v588
        %v590 = vmul.f32 %v538, %v588
        %v591 = vmul.f32 %v539, %v588
        %v592 = vmul.f32 %v540, %v588
        %v593 = vmul.f32 %v541, %v588
        %v594 = vmul.f32 %v542, %v588
        %v595 = vmul.f32 %v543, %v588
        %v596 = vmul.f32 %v544, %v588
        %v597 = vmul.f32 %v545, %v588
        %v598 = vmul.f32 %v546, %v588
        %v599 = vmul.f32 %v547, %v588
        %v600 = vmul.f32 %v548, %v588
        %v601 = vmul.f32 %v549, %v588
        %v602 = vmul.f32 %v550, %v588
        %v603 = vmul.f32 %v551, %v588
        %v604 = vmul.f32 %v552, %v588
        %v605 = vadd.f32 %v572, %v589
        %v606 = vadd.f32 %v573, %v590
        %v607 = vadd.f32 %v574, %v591
        %v608 = vadd.f32 %v575, %v592
        %v609 = vadd.f32 %v576, %v593
        %v610 = vadd.f32 %v577, %v594
        %v611 = vadd.f32 %v578, %v595
        %v612 = vadd.f32 %v579, %v596
        %v613 = vadd.f32 %v580, %v597
        %v614 = vadd.f32 %v581, %v598
        %v615 = vadd.f32 %v582, %v599
        %v616 = vadd.f32 %v583, %v600
        %v617 = vadd.f32 %v584, %v601
        %v618 = vadd.f32 %v585, %v602
        %v619 = vadd.f32 %v586, %v603
        %v620 = vadd.f32 %v587, %v604
        %v621 = vperm.slane %v296, 2
        %v622 = vmul.f32 %v539, %v621
        %v623 = vmul.f32 %v540, %v621
        %v624 = vmul.f32 %v541, %v621
        %v625 = vmul.f32 %v542, %v621
        %v626 = vmul.f32 %v543, %v621
        %v627 = vmul.f32 %v544, %v621
        %v628 = vmul.f32 %v545, %v621
        %v629 = vmul.f32 %v546, %v621
        %v630 = vmul.f32 %v547, %v621
        %v631 = vmul.f32 %v548, %v621
        %v632 = vmul.f32 %v549, %v621
        %v633 = vmul.f32 %v550, %v621
        %v634 = vmul.f32 %v551, %v621
        %v635 = vmul.f32 %v552, %v621
        %v636 = vmul.f32 %v553, %v621
        %v637 = vmul.f32 %v554, %v621
        %v638 = vadd.f32 %v605, %v622
        %v639 = vadd.f32 %v606, %v623
        %v640 = vadd.f32 %v607, %v624
        %v641 = vadd.f32 %v608, %v625
        %v642 = vadd.f32 %v609, %v626
        %v643 = vadd.f32 %v610, %v627
        %v644 = vadd.f32 %v611, %v628
        %v645 = vadd.f32 %v612, %v629
        %v646 = vadd.f32 %v613, %v630
        %v647 = vadd.f32 %v614, %v631
        %v648 = vadd.f32 %v615, %v632
        %v649 = vadd.f32 %v616, %v633
        %v650 = vadd.f32 %v617, %v634
        %v651 = vadd.f32 %v618, %v635
        %v652 = vadd.f32 %v619, %v636
        %v653 = vadd.f32 %v620, %v637
        %654 = vst [vmem:[#allocation2] sm:$0xff] %v638
        %655 = vst [vmem:[#allocation2 + $0x8] sm:$0xff] %v639
        %656 = vst [vmem:[#allocation2 + $0x10] sm:$0xff] %v640
        %657 = vst [vmem:[#allocation2 + $0x18] sm:$0xff] %v641
        %658 = vst [vmem:[#allocation2 + $0x20] sm:$0xff] %v642
        %659 = vst [vmem:[#allocation2 + $0x28] sm:$0xff] %v643
        %660 = vst [vmem:[#allocation2 + $0x30] sm:$0xff] %v644
        %661 = vst [vmem:[#allocation2 + $0x38] sm:$0xff] %v645
        %662 = vst [vmem:[#allocation2 + $0x40] sm:$0xff] %v646
        %663 = vst [vmem:[#allocation2 + $0x48] sm:$0xff] %v647
        %664 = vst [vmem:[#allocation2 + $0x50] sm:$0xff] %v648
        %665 = vst [vmem:[#allocation2 + $0x58] sm:$0xff] %v649
        %666 = vst [vmem:[#allocation2 + $0x60] sm:$0xff] %v650
        %667 = vst [vmem:[#allocation2 + $0x68] sm:$0xff] %v651
        %668 = vst [vmem:[#allocation2 + $0x70] sm:$0xff] %v652
        %669 = vst [vmem:[#allocation2 + $0x78] sm:$0xff] %v653
        %s670 = scalar_lea.vmem %s271, 192
        %v671 = vld [vmem:[%s670] sm:$0xff]
        %v672 = vld [vmem:[%s670 + $0x8] sm:$0xff]
        %v673 = vld [vmem:[%s670 + $0x18] sm:$0xff]
        %v674 = vld [vmem:[%s670 + $0x20] sm:$0xff]
        %v675 = vld [vmem:[%s670 + $0x30] sm:$0xff]
        %v676 = vld [vmem:[%s670 + $0x38] sm:$0xff]
        %v677 = vld [vmem:[%s670 + $0x48] sm:$0xff]
        %v678 = vld [vmem:[%s670 + $0x50] sm:$0xff]
        %v679 = vld [vmem:[%s670 + $0x60] sm:$0xff]
        %v680 = vld [vmem:[%s670 + $0x68] sm:$0xff]
        %v681 = vld [vmem:[%s670 + $0x78] sm:$0xff]
        %v682 = vld [vmem:[%s670 + $0x80] sm:$0xff]
        %v683 = vld [vmem:[%s670 + $0x90] sm:$0xff]
        %v684 = vld [vmem:[%s670 + $0x98] sm:$0xff]
        %v685 = vld [vmem:[%s670 + $0xa8] sm:$0xff]
        %v686 = vld [vmem:[%s670 + $0xb0] sm:$0xff]
        %v687 = vld [vmem:[%s670 + $0xc0] sm:$0xff]
        %v688 = vld [vmem:[%s670 + $0xc8] sm:$0xff]
        %v689 = vld [vmem:[%s670 + $0xd8] sm:$0xff]
        %v690 = vld [vmem:[%s670 + $0xe0] sm:$0xff]
        %v691 = vmul.f32 %v671, %v317
        %v692 = vmul.f32 %v672, %v317
        %v693 = vmul.f32 %v673, %v317
        %v694 = vmul.f32 %v674, %v317
        %v695 = vmul.f32 %v675, %v317
        %v696 = vmul.f32 %v676, %v317
        %v697 = vmul.f32 %v677, %v317
        %v698 = vmul.f32 %v678, %v317
        %v699 = vmul.f32 %v679, %v317
        %v700 = vmul.f32 %v680, %v317
        %v701 = vmul.f32 %v681, %v317
        %v702 = vmul.f32 %v682, %v317
        %v703 = vmul.f32 %v683, %v317
        %v704 = vmul.f32 %v684, %v317
        %v705 = vmul.f32 %v685, %v317
        %v706 = vmul.f32 %v686, %v317
        %v707 = vadd.f32 %v691, 0.0
        %v708 = vadd.f32 %v692, 0.0
        %v709 = vadd.f32 %v693, 0.0
        %v710 = vadd.f32 %v694, 0.0
        %v711 = vadd.f32 %v695, 0.0
        %v712 = vadd.f32 %v696, 0.0
        %v713 = vadd.f32 %v697, 0.0
        %v714 = vadd.f32 %v698, 0.0
        %v715 = vadd.f32 %v699, 0.0
        %v716 = vadd.f32 %v700, 0.0
        %v717 = vadd.f32 %v701, 0.0
        %v718 = vadd.f32 %v702, 0.0
        %v719 = vadd.f32 %v703, 0.0
        %v720 = vadd.f32 %v704, 0.0
        %v721 = vadd.f32 %v705, 0.0
        %v722 = vadd.f32 %v706, 0.0
        %v723 = vmul.f32 %v673, %v350
        %v724 = vmul.f32 %v674, %v350
        %v725 = vmul.f32 %v675, %v350
        %v726 = vmul.f32 %v676, %v350
        %v727 = vmul.f32 %v677, %v350
        %v728 = vmul.f32 %v678, %v350
        %v729 = vmul.f32 %v679, %v350
        %v730 = vmul.f32 %v680, %v350
        %v731 = vmul.f32 %v681, %v350
        %v732 = vmul.f32 %v682, %v350
        %v733 = vmul.f32 %v683, %v350
        %v734 = vmul.f32 %v684, %v350
        %v735 = vmul.f32 %v685, %v350
        %v736 = vmul.f32 %v686, %v350
        %v737 = vmul.f32 %v687, %v350
        %v738 = vmul.f32 %v688, %v350
        %v739 = vadd.f32 %v707, %v723
        %v740 = vadd.f32 %v708, %v724
        %v741 = vadd.f32 %v709, %v725
        %v742 = vadd.f32 %v710, %v726
        %v743 = vadd.f32 %v711, %v727
        %v744 = vadd.f32 %v712, %v728
        %v745 = vadd.f32 %v713, %v729
        %v746 = vadd.f32 %v714, %v730
        %v747 = vadd.f32 %v715, %v731
        %v748 = vadd.f32 %v716, %v732
        %v749 = vadd.f32 %v717, %v733
        %v750 = vadd.f32 %v718, %v734
        %v751 = vadd.f32 %v719, %v735
        %v752 = vadd.f32 %v720, %v736
        %v753 = vadd.f32 %v721, %v737
        %v754 = vadd.f32 %v722, %v738
        %v755 = vmul.f32 %v675, %v383
        %v756 = vmul.f32 %v676, %v383
        %v757 = vmul.f32 %v677, %v383
        %v758 = vmul.f32 %v678, %v383
        %v759 = vmul.f32 %v679, %v383
        %v760 = vmul.f32 %v680, %v383
        %v761 = vmul.f32 %v681, %v383
        %v762 = vmul.f32 %v682, %v383
        %v763 = vmul.f32 %v683, %v383
        %v764 = vmul.f32 %v684, %v383
        %v765 = vmul.f32 %v685, %v383
        %v766 = vmul.f32 %v686, %v383
        %v767 = vmul.f32 %v687, %v383
        %v768 = vmul.f32 %v688, %v383
        %v769 = vmul.f32 %v689, %v383
        %v770 = vmul.f32 %v690, %v383
        %v771 = vadd.f32 %v739, %v755
        %v772 = vadd.f32 %v740, %v756
        %v773 = vadd.f32 %v741, %v757
        %v774 = vadd.f32 %v742, %v758
        %v775 = vadd.f32 %v743, %v759
        %v776 = vadd.f32 %v744, %v760
        %v777 = vadd.f32 %v745, %v761
        %v778 = vadd.f32 %v746, %v762
        %v779 = vadd.f32 %v747, %v763
        %v780 = vadd.f32 %v748, %v764
        %v781 = vadd.f32 %v749, %v765
        %v782 = vadd.f32 %v750, %v766
        %v783 = vadd.f32 %v751, %v767
        %v784 = vadd.f32 %v752, %v768
        %v785 = vadd.f32 %v753, %v769
        %v786 = vadd.f32 %v754, %v770
        %v787 = vld [vmem:[%s670 + $0x1] sm:$0xff]
        %v788 = vld [vmem:[%s670 + $0x9] sm:$0xff]
        %v789 = vld [vmem:[%s670 + $0x19] sm:$0xff]
        %v790 = vld [vmem:[%s670 + $0x21] sm:$0xff]
        %v791 = vld [vmem:[%s670 + $0x31] sm:$0xff]
        %v792 = vld [vmem:[%s670 + $0x39] sm:$0xff]
        %v793 = vld [vmem:[%s670 + $0x49] sm:$0xff]
        %v794 = vld [vmem:[%s670 + $0x51] sm:$0xff]
        %v795 = vld [vmem:[%s670 + $0x61] sm:$0xff]
        %v796 = vld [vmem:[%s670 + $0x69] sm:$0xff]
        %v797 = vld [vmem:[%s670 + $0x79] sm:$0xff]
        %v798 = vld [vmem:[%s670 + $0x81] sm:$0xff]
        %v799 = vld [vmem:[%s670 + $0x91] sm:$0xff]
        %v800 = vld [vmem:[%s670 + $0x99] sm:$0xff]
        %v801 = vld [vmem:[%s670 + $0xa9] sm:$0xff]
        %v802 = vld [vmem:[%s670 + $0xb1] sm:$0xff]
        %v803 = vld [vmem:[%s670 + $0xc1] sm:$0xff]
        %v804 = vld [vmem:[%s670 + $0xc9] sm:$0xff]
        %v805 = vld [vmem:[%s670 + $0xd9] sm:$0xff]
        %v806 = vld [vmem:[%s670 + $0xe1] sm:$0xff]
        %v807 = vmul.f32 %v787, %v436
        %v808 = vmul.f32 %v788, %v436
        %v809 = vmul.f32 %v789, %v436
        %v810 = vmul.f32 %v790, %v436
        %v811 = vmul.f32 %v791, %v436
        %v812 = vmul.f32 %v792, %v436
        %v813 = vmul.f32 %v793, %v436
        %v814 = vmul.f32 %v794, %v436
        %v815 = vmul.f32 %v795, %v436
        %v816 = vmul.f32 %v796, %v436
        %v817 = vmul.f32 %v797, %v436
        %v818 = vmul.f32 %v798, %v436
        %v819 = vmul.f32 %v799, %v436
        %v820 = vmul.f32 %v800, %v436
        %v821 = vmul.f32 %v801, %v436
        %v822 = vmul.f32 %v802, %v436
        %v823 = vadd.f32 %v771, %v807
        %v824 = vadd.f32 %v772, %v808
        %v825 = vadd.f32 %v773, %v809
        %v826 = vadd.f32 %v774, %v810
        %v827 = vadd.f32 %v775, %v811
        %v828 = vadd.f32 %v776, %v812
        %v829 = vadd.f32 %v777, %v813
        %v830 = vadd.f32 %v778, %v814
        %v831 = vadd.f32 %v779, %v815
        %v832 = vadd.f32 %v780, %v816
        %v833 = vadd.f32 %v781, %v817
        %v834 = vadd.f32 %v782, %v818
        %v835 = vadd.f32 %v783, %v819
        %v836 = vadd.f32 %v784, %v820
        %v837 = vadd.f32 %v785, %v821
        %v838 = vadd.f32 %v786, %v822
        %v839 = vmul.f32 %v789, %v469
        %v840 = vmul.f32 %v790, %v469
        %v841 = vmul.f32 %v791, %v469
        %v842 = vmul.f32 %v792, %v469
        %v843 = vmul.f32 %v793, %v469
        %v844 = vmul.f32 %v794, %v469
        %v845 = vmul.f32 %v795, %v469
        %v846 = vmul.f32 %v796, %v469
        %v847 = vmul.f32 %v797, %v469
        %v848 = vmul.f32 %v798, %v469
        %v849 = vmul.f32 %v799, %v469
        %v850 = vmul.f32 %v800, %v469
        %v851 = vmul.f32 %v801, %v469
        %v852 = vmul.f32 %v802, %v469
        %v853 = vmul.f32 %v803, %v469
        %v854 = vmul.f32 %v804, %v469
        %v855 = vadd.f32 %v823, %v839
        %v856 = vadd.f32 %v824, %v840
        %v857 = vadd.f32 %v825, %v841
        %v858 = vadd.f32 %v826, %v842
        %v859 = vadd.f32 %v827, %v843
        %v860 = vadd.f32 %v828, %v844
        %v861 = vadd.f32 %v829, %v845
        %v862 = vadd.f32 %v830, %v846
        %v863 = vadd.f32 %v831, %v847
        %v864 = vadd.f32 %v832, %v848
        %v865 = vadd.f32 %v833, %v849
        %v866 = vadd.f32 %v834, %v850
        %v867 = vadd.f32 %v835, %v851
        %v868 = vadd.f32 %v836, %v852
        %v869 = vadd.f32 %v837, %v853
        %v870 = vadd.f32 %v838, %v854
        %v871 = vmul.f32 %v791, %v502
        %v872 = vmul.f32 %v792, %v502
        %v873 = vmul.f32 %v793, %v502
        %v874 = vmul.f32 %v794, %v502
        %v875 = vmul.f32 %v795, %v502
        %v876 = vmul.f32 %v796, %v502
        %v877 = vmul.f32 %v797, %v502
        %v878 = vmul.f32 %v798, %v502
        %v879 = vmul.f32 %v799, %v502
        %v880 = vmul.f32 %v800, %v502
        %v881 = vmul.f32 %v801, %v502
        %v882 = vmul.f32 %v802, %v502
        %v883 = vmul.f32 %v803, %v502
        %v884 = vmul.f32 %v804, %v502
        %v885 = vmul.f32 %v805, %v502
        %v886 = vmul.f32 %v806, %v502
        %v887 = vadd.f32 %v855, %v871
        %v888 = vadd.f32 %v856, %v872
        %v889 = vadd.f32 %v857, %v873
        %v890 = vadd.f32 %v858, %v874
        %v891 = vadd.f32 %v859, %v875
        %v892 = vadd.f32 %v860, %v876
        %v893 = vadd.f32 %v861, %v877
        %v894 = vadd.f32 %v862, %v878
        %v895 = vadd.f32 %v863, %v879
        %v896 = vadd.f32 %v864, %v880
        %v897 = vadd.f32 %v865, %v881
        %v898 = vadd.f32 %v866, %v882
        %v899 = vadd.f32 %v867, %v883
        %v900 = vadd.f32 %v868, %v884
        %v901 = vadd.f32 %v869, %v885
        %v902 = vadd.f32 %v870, %v886
        %v903 = vld [vmem:[%s670 + $0x2] sm:$0xff]
        %v904 = vld [vmem:[%s670 + $0xa] sm:$0xff]
        %v905 = vld [vmem:[%s670 + $0x1a] sm:$0xff]
        %v906 = vld [vmem:[%s670 + $0x22] sm:$0xff]
        %v907 = vld [vmem:[%s670 + $0x32] sm:$0xff]
        %v908 = vld [vmem:[%s670 + $0x3a] sm:$0xff]
        %v909 = vld [vmem:[%s670 + $0x4a] sm:$0xff]
        %v910 = vld [vmem:[%s670 + $0x52] sm:$0xff]
        %v911 = vld [vmem:[%s670 + $0x62] sm:$0xff]
        %v912 = vld [vmem:[%s670 + $0x6a] sm:$0xff]
        %v913 = vld [vmem:[%s670 + $0x7a] sm:$0xff]
        %v914 = vld [vmem:[%s670 + $0x82] sm:$0xff]
        %v915 = vld [vmem:[%s670 + $0x92] sm:$0xff]
        %v916 = vld [vmem:[%s670 + $0x9a] sm:$0xff]
        %v917 = vld [vmem:[%s670 + $0xaa] sm:$0xff]
        %v918 = vld [vmem:[%s670 + $0xb2] sm:$0xff]
        %v919 = vld [vmem:[%s670 + $0xc2] sm:$0xff]
        %v920 = vld [vmem:[%s670 + $0xca] sm:$0xff]
        %v921 = vld [vmem:[%s670 + $0xda] sm:$0xff]
        %v922 = vld [vmem:[%s670 + $0xe2] sm:$0xff]
        %v923 = vmul.f32 %v903, %v555
        %v924 = vmul.f32 %v904, %v555
        %v925 = vmul.f32 %v905, %v555
        %v926 = vmul.f32 %v906, %v555
        %v927 = vmul.f32 %v907, %v555
        %v928 = vmul.f32 %v908, %v555
        %v929 = vmul.f32 %v909, %v555
        %v930 = vmul.f32 %v910, %v555
        %v931 = vmul.f32 %v911, %v555
        %v932 = vmul.f32 %v912, %v555
        %v933 = vmul.f32 %v913, %v555
        %v934 = vmul.f32 %v914, %v555
        %v935 = vmul.f32 %v915, %v555
        %v936 = vmul.f32 %v916, %v555
        %v937 = vmul.f32 %v917, %v555
        %v938 = vmul.f32 %v918, %v555
        %v939 = vadd.f32 %v887, %v923
        %v940 = vadd.f32 %v888, %v924
        %v941 = vadd.f32 %v889, %v925
        %v942 = vadd.f32 %v890, %v926
        %v943 = vadd.f32 %v891, %v927
        %v944 = vadd.f32 %v892, %v928
        %v945 = vadd.f32 %v893, %v929
        %v946 = vadd.f32 %v894, %v930
        %v947 = vadd.f32 %v895, %v931
        %v948 = vadd.f32 %v896, %v932
        %v949 = vadd.f32 %v897, %v933
        %v950 = vadd.f32 %v898, %v934
        %v951 = vadd.f32 %v899, %v935
        %v952 = vadd.f32 %v900, %v936
        %v953 = vadd.f32 %v901, %v937
        %v954 = vadd.f32 %v902, %v938
        %v955 = vmul.f32 %v905, %v588
        %v956 = vmul.f32 %v906, %v588
        %v957 = vmul.f32 %v907, %v588
        %v958 = vmul.f32 %v908, %v588
        %v959 = vmul.f32 %v909, %v588
        %v960 = vmul.f32 %v910, %v588
        %v961 = vmul.f32 %v911, %v588
        %v962 = vmul.f32 %v912, %v588
        %v963 = vmul.f32 %v913, %v588
        %v964 = vmul.f32 %v914, %v588
        %v965 = vmul.f32 %v915, %v588
        %v966 = vmul.f32 %v916, %v588
        %v967 = vmul.f32 %v917, %v588
        %v968 = vmul.f32 %v918, %v588
        %v969 = vmul.f32 %v919, %v588
        %v970 = vmul.f32 %v920, %v588
        %v971 = vadd.f32 %v939, %v955
        %v972 = vadd.f32 %v940, %v956
        %v973 = vadd.f32 %v941, %v957
        %v974 = vadd.f32 %v942, %v958
        %v975 = vadd.f32 %v943, %v959
        %v976 = vadd.f32 %v944, %v960
        %v977 = vadd.f32 %v945, %v961
        %v978 = vadd.f32 %v946, %v962
        %v979 = vadd.f32 %v947, %v963
        %v980 = vadd.f32 %v948, %v964
        %v981 = vadd.f32 %v949, %v965
        %v982 = vadd.f32 %v950, %v966
        %v983 = vadd.f32 %v951, %v967
        %v984 = vadd.f32 %v952, %v968
        %v985 = vadd.f32 %v953, %v969
        %v986 = vadd.f32 %v954, %v970
        %v987 = vmul.f32 %v907, %v621
        %v988 = vmul.f32 %v908, %v621
        %v989 = vmul.f32 %v909, %v621
        %v990 = vmul.f32 %v910, %v621
        %v991 = vmul.f32 %v911, %v621
        %v992 = vmul.f32 %v912, %v621
        %v993 = vmul.f32 %v913, %v621
        %v994 = vmul.f32 %v914, %v621
        %v995 = vmul.f32 %v915, %v621
        %v996 = vmul.f32 %v916, %v621
        %v997 = vmul.f32 %v917, %v621
        %v998 = vmul.f32 %v918, %v621
        %v999 = vmul.f32 %v919, %v621
        %v1000 = vmul.f32 %v920, %v621
        %v1001 = vmul.f32 %v921, %v621
        %v1002 = vmul.f32 %v922, %v621
        %v1003 = vadd.f32 %v971, %v987
        %v1004 = vadd.f32 %v972, %v988
        %v1005 = vadd.f32 %v973, %v989
        %v1006 = vadd.f32 %v974, %v990
        %v1007 = vadd.f32 %v975, %v991
        %v1008 = vadd.f32 %v976, %v992
        %v1009 = vadd.f32 %v977, %v993
        %v1010 = vadd.f32 %v978, %v994
        %v1011 = vadd.f32 %v979, %v995
        %v1012 = vadd.f32 %v980, %v996
        %v1013 = vadd.f32 %v981, %v997
        %v1014 = vadd.f32 %v982, %v998
        %v1015 = vadd.f32 %v983, %v999
        %v1016 = vadd.f32 %v984, %v1000
        %v1017 = vadd.f32 %v985, %v1001
        %v1018 = vadd.f32 %v986, %v1002
        %1019 = vst [vmem:[#allocation2 + $0x80] sm:$0xff] %v1003
        %1020 = vst [vmem:[#allocation2 + $0x88] sm:$0xff] %v1004
        %1021 = vst [vmem:[#allocation2 + $0x90] sm:$0xff] %v1005
        %1022 = vst [vmem:[#allocation2 + $0x98] sm:$0xff] %v1006
        %1023 = vst [vmem:[#allocation2 + $0xa0] sm:$0xff] %v1007
        %1024 = vst [vmem:[#allocation2 + $0xa8] sm:$0xff] %v1008
        %1025 = vst [vmem:[#allocation2 + $0xb0] sm:$0xff] %v1009
        %1026 = vst [vmem:[#allocation2 + $0xb8] sm:$0xff] %v1010
        %1027 = vst [vmem:[#allocation2 + $0xc0] sm:$0xff] %v1011
        %1028 = vst [vmem:[#allocation2 + $0xc8] sm:$0xff] %v1012
        %1029 = vst [vmem:[#allocation2 + $0xd0] sm:$0xff] %v1013
        %1030 = vst [vmem:[#allocation2 + $0xd8] sm:$0xff] %v1014
        %1031 = vst [vmem:[#allocation2 + $0xe0] sm:$0xff] %v1015
        %1032 = vst [vmem:[#allocation2 + $0xe8] sm:$0xff] %v1016
        %1033 = vst [vmem:[#allocation2 + $0xf0] sm:$0xff] %v1017
        %1034 = vst [vmem:[#allocation2 + $0xf8] sm:$0xff] %v1018
      $region44: #{exit_flow.7} parent=39 // pred_fallthru
        _
      %v1035 = vld [vmem:[#allocation2] sm:$0xff]
      %v1036 = vld [vmem:[#allocation2 + $0x8] sm:$0xff]
      %v1037 = vld [vmem:[#allocation2 + $0x10] sm:$0xff]
      %v1038 = vld [vmem:[#allocation2 + $0x18] sm:$0xff]
      %v1039 = vld [vmem:[#allocation2 + $0x20] sm:$0xff]
      %v1040 = vld [vmem:[#allocation2 + $0x28] sm:$0xff]
      %v1041 = vld [vmem:[#allocation2 + $0x30] sm:$0xff]
      %v1042 = vld [vmem:[#allocation2 + $0x38] sm:$0xff]
      %v1043 = vld [vmem:[#allocation2 + $0x40] sm:$0xff]
      %v1044 = vld [vmem:[#allocation2 + $0x48] sm:$0xff]
      %v1045 = vld [vmem:[#allocation2 + $0x50] sm:$0xff]
      %v1046 = vld [vmem:[#allocation2 + $0x58] sm:$0xff]
      %v1047 = vld [vmem:[#allocation2 + $0x60] sm:$0xff]
      %v1048 = vld [vmem:[#allocation2 + $0x68] sm:$0xff]
      %v1049 = vld [vmem:[#allocation2 + $0x70] sm:$0xff]
      %v1050 = vld [vmem:[#allocation2 + $0x78] sm:$0xff]
      %v1051 = vld [vmem:[#allocation2 + $0x80] sm:$0xff]
      %v1052 = vld [vmem:[#allocation2 + $0x88] sm:$0xff]
      %v1053 = vld [vmem:[#allocation2 + $0x90] sm:$0xff]
      %v1054 = vld [vmem:[#allocation2 + $0x98] sm:$0xff]
      %v1055 = vld [vmem:[#allocation2 + $0xa0] sm:$0xff]
      %v1056 = vld [vmem:[#allocation2 + $0xa8] sm:$0xff]
      %v1057 = vld [vmem:[#allocation2 + $0xb0] sm:$0xff]
      %v1058 = vld [vmem:[#allocation2 + $0xb8] sm:$0xff]
      %v1059 = vld [vmem:[#allocation2 + $0xc0] sm:$0xff]
      %v1060 = vld [vmem:[#allocation2 + $0xc8] sm:$0xff]
      %v1061 = vld [vmem:[#allocation2 + $0xd0] sm:$0xff]
      %v1062 = vld [vmem:[#allocation2 + $0xd8] sm:$0xff]
      %v1063 = vld [vmem:[#allocation2 + $0xe0] sm:$0xff]
      %v1064 = vld [vmem:[#allocation2 + $0xe8] sm:$0xff]
      %v1065 = vld [vmem:[#allocation2 + $0xf0] sm:$0xff]
      %v1066 = vld [vmem:[#allocation2 + $0xf8] sm:$0xff]
      %v1067 = vld [vmem:[%s275] sm:$0xff]
      %v1068 = vld [vmem:[%s275 + $0x8] sm:$0xff]
      %v1069 = vld [vmem:[%s275 + $0x10] sm:$0xff]
      %v1070 = vld [vmem:[%s275 + $0x18] sm:$0xff]
      %v1071 = vld [vmem:[%s275 + $0x20] sm:$0xff]
      %v1072 = vld [vmem:[%s275 + $0x28] sm:$0xff]
      %v1073 = vld [vmem:[%s275 + $0x30] sm:$0xff]
      %v1074 = vld [vmem:[%s275 + $0x38] sm:$0xff]
      %v1075 = vld [vmem:[%s275 + $0x40] sm:$0xff]
      %v1076 = vld [vmem:[%s275 + $0x48] sm:$0xff]
      %v1077 = vld [vmem:[%s275 + $0x50] sm:$0xff]
      %v1078 = vld [vmem:[%s275 + $0x58] sm:$0xff]
      %v1079 = vld [vmem:[%s275 + $0x60] sm:$0xff]
      %v1080 = vld [vmem:[%s275 + $0x68] sm:$0xff]
      %v1081 = vld [vmem:[%s275 + $0x70] sm:$0xff]
      %v1082 = vld [vmem:[%s275 + $0x78] sm:$0xff]
      %1083 = vmatpush.msra.mxu0 %v1082
      %1084 = vmatpush.msra.mxu0 %v1081
      %1085 = vmatpush.msra.mxu0 %v1080
      %1086 = vmatpush.msra.mxu0 %v1079
      %1087 = vmatpush.msra.mxu0 %v1078
      %1088 = vmatpush.msra.mxu0 %v1077
      %1089 = vmatpush.msra.mxu0 %v1076
      %1090 = vmatpush.msra.mxu0 %v1075
      %1091 = vmatpush.msra.mxu0 %v1074
      %1092 = vmatpush.msra.mxu0 %v1073
      %1093 = vmatpush.msra.mxu0 %v1072
      %1094 = vmatpush.msra.mxu0 %v1071
      %1095 = vmatpush.msra.mxu0 %v1070
      %1096 = vmatpush.msra.mxu0 %v1069
      %1097 = vmatpush.msra.mxu0 %v1068
      %1098 = vmatpush.msra.mxu0 %v1067
      %1099 = vmatmul.f32.gmra.mxu0 %v1035
      %v1100 = vpop.f32.mrf.mxu0
      %v1101 = vadd.f32 0.0, %v1100
      %1102 = vmatmul.f32.gmra.mxu0 %v1036
      %v1103 = vpop.f32.mrf.mxu0
      %v1104 = vadd.f32 0.0, %v1103
      %1105 = vmatmul.f32.gmra.mxu0 %v1037
      %v1106 = vpop.f32.mrf.mxu0
      %v1107 = vadd.f32 0.0, %v1106
      %1108 = vmatmul.f32.gmra.mxu0 %v1038
      %v1109 = vpop.f32.mrf.mxu0
      %v1110 = vadd.f32 0.0, %v1109
      %1111 = vmatmul.f32.gmra.mxu0 %v1039
      %v1112 = vpop.f32.mrf.mxu0
      %v1113 = vadd.f32 0.0, %v1112
      %1114 = vmatmul.f32.gmra.mxu0 %v1040
      %v1115 = vpop.f32.mrf.mxu0
      %v1116 = vadd.f32 0.0, %v1115
      %1117 = vmatmul.f32.gmra.mxu0 %v1041
      %v1118 = vpop.f32.mrf.mxu0
      %v1119 = vadd.f32 0.0, %v1118
      %1120 = vmatmul.f32.gmra.mxu0 %v1042
      %v1121 = vpop.f32.mrf.mxu0
      %v1122 = vadd.f32 0.0, %v1121
      %1123 = vmatmul.f32.gmra.mxu0 %v1043
      %v1124 = vpop.f32.mrf.mxu0
      %v1125 = vadd.f32 0.0, %v1124
      %1126 = vmatmul.f32.gmra.mxu0 %v1044
      %v1127 = vpop.f32.mrf.mxu0
      %v1128 = vadd.f32 0.0, %v1127
      %1129 = vmatmul.f32.gmra.mxu0 %v1045
      %v1130 = vpop.f32.mrf.mxu0
      %v1131 = vadd.f32 0.0, %v1130
      %1132 = vmatmul.f32.gmra.mxu0 %v1046
      %v1133 = vpop.f32.mrf.mxu0
      %v1134 = vadd.f32 0.0, %v1133
      %1135 = vmatmul.f32.gmra.mxu0 %v1047
      %v1136 = vpop.f32.mrf.mxu0
      %v1137 = vadd.f32 0.0, %v1136
      %1138 = vmatmul.f32.gmra.mxu0 %v1048
      %v1139 = vpop.f32.mrf.mxu0
      %v1140 = vadd.f32 0.0, %v1139
      %1141 = vmatmul.f32.gmra.mxu0 %v1049
      %v1142 = vpop.f32.mrf.mxu0
      %v1143 = vadd.f32 0.0, %v1142
      %1144 = vmatmul.f32.gmra.mxu0 %v1050
      %v1145 = vpop.f32.mrf.mxu0
      %v1146 = vadd.f32 0.0, %v1145
      %1147 = vmatmul.f32.gmra.mxu0 %v1051
      %v1148 = vpop.f32.mrf.mxu0
      %v1149 = vadd.f32 0.0, %v1148
      %1150 = vmatmul.f32.gmra.mxu0 %v1052
      %v1151 = vpop.f32.mrf.mxu0
      %v1152 = vadd.f32 0.0, %v1151
      %1153 = vmatmul.f32.gmra.mxu0 %v1053
      %v1154 = vpop.f32.mrf.mxu0
      %v1155 = vadd.f32 0.0, %v1154
      %1156 = vmatmul.f32.gmra.mxu0 %v1054
      %v1157 = vpop.f32.mrf.mxu0
      %v1158 = vadd.f32 0.0, %v1157
      %1159 = vmatmul.f32.gmra.mxu0 %v1055
      %v1160 = vpop.f32.mrf.mxu0
      %v1161 = vadd.f32 0.0, %v1160
      %1162 = vmatmul.f32.gmra.mxu0 %v1056
      %v1163 = vpop.f32.mrf.mxu0
      %v1164 = vadd.f32 0.0, %v1163
      %1165 = vmatmul.f32.gmra.mxu0 %v1057
      %v1166 = vpop.f32.mrf.mxu0
      %v1167 = vadd.f32 0.0, %v1166
      %1168 = vmatmul.f32.gmra.mxu0 %v1058
      %v1169 = vpop.f32.mrf.mxu0
      %v1170 = vadd.f32 0.0, %v1169
      %1171 = vmatmul.f32.gmra.mxu0 %v1059
      %v1172 = vpop.f32.mrf.mxu0
      %v1173 = vadd.f32 0.0, %v1172
      %1174 = vmatmul.f32.gmra.mxu0 %v1060
      %v1175 = vpop.f32.mrf.mxu0
      %v1176 = vadd.f32 0.0, %v1175
      %1177 = vmatmul.f32.gmra.mxu0 %v1061
      %v1178 = vpop.f32.mrf.mxu0
      %v1179 = vadd.f32 0.0, %v1178
      %1180 = vmatmul.f32.gmra.mxu0 %v1062
      %v1181 = vpop.f32.mrf.mxu0
      %v1182 = vadd.f32 0.0, %v1181
      %1183 = vmatmul.f32.gmra.mxu0 %v1063
      %v1184 = vpop.f32.mrf.mxu0
      %v1185 = vadd.f32 0.0, %v1184
      %1186 = vmatmul.f32.gmra.mxu0 %v1064
      %v1187 = vpop.f32.mrf.mxu0
      %v1188 = vadd.f32 0.0, %v1187
      %1189 = vmatmul.f32.gmra.mxu0 %v1065
      %v1190 = vpop.f32.mrf.mxu0
      %v1191 = vadd.f32 0.0, %v1190
      %1192 = vmatmul.f32.gmra.mxu0 %v1066
      %v1193 = vpop.f32.mrf.mxu0
      %v1194 = vadd.f32 0.0, %v1193
      %1195 = vdwg.mxu0
      %v1196 = vld [vmem:[%s278] sm:$0x1]
      %v1198 = vperm.slane %v1196, 0
      %v1200 = vmul.f32 %v1101, %v1198
      %v1201 = vmul.f32 %v1104, %v1198
      %v1202 = vmul.f32 %v1107, %v1198
      %v1203 = vmul.f32 %v1110, %v1198
      %v1204 = vmul.f32 %v1113, %v1198
      %v1205 = vmul.f32 %v1116, %v1198
      %v1206 = vmul.f32 %v1119, %v1198
      %v1207 = vmul.f32 %v1122, %v1198
      %v1208 = vmul.f32 %v1125, %v1198
      %v1209 = vmul.f32 %v1128, %v1198
      %v1210 = vmul.f32 %v1131, %v1198
      %v1211 = vmul.f32 %v1134, %v1198
      %v1212 = vmul.f32 %v1137, %v1198
      %v1213 = vmul.f32 %v1140, %v1198
      %v1214 = vmul.f32 %v1143, %v1198
      %v1215 = vmul.f32 %v1146, %v1198
      %v1216 = vmul.f32 %v1149, %v1198
      %v1217 = vmul.f32 %v1152, %v1198
      %v1218 = vmul.f32 %v1155, %v1198
      %v1219 = vmul.f32 %v1158, %v1198
      %v1220 = vmul.f32 %v1161, %v1198
      %v1221 = vmul.f32 %v1164, %v1198
      %v1222 = vmul.f32 %v1167, %v1198
      %v1223 = vmul.f32 %v1170, %v1198
      %v1224 = vmul.f32 %v1173, %v1198
      %v1225 = vmul.f32 %v1176, %v1198
      %v1226 = vmul.f32 %v1179, %v1198
      %v1227 = vmul.f32 %v1182, %v1198
      %v1228 = vmul.f32 %v1185, %v1198
      %v1229 = vmul.f32 %v1188, %v1198
      %v1230 = vmul.f32 %v1191, %v1198
      %v1231 = vmul.f32 %v1194, %v1198
      %v1232 = vld [vmem:[%s281] sm:$0x1]
      %v1234 = vperm.slane %v1232, 0
      %v1236 = vadd.f32 %v1200, %v1234
      %v1237 = vadd.f32 %v1201, %v1234
      %v1238 = vadd.f32 %v1202, %v1234
      %v1239 = vadd.f32 %v1203, %v1234
      %v1240 = vadd.f32 %v1204, %v1234
      %v1241 = vadd.f32 %v1205, %v1234
      %v1242 = vadd.f32 %v1206, %v1234
      %v1243 = vadd.f32 %v1207, %v1234
      %v1244 = vadd.f32 %v1208, %v1234
      %v1245 = vadd.f32 %v1209, %v1234
      %v1246 = vadd.f32 %v1210, %v1234
      %v1247 = vadd.f32 %v1211, %v1234
      %v1248 = vadd.f32 %v1212, %v1234
      %v1249 = vadd.f32 %v1213, %v1234
      %v1250 = vadd.f32 %v1214, %v1234
      %v1251 = vadd.f32 %v1215, %v1234
      %v1252 = vadd.f32 %v1216, %v1234
      %v1253 = vadd.f32 %v1217, %v1234
      %v1254 = vadd.f32 %v1218, %v1234
      %v1255 = vadd.f32 %v1219, %v1234
      %v1256 = vadd.f32 %v1220, %v1234
      %v1257 = vadd.f32 %v1221, %v1234
      %v1258 = vadd.f32 %v1222, %v1234
      %v1259 = vadd.f32 %v1223, %v1234
      %v1260 = vadd.f32 %v1224, %v1234
      %v1261 = vadd.f32 %v1225, %v1234
      %v1262 = vadd.f32 %v1226, %v1234
      %v1263 = vadd.f32 %v1227, %v1234
      %v1264 = vadd.f32 %v1228, %v1234
      %v1265 = vadd.f32 %v1229, %v1234
      %v1266 = vadd.f32 %v1230, %v1234
      %v1267 = vadd.f32 %v1231, %v1234
      %1268 = vst [vmem:[%s289] sm:$0xff] %v1236
      %1269 = vst [vmem:[%s289 + $0x8] sm:$0xff] %v1237
      %1270 = vst [vmem:[%s289 + $0x10] sm:$0xff] %v1238
      %1271 = vst [vmem:[%s289 + $0x18] sm:$0xff] %v1239
      %1272 = vst [vmem:[%s289 + $0x20] sm:$0xff] %v1240
      %1273 = vst [vmem:[%s289 + $0x28] sm:$0xff] %v1241
      %1274 = vst [vmem:[%s289 + $0x30] sm:$0xff] %v1242
      %1275 = vst [vmem:[%s289 + $0x38] sm:$0xff] %v1243
      %1276 = vst [vmem:[%s289 + $0x40] sm:$0xff] %v1244
      %1277 = vst [vmem:[%s289 + $0x48] sm:$0xff] %v1245
      %1278 = vst [vmem:[%s289 + $0x50] sm:$0xff] %v1246
      %1279 = vst [vmem:[%s289 + $0x58] sm:$0xff] %v1247
      %1280 = vst [vmem:[%s289 + $0x60] sm:$0xff] %v1248
      %1281 = vst [vmem:[%s289 + $0x68] sm:$0xff] %v1249
      %1282 = vst [vmem:[%s289 + $0x70] sm:$0xff] %v1250
      %1283 = vst [vmem:[%s289 + $0x78] sm:$0xff] %v1251
      %1284 = vst [vmem:[%s289 + $0x80] sm:$0xff] %v1252
      %1285 = vst [vmem:[%s289 + $0x88] sm:$0xff] %v1253
      %1286 = vst [vmem:[%s289 + $0x90] sm:$0xff] %v1254
      %1287 = vst [vmem:[%s289 + $0x98] sm:$0xff] %v1255
      %1288 = vst [vmem:[%s289 + $0xa0] sm:$0xff] %v1256
      %1289 = vst [vmem:[%s289 + $0xa8] sm:$0xff] %v1257
      %1290 = vst [vmem:[%s289 + $0xb0] sm:$0xff] %v1258
      %1291 = vst [vmem:[%s289 + $0xb8] sm:$0xff] %v1259
      %1292 = vst [vmem:[%s289 + $0xc0] sm:$0xff] %v1260
      %1293 = vst [vmem:[%s289 + $0xc8] sm:$0xff] %v1261
      %1294 = vst [vmem:[%s289 + $0xd0] sm:$0xff] %v1262
      %1295 = vst [vmem:[%s289 + $0xd8] sm:$0xff] %v1263
      %1296 = vst [vmem:[%s289 + $0xe0] sm:$0xff] %v1264
      %1297 = vst [vmem:[%s289 + $0xe8] sm:$0xff] %v1265
      %1298 = vst [vmem:[%s289 + $0xf0] sm:$0xff] %v1266
      %1299 = vst [vmem:[%s289 + $0xf8] sm:$0xff] %v1267
      %p1300 = scmp.lt.s32.totalorder %s20, 1
      %s1301 = scalar_select %p1300, %s20, 1
      %p1302 = scmp.lt.s32.totalorder %s21, 0
      %s1303 = scalar_select %p1302, %s21, 0
      %s1304 = smul.addr %s1301, 32
      %s1305 = sadd.s32 %s1303, %s1304
      %s1306 = smul.addr %s1305, 8
      %s1307 = scalar_lea.vmem %s5, %s1306
      // Predicated region
      $region45: #{exit_flow.7} parent=39 // pred_check
        %p1308 = pneg %p173
      $region46: #{exit_flow.7} parent=39 // pred_check_branch
        %1310 = sbr.rel (%p1308) target = $region48
      $region47: #{exit_flow.7} parent=39 // pred_region
        _
      $region48: #{exit_flow.7} parent=39 // pred_fallthru
        _
    $region40: #{exit_flow.7} parent=5 // pred_fallthru
      _
    %p1311 = scmp.le.s32.totalorder 2, %s11
    // Predicated region
    $region49: #{exit_flow.7} parent=5 // pred_check
      %p1312 = pneg %p1311
    $region50: #{exit_flow.7} parent=5 // pred_check_branch
      %1314 = sbr.rel (%p1312) target = $region52
    $region51: #{exit_flow.7} parent=5 // pred_region
      %s1315 = ssub.s32 %s11, 2
      // Predicated region
      $region53: #{exit_flow.7} parent=51 // pred_check
        %p1316 = pneg %p179
      $region54: #{exit_flow.7} parent=51 // pred_check_branch
        %1318 = sbr.rel (%p1316) target = $region56
      $region55: #{exit_flow.7} parent=51 // pred_region
        %p1319 = scmp.lt.s32.totalorder %s22, 1
        %s1320 = scalar_select %p1319, %s22, 1
        %p1321 = scmp.lt.s32.totalorder %s23, 0
        %s1322 = scalar_select %p1321, %s23, 0
        %s1323 = smul.addr %s1320, 32
        %s1324 = sadd.s32 %s1322, %s1323
        %s1325 = smul.addr %s1324, 8
        %s1326 = scalar_lea.vmem %s5, %s1325
      $region56: #{exit_flow.7} parent=51 // pred_fallthru
        _
    $region52: #{exit_flow.7} parent=5 // pred_fallthru
      _
  $region6: #{exit_flow.7} parent=0 // loop_footer
    %s15 = sadd.s32 1, %s11
  $region7: #{exit_flow.7} parent=0 // loop_footer_branch
    %10 = sbr.rel target = $region3
  $region8: #{exit_flow.7} parent=0 // loop_exit
    _

// kernel: exit_flow.6
$region0: #{exit_flow.6}
  #allocation0 [shape = 'u32[]', space=smem, size = 0x4, offset = 0x4, fixed_abs, tag = 'smem constant byte address 0x4 - core index']
  #allocation1 [shape = 'u32[72,128]{1,0:T(1,128)}', space=vmem, size = 0x9000, scoped, tag = 'internal scratch']
  #allocation2 [shape = 'f32[256,128]{1,0:T(8,128)}', space=vmem, size = 0x20000, scoped, tag = 'scratch operand']
  %s0 = inlined_call_operand.vmem [shape: f32[2,18,18,128], index: 0, kind: input, shape index: {}]
  %s1 = inlined_call_operand.vmem [shape: f32[3,3,128], index: 1, kind: input, shape index: {}]
  %s2 = inlined_call_operand.vmem [shape: f32[128,128], index: 2, kind: input, shape index: {}]
  %s3 = inlined_call_operand.vmem [shape: f32[1,128], index: 3, kind: input, shape index: {}]
  %s4 = inlined_call_operand.vmem [shape: f32[1,128], index: 4, kind: input, shape index: {}]
  %s5 = inlined_call_operand.vmem [shape: f32[2,256,128], index: 5, kind: output, shape index: {}]
  %s6 = sld [smem:[#allocation0]]
  $region57: #{exit_flow.6} parent=0
    _
  %s8 = ssub.s32 1, %s6
  %s9 = scalar_select 0, %s8, %s6
  loop: start=0, step=1, limit=4
  $region2: #{exit_flow.6} parent=0 // loop_pre_header
    _
  $region3: #{exit_flow.6} parent=0 // loop_header
    %s11 = sphi 0, %s15
    %p12 = scmp.ge.s32.totalorder %s11, 4
    %s18 = sphi 0, %s30
    %s19 = sphi 0, %s26
    %s20 = sphi 0, %s18
    %s21 = sphi 0, %s19
    %s22 = sphi 0, %s20
    %s23 = sphi 0, %s21
    %s33 = sphi 0, %s35
    %s36 = sphi 0, %s33
    %s37 = sphi 0, %s36
    %s53 = sphi 0, %s37
    %s57 = sphi 0, %s57
    %s59 = sphi 0, %s57
    %s60 = sphi 0, %s59
    %s74 = sphi 0, %s60
    %s80 = sphi 0, %s82
    %s83 = sphi 0, %s80
    %s84 = sphi 0, %s83
    %s100 = sphi 0, %s84
    %s106 = sphi 0, %s108
    %s109 = sphi 0, %s106
    %s110 = sphi 0, %s109
    %s126 = sphi 0, %s110
    %s132 = sphi 0, %s134
    %s135 = sphi 0, %s132
    %s136 = sphi 0, %s135
    %s152 = sphi 0, %s136
    %s160 = sphi 0, %s162
    %s163 = sphi 0, %s160
    %s164 = sphi 0, %s163
    %s180 = sphi 0, %s164
  $region4: #{exit_flow.6} parent=0 // loop_header_branch
    %14 = sbr.rel (%p12) target = $region8
  $region5: #{exit_flow.6} parent=0 // loop_body
    %s16 = ssub.s32 %s11, 1
    %s17 = ssub.s32 %s11, 2
    %s24 = sadd.s32 1, %s19
    %p25 = scmp.ge.s32.totalorder %s24, 1
    %s26 = scalar_select %p25, 0, %s24
    %s27 = sadd.s32 1, %s18
    %s28 = scalar_select %p25, %s27, %s18
    %p29 = scmp.ge.s32.totalorder %s28, 2
    %s30 = scalar_select %p29, 0, %s28
    %s31 = ssub.s32 %s18, %s30
    %p32 = scmp.eq.s32.totalorder %s31, 0
    %s34 = sadd.s32 %s33, 1
    %s35 = scalar_select %p32, %s33, %s34
    %p38 = pneg %p32
    %p39 = scmp.eq.s32.totalorder %s11, 1
    %p40 = por %p38, %p39
    %p41 = scmp.ne.s32.totalorder %s33, %s36
    %p42 = scmp.eq.s32.totalorder %s11, 0
    %p43 = por %p41, %p42
    %p44 = scmp.ne.s32.totalorder %s33, %s36
    %p45 = scmp.eq.s32.totalorder %s16, 1
    %p46 = por %p44, %p45
    %p47 = scmp.ne.s32.totalorder %s36, %s37
    %p48 = scmp.eq.s32.totalorder %s16, 0
    %p49 = por %p47, %p48
    %p50 = scmp.ne.s32.totalorder %s36, %s37
    %p51 = scmp.eq.s32.totalorder %s17, 1
    %p52 = por %p50, %p51
    %p54 = scmp.ne.s32.totalorder %s37, %s53
    %p55 = scmp.eq.s32.totalorder %s17, 0
    %p56 = por %p54, %p55
    %s58 = sadd.s32 %s57, 1
    %p61 = scmp.eq.s32.totalorder %s11, 1
    %p62 = scmp.ne.s32.totalorder %s57, %s59
    %p63 = scmp.eq.s32.totalorder %s11, 0
    %p64 = por %p62, %p63
    %p65 = scmp.ne.s32.totalorder %s57, %s59
    %p66 = scmp.eq.s32.totalorder %s16, 1
    %p67 = por %p65, %p66
    %p68 = scmp.ne.s32.totalorder %s59, %s60
    %p69 = scmp.eq.s32.totalorder %s16, 0
    %p70 = por %p68, %p69
    %p71 = scmp.ne.s32.totalorder %s59, %s60
    %p72 = scmp.eq.s32.totalorder %s17, 1
    %p73 = por %p71, %p72
    %p75 = scmp.ne.s32.totalorder %s60, %s74
    %p76 = scmp.eq.s32.totalorder %s17, 0
    %p77 = por %p75, %p76
    %s78 = ssub.s32 %s19, %s26
    %p79 = scmp.eq.s32.totalorder %s78, 0
    %s81 = sadd.s32 %s80, 1
    %s82 = scalar_select %p79, %s80, %s81
    %p85 = pneg %p79
    %p86 = scmp.eq.s32.totalorder %s11, 1
    %p87 = por %p85, %p86
    %p88 = scmp.ne.s32.totalorder %s80, %s83
    %p89 = scmp.eq.s32.totalorder %s11, 0
    %p90 = por %p88, %p89
    %p91 = scmp.ne.s32.totalorder %s80, %s83
    %p92 = scmp.eq.s32.totalorder %s16, 1
    %p93 = por %p91, %p92
    %p94 = scmp.ne.s32.totalorder %s83, %s84
    %p95 = scmp.eq.s32.totalorder %s16, 0
    %p96 = por %p94, %p95
    %p97 = scmp.ne.s32.totalorder %s83, %s84
    %p98 = scmp.eq.s32.totalorder %s17, 1
    %p99 = por %p97, %p98
    %p101 = scmp.ne.s32.totalorder %s84, %s100
    %p102 = scmp.eq.s32.totalorder %s17, 0
    %p103 = por %p101, %p102
    %s104 = ssub.s32 %s19, %s26
    %p105 = scmp.eq.s32.totalorder %s104, 0
    %s107 = sadd.s32 %s106, 1
    %s108 = scalar_select %p105, %s106, %s107
    %p111 = pneg %p105
    %p112 = scmp.eq.s32.totalorder %s11, 1
    %p113 = por %p111, %p112
    %p114 = scmp.ne.s32.totalorder %s106, %s109
    %p115 = scmp.eq.s32.totalorder %s11, 0
    %p116 = por %p114, %p115
    %p117 = scmp.ne.s32.totalorder %s106, %s109
    %p118 = scmp.eq.s32.totalorder %s16, 1
    %p119 = por %p117, %p118
    %p120 = scmp.ne.s32.totalorder %s109, %s110
    %p121 = scmp.eq.s32.totalorder %s16, 0
    %p122 = por %p120, %p121
    %p123 = scmp.ne.s32.totalorder %s109, %s110
    %p124 = scmp.eq.s32.totalorder %s17, 1
    %p125 = por %p123, %p124
    %p127 = scmp.ne.s32.totalorder %s110, %s126
    %p128 = scmp.eq.s32.totalorder %s17, 0
    %p129 = por %p127, %p128
    %s130 = ssub.s32 %s19, %s26
    %p131 = scmp.eq.s32.totalorder %s130, 0
    %s133 = sadd.s32 %s132, 1
    %s134 = scalar_select %p131, %s132, %s133
    %p137 = pneg %p131
    %p138 = scmp.eq.s32.totalorder %s11, 1
    %p139 = por %p137, %p138
    %p140 = scmp.ne.s32.totalorder %s132, %s135
    %p141 = scmp.eq.s32.totalorder %s11, 0
    %p142 = por %p140, %p141
    %p143 = scmp.ne.s32.totalorder %s132, %s135
    %p144 = scmp.eq.s32.totalorder %s16, 1
    %p145 = por %p143, %p144
    %p146 = scmp.ne.s32.totalorder %s135, %s136
    %p147 = scmp.eq.s32.totalorder %s16, 0
    %p148 = por %p146, %p147
    %p149 = scmp.ne.s32.totalorder %s135, %s136
    %p150 = scmp.eq.s32.totalorder %s17, 1
    %p151 = por %p149, %p150
    %p153 = scmp.ne.s32.totalorder %s136, %s152
    %p154 = scmp.eq.s32.totalorder %s17, 0
    %p155 = por %p153, %p154
    %s156 = ssub.s32 %s18, %s30
    %s157 = ssub.s32 %s19, %s26
    %s158 = sor.u32 %s156, %s157
    %p159 = scmp.eq.s32.totalorder %s158, 0
    %s161 = sadd.s32 %s160, 1
    %s162 = scalar_select %p159, %s160, %s161
    %p165 = pneg %p159
    %p166 = scmp.eq.s32.totalorder %s11, 1
    %p167 = por %p165, %p166
    %p168 = scmp.ne.s32.totalorder %s160, %s163
    %p169 = scmp.eq.s32.totalorder %s11, 0
    %p170 = por %p168, %p169
    %p171 = scmp.ne.s32.totalorder %s160, %s163
    %p172 = scmp.eq.s32.totalorder %s16, 1
    %p173 = por %p171, %p172
    %p174 = scmp.ne.s32.totalorder %s163, %s164
    %p175 = scmp.eq.s32.totalorder %s16, 0
    %p176 = por %p174, %p175
    %p177 = scmp.ne.s32.totalorder %s163, %s164
    %p178 = scmp.eq.s32.totalorder %s17, 1
    %p179 = por %p177, %p178
    %p181 = scmp.ne.s32.totalorder %s164, %s180
    %p182 = scmp.eq.s32.totalorder %s17, 0
    %p183 = por %p181, %p182
    %p184 = scmp.le.s32.totalorder 1, %s11
    %p185 = scmp.lt.s32.totalorder %s11, 3
    %p186 = pnand %p184, %p185
    %p187 = pneg %p186
    // Predicated region
    $region9: #{exit_flow.6} parent=5 // pred_check
      _
    $region10: #{exit_flow.6} parent=5 // pred_check_branch
      %189 = sbr.rel (%p186) target = $region12
    $region11: #{exit_flow.6} parent=5 // pred_region
      %s190 = ssub.s32 %s11, 1
      // Predicated region
      $region13: #{exit_flow.6} parent=11 // pred_check
        %p191 = pneg %p70
      $region14: #{exit_flow.6} parent=11 // pred_check_branch
        %193 = sbr.rel (%p191) target = $region16
      $region15: #{exit_flow.6} parent=11 // pred_region
        _
      $region16: #{exit_flow.6} parent=11 // pred_fallthru
        _
      // Predicated region
      $region17: #{exit_flow.6} parent=11 // pred_check
        %p194 = pneg %p96
      $region18: #{exit_flow.6} parent=11 // pred_check_branch
        %196 = sbr.rel (%p194) target = $region20
      $region19: #{exit_flow.6} parent=11 // pred_region
        %p197 = scmp.lt.s32.totalorder %s21, 0
        %s198 = scalar_select %p197, %s21, 0
        %s199 = smul.addr %s198, 8
        %s200 = scalar_lea.vmem %s2, %s199
      $region20: #{exit_flow.6} parent=11 // pred_fallthru
        _
      // Predicated region
      $region21: #{exit_flow.6} parent=11 // pred_check
        %p201 = pneg %p122
      $region22: #{exit_flow.6} parent=11 // pred_check_branch
        %203 = sbr.rel (%p201) target = $region24
      $region23: #{exit_flow.6} parent=11 // pred_region
        %p204 = scmp.lt.s32.totalorder %s21, 0
        %s205 = scalar_select %p204, %s21, 0
        %s206 = scalar_lea.vmem %s3, %s205
      $region24: #{exit_flow.6} parent=11 // pred_fallthru
        _
      // Predicated region
      $region25: #{exit_flow.6} parent=11 // pred_check
        %p207 = pneg %p148
      $region26: #{exit_flow.6} parent=11 // pred_check_branch
        %209 = sbr.rel (%p207) target = $region28
      $region27: #{exit_flow.6} parent=11 // pred_region
        %p210 = scmp.lt.s32.totalorder %s21, 0
        %s211 = scalar_select %p210, %s21, 0
        %s212 = scalar_lea.vmem %s4, %s211
      $region28: #{exit_flow.6} parent=11 // pred_fallthru
        _
    $region12: #{exit_flow.6} parent=5 // pred_fallthru
      _
    %p213 = scmp.lt.s32.totalorder %s11, 2
    // Predicated region
    $region29: #{exit_flow.6} parent=5 // pred_check
      %p214 = pneg %p213
    $region30: #{exit_flow.6} parent=5 // pred_check_branch
      %216 = sbr.rel (%p214) target = $region32
    $region31: #{exit_flow.6} parent=5 // pred_region
      // Predicated region
      $region33: #{exit_flow.6} parent=31 // pred_check
        %p217 = pneg %p43
      $region34: #{exit_flow.6} parent=31 // pred_check_branch
        %219 = sbr.rel (%p217) target = $region36
      $region35: #{exit_flow.6} parent=31 // pred_region
        %p220 = scmp.lt.s32.totalorder %s18, 1
        %s221 = scalar_select %p220, %s18, 1
        %s222 = smul.addr %s221, 54
        %s223 = smul.addr %s222, 8
        %s224 = scalar_lea.vmem %s0, %s223
      $region36: #{exit_flow.6} parent=31 // pred_fallthru
        _
    $region32: #{exit_flow.6} parent=5 // pred_fallthru
      _
    %p225 = scmp.le.s32.totalorder 1, %s11
    %p226 = scmp.lt.s32.totalorder %s11, 3
    %p227 = pnand %p225, %p226
    %p228 = pneg %p227
    // Predicated region
    $region37: #{exit_flow.6} parent=5 // pred_check
      _
    $region38: #{exit_flow.6} parent=5 // pred_check_branch
      %230 = sbr.rel (%p227) target = $region40
    $region39: #{exit_flow.6} parent=5 // pred_region
      %s231 = ssub.s32 %s11, 1
      %p232 = scmp.lt.s32.totalorder %s20, 1
      %s233 = scalar_select %p232, %s20, 1
      %s234 = smul.addr %s233, 54
      %s235 = smul.addr %s234, 8
      %s236 = scalar_lea.vmem %s0, %s235
      %p237 = pneg %p49
      %p238 = pneg %p46
      %p239 = pneg %p70
      %p240 = pneg %p67
      %p241 = scmp.lt.s32.totalorder %s21, 0
      %s242 = scalar_select %p241, %s21, 0
      %s243 = smul.addr %s242, 8
      %s244 = scalar_lea.vmem %s2, %s243
      %p245 = pneg %p96
      %p246 = pneg %p93
      %p247 = scmp.lt.s32.totalorder %s21, 0
      %s248 = scalar_select %p247, %s21, 0
      %s249 = scalar_lea.vmem %s3, %s248
      %p250 = pneg %p122
      %p251 = pneg %p119
      %p252 = scmp.lt.s32.totalorder %s21, 0
      %s253 = scalar_select %p252, %s21, 0
      %s254 = scalar_lea.vmem %s4, %s253
      %p255 = pneg %p148
      %p256 = pneg %p145
      %p257 = pneg %p176
      %p258 = pneg %p173
      %p259 = scmp.lt.s32.totalorder %s20, 1
      %s260 = scalar_select %p259, %s20, 1
      %p261 = scmp.lt.s32.totalorder %s21, 0
      %s262 = scalar_select %p261, %s21, 0
      %s263 = smul.addr %s260, 32
      %s264 = sadd.s32 %s262, %s263
      %s265 = smul.addr %s264, 8
      %s266 = scalar_lea.vmem %s5, %s265
      %p267 = scmp.lt.s32.totalorder %s20, 1
      %s268 = scalar_select %p267, %s20, 1
      %s269 = smul.addr %s268, 54
      %s270 = smul.addr %s269, 8
      %s271 = scalar_lea.vmem %s0, %s270
      %p272 = scmp.lt.s32.totalorder %s21, 0
      %s273 = scalar_select %p272, %s21, 0
      %s274 = smul.addr %s273, 8
      %s275 = scalar_lea.vmem %s2, %s274
      %p276 = scmp.lt.s32.totalorder %s21, 0
      %s277 = scalar_select %p276, %s21, 0
      %s278 = scalar_lea.vmem %s3, %s277
      %p279 = scmp.lt.s32.totalorder %s21, 0
      %s280 = scalar_select %p279, %s21, 0
      %s281 = scalar_lea.vmem %s4, %s280
      %p282 = scmp.lt.s32.totalorder %s20, 1
      %s283 = scalar_select %p282, %s20, 1
      %p284 = scmp.lt.s32.totalorder %s21, 0
      %s285 = scalar_select %p284, %s21, 0
      %s286 = smul.addr %s283, 32
      %s287 = sadd.s32 %s285, %s286
      %s288 = smul.addr %s287, 8
      %s289 = scalar_lea.vmem %s5, %s288
      %p290 = scmp.eq.s32.totalorder %s21, 0
      // Predicated region
      $region41: #{exit_flow.6} parent=39 // pred_check
        %p291 = pneg %p290
      $region42: #{exit_flow.6} parent=39 // pred_check_branch
        %293 = sbr.rel (%p291) target = $region44
      $region43: #{exit_flow.6} parent=39 // pred_region
        %v294 = vld [vmem:[%s1] sm:$0x7]
        %v295 = vld [vmem:[%s1 + $0x4] sm:$0x7]
        %v296 = vld [vmem:[%s1 + $0x8] sm:$0x7]
        %v297 = vld [vmem:[%s271] sm:$0xff]
        %v298 = vld [vmem:[%s271 + $0x8] sm:$0xff]
        %v299 = vld [vmem:[%s271 + $0x18] sm:$0xff]
        %v300 = vld [vmem:[%s271 + $0x20] sm:$0xff]
        %v301 = vld [vmem:[%s271 + $0x30] sm:$0xff]
        %v302 = vld [vmem:[%s271 + $0x38] sm:$0xff]
        %v303 = vld [vmem:[%s271 + $0x48] sm:$0xff]
        %v304 = vld [vmem:[%s271 + $0x50] sm:$0xff]
        %v305 = vld [vmem:[%s271 + $0x60] sm:$0xff]
        %v306 = vld [vmem:[%s271 + $0x68] sm:$0xff]
        %v307 = vld [vmem:[%s271 + $0x78] sm:$0xff]
        %v308 = vld [vmem:[%s271 + $0x80] sm:$0xff]
        %v309 = vld [vmem:[%s271 + $0x90] sm:$0xff]
        %v310 = vld [vmem:[%s271 + $0x98] sm:$0xff]
        %v311 = vld [vmem:[%s271 + $0xa8] sm:$0xff]
        %v312 = vld [vmem:[%s271 + $0xb0] sm:$0xff]
        %v313 = vld [vmem:[%s271 + $0xc0] sm:$0xff]
        %v314 = vld [vmem:[%s271 + $0xc8] sm:$0xff]
        %v315 = vld [vmem:[%s271 + $0xd8] sm:$0xff]
        %v316 = vld [vmem:[%s271 + $0xe0] sm:$0xff]
        %v317 = vmax.f32 %v297, 0.0
        %v318 = vmax.f32 %v298, 0.0
        %v319 = vmax.f32 %v299, 0.0
        %v320 = vmax.f32 %v300, 0.0
        %v321 = vmax.f32 %v301, 0.0
        %v322 = vmax.f32 %v302, 0.0
        %v323 = vmax.f32 %v303, 0.0
        %v324 = vmax.f32 %v304, 0.0
        %v325 = vmax.f32 %v305, 0.0
        %v326 = vmax.f32 %v306, 0.0
        %v327 = vmax.f32 %v307, 0.0
        %v328 = vmax.f32 %v308, 0.0
        %v329 = vmax.f32 %v309, 0.0
        %v330 = vmax.f32 %v310, 0.0
        %v331 = vmax.f32 %v311, 0.0
        %v332 = vmax.f32 %v312, 0.0
        %v333 = vmax.f32 %v313, 0.0
        %v334 = vmax.f32 %v314, 0.0
        %v335 = vmax.f32 %v315, 0.0
        %v336 = vmax.f32 %v316, 0.0
        %v337 = vperm.slane %v294, 0
        %v338 = vmul.f32 %v317, %v337
        %v339 = vmul.f32 %v318, %v337
        %v340 = vmul.f32 %v319, %v337
        %v341 = vmul.f32 %v320, %v337
        %v342 = vmul.f32 %v321, %v337
        %v343 = vmul.f32 %v322, %v337
        %v344 = vmul.f32 %v323, %v337
        %v345 = vmul.f32 %v324, %v337
        %v346 = vmul.f32 %v325, %v337
        %v347 = vmul.f32 %v326, %v337
        %v348 = vmul.f32 %v327, %v337
        %v349 = vmul.f32 %v328, %v337
        %v350 = vmul.f32 %v329, %v337
        %v351 = vmul.f32 %v330, %v337
        %v352 = vmul.f32 %v331, %v337
        %v353 = vmul.f32 %v332, %v337
        %v354 = vadd.f32 %v338, 0.0
        %v355 = vadd.f32 %v339, 0.0
        %v356 = vadd.f32 %v340, 0.0
        %v357 = vadd.f32 %v341, 0.0
        %v358 = vadd.f32 %v342, 0.0
        %v359 = vadd.f32 %v343, 0.0
        %v360 = vadd.f32 %v344, 0.0
        %v361 = vadd.f32 %v345, 0.0
        %v362 = vadd.f32 %v346, 0.0
        %v363 = vadd.f32 %v347, 0.0
        %v364 = vadd.f32 %v348, 0.0
        %v365 = vadd.f32 %v349, 0.0
        %v366 = vadd.f32 %v350, 0.0
        %v367 = vadd.f32 %v351, 0.0
        %v368 = vadd.f32 %v352, 0.0
        %v369 = vadd.f32 %v353, 0.0
        %v370 = vperm.slane %v295, 0
        %v371 = vmul.f32 %v319, %v370
        %v372 = vmul.f32 %v320, %v370
        %v373 = vmul.f32 %v321, %v370
        %v374 = vmul.f32 %v322, %v370
        %v375 = vmul.f32 %v323, %v370
        %v376 = vmul.f32 %v324, %v370
        %v377 = vmul.f32 %v325, %v370
        %v378 = vmul.f32 %v326, %v370
        %v379 = vmul.f32 %v327, %v370
        %v380 = vmul.f32 %v328, %v370
        %v381 = vmul.f32 %v329, %v370
        %v382 = vmul.f32 %v330, %v370
        %v383 = vmul.f32 %v331, %v370
        %v384 = vmul.f32 %v332, %v370
        %v385 = vmul.f32 %v333, %v370
        %v386 = vmul.f32 %v334, %v370
        %v387 = vadd.f32 %v354, %v371
        %v388 = vadd.f32 %v355, %v372
        %v389 = vadd.f32 %v356, %v373
        %v390 = vadd.f32 %v357, %v374
        %v391 = vadd.f32 %v358, %v375
        %v392 = vadd.f32 %v359, %v376
        %v393 = vadd.f32 %v360, %v377
        %v394 = vadd.f32 %v361, %v378
        %v395 = vadd.f32 %v362, %v379
        %v396 = vadd.f32 %v363, %v380
        %v397 = vadd.f32 %v364, %v381
        %v398 = vadd.f32 %v365, %v382
        %v399 = vadd.f32 %v366, %v383
        %v400 = vadd.f32 %v367, %v384
        %v401 = vadd.f32 %v368, %v385
        %v402 = vadd.f32 %v369, %v386
        %v403 = vperm.slane %v296, 0
        %v404 = vmul.f32 %v321, %v403
        %v405 = vmul.f32 %v322, %v403
        %v406 = vmul.f32 %v323, %v403
        %v407 = vmul.f32 %v324, %v403
        %v408 = vmul.f32 %v325, %v403
        %v409 = vmul.f32 %v326, %v403
        %v410 = vmul.f32 %v327, %v403
        %v411 = vmul.f32 %v328, %v403
        %v412 = vmul.f32 %v329, %v403
        %v413 = vmul.f32 %v330, %v403
        %v414 = vmul.f32 %v331, %v403
        %v415 = vmul.f32 %v332, %v403
        %v416 = vmul.f32 %v333, %v403
        %v417 = vmul.f32 %v334, %v403
        %v418 = vmul.f32 %v335, %v403
        %v419 = vmul.f32 %v336, %v403
        %v420 = vadd.f32 %v387, %v404
        %v421 = vadd.f32 %v388, %v405
        %v422 = vadd.f32 %v389, %v406
        %v423 = vadd.f32 %v390, %v407
        %v424 = vadd.f32 %v391, %v408
        %v425 = vadd.f32 %v392, %v409
        %v426 = vadd.f32 %v393, %v410
        %v427 = vadd.f32 %v394, %v411
        %v428 = vadd.f32 %v395, %v412
        %v429 = vadd.f32 %v396, %v413
        %v430 = vadd.f32 %v397, %v414
        %v431 = vadd.f32 %v398, %v415
        %v432 = vadd.f32 %v399, %v416
        %v433 = vadd.f32 %v400, %v417
        %v434 = vadd.f32 %v401, %v418
        %v435 = vadd.f32 %v402, %v419
        %v436 = vld [vmem:[%s271 + $0x1] sm:$0xff]
        %v437 = vld [vmem:[%s271 + $0x9] sm:$0xff]
        %v438 = vld [vmem:[%s271 + $0x19] sm:$0xff]
        %v439 = vld [vmem:[%s271 + $0x21] sm:$0xff]
        %v440 = vld [vmem:[%s271 + $0x31] sm:$0xff]
        %v441 = vld [vmem:[%s271 + $0x39] sm:$0xff]
        %v442 = vld [vmem:[%s271 + $0x49] sm:$0xff]
        %v443 = vld [vmem:[%s271 + $0x51] sm:$0xff]
        %v444 = vld [vmem:[%s271 + $0x61] sm:$0xff]
        %v445 = vld [vmem:[%s271 + $0x69] sm:$0xff]
        %v446 = vld [vmem:[%s271 + $0x79] sm:$0xff]
        %v447 = vld [vmem:[%s271 + $0x81] sm:$0xff]
        %v448 = vld [vmem:[%s271 + $0x91] sm:$0xff]
        %v449 = vld [vmem:[%s271 + $0x99] sm:$0xff]
        %v450 = vld [vmem:[%s271 + $0xa9] sm:$0xff]
        %v451 = vld [vmem:[%s271 + $0xb1] sm:$0xff]
        %v452 = vld [vmem:[%s271 + $0xc1] sm:$0xff]
        %v453 = vld [vmem:[%s271 + $0xc9] sm:$0xff]
        %v454 = vld [vmem:[%s271 + $0xd9] sm:$0xff]
        %v455 = vld [vmem:[%s271 + $0xe1] sm:$0xff]
        %v456 = vmax.f32 %v436, 0.0
        %v457 = vmax.f32 %v437, 0.0
        %v458 = vmax.f32 %v438, 0.0
        %v459 = vmax.f32 %v439, 0.0
        %v460 = vmax.f32 %v440, 0.0
        %v461 = vmax.f32 %v441, 0.0
        %v462 = vmax.f32 %v442, 0.0
        %v463 = vmax.f32 %v443, 0.0
        %v464 = vmax.f32 %v444, 0.0
        %v465 = vmax.f32 %v445, 0.0
        %v466 = vmax.f32 %v446, 0.0
        %v467 = vmax.f32 %v447, 0.0
        %v468 = vmax.f32 %v448, 0.0
        %v469 = vmax.f32 %v449, 0.0
        %v470 = vmax.f32 %v450, 0.0
        %v471 = vmax.f32 %v451, 0.0
        %v472 = vmax.f32 %v452, 0.0
        %v473 = vmax.f32 %v453, 0.0
        %v474 = vmax.f32 %v454, 0.0
        %v475 = vmax.f32 %v455, 0.0
        %v476 = vperm.slane %v294, 1
        %v477 = vmul.f32 %v456, %v476
        %v478 = vmul.f32 %v457, %v476
        %v479 = vmul.f32 %v458, %v476
        %v480 = vmul.f32 %v459, %v476
        %v481 = vmul.f32 %v460, %v476
        %v482 = vmul.f32 %v461, %v476
        %v483 = vmul.f32 %v462, %v476
        %v484 = vmul.f32 %v463, %v476
        %v485 = vmul.f32 %v464, %v476
        %v486 = vmul.f32 %v465, %v476
        %v487 = vmul.f32 %v466, %v476
        %v488 = vmul.f32 %v467, %v476
        %v489 = vmul.f32 %v468, %v476
        %v490 = vmul.f32 %v469, %v476
        %v491 = vmul.f32 %v470, %v476
        %v492 = vmul.f32 %v471, %v476
        %v493 = vadd.f32 %v420, %v477
        %v494 = vadd.f32 %v421, %v478
        %v495 = vadd.f32 %v422, %v479
        %v496 = vadd.f32 %v423, %v480
        %v497 = vadd.f32 %v424, %v481
        %v498 = vadd.f32 %v425, %v482
        %v499 = vadd.f32 %v426, %v483
        %v500 = vadd.f32 %v427, %v484
        %v501 = vadd.f32 %v428, %v485
        %v502 = vadd.f32 %v429, %v486
        %v503 = vadd.f32 %v430, %v487
        %v504 = vadd.f32 %v431, %v488
        %v505 = vadd.f32 %v432, %v489
        %v506 = vadd.f32 %v433, %v490
        %v507 = vadd.f32 %v434, %v491
        %v508 = vadd.f32 %v435, %v492
        %v509 = vperm.slane %v295, 1
        %v510 = vmul.f32 %v458, %v509
        %v511 = vmul.f32 %v459, %v509
        %v512 = vmul.f32 %v460, %v509
        %v513 = vmul.f32 %v461, %v509
        %v514 = vmul.f32 %v462, %v509
        %v515 = vmul.f32 %v463, %v509
        %v516 = vmul.f32 %v464, %v509
        %v517 = vmul.f32 %v465, %v509
        %v518 = vmul.f32 %v466, %v509
        %v519 = vmul.f32 %v467, %v509
        %v520 = vmul.f32 %v468, %v509
        %v521 = vmul.f32 %v469, %v509
        %v522 = vmul.f32 %v470, %v509
        %v523 = vmul.f32 %v471, %v509
        %v524 = vmul.f32 %v472, %v509
        %v525 = vmul.f32 %v473, %v509
        %v526 = vadd.f32 %v493, %v510
        %v527 = vadd.f32 %v494, %v511
        %v528 = vadd.f32 %v495, %v512
        %v529 = vadd.f32 %v496, %v513
        %v530 = vadd.f32 %v497, %v514
        %v531 = vadd.f32 %v498, %v515
        %v532 = vadd.f32 %v499, %v516
        %v533 = vadd.f32 %v500, %v517
        %v534 = vadd.f32 %v501, %v518
        %v535 = vadd.f32 %v502, %v519
        %v536 = vadd.f32 %v503, %v520
        %v537 = vadd.f32 %v504, %v521
        %v538 = vadd.f32 %v505, %v522
        %v539 = vadd.f32 %v506, %v523
        %v540 = vadd.f32 %v507, %v524
        %v541 = vadd.f32 %v508, %v525
        %v542 = vperm.slane %v296, 1
        %v543 = vmul.f32 %v460, %v542
        %v544 = vmul.f32 %v461, %v542
        %v545 = vmul.f32 %v462, %v542
        %v546 = vmul.f32 %v463, %v542
        %v547 = vmul.f32 %v464, %v542
        %v548 = vmul.f32 %v465, %v542
        %v549 = vmul.f32 %v466, %v542
        %v550 = vmul.f32 %v467, %v542
        %v551 = vmul.f32 %v468, %v542
        %v552 = vmul.f32 %v469, %v542
        %v553 = vmul.f32 %v470, %v542
        %v554 = vmul.f32 %v471, %v542
        %v555 = vmul.f32 %v472, %v542
        %v556 = vmul.f32 %v473, %v542
        %v557 = vmul.f32 %v474, %v542
        %v558 = vmul.f32 %v475, %v542
        %v559 = vadd.f32 %v526, %v543
        %v560 = vadd.f32 %v527, %v544
        %v561 = vadd.f32 %v528, %v545
        %v562 = vadd.f32 %v529, %v546
        %v563 = vadd.f32 %v530, %v547
        %v564 = vadd.f32 %v531, %v548
        %v565 = vadd.f32 %v532, %v549
        %v566 = vadd.f32 %v533, %v550
        %v567 = vadd.f32 %v534, %v551
        %v568 = vadd.f32 %v535, %v552
        %v569 = vadd.f32 %v536, %v553
        %v570 = vadd.f32 %v537, %v554
        %v571 = vadd.f32 %v538, %v555
        %v572 = vadd.f32 %v539, %v556
        %v573 = vadd.f32 %v540, %v557
        %v574 = vadd.f32 %v541, %v558
        %v575 = vld [vmem:[%s271 + $0x2] sm:$0xff]
        %v576 = vld [vmem:[%s271 + $0xa] sm:$0xff]
        %v577 = vld [vmem:[%s271 + $0x1a] sm:$0xff]
        %v578 = vld [vmem:[%s271 + $0x22] sm:$0xff]
        %v579 = vld [vmem:[%s271 + $0x32] sm:$0xff]
        %v580 = vld [vmem:[%s271 + $0x3a] sm:$0xff]
        %v581 = vld [vmem:[%s271 + $0x4a] sm:$0xff]
        %v582 = vld [vmem:[%s271 + $0x52] sm:$0xff]
        %v583 = vld [vmem:[%s271 + $0x62] sm:$0xff]
        %v584 = vld [vmem:[%s271 + $0x6a] sm:$0xff]
        %v585 = vld [vmem:[%s271 + $0x7a] sm:$0xff]
        %v586 = vld [vmem:[%s271 + $0x82] sm:$0xff]
        %v587 = vld [vmem:[%s271 + $0x92] sm:$0xff]
        %v588 = vld [vmem:[%s271 + $0x9a] sm:$0xff]
        %v589 = vld [vmem:[%s271 + $0xaa] sm:$0xff]
        %v590 = vld [vmem:[%s271 + $0xb2] sm:$0xff]
        %v591 = vld [vmem:[%s271 + $0xc2] sm:$0xff]
        %v592 = vld [vmem:[%s271 + $0xca] sm:$0xff]
        %v593 = vld [vmem:[%s271 + $0xda] sm:$0xff]
        %v594 = vld [vmem:[%s271 + $0xe2] sm:$0xff]
        %v595 = vmax.f32 %v575, 0.0
        %v596 = vmax.f32 %v576, 0.0
        %v597 = vmax.f32 %v577, 0.0
        %v598 = vmax.f32 %v578, 0.0
        %v599 = vmax.f32 %v579, 0.0
        %v600 = vmax.f32 %v580, 0.0
        %v601 = vmax.f32 %v581, 0.0
        %v602 = vmax.f32 %v582, 0.0
        %v603 = vmax.f32 %v583, 0.0
        %v604 = vmax.f32 %v584, 0.0
        %v605 = vmax.f32 %v585, 0.0
        %v606 = vmax.f32 %v586, 0.0
        %v607 = vmax.f32 %v587, 0.0
        %v608 = vmax.f32 %v588, 0.0
        %v609 = vmax.f32 %v589, 0.0
        %v610 = vmax.f32 %v590, 0.0
        %v611 = vmax.f32 %v591, 0.0
        %v612 = vmax.f32 %v592, 0.0
        %v613 = vmax.f32 %v593, 0.0
        %v614 = vmax.f32 %v594, 0.0
        %v615 = vperm.slane %v294, 2
        %v616 = vmul.f32 %v595, %v615
        %v617 = vmul.f32 %v596, %v615
        %v618 = vmul.f32 %v597, %v615
        %v619 = vmul.f32 %v598, %v615
        %v620 = vmul.f32 %v599, %v615
        %v621 = vmul.f32 %v600, %v615
        %v622 = vmul.f32 %v601, %v615
        %v623 = vmul.f32 %v602, %v615
        %v624 = vmul.f32 %v603, %v615
        %v625 = vmul.f32 %v604, %v615
        %v626 = vmul.f32 %v605, %v615
        %v627 = vmul.f32 %v606, %v615
        %v628 = vmul.f32 %v607, %v615
        %v629 = vmul.f32 %v608, %v615
        %v630 = vmul.f32 %v609, %v615
        %v631 = vmul.f32 %v610, %v615
        %v632 = vadd.f32 %v559, %v616
        %v633 = vadd.f32 %v560, %v617
        %v634 = vadd.f32 %v561, %v618
        %v635 = vadd.f32 %v562, %v619
        %v636 = vadd.f32 %v563, %v620
        %v637 = vadd.f32 %v564, %v621
        %v638 = vadd.f32 %v565, %v622
        %v639 = vadd.f32 %v566, %v623
        %v640 = vadd.f32 %v567, %v624
        %v641 = vadd.f32 %v568, %v625
        %v642 = vadd.f32 %v569, %v626
        %v643 = vadd.f32 %v570, %v627
        %v644 = vadd.f32 %v571, %v628
        %v645 = vadd.f32 %v572, %v629
        %v646 = vadd.f32 %v573, %v630
        %v647 = vadd.f32 %v574, %v631
        %v648 = vperm.slane %v295, 2
        %v649 = vmul.f32 %v597, %v648
        %v650 = vmul.f32 %v598, %v648
        %v651 = vmul.f32 %v599, %v648
        %v652 = vmul.f32 %v600, %v648
        %v653 = vmul.f32 %v601, %v648
        %v654 = vmul.f32 %v602, %v648
        %v655 = vmul.f32 %v603, %v648
        %v656 = vmul.f32 %v604, %v648
        %v657 = vmul.f32 %v605, %v648
        %v658 = vmul.f32 %v606, %v648
        %v659 = vmul.f32 %v607, %v648
        %v660 = vmul.f32 %v608, %v648
        %v661 = vmul.f32 %v609, %v648
        %v662 = vmul.f32 %v610, %v648
        %v663 = vmul.f32 %v611, %v648
        %v664 = vmul.f32 %v612, %v648
        %v665 = vadd.f32 %v632, %v649
        %v666 = vadd.f32 %v633, %v650
        %v667 = vadd.f32 %v634, %v651
        %v668 = vadd.f32 %v635, %v652
        %v669 = vadd.f32 %v636, %v653
        %v670 = vadd.f32 %v637, %v654
        %v671 = vadd.f32 %v638, %v655
        %v672 = vadd.f32 %v639, %v656
        %v673 = vadd.f32 %v640, %v657
        %v674 = vadd.f32 %v641, %v658
        %v675 = vadd.f32 %v642, %v659
        %v676 = vadd.f32 %v643, %v660
        %v677 = vadd.f32 %v644, %v661
        %v678 = vadd.f32 %v645, %v662
        %v679 = vadd.f32 %v646, %v663
        %v680 = vadd.f32 %v647, %v664
        %v681 = vperm.slane %v296, 2
        %v682 = vmul.f32 %v599, %v681
        %v683 = vmul.f32 %v600, %v681
        %v684 = vmul.f32 %v601, %v681
        %v685 = vmul.f32 %v602, %v681
        %v686 = vmul.f32 %v603, %v681
        %v687 = vmul.f32 %v604, %v681
        %v688 = vmul.f32 %v605, %v681
        %v689 = vmul.f32 %v606, %v681
        %v690 = vmul.f32 %v607, %v681
        %v691 = vmul.f32 %v608, %v681
        %v692 = vmul.f32 %v609, %v681
        %v693 = vmul.f32 %v610, %v681
        %v694 = vmul.f32 %v611, %v681
        %v695 = vmul.f32 %v612, %v681
        %v696 = vmul.f32 %v613, %v681
        %v697 = vmul.f32 %v614, %v681
        %v698 = vadd.f32 %v665, %v682
        %v699 = vadd.f32 %v666, %v683
        %v700 = vadd.f32 %v667, %v684
        %v701 = vadd.f32 %v668, %v685
        %v702 = vadd.f32 %v669, %v686
        %v703 = vadd.f32 %v670, %v687
        %v704 = vadd.f32 %v671, %v688
        %v705 = vadd.f32 %v672, %v689
        %v706 = vadd.f32 %v673, %v690
        %v707 = vadd.f32 %v674, %v691
        %v708 = vadd.f32 %v675, %v692
        %v709 = vadd.f32 %v676, %v693
        %v710 = vadd.f32 %v677, %v694
        %v711 = vadd.f32 %v678, %v695
        %v712 = vadd.f32 %v679, %v696
        %v713 = vadd.f32 %v680, %v697
        %714 = vst [vmem:[#allocation2] sm:$0xff] %v698
        %715 = vst [vmem:[#allocation2 + $0x8] sm:$0xff] %v699
        %716 = vst [vmem:[#allocation2 + $0x10] sm:$0xff] %v700
        %717 = vst [vmem:[#allocation2 + $0x18] sm:$0xff] %v701
        %718 = vst [vmem:[#allocation2 + $0x20] sm:$0xff] %v702
        %719 = vst [vmem:[#allocation2 + $0x28] sm:$0xff] %v703
        %720 = vst [vmem:[#allocation2 + $0x30] sm:$0xff] %v704
        %721 = vst [vmem:[#allocation2 + $0x38] sm:$0xff] %v705
        %722 = vst [vmem:[#allocation2 + $0x40] sm:$0xff] %v706
        %723 = vst [vmem:[#allocation2 + $0x48] sm:$0xff] %v707
        %724 = vst [vmem:[#allocation2 + $0x50] sm:$0xff] %v708
        %725 = vst [vmem:[#allocation2 + $0x58] sm:$0xff] %v709
        %726 = vst [vmem:[#allocation2 + $0x60] sm:$0xff] %v710
        %727 = vst [vmem:[#allocation2 + $0x68] sm:$0xff] %v711
        %728 = vst [vmem:[#allocation2 + $0x70] sm:$0xff] %v712
        %729 = vst [vmem:[#allocation2 + $0x78] sm:$0xff] %v713
        %s730 = scalar_lea.vmem %s271, 192
        %v731 = vld [vmem:[%s730] sm:$0xff]
        %v732 = vld [vmem:[%s730 + $0x8] sm:$0xff]
        %v733 = vld [vmem:[%s730 + $0x18] sm:$0xff]
        %v734 = vld [vmem:[%s730 + $0x20] sm:$0xff]
        %v735 = vld [vmem:[%s730 + $0x30] sm:$0xff]
        %v736 = vld [vmem:[%s730 + $0x38] sm:$0xff]
        %v737 = vld [vmem:[%s730 + $0x48] sm:$0xff]
        %v738 = vld [vmem:[%s730 + $0x50] sm:$0xff]
        %v739 = vld [vmem:[%s730 + $0x60] sm:$0xff]
        %v740 = vld [vmem:[%s730 + $0x68] sm:$0xff]
        %v741 = vld [vmem:[%s730 + $0x78] sm:$0xff]
        %v742 = vld [vmem:[%s730 + $0x80] sm:$0xff]
        %v743 = vld [vmem:[%s730 + $0x90] sm:$0xff]
        %v744 = vld [vmem:[%s730 + $0x98] sm:$0xff]
        %v745 = vld [vmem:[%s730 + $0xa8] sm:$0xff]
        %v746 = vld [vmem:[%s730 + $0xb0] sm:$0xff]
        %v747 = vld [vmem:[%s730 + $0xc0] sm:$0xff]
        %v748 = vld [vmem:[%s730 + $0xc8] sm:$0xff]
        %v749 = vld [vmem:[%s730 + $0xd8] sm:$0xff]
        %v750 = vld [vmem:[%s730 + $0xe0] sm:$0xff]
        %v751 = vmax.f32 %v731, 0.0
        %v752 = vmax.f32 %v732, 0.0
        %v753 = vmax.f32 %v733, 0.0
        %v754 = vmax.f32 %v734, 0.0
        %v755 = vmax.f32 %v735, 0.0
        %v756 = vmax.f32 %v736, 0.0
        %v757 = vmax.f32 %v737, 0.0
        %v758 = vmax.f32 %v738, 0.0
        %v759 = vmax.f32 %v739, 0.0
        %v760 = vmax.f32 %v740, 0.0
        %v761 = vmax.f32 %v741, 0.0
        %v762 = vmax.f32 %v742, 0.0
        %v763 = vmax.f32 %v743, 0.0
        %v764 = vmax.f32 %v744, 0.0
        %v765 = vmax.f32 %v745, 0.0
        %v766 = vmax.f32 %v746, 0.0
        %v767 = vmax.f32 %v747, 0.0
        %v768 = vmax.f32 %v748, 0.0
        %v769 = vmax.f32 %v749, 0.0
        %v770 = vmax.f32 %v750, 0.0
        %v771 = vmul.f32 %v751, %v337
        %v772 = vmul.f32 %v752, %v337
        %v773 = vmul.f32 %v753, %v337
        %v774 = vmul.f32 %v754, %v337
        %v775 = vmul.f32 %v755, %v337
        %v776 = vmul.f32 %v756, %v337
        %v777 = vmul.f32 %v757, %v337
        %v778 = vmul.f32 %v758, %v337
        %v779 = vmul.f32 %v759, %v337
        %v780 = vmul.f32 %v760, %v337
        %v781 = vmul.f32 %v761, %v337
        %v782 = vmul.f32 %v762, %v337
        %v783 = vmul.f32 %v763, %v337
        %v784 = vmul.f32 %v764, %v337
        %v785 = vmul.f32 %v765, %v337
        %v786 = vmul.f32 %v766, %v337
        %v787 = vadd.f32 %v771, 0.0
        %v788 = vadd.f32 %v772, 0.0
        %v789 = vadd.f32 %v773, 0.0
        %v790 = vadd.f32 %v774, 0.0
        %v791 = vadd.f32 %v775, 0.0
        %v792 = vadd.f32 %v776, 0.0
        %v793 = vadd.f32 %v777, 0.0
        %v794 = vadd.f32 %v778, 0.0
        %v795 = vadd.f32 %v779, 0.0
        %v796 = vadd.f32 %v780, 0.0
        %v797 = vadd.f32 %v781, 0.0
        %v798 = vadd.f32 %v782, 0.0
        %v799 = vadd.f32 %v783, 0.0
        %v800 = vadd.f32 %v784, 0.0
        %v801 = vadd.f32 %v785, 0.0
        %v802 = vadd.f32 %v786, 0.0
        %v803 = vmul.f32 %v753, %v370
        %v804 = vmul.f32 %v754, %v370
        %v805 = vmul.f32 %v755, %v370
        %v806 = vmul.f32 %v756, %v370
        %v807 = vmul.f32 %v757, %v370
        %v808 = vmul.f32 %v758, %v370
        %v809 = vmul.f32 %v759, %v370
        %v810 = vmul.f32 %v760, %v370
        %v811 = vmul.f32 %v761, %v370
        %v812 = vmul.f32 %v762, %v370
        %v813 = vmul.f32 %v763, %v370
        %v814 = vmul.f32 %v764, %v370
        %v815 = vmul.f32 %v765, %v370
        %v816 = vmul.f32 %v766, %v370
        %v817 = vmul.f32 %v767, %v370
        %v818 = vmul.f32 %v768, %v370
        %v819 = vadd.f32 %v787, %v803
        %v820 = vadd.f32 %v788, %v804
        %v821 = vadd.f32 %v789, %v805
        %v822 = vadd.f32 %v790, %v806
        %v823 = vadd.f32 %v791, %v807
        %v824 = vadd.f32 %v792, %v808
        %v825 = vadd.f32 %v793, %v809
        %v826 = vadd.f32 %v794, %v810
        %v827 = vadd.f32 %v795, %v811
        %v828 = vadd.f32 %v796, %v812
        %v829 = vadd.f32 %v797, %v813
        %v830 = vadd.f32 %v798, %v814
        %v831 = vadd.f32 %v799, %v815
        %v832 = vadd.f32 %v800, %v816
        %v833 = vadd.f32 %v801, %v817
        %v834 = vadd.f32 %v802, %v818
        %v835 = vmul.f32 %v755, %v403
        %v836 = vmul.f32 %v756, %v403
        %v837 = vmul.f32 %v757, %v403
        %v838 = vmul.f32 %v758, %v403
        %v839 = vmul.f32 %v759, %v403
        %v840 = vmul.f32 %v760, %v403
        %v841 = vmul.f32 %v761, %v403
        %v842 = vmul.f32 %v762, %v403
        %v843 = vmul.f32 %v763, %v403
        %v844 = vmul.f32 %v764, %v403
        %v845 = vmul.f32 %v765, %v403
        %v846 = vmul.f32 %v766, %v403
        %v847 = vmul.f32 %v767, %v403
        %v848 = vmul.f32 %v768, %v403
        %v849 = vmul.f32 %v769, %v403
        %v850 = vmul.f32 %v770, %v403
        %v851 = vadd.f32 %v819, %v835
        %v852 = vadd.f32 %v820, %v836
        %v853 = vadd.f32 %v821, %v837
        %v854 = vadd.f32 %v822, %v838
        %v855 = vadd.f32 %v823, %v839
        %v856 = vadd.f32 %v824, %v840
        %v857 = vadd.f32 %v825, %v841
        %v858 = vadd.f32 %v826, %v842
        %v859 = vadd.f32 %v827, %v843
        %v860 = vadd.f32 %v828, %v844
        %v861 = vadd.f32 %v829, %v845
        %v862 = vadd.f32 %v830, %v846
        %v863 = vadd.f32 %v831, %v847
        %v864 = vadd.f32 %v832, %v848
        %v865 = vadd.f32 %v833, %v849
        %v866 = vadd.f32 %v834, %v850
        %v867 = vld [vmem:[%s730 + $0x1] sm:$0xff]
        %v868 = vld [vmem:[%s730 + $0x9] sm:$0xff]
        %v869 = vld [vmem:[%s730 + $0x19] sm:$0xff]
        %v870 = vld [vmem:[%s730 + $0x21] sm:$0xff]
        %v871 = vld [vmem:[%s730 + $0x31] sm:$0xff]
        %v872 = vld [vmem:[%s730 + $0x39] sm:$0xff]
        %v873 = vld [vmem:[%s730 + $0x49] sm:$0xff]
        %v874 = vld [vmem:[%s730 + $0x51] sm:$0xff]
        %v875 = vld [vmem:[%s730 + $0x61] sm:$0xff]
        %v876 = vld [vmem:[%s730 + $0x69] sm:$0xff]
        %v877 = vld [vmem:[%s730 + $0x79] sm:$0xff]
        %v878 = vld [vmem:[%s730 + $0x81] sm:$0xff]
        %v879 = vld [vmem:[%s730 + $0x91] sm:$0xff]
        %v880 = vld [vmem:[%s730 + $0x99] sm:$0xff]
        %v881 = vld [vmem:[%s730 + $0xa9] sm:$0xff]
        %v882 = vld [vmem:[%s730 + $0xb1] sm:$0xff]
        %v883 = vld [vmem:[%s730 + $0xc1] sm:$0xff]
        %v884 = vld [vmem:[%s730 + $0xc9] sm:$0xff]
        %v885 = vld [vmem:[%s730 + $0xd9] sm:$0xff]
        %v886 = vld [vmem:[%s730 + $0xe1] sm:$0xff]
        %v887 = vmax.f32 %v867, 0.0
        %v888 = vmax.f32 %v868, 0.0
        %v889 = vmax.f32 %v869, 0.0
        %v890 = vmax.f32 %v870, 0.0
        %v891 = vmax.f32 %v871, 0.0
        %v892 = vmax.f32 %v872, 0.0
        %v893 = vmax.f32 %v873, 0.0
        %v894 = vmax.f32 %v874, 0.0
        %v895 = vmax.f32 %v875, 0.0
        %v896 = vmax.f32 %v876, 0.0
        %v897 = vmax.f32 %v877, 0.0
        %v898 = vmax.f32 %v878, 0.0
        %v899 = vmax.f32 %v879, 0.0
        %v900 = vmax.f32 %v880, 0.0
        %v901 = vmax.f32 %v881, 0.0
        %v902 = vmax.f32 %v882, 0.0
        %v903 = vmax.f32 %v883, 0.0
        %v904 = vmax.f32 %v884, 0.0
        %v905 = vmax.f32 %v885, 0.0
        %v906 = vmax.f32 %v886, 0.0
        %v907 = vmul.f32 %v887, %v476
        %v908 = vmul.f32 %v888, %v476
        %v909 = vmul.f32 %v889, %v476
        %v910 = vmul.f32 %v890, %v476
        %v911 = vmul.f32 %v891, %v476
        %v912 = vmul.f32 %v892, %v476
        %v913 = vmul.f32 %v893, %v476
        %v914 = vmul.f32 %v894, %v476
        %v915 = vmul.f32 %v895, %v476
        %v916 = vmul.f32 %v896, %v476
        %v917 = vmul.f32 %v897, %v476
        %v918 = vmul.f32 %v898, %v476
        %v919 = vmul.f32 %v899, %v476
        %v920 = vmul.f32 %v900, %v476
        %v921 = vmul.f32 %v901, %v476
        %v922 = vmul.f32 %v902, %v476
        %v923 = vadd.f32 %v851, %v907
        %v924 = vadd.f32 %v852, %v908
        %v925 = vadd.f32 %v853, %v909
        %v926 = vadd.f32 %v854, %v910
        %v927 = vadd.f32 %v855, %v911
        %v928 = vadd.f32 %v856, %v912
        %v929 = vadd.f32 %v857, %v913
        %v930 = vadd.f32 %v858, %v914
        %v931 = vadd.f32 %v859, %v915
        %v932 = vadd.f32 %v860, %v916
        %v933 = vadd.f32 %v861, %v917
        %v934 = vadd.f32 %v862, %v918
        %v935 = vadd.f32 %v863, %v919
        %v936 = vadd.f32 %v864, %v920
        %v937 = vadd.f32 %v865, %v921
        %v938 = vadd.f32 %v866, %v922
        %v939 = vmul.f32 %v889, %v509
        %v940 = vmul.f32 %v890, %v509
        %v941 = vmul.f32 %v891, %v509
        %v942 = vmul.f32 %v892, %v509
        %v943 = vmul.f32 %v893, %v509
        %v944 = vmul.f32 %v894, %v509
        %v945 = vmul.f32 %v895, %v509
        %v946 = vmul.f32 %v896, %v509
        %v947 = vmul.f32 %v897, %v509
        %v948 = vmul.f32 %v898, %v509
        %v949 = vmul.f32 %v899, %v509
        %v950 = vmul.f32 %v900, %v509
        %v951 = vmul.f32 %v901, %v509
        %v952 = vmul.f32 %v902, %v509
        %v953 = vmul.f32 %v903, %v509
        %v954 = vmul.f32 %v904, %v509
        %v955 = vadd.f32 %v923, %v939
        %v956 = vadd.f32 %v924, %v940
        %v957 = vadd.f32 %v925, %v941
        %v958 = vadd.f32 %v926, %v942
        %v959 = vadd.f32 %v927, %v943
        %v960 = vadd.f32 %v928, %v944
        %v961 = vadd.f32 %v929, %v945
        %v962 = vadd.f32 %v930, %v946
        %v963 = vadd.f32 %v931, %v947
        %v964 = vadd.f32 %v932, %v948
        %v965 = vadd.f32 %v933, %v949
        %v966 = vadd.f32 %v934, %v950
        %v967 = vadd.f32 %v935, %v951
        %v968 = vadd.f32 %v936, %v952
        %v969 = vadd.f32 %v937, %v953
        %v970 = vadd.f32 %v938, %v954
        %v971 = vmul.f32 %v891, %v542
        %v972 = vmul.f32 %v892, %v542
        %v973 = vmul.f32 %v893, %v542
        %v974 = vmul.f32 %v894, %v542
        %v975 = vmul.f32 %v895, %v542
        %v976 = vmul.f32 %v896, %v542
        %v977 = vmul.f32 %v897, %v542
        %v978 = vmul.f32 %v898, %v542
        %v979 = vmul.f32 %v899, %v542
        %v980 = vmul.f32 %v900, %v542
        %v981 = vmul.f32 %v901, %v542
        %v982 = vmul.f32 %v902, %v542
        %v983 = vmul.f32 %v903, %v542
        %v984 = vmul.f32 %v904, %v542
        %v985 = vmul.f32 %v905, %v542
        %v986 = vmul.f32 %v906, %v542
        %v987 = vadd.f32 %v955, %v971
        %v988 = vadd.f32 %v956, %v972
        %v989 = vadd.f32 %v957, %v973
        %v990 = vadd.f32 %v958, %v974
        %v991 = vadd.f32 %v959, %v975
        %v992 = vadd.f32 %v960, %v976
        %v993 = vadd.f32 %v961, %v977
        %v994 = vadd.f32 %v962, %v978
        %v995 = vadd.f32 %v963, %v979
        %v996 = vadd.f32 %v964, %v980
        %v997 = vadd.f32 %v965, %v981
        %v998 = vadd.f32 %v966, %v982
        %v999 = vadd.f32 %v967, %v983
        %v1000 = vadd.f32 %v968, %v984
        %v1001 = vadd.f32 %v969, %v985
        %v1002 = vadd.f32 %v970, %v986
        %v1003 = vld [vmem:[%s730 + $0x2] sm:$0xff]
        %v1004 = vld [vmem:[%s730 + $0xa] sm:$0xff]
        %v1005 = vld [vmem:[%s730 + $0x1a] sm:$0xff]
        %v1006 = vld [vmem:[%s730 + $0x22] sm:$0xff]
        %v1007 = vld [vmem:[%s730 + $0x32] sm:$0xff]
        %v1008 = vld [vmem:[%s730 + $0x3a] sm:$0xff]
        %v1009 = vld [vmem:[%s730 + $0x4a] sm:$0xff]
        %v1010 = vld [vmem:[%s730 + $0x52] sm:$0xff]
        %v1011 = vld [vmem:[%s730 + $0x62] sm:$0xff]
        %v1012 = vld [vmem:[%s730 + $0x6a] sm:$0xff]
        %v1013 = vld [vmem:[%s730 + $0x7a] sm:$0xff]
        %v1014 = vld [vmem:[%s730 + $0x82] sm:$0xff]
        %v1015 = vld [vmem:[%s730 + $0x92] sm:$0xff]
        %v1016 = vld [vmem:[%s730 + $0x9a] sm:$0xff]
        %v1017 = vld [vmem:[%s730 + $0xaa] sm:$0xff]
        %v1018 = vld [vmem:[%s730 + $0xb2] sm:$0xff]
        %v1019 = vld [vmem:[%s730 + $0xc2] sm:$0xff]
        %v1020 = vld [vmem:[%s730 + $0xca] sm:$0xff]
        %v1021 = vld [vmem:[%s730 + $0xda] sm:$0xff]
        %v1022 = vld [vmem:[%s730 + $0xe2] sm:$0xff]
        %v1023 = vmax.f32 %v1003, 0.0
        %v1024 = vmax.f32 %v1004, 0.0
        %v1025 = vmax.f32 %v1005, 0.0
        %v1026 = vmax.f32 %v1006, 0.0
        %v1027 = vmax.f32 %v1007, 0.0
        %v1028 = vmax.f32 %v1008, 0.0
        %v1029 = vmax.f32 %v1009, 0.0
        %v1030 = vmax.f32 %v1010, 0.0
        %v1031 = vmax.f32 %v1011, 0.0
        %v1032 = vmax.f32 %v1012, 0.0
        %v1033 = vmax.f32 %v1013, 0.0
        %v1034 = vmax.f32 %v1014, 0.0
        %v1035 = vmax.f32 %v1015, 0.0
        %v1036 = vmax.f32 %v1016, 0.0
        %v1037 = vmax.f32 %v1017, 0.0
        %v1038 = vmax.f32 %v1018, 0.0
        %v1039 = vmax.f32 %v1019, 0.0
        %v1040 = vmax.f32 %v1020, 0.0
        %v1041 = vmax.f32 %v1021, 0.0
        %v1042 = vmax.f32 %v1022, 0.0
        %v1043 = vmul.f32 %v1023, %v615
        %v1044 = vmul.f32 %v1024, %v615
        %v1045 = vmul.f32 %v1025, %v615
        %v1046 = vmul.f32 %v1026, %v615
        %v1047 = vmul.f32 %v1027, %v615
        %v1048 = vmul.f32 %v1028, %v615
        %v1049 = vmul.f32 %v1029, %v615
        %v1050 = vmul.f32 %v1030, %v615
        %v1051 = vmul.f32 %v1031, %v615
        %v1052 = vmul.f32 %v1032, %v615
        %v1053 = vmul.f32 %v1033, %v615
        %v1054 = vmul.f32 %v1034, %v615
        %v1055 = vmul.f32 %v1035, %v615
        %v1056 = vmul.f32 %v1036, %v615
        %v1057 = vmul.f32 %v1037, %v615
        %v1058 = vmul.f32 %v1038, %v615
        %v1059 = vadd.f32 %v987, %v1043
        %v1060 = vadd.f32 %v988, %v1044
        %v1061 = vadd.f32 %v989, %v1045
        %v1062 = vadd.f32 %v990, %v1046
        %v1063 = vadd.f32 %v991, %v1047
        %v1064 = vadd.f32 %v992, %v1048
        %v1065 = vadd.f32 %v993, %v1049
        %v1066 = vadd.f32 %v994, %v1050
        %v1067 = vadd.f32 %v995, %v1051
        %v1068 = vadd.f32 %v996, %v1052
        %v1069 = vadd.f32 %v997, %v1053
        %v1070 = vadd.f32 %v998, %v1054
        %v1071 = vadd.f32 %v999, %v1055
        %v1072 = vadd.f32 %v1000, %v1056
        %v1073 = vadd.f32 %v1001, %v1057
        %v1074 = vadd.f32 %v1002, %v1058
        %v1075 = vmul.f32 %v1025, %v648
        %v1076 = vmul.f32 %v1026, %v648
        %v1077 = vmul.f32 %v1027, %v648
        %v1078 = vmul.f32 %v1028, %v648
        %v1079 = vmul.f32 %v1029, %v648
        %v1080 = vmul.f32 %v1030, %v648
        %v1081 = vmul.f32 %v1031, %v648
        %v1082 = vmul.f32 %v1032, %v648
        %v1083 = vmul.f32 %v1033, %v648
        %v1084 = vmul.f32 %v1034, %v648
        %v1085 = vmul.f32 %v1035, %v648
        %v1086 = vmul.f32 %v1036, %v648
        %v1087 = vmul.f32 %v1037, %v648
        %v1088 = vmul.f32 %v1038, %v648
        %v1089 = vmul.f32 %v1039, %v648
        %v1090 = vmul.f32 %v1040, %v648
        %v1091 = vadd.f32 %v1059, %v1075
        %v1092 = vadd.f32 %v1060, %v1076
        %v1093 = vadd.f32 %v1061, %v1077
        %v1094 = vadd.f32 %v1062, %v1078
        %v1095 = vadd.f32 %v1063, %v1079
        %v1096 = vadd.f32 %v1064, %v1080
        %v1097 = vadd.f32 %v1065, %v1081
        %v1098 = vadd.f32 %v1066, %v1082
        %v1099 = vadd.f32 %v1067, %v1083
        %v1100 = vadd.f32 %v1068, %v1084
        %v1101 = vadd.f32 %v1069, %v1085
        %v1102 = vadd.f32 %v1070, %v1086
        %v1103 = vadd.f32 %v1071, %v1087
        %v1104 = vadd.f32 %v1072, %v1088
        %v1105 = vadd.f32 %v1073, %v1089
        %v1106 = vadd.f32 %v1074, %v1090
        %v1107 = vmul.f32 %v1027, %v681
        %v1108 = vmul.f32 %v1028, %v681
        %v1109 = vmul.f32 %v1029, %v681
        %v1110 = vmul.f32 %v1030, %v681
        %v1111 = vmul.f32 %v1031, %v681
        %v1112 = vmul.f32 %v1032, %v681
        %v1113 = vmul.f32 %v1033, %v681
        %v1114 = vmul.f32 %v1034, %v681
        %v1115 = vmul.f32 %v1035, %v681
        %v1116 = vmul.f32 %v1036, %v681
        %v1117 = vmul.f32 %v1037, %v681
        %v1118 = vmul.f32 %v1038, %v681
        %v1119 = vmul.f32 %v1039, %v681
        %v1120 = vmul.f32 %v1040, %v681
        %v1121 = vmul.f32 %v1041, %v681
        %v1122 = vmul.f32 %v1042, %v681
        %v1123 = vadd.f32 %v1091, %v1107
        %v1124 = vadd.f32 %v1092, %v1108
        %v1125 = vadd.f32 %v1093, %v1109
        %v1126 = vadd.f32 %v1094, %v1110
        %v1127 = vadd.f32 %v1095, %v1111
        %v1128 = vadd.f32 %v1096, %v1112
        %v1129 = vadd.f32 %v1097, %v1113
        %v1130 = vadd.f32 %v1098, %v1114
        %v1131 = vadd.f32 %v1099, %v1115
        %v1132 = vadd.f32 %v1100, %v1116
        %v1133 = vadd.f32 %v1101, %v1117
        %v1134 = vadd.f32 %v1102, %v1118
        %v1135 = vadd.f32 %v1103, %v1119
        %v1136 = vadd.f32 %v1104, %v1120
        %v1137 = vadd.f32 %v1105, %v1121
        %v1138 = vadd.f32 %v1106, %v1122
        %1139 = vst [vmem:[#allocation2 + $0x80] sm:$0xff] %v1123
        %1140 = vst [vmem:[#allocation2 + $0x88] sm:$0xff] %v1124
        %1141 = vst [vmem:[#allocation2 + $0x90] sm:$0xff] %v1125
        %1142 = vst [vmem:[#allocation2 + $0x98] sm:$0xff] %v1126
        %1143 = vst [vmem:[#allocation2 + $0xa0] sm:$0xff] %v1127
        %1144 = vst [vmem:[#allocation2 + $0xa8] sm:$0xff] %v1128
        %1145 = vst [vmem:[#allocation2 + $0xb0] sm:$0xff] %v1129
        %1146 = vst [vmem:[#allocation2 + $0xb8] sm:$0xff] %v1130
        %1147 = vst [vmem:[#allocation2 + $0xc0] sm:$0xff] %v1131
        %1148 = vst [vmem:[#allocation2 + $0xc8] sm:$0xff] %v1132
        %1149 = vst [vmem:[#allocation2 + $0xd0] sm:$0xff] %v1133
        %1150 = vst [vmem:[#allocation2 + $0xd8] sm:$0xff] %v1134
        %1151 = vst [vmem:[#allocation2 + $0xe0] sm:$0xff] %v1135
        %1152 = vst [vmem:[#allocation2 + $0xe8] sm:$0xff] %v1136
        %1153 = vst [vmem:[#allocation2 + $0xf0] sm:$0xff] %v1137
        %1154 = vst [vmem:[#allocation2 + $0xf8] sm:$0xff] %v1138
      $region44: #{exit_flow.6} parent=39 // pred_fallthru
        _
      %v1155 = vld [vmem:[#allocation2] sm:$0xff]
      %v1156 = vld [vmem:[#allocation2 + $0x8] sm:$0xff]
      %v1157 = vld [vmem:[#allocation2 + $0x10] sm:$0xff]
      %v1158 = vld [vmem:[#allocation2 + $0x18] sm:$0xff]
      %v1159 = vld [vmem:[#allocation2 + $0x20] sm:$0xff]
      %v1160 = vld [vmem:[#allocation2 + $0x28] sm:$0xff]
      %v1161 = vld [vmem:[#allocation2 + $0x30] sm:$0xff]
      %v1162 = vld [vmem:[#allocation2 + $0x38] sm:$0xff]
      %v1163 = vld [vmem:[#allocation2 + $0x40] sm:$0xff]
      %v1164 = vld [vmem:[#allocation2 + $0x48] sm:$0xff]
      %v1165 = vld [vmem:[#allocation2 + $0x50] sm:$0xff]
      %v1166 = vld [vmem:[#allocation2 + $0x58] sm:$0xff]
      %v1167 = vld [vmem:[#allocation2 + $0x60] sm:$0xff]
      %v1168 = vld [vmem:[#allocation2 + $0x68] sm:$0xff]
      %v1169 = vld [vmem:[#allocation2 + $0x70] sm:$0xff]
      %v1170 = vld [vmem:[#allocation2 + $0x78] sm:$0xff]
      %v1171 = vld [vmem:[#allocation2 + $0x80] sm:$0xff]
      %v1172 = vld [vmem:[#allocation2 + $0x88] sm:$0xff]
      %v1173 = vld [vmem:[#allocation2 + $0x90] sm:$0xff]
      %v1174 = vld [vmem:[#allocation2 + $0x98] sm:$0xff]
      %v1175 = vld [vmem:[#allocation2 + $0xa0] sm:$0xff]
      %v1176 = vld [vmem:[#allocation2 + $0xa8] sm:$0xff]
      %v1177 = vld [vmem:[#allocation2 + $0xb0] sm:$0xff]
      %v1178 = vld [vmem:[#allocation2 + $0xb8] sm:$0xff]
      %v1179 = vld [vmem:[#allocation2 + $0xc0] sm:$0xff]
      %v1180 = vld [vmem:[#allocation2 + $0xc8] sm:$0xff]
      %v1181 = vld [vmem:[#allocation2 + $0xd0] sm:$0xff]
      %v1182 = vld [vmem:[#allocation2 + $0xd8] sm:$0xff]
      %v1183 = vld [vmem:[#allocation2 + $0xe0] sm:$0xff]
      %v1184 = vld [vmem:[#allocation2 + $0xe8] sm:$0xff]
      %v1185 = vld [vmem:[#allocation2 + $0xf0] sm:$0xff]
      %v1186 = vld [vmem:[#allocation2 + $0xf8] sm:$0xff]
      %v1187 = vld [vmem:[%s275] sm:$0xff]
      %v1188 = vld [vmem:[%s275 + $0x8] sm:$0xff]
      %v1189 = vld [vmem:[%s275 + $0x10] sm:$0xff]
      %v1190 = vld [vmem:[%s275 + $0x18] sm:$0xff]
      %v1191 = vld [vmem:[%s275 + $0x20] sm:$0xff]
      %v1192 = vld [vmem:[%s275 + $0x28] sm:$0xff]
      %v1193 = vld [vmem:[%s275 + $0x30] sm:$0xff]
      %v1194 = vld [vmem:[%s275 + $0x38] sm:$0xff]
      %v1195 = vld [vmem:[%s275 + $0x40] sm:$0xff]
      %v1196 = vld [vmem:[%s275 + $0x48] sm:$0xff]
      %v1197 = vld [vmem:[%s275 + $0x50] sm:$0xff]
      %v1198 = vld [vmem:[%s275 + $0x58] sm:$0xff]
      %v1199 = vld [vmem:[%s275 + $0x60] sm:$0xff]
      %v1200 = vld [vmem:[%s275 + $0x68] sm:$0xff]
      %v1201 = vld [vmem:[%s275 + $0x70] sm:$0xff]
      %v1202 = vld [vmem:[%s275 + $0x78] sm:$0xff]
      %1203 = vmatpush.msra.mxu0 %v1202
      %1204 = vmatpush.msra.mxu0 %v1201
      %1205 = vmatpush.msra.mxu0 %v1200
      %1206 = vmatpush.msra.mxu0 %v1199
      %1207 = vmatpush.msra.mxu0 %v1198
      %1208 = vmatpush.msra.mxu0 %v1197
      %1209 = vmatpush.msra.mxu0 %v1196
      %1210 = vmatpush.msra.mxu0 %v1195
      %1211 = vmatpush.msra.mxu0 %v1194
      %1212 = vmatpush.msra.mxu0 %v1193
      %1213 = vmatpush.msra.mxu0 %v1192
      %1214 = vmatpush.msra.mxu0 %v1191
      %1215 = vmatpush.msra.mxu0 %v1190
      %1216 = vmatpush.msra.mxu0 %v1189
      %1217 = vmatpush.msra.mxu0 %v1188
      %1218 = vmatpush.msra.mxu0 %v1187
      %1219 = vmatmul.f32.gmra.mxu0 %v1155
      %v1220 = vpop.f32.mrf.mxu0
      %v1221 = vadd.f32 0.0, %v1220
      %1222 = vmatmul.f32.gmra.mxu0 %v1156
      %v1223 = vpop.f32.mrf.mxu0
      %v1224 = vadd.f32 0.0, %v1223
      %1225 = vmatmul.f32.gmra.mxu0 %v1157
      %v1226 = vpop.f32.mrf.mxu0
      %v1227 = vadd.f32 0.0, %v1226
      %1228 = vmatmul.f32.gmra.mxu0 %v1158
      %v1229 = vpop.f32.mrf.mxu0
      %v1230 = vadd.f32 0.0, %v1229
      %1231 = vmatmul.f32.gmra.mxu0 %v1159
      %v1232 = vpop.f32.mrf.mxu0
      %v1233 = vadd.f32 0.0, %v1232
      %1234 = vmatmul.f32.gmra.mxu0 %v1160
      %v1235 = vpop.f32.mrf.mxu0
      %v1236 = vadd.f32 0.0, %v1235
      %1237 = vmatmul.f32.gmra.mxu0 %v1161
      %v1238 = vpop.f32.mrf.mxu0
      %v1239 = vadd.f32 0.0, %v1238
      %1240 = vmatmul.f32.gmra.mxu0 %v1162
      %v1241 = vpop.f32.mrf.mxu0
      %v1242 = vadd.f32 0.0, %v1241
      %1243 = vmatmul.f32.gmra.mxu0 %v1163
      %v1244 = vpop.f32.mrf.mxu0
      %v1245 = vadd.f32 0.0, %v1244
      %1246 = vmatmul.f32.gmra.mxu0 %v1164
      %v1247 = vpop.f32.mrf.mxu0
      %v1248 = vadd.f32 0.0, %v1247
      %1249 = vmatmul.f32.gmra.mxu0 %v1165
      %v1250 = vpop.f32.mrf.mxu0
      %v1251 = vadd.f32 0.0, %v1250
      %1252 = vmatmul.f32.gmra.mxu0 %v1166
      %v1253 = vpop.f32.mrf.mxu0
      %v1254 = vadd.f32 0.0, %v1253
      %1255 = vmatmul.f32.gmra.mxu0 %v1167
      %v1256 = vpop.f32.mrf.mxu0
      %v1257 = vadd.f32 0.0, %v1256
      %1258 = vmatmul.f32.gmra.mxu0 %v1168
      %v1259 = vpop.f32.mrf.mxu0
      %v1260 = vadd.f32 0.0, %v1259
      %1261 = vmatmul.f32.gmra.mxu0 %v1169
      %v1262 = vpop.f32.mrf.mxu0
      %v1263 = vadd.f32 0.0, %v1262
      %1264 = vmatmul.f32.gmra.mxu0 %v1170
      %v1265 = vpop.f32.mrf.mxu0
      %v1266 = vadd.f32 0.0, %v1265
      %1267 = vmatmul.f32.gmra.mxu0 %v1171
      %v1268 = vpop.f32.mrf.mxu0
      %v1269 = vadd.f32 0.0, %v1268
      %1270 = vmatmul.f32.gmra.mxu0 %v1172
      %v1271 = vpop.f32.mrf.mxu0
      %v1272 = vadd.f32 0.0, %v1271
      %1273 = vmatmul.f32.gmra.mxu0 %v1173
      %v1274 = vpop.f32.mrf.mxu0
      %v1275 = vadd.f32 0.0, %v1274
      %1276 = vmatmul.f32.gmra.mxu0 %v1174
      %v1277 = vpop.f32.mrf.mxu0
      %v1278 = vadd.f32 0.0, %v1277
      %1279 = vmatmul.f32.gmra.mxu0 %v1175
      %v1280 = vpop.f32.mrf.mxu0
      %v1281 = vadd.f32 0.0, %v1280
      %1282 = vmatmul.f32.gmra.mxu0 %v1176
      %v1283 = vpop.f32.mrf.mxu0
      %v1284 = vadd.f32 0.0, %v1283
      %1285 = vmatmul.f32.gmra.mxu0 %v1177
      %v1286 = vpop.f32.mrf.mxu0
      %v1287 = vadd.f32 0.0, %v1286
      %1288 = vmatmul.f32.gmra.mxu0 %v1178
      %v1289 = vpop.f32.mrf.mxu0
      %v1290 = vadd.f32 0.0, %v1289
      %1291 = vmatmul.f32.gmra.mxu0 %v1179
      %v1292 = vpop.f32.mrf.mxu0
      %v1293 = vadd.f32 0.0, %v1292
      %1294 = vmatmul.f32.gmra.mxu0 %v1180
      %v1295 = vpop.f32.mrf.mxu0
      %v1296 = vadd.f32 0.0, %v1295
      %1297 = vmatmul.f32.gmra.mxu0 %v1181
      %v1298 = vpop.f32.mrf.mxu0
      %v1299 = vadd.f32 0.0, %v1298
      %1300 = vmatmul.f32.gmra.mxu0 %v1182
      %v1301 = vpop.f32.mrf.mxu0
      %v1302 = vadd.f32 0.0, %v1301
      %1303 = vmatmul.f32.gmra.mxu0 %v1183
      %v1304 = vpop.f32.mrf.mxu0
      %v1305 = vadd.f32 0.0, %v1304
      %1306 = vmatmul.f32.gmra.mxu0 %v1184
      %v1307 = vpop.f32.mrf.mxu0
      %v1308 = vadd.f32 0.0, %v1307
      %1309 = vmatmul.f32.gmra.mxu0 %v1185
      %v1310 = vpop.f32.mrf.mxu0
      %v1311 = vadd.f32 0.0, %v1310
      %1312 = vmatmul.f32.gmra.mxu0 %v1186
      %v1313 = vpop.f32.mrf.mxu0
      %v1314 = vadd.f32 0.0, %v1313
      %1315 = vdwg.mxu0
      %v1316 = vld [vmem:[%s278] sm:$0x1]
      %v1318 = vperm.slane %v1316, 0
      %v1320 = vmul.f32 %v1221, %v1318
      %v1321 = vmul.f32 %v1224, %v1318
      %v1322 = vmul.f32 %v1227, %v1318
      %v1323 = vmul.f32 %v1230, %v1318
      %v1324 = vmul.f32 %v1233, %v1318
      %v1325 = vmul.f32 %v1236, %v1318
      %v1326 = vmul.f32 %v1239, %v1318
      %v1327 = vmul.f32 %v1242, %v1318
      %v1328 = vmul.f32 %v1245, %v1318
      %v1329 = vmul.f32 %v1248, %v1318
      %v1330 = vmul.f32 %v1251, %v1318
      %v1331 = vmul.f32 %v1254, %v1318
      %v1332 = vmul.f32 %v1257, %v1318
      %v1333 = vmul.f32 %v1260, %v1318
      %v1334 = vmul.f32 %v1263, %v1318
      %v1335 = vmul.f32 %v1266, %v1318
      %v1336 = vmul.f32 %v1269, %v1318
      %v1337 = vmul.f32 %v1272, %v1318
      %v1338 = vmul.f32 %v1275, %v1318
      %v1339 = vmul.f32 %v1278, %v1318
      %v1340 = vmul.f32 %v1281, %v1318
      %v1341 = vmul.f32 %v1284, %v1318
      %v1342 = vmul.f32 %v1287, %v1318
      %v1343 = vmul.f32 %v1290, %v1318
      %v1344 = vmul.f32 %v1293, %v1318
      %v1345 = vmul.f32 %v1296, %v1318
      %v1346 = vmul.f32 %v1299, %v1318
      %v1347 = vmul.f32 %v1302, %v1318
      %v1348 = vmul.f32 %v1305, %v1318
      %v1349 = vmul.f32 %v1308, %v1318
      %v1350 = vmul.f32 %v1311, %v1318
      %v1351 = vmul.f32 %v1314, %v1318
      %v1352 = vld [vmem:[%s281] sm:$0x1]
      %v1354 = vperm.slane %v1352, 0
      %v1356 = vadd.f32 %v1320, %v1354
      %v1357 = vadd.f32 %v1321, %v1354
      %v1358 = vadd.f32 %v1322, %v1354
      %v1359 = vadd.f32 %v1323, %v1354
      %v1360 = vadd.f32 %v1324, %v1354
      %v1361 = vadd.f32 %v1325, %v1354
      %v1362 = vadd.f32 %v1326, %v1354
      %v1363 = vadd.f32 %v1327, %v1354
      %v1364 = vadd.f32 %v1328, %v1354
      %v1365 = vadd.f32 %v1329, %v1354
      %v1366 = vadd.f32 %v1330, %v1354
      %v1367 = vadd.f32 %v1331, %v1354
      %v1368 = vadd.f32 %v1332, %v1354
      %v1369 = vadd.f32 %v1333, %v1354
      %v1370 = vadd.f32 %v1334, %v1354
      %v1371 = vadd.f32 %v1335, %v1354
      %v1372 = vadd.f32 %v1336, %v1354
      %v1373 = vadd.f32 %v1337, %v1354
      %v1374 = vadd.f32 %v1338, %v1354
      %v1375 = vadd.f32 %v1339, %v1354
      %v1376 = vadd.f32 %v1340, %v1354
      %v1377 = vadd.f32 %v1341, %v1354
      %v1378 = vadd.f32 %v1342, %v1354
      %v1379 = vadd.f32 %v1343, %v1354
      %v1380 = vadd.f32 %v1344, %v1354
      %v1381 = vadd.f32 %v1345, %v1354
      %v1382 = vadd.f32 %v1346, %v1354
      %v1383 = vadd.f32 %v1347, %v1354
      %v1384 = vadd.f32 %v1348, %v1354
      %v1385 = vadd.f32 %v1349, %v1354
      %v1386 = vadd.f32 %v1350, %v1354
      %v1387 = vadd.f32 %v1351, %v1354
      %v1388 = vmax.f32 %v1356, 0.0
      %v1389 = vmax.f32 %v1357, 0.0
      %v1390 = vmax.f32 %v1358, 0.0
      %v1391 = vmax.f32 %v1359, 0.0
      %v1392 = vmax.f32 %v1360, 0.0
      %v1393 = vmax.f32 %v1361, 0.0
      %v1394 = vmax.f32 %v1362, 0.0
      %v1395 = vmax.f32 %v1363, 0.0
      %v1396 = vmax.f32 %v1364, 0.0
      %v1397 = vmax.f32 %v1365, 0.0
      %v1398 = vmax.f32 %v1366, 0.0
      %v1399 = vmax.f32 %v1367, 0.0
      %v1400 = vmax.f32 %v1368, 0.0
      %v1401 = vmax.f32 %v1369, 0.0
      %v1402 = vmax.f32 %v1370, 0.0
      %v1403 = vmax.f32 %v1371, 0.0
      %v1404 = vmax.f32 %v1372, 0.0
      %v1405 = vmax.f32 %v1373, 0.0
      %v1406 = vmax.f32 %v1374, 0.0
      %v1407 = vmax.f32 %v1375, 0.0
      %v1408 = vmax.f32 %v1376, 0.0
      %v1409 = vmax.f32 %v1377, 0.0
      %v1410 = vmax.f32 %v1378, 0.0
      %v1411 = vmax.f32 %v1379, 0.0
      %v1412 = vmax.f32 %v1380, 0.0
      %v1413 = vmax.f32 %v1381, 0.0
      %v1414 = vmax.f32 %v1382, 0.0
      %v1415 = vmax.f32 %v1383, 0.0
      %v1416 = vmax.f32 %v1384, 0.0
      %v1417 = vmax.f32 %v1385, 0.0
      %v1418 = vmax.f32 %v1386, 0.0
      %v1419 = vmax.f32 %v1387, 0.0
      %1420 = vst [vmem:[%s289] sm:$0xff] %v1388
      %1421 = vst [vmem:[%s289 + $0x8] sm:$0xff] %v1389
      %1422 = vst [vmem:[%s289 + $0x10] sm:$0xff] %v1390
      %1423 = vst [vmem:[%s289 + $0x18] sm:$0xff] %v1391
      %1424 = vst [vmem:[%s289 + $0x20] sm:$0xff] %v1392
      %1425 = vst [vmem:[%s289 + $0x28] sm:$0xff] %v1393
      %1426 = vst [vmem:[%s289 + $0x30] sm:$0xff] %v1394
      %1427 = vst [vmem:[%s289 + $0x38] sm:$0xff] %v1395
      %1428 = vst [vmem:[%s289 + $0x40] sm:$0xff] %v1396
      %1429 = vst [vmem:[%s289 + $0x48] sm:$0xff] %v1397
      %1430 = vst [vmem:[%s289 + $0x50] sm:$0xff] %v1398
      %1431 = vst [vmem:[%s289 + $0x58] sm:$0xff] %v1399
      %1432 = vst [vmem:[%s289 + $0x60] sm:$0xff] %v1400
      %1433 = vst [vmem:[%s289 + $0x68] sm:$0xff] %v1401
      %1434 = vst [vmem:[%s289 + $0x70] sm:$0xff] %v1402
      %1435 = vst [vmem:[%s289 + $0x78] sm:$0xff] %v1403
      %1436 = vst [vmem:[%s289 + $0x80] sm:$0xff] %v1404
      %1437 = vst [vmem:[%s289 + $0x88] sm:$0xff] %v1405
      %1438 = vst [vmem:[%s289 + $0x90] sm:$0xff] %v1406
      %1439 = vst [vmem:[%s289 + $0x98] sm:$0xff] %v1407
      %1440 = vst [vmem:[%s289 + $0xa0] sm:$0xff] %v1408
      %1441 = vst [vmem:[%s289 + $0xa8] sm:$0xff] %v1409
      %1442 = vst [vmem:[%s289 + $0xb0] sm:$0xff] %v1410
      %1443 = vst [vmem:[%s289 + $0xb8] sm:$0xff] %v1411
      %1444 = vst [vmem:[%s289 + $0xc0] sm:$0xff] %v1412
      %1445 = vst [vmem:[%s289 + $0xc8] sm:$0xff] %v1413
      %1446 = vst [vmem:[%s289 + $0xd0] sm:$0xff] %v1414
      %1447 = vst [vmem:[%s289 + $0xd8] sm:$0xff] %v1415
      %1448 = vst [vmem:[%s289 + $0xe0] sm:$0xff] %v1416
      %1449 = vst [vmem:[%s289 + $0xe8] sm:$0xff] %v1417
      %1450 = vst [vmem:[%s289 + $0xf0] sm:$0xff] %v1418
      %1451 = vst [vmem:[%s289 + $0xf8] sm:$0xff] %v1419
      %p1452 = scmp.lt.s32.totalorder %s20, 1
      %s1453 = scalar_select %p1452, %s20, 1
      %p1454 = scmp.lt.s32.totalorder %s21, 0
      %s1455 = scalar_select %p1454, %s21, 0
      %s1456 = smul.addr %s1453, 32
      %s1457 = sadd.s32 %s1455, %s1456
      %s1458 = smul.addr %s1457, 8
      %s1459 = scalar_lea.vmem %s5, %s1458
      // Predicated region
      $region45: #{exit_flow.6} parent=39 // pred_check
        %p1460 = pneg %p173
      $region46: #{exit_flow.6} parent=39 // pred_check_branch
        %1462 = sbr.rel (%p1460) target = $region48
      $region47: #{exit_flow.6} parent=39 // pred_region
        _
      $region48: #{exit_flow.6} parent=39 // pred_fallthru
        _
    $region40: #{exit_flow.6} parent=5 // pred_fallthru
      _
    %p1463 = scmp.le.s32.totalorder 2, %s11
    // Predicated region
    $region49: #{exit_flow.6} parent=5 // pred_check
      %p1464 = pneg %p1463
    $region50: #{exit_flow.6} parent=5 // pred_check_branch
      %1466 = sbr.rel (%p1464) target = $region52
    $region51: #{exit_flow.6} parent=5 // pred_region
      %s1467 = ssub.s32 %s11, 2
      // Predicated region
      $region53: #{exit_flow.6} parent=51 // pred_check
        %p1468 = pneg %p179
      $region54: #{exit_flow.6} parent=51 // pred_check_branch
        %1470 = sbr.rel (%p1468) target = $region56
      $region55: #{exit_flow.6} parent=51 // pred_region
        %p1471 = scmp.lt.s32.totalorder %s22, 1
        %s1472 = scalar_select %p1471, %s22, 1
        %p1473 = scmp.lt.s32.totalorder %s23, 0
        %s1474 = scalar_select %p1473, %s23, 0
        %s1475 = smul.addr %s1472, 32
        %s1476 = sadd.s32 %s1474, %s1475
        %s1477 = smul.addr %s1476, 8
        %s1478 = scalar_lea.vmem %s5, %s1477
      $region56: #{exit_flow.6} parent=51 // pred_fallthru
        _
    $region52: #{exit_flow.6} parent=5 // pred_fallthru
      _
  $region6: #{exit_flow.6} parent=0 // loop_footer
    %s15 = sadd.s32 1, %s11
  $region7: #{exit_flow.6} parent=0 // loop_footer_branch
    %10 = sbr.rel target = $region3
  $region8: #{exit_flow.6} parent=0 // loop_exit
    _

// kernel: exit_flow.9
$region0: #{exit_flow.9}
  #allocation0 [shape = 'u32[]', space=smem, size = 0x4, offset = 0x4, fixed_abs, tag = 'smem constant byte address 0x4 - core index']
  #allocation1 [shape = 'u32[72,128]{1,0:T(1,128)}', space=vmem, size = 0x9000, scoped, tag = 'internal scratch']
  %s0 = inlined_call_operand.vmem [shape: f32[2,10,10,128], index: 0, kind: input, shape index: {}]
  %s1 = inlined_call_operand.vmem [shape: f32[2,10,9,128], index: 1, kind: input, shape index: {}]
  %s2 = inlined_call_operand.vmem [shape: f32[2,9,10,128], index: 2, kind: input, shape index: {}]
  %s3 = inlined_call_operand.vmem [shape: f32[2,9,9,128], index: 3, kind: input, shape index: {}]
  %s4 = inlined_call_operand.vmem [shape: f32[2,8,8,128], index: 4, kind: input, shape index: {}]
  %s5 = inlined_call_operand.vmem [shape: f32[2,8,8,128], index: 5, kind: output, shape index: {}]
  %s6 = sld [smem:[#allocation0]]
  $region53: #{exit_flow.9} parent=0
    _
  %s8 = ssub.s32 1, %s6
  %s9 = scalar_select 0, %s8, %s6
  loop: start=0, step=1, limit=4
  $region2: #{exit_flow.9} parent=0 // loop_pre_header
    _
  $region3: #{exit_flow.9} parent=0 // loop_header
    %s11 = sphi 0, %s15
    %p12 = scmp.ge.s32.totalorder %s11, 4
    %s21 = sphi 0, %s23
    %s24 = sphi 0, %s21
    %s25 = sphi 0, %s24
    %s41 = sphi 0, %s25
    %s47 = sphi 0, %s49
    %s50 = sphi 0, %s47
    %s51 = sphi 0, %s50
    %s67 = sphi 0, %s51
    %s73 = sphi 0, %s75
    %s76 = sphi 0, %s73
    %s77 = sphi 0, %s76
    %s93 = sphi 0, %s77
    %s99 = sphi 0, %s101
    %s102 = sphi 0, %s99
    %s103 = sphi 0, %s102
    %s119 = sphi 0, %s103
    %s125 = sphi 0, %s127
    %s128 = sphi 0, %s125
    %s129 = sphi 0, %s128
    %s145 = sphi 0, %s129
    %s151 = sphi 0, %s153
    %s154 = sphi 0, %s151
    %s155 = sphi 0, %s154
    %s171 = sphi 0, %s155
  $region4: #{exit_flow.9} parent=0 // loop_header_branch
    %14 = sbr.rel (%p12) target = $region8
  $region5: #{exit_flow.9} parent=0 // loop_body
    %s16 = ssub.s32 %s11, 1
    %s17 = ssub.s32 %s11, 2
    %s18 = sadd.s32 %s11, 1
    %s19 = ssub.s32 %s11, %s18
    %p20 = scmp.eq.s32.totalorder %s19, 0
    %s22 = sadd.s32 %s21, 1
    %s23 = scalar_select %p20, %s21, %s22
    %p26 = pneg %p20
    %p27 = scmp.eq.s32.totalorder %s11, 1
    %p28 = por %p26, %p27
    %p29 = scmp.ne.s32.totalorder %s21, %s24
    %p30 = scmp.eq.s32.totalorder %s11, 0
    %p31 = por %p29, %p30
    %p32 = scmp.ne.s32.totalorder %s21, %s24
    %p33 = scmp.eq.s32.totalorder %s16, 1
    %p34 = por %p32, %p33
    %p35 = scmp.ne.s32.totalorder %s24, %s25
    %p36 = scmp.eq.s32.totalorder %s16, 0
    %p37 = por %p35, %p36
    %p38 = scmp.ne.s32.totalorder %s24, %s25
    %p39 = scmp.eq.s32.totalorder %s17, 1
    %p40 = por %p38, %p39
    %p42 = scmp.ne.s32.totalorder %s25, %s41
    %p43 = scmp.eq.s32.totalorder %s17, 0
    %p44 = por %p42, %p43
    %s45 = ssub.s32 %s11, %s18
    %p46 = scmp.eq.s32.totalorder %s45, 0
    %s48 = sadd.s32 %s47, 1
    %s49 = scalar_select %p46, %s47, %s48
    %p52 = pneg %p46
    %p53 = scmp.eq.s32.totalorder %s11, 1
    %p54 = por %p52, %p53
    %p55 = scmp.ne.s32.totalorder %s47, %s50
    %p56 = scmp.eq.s32.totalorder %s11, 0
    %p57 = por %p55, %p56
    %p58 = scmp.ne.s32.totalorder %s47, %s50
    %p59 = scmp.eq.s32.totalorder %s16, 1
    %p60 = por %p58, %p59
    %p61 = scmp.ne.s32.totalorder %s50, %s51
    %p62 = scmp.eq.s32.totalorder %s16, 0
    %p63 = por %p61, %p62
    %p64 = scmp.ne.s32.totalorder %s50, %s51
    %p65 = scmp.eq.s32.totalorder %s17, 1
    %p66 = por %p64, %p65
    %p68 = scmp.ne.s32.totalorder %s51, %s67
    %p69 = scmp.eq.s32.totalorder %s17, 0
    %p70 = por %p68, %p69
    %s71 = ssub.s32 %s11, %s18
    %p72 = scmp.eq.s32.totalorder %s71, 0
    %s74 = sadd.s32 %s73, 1
    %s75 = scalar_select %p72, %s73, %s74
    %p78 = pneg %p72
    %p79 = scmp.eq.s32.totalorder %s11, 1
    %p80 = por %p78, %p79
    %p81 = scmp.ne.s32.totalorder %s73, %s76
    %p82 = scmp.eq.s32.totalorder %s11, 0
    %p83 = por %p81, %p82
    %p84 = scmp.ne.s32.totalorder %s73, %s76
    %p85 = scmp.eq.s32.totalorder %s16, 1
    %p86 = por %p84, %p85
    %p87 = scmp.ne.s32.totalorder %s76, %s77
    %p88 = scmp.eq.s32.totalorder %s16, 0
    %p89 = por %p87, %p88
    %p90 = scmp.ne.s32.totalorder %s76, %s77
    %p91 = scmp.eq.s32.totalorder %s17, 1
    %p92 = por %p90, %p91
    %p94 = scmp.ne.s32.totalorder %s77, %s93
    %p95 = scmp.eq.s32.totalorder %s17, 0
    %p96 = por %p94, %p95
    %s97 = ssub.s32 %s11, %s18
    %p98 = scmp.eq.s32.totalorder %s97, 0
    %s100 = sadd.s32 %s99, 1
    %s101 = scalar_select %p98, %s99, %s100
    %p104 = pneg %p98
    %p105 = scmp.eq.s32.totalorder %s11, 1
    %p106 = por %p104, %p105
    %p107 = scmp.ne.s32.totalorder %s99, %s102
    %p108 = scmp.eq.s32.totalorder %s11, 0
    %p109 = por %p107, %p108
    %p110 = scmp.ne.s32.totalorder %s99, %s102
    %p111 = scmp.eq.s32.totalorder %s16, 1
    %p112 = por %p110, %p111
    %p113 = scmp.ne.s32.totalorder %s102, %s103
    %p114 = scmp.eq.s32.totalorder %s16, 0
    %p115 = por %p113, %p114
    %p116 = scmp.ne.s32.totalorder %s102, %s103
    %p117 = scmp.eq.s32.totalorder %s17, 1
    %p118 = por %p116, %p117
    %p120 = scmp.ne.s32.totalorder %s103, %s119
    %p121 = scmp.eq.s32.totalorder %s17, 0
    %p122 = por %p120, %p121
    %s123 = ssub.s32 %s11, %s18
    %p124 = scmp.eq.s32.totalorder %s123, 0
    %s126 = sadd.s32 %s125, 1
    %s127 = scalar_select %p124, %s125, %s126
    %p130 = pneg %p124
    %p131 = scmp.eq.s32.totalorder %s11, 1
    %p132 = por %p130, %p131
    %p133 = scmp.ne.s32.totalorder %s125, %s128
    %p134 = scmp.eq.s32.totalorder %s11, 0
    %p135 = por %p133, %p134
    %p136 = scmp.ne.s32.totalorder %s125, %s128
    %p137 = scmp.eq.s32.totalorder %s16, 1
    %p138 = por %p136, %p137
    %p139 = scmp.ne.s32.totalorder %s128, %s129
    %p140 = scmp.eq.s32.totalorder %s16, 0
    %p141 = por %p139, %p140
    %p142 = scmp.ne.s32.totalorder %s128, %s129
    %p143 = scmp.eq.s32.totalorder %s17, 1
    %p144 = por %p142, %p143
    %p146 = scmp.ne.s32.totalorder %s129, %s145
    %p147 = scmp.eq.s32.totalorder %s17, 0
    %p148 = por %p146, %p147
    %s149 = ssub.s32 %s11, %s18
    %p150 = scmp.eq.s32.totalorder %s149, 0
    %s152 = sadd.s32 %s151, 1
    %s153 = scalar_select %p150, %s151, %s152
    %p156 = pneg %p150
    %p157 = scmp.eq.s32.totalorder %s11, 1
    %p158 = por %p156, %p157
    %p159 = scmp.ne.s32.totalorder %s151, %s154
    %p160 = scmp.eq.s32.totalorder %s11, 0
    %p161 = por %p159, %p160
    %p162 = scmp.ne.s32.totalorder %s151, %s154
    %p163 = scmp.eq.s32.totalorder %s16, 1
    %p164 = por %p162, %p163
    %p165 = scmp.ne.s32.totalorder %s154, %s155
    %p166 = scmp.eq.s32.totalorder %s16, 0
    %p167 = por %p165, %p166
    %p168 = scmp.ne.s32.totalorder %s154, %s155
    %p169 = scmp.eq.s32.totalorder %s17, 1
    %p170 = por %p168, %p169
    %p172 = scmp.ne.s32.totalorder %s155, %s171
    %p173 = scmp.eq.s32.totalorder %s17, 0
    %p174 = por %p172, %p173
    %p175 = scmp.le.s32.totalorder 1, %s11
    %p176 = scmp.lt.s32.totalorder %s11, 3
    %p177 = pnand %p175, %p176
    %p178 = pneg %p177
    // Predicated region
    $region9: #{exit_flow.9} parent=5 // pred_check
      _
    $region10: #{exit_flow.9} parent=5 // pred_check_branch
      %180 = sbr.rel (%p177) target = $region12
    $region11: #{exit_flow.9} parent=5 // pred_region
      %s181 = ssub.s32 %s11, 1
    $region12: #{exit_flow.9} parent=5 // pred_fallthru
      _
    %p182 = scmp.lt.s32.totalorder %s11, 2
    // Predicated region
    $region13: #{exit_flow.9} parent=5 // pred_check
      %p183 = pneg %p182
    $region14: #{exit_flow.9} parent=5 // pred_check_branch
      %185 = sbr.rel (%p183) target = $region16
    $region15: #{exit_flow.9} parent=5 // pred_region
      // Predicated region
      $region17: #{exit_flow.9} parent=15 // pred_check
        %p186 = pneg %p31
      $region18: #{exit_flow.9} parent=15 // pred_check_branch
        %188 = sbr.rel (%p186) target = $region20
      $region19: #{exit_flow.9} parent=15 // pred_region
        %p189 = scmp.lt.s32.totalorder %s11, 1
        %s190 = scalar_select %p189, %s11, 1
        %s191 = smul.addr %s190, 20
        %s192 = smul.addr %s191, 8
        %s193 = scalar_lea.vmem %s0, %s192
      $region20: #{exit_flow.9} parent=15 // pred_fallthru
        _
      // Predicated region
      $region21: #{exit_flow.9} parent=15 // pred_check
        %p194 = pneg %p57
      $region22: #{exit_flow.9} parent=15 // pred_check_branch
        %196 = sbr.rel (%p194) target = $region24
      $region23: #{exit_flow.9} parent=15 // pred_region
        %p197 = scmp.lt.s32.totalorder %s11, 1
        %s198 = scalar_select %p197, %s11, 1
        %s199 = smul.addr %s198, 20
        %s200 = smul.addr %s199, 8
        %s201 = scalar_lea.vmem %s1, %s200
      $region24: #{exit_flow.9} parent=15 // pred_fallthru
        _
      // Predicated region
      $region25: #{exit_flow.9} parent=15 // pred_check
        %p202 = pneg %p83
      $region26: #{exit_flow.9} parent=15 // pred_check_branch
        %204 = sbr.rel (%p202) target = $region28
      $region27: #{exit_flow.9} parent=15 // pred_region
        %p205 = scmp.lt.s32.totalorder %s11, 1
        %s206 = scalar_select %p205, %s11, 1
        %s207 = smul.addr %s206, 18
        %s208 = smul.addr %s207, 8
        %s209 = scalar_lea.vmem %s2, %s208
      $region28: #{exit_flow.9} parent=15 // pred_fallthru
        _
      // Predicated region
      $region29: #{exit_flow.9} parent=15 // pred_check
        %p210 = pneg %p109
      $region30: #{exit_flow.9} parent=15 // pred_check_branch
        %212 = sbr.rel (%p210) target = $region32
      $region31: #{exit_flow.9} parent=15 // pred_region
        %p213 = scmp.lt.s32.totalorder %s11, 1
        %s214 = scalar_select %p213, %s11, 1
        %s215 = smul.addr %s214, 18
        %s216 = smul.addr %s215, 8
        %s217 = scalar_lea.vmem %s3, %s216
      $region32: #{exit_flow.9} parent=15 // pred_fallthru
        _
      // Predicated region
      $region33: #{exit_flow.9} parent=15 // pred_check
        %p218 = pneg %p135
      $region34: #{exit_flow.9} parent=15 // pred_check_branch
        %220 = sbr.rel (%p218) target = $region36
      $region35: #{exit_flow.9} parent=15 // pred_region
        %p221 = scmp.lt.s32.totalorder %s11, 1
        %s222 = scalar_select %p221, %s11, 1
        %s223 = smul.addr %s222, 8
        %s224 = smul.addr %s223, 8
        %s225 = scalar_lea.vmem %s4, %s224
      $region36: #{exit_flow.9} parent=15 // pred_fallthru
        _
    $region16: #{exit_flow.9} parent=5 // pred_fallthru
      _
    %p226 = scmp.le.s32.totalorder 1, %s11
    %p227 = scmp.lt.s32.totalorder %s11, 3
    %p228 = pnand %p226, %p227
    %p229 = pneg %p228
    // Predicated region
    $region37: #{exit_flow.9} parent=5 // pred_check
      _
    $region38: #{exit_flow.9} parent=5 // pred_check_branch
      %231 = sbr.rel (%p228) target = $region40
    $region39: #{exit_flow.9} parent=5 // pred_region
      %s232 = ssub.s32 %s11, 1
      %p233 = scmp.lt.s32.totalorder %s16, 1
      %s234 = scalar_select %p233, %s16, 1
      %s235 = smul.addr %s234, 20
      %s236 = smul.addr %s235, 8
      %s237 = scalar_lea.vmem %s0, %s236
      %p238 = pneg %p37
      %p239 = pneg %p34
      %p240 = scmp.lt.s32.totalorder %s16, 1
      %s241 = scalar_select %p240, %s16, 1
      %s242 = smul.addr %s241, 20
      %s243 = smul.addr %s242, 8
      %s244 = scalar_lea.vmem %s1, %s243
      %p245 = pneg %p63
      %p246 = pneg %p60
      %p247 = scmp.lt.s32.totalorder %s16, 1
      %s248 = scalar_select %p247, %s16, 1
      %s249 = smul.addr %s248, 18
      %s250 = smul.addr %s249, 8
      %s251 = scalar_lea.vmem %s2, %s250
      %p252 = pneg %p89
      %p253 = pneg %p86
      %p254 = scmp.lt.s32.totalorder %s16, 1
      %s255 = scalar_select %p254, %s16, 1
      %s256 = smul.addr %s255, 18
      %s257 = smul.addr %s256, 8
      %s258 = scalar_lea.vmem %s3, %s257
      %p259 = pneg %p115
      %p260 = pneg %p112
      %p261 = scmp.lt.s32.totalorder %s16, 1
      %s262 = scalar_select %p261, %s16, 1
      %s263 = smul.addr %s262, 8
      %s264 = smul.addr %s263, 8
      %s265 = scalar_lea.vmem %s4, %s264
      %p266 = pneg %p141
      %p267 = pneg %p138
      %p268 = pneg %p167
      %p269 = pneg %p164
      %p270 = scmp.lt.s32.totalorder %s16, 1
      %s271 = scalar_select %p270, %s16, 1
      %s272 = smul.addr %s271, 8
      %s273 = smul.addr %s272, 8
      %s274 = scalar_lea.vmem %s5, %s273
      %p275 = scmp.lt.s32.totalorder %s16, 1
      %s276 = scalar_select %p275, %s16, 1
      %s277 = smul.addr %s276, 20
      %s278 = smul.addr %s277, 8
      %s279 = scalar_lea.vmem %s0, %s278
      %p280 = scmp.lt.s32.totalorder %s16, 1
      %s281 = scalar_select %p280, %s16, 1
      %s282 = smul.addr %s281, 20
      %s283 = smul.addr %s282, 8
      %s284 = scalar_lea.vmem %s1, %s283
      %p285 = scmp.lt.s32.totalorder %s16, 1
      %s286 = scalar_select %p285, %s16, 1
      %s287 = smul.addr %s286, 18
      %s288 = smul.addr %s287, 8
      %s289 = scalar_lea.vmem %s2, %s288
      %p290 = scmp.lt.s32.totalorder %s16, 1
      %s291 = scalar_select %p290, %s16, 1
      %s292 = smul.addr %s291, 18
      %s293 = smul.addr %s292, 8
      %s294 = scalar_lea.vmem %s3, %s293
      %p295 = scmp.lt.s32.totalorder %s16, 1
      %s296 = scalar_select %p295, %s16, 1
      %s297 = smul.addr %s296, 8
      %s298 = smul.addr %s297, 8
      %s299 = scalar_lea.vmem %s4, %s298
      %p300 = scmp.lt.s32.totalorder %s16, 1
      %s301 = scalar_select %p300, %s16, 1
      %s302 = smul.addr %s301, 8
      %s303 = smul.addr %s302, 8
      %s304 = scalar_lea.vmem %s5, %s303
      %v305 = vld [vmem:[%s279] sm:$0xff]
      %v306 = vld [vmem:[%s279 + $0x8] sm:$0x3]
      %v307 = vld [vmem:[%s279 + $0x10] sm:$0xff]
      %v308 = vld [vmem:[%s279 + $0x18] sm:$0x3]
      %v309 = vld [vmem:[%s279 + $0x20] sm:$0xff]
      %v310 = vld [vmem:[%s279 + $0x28] sm:$0x3]
      %v311 = vld [vmem:[%s279 + $0x30] sm:$0xff]
      %v312 = vld [vmem:[%s279 + $0x38] sm:$0x3]
      %v313 = vld [vmem:[%s279 + $0x40] sm:$0xff]
      %v314 = vld [vmem:[%s279 + $0x48] sm:$0x3]
      %v315 = vld [vmem:[%s279 + $0x50] sm:$0xff]
      %v316 = vld [vmem:[%s279 + $0x58] sm:$0x3]
      %v317 = vld [vmem:[%s279 + $0x60] sm:$0xff]
      %v318 = vld [vmem:[%s279 + $0x68] sm:$0x3]
      %v319 = vld [vmem:[%s279 + $0x70] sm:$0xff]
      %v320 = vld [vmem:[%s279 + $0x78] sm:$0x3]
      %v321 = vld [vmem:[%s279 + $0x80] sm:$0xff]
      %v322 = vld [vmem:[%s279 + $0x88] sm:$0x3]
      %v323 = vld [vmem:[%s284] sm:$0xff]
      %v324 = vld [vmem:[%s284 + $0x10] sm:$0xff]
      %v325 = vld [vmem:[%s284 + $0x20] sm:$0xff]
      %v326 = vld [vmem:[%s284 + $0x30] sm:$0xff]
      %v327 = vld [vmem:[%s284 + $0x40] sm:$0xff]
      %v328 = vld [vmem:[%s284 + $0x50] sm:$0xff]
      %v329 = vld [vmem:[%s284 + $0x60] sm:$0xff]
      %v330 = vld [vmem:[%s284 + $0x70] sm:$0xff]
      %v331 = vld [vmem:[%s284 + $0x80] sm:$0xff]
      %v332 = vld [vmem:[%s289] sm:$0xff]
      %v333 = vld [vmem:[%s289 + $0x8] sm:$0x3]
      %v334 = vld [vmem:[%s289 + $0x10] sm:$0xff]
      %v335 = vld [vmem:[%s289 + $0x18] sm:$0x3]
      %v336 = vld [vmem:[%s289 + $0x20] sm:$0xff]
      %v337 = vld [vmem:[%s289 + $0x28] sm:$0x3]
      %v338 = vld [vmem:[%s289 + $0x30] sm:$0xff]
      %v339 = vld [vmem:[%s289 + $0x38] sm:$0x3]
      %v340 = vld [vmem:[%s289 + $0x40] sm:$0xff]
      %v341 = vld [vmem:[%s289 + $0x48] sm:$0x3]
      %v342 = vld [vmem:[%s289 + $0x50] sm:$0xff]
      %v343 = vld [vmem:[%s289 + $0x58] sm:$0x3]
      %v344 = vld [vmem:[%s289 + $0x60] sm:$0xff]
      %v345 = vld [vmem:[%s289 + $0x68] sm:$0x3]
      %v346 = vld [vmem:[%s289 + $0x70] sm:$0xff]
      %v347 = vld [vmem:[%s289 + $0x78] sm:$0x3]
      %v348 = vld [vmem:[%s294] sm:$0xff]
      %v349 = vld [vmem:[%s294 + $0x10] sm:$0xff]
      %v350 = vld [vmem:[%s294 + $0x20] sm:$0xff]
      %v351 = vld [vmem:[%s294 + $0x30] sm:$0xff]
      %v352 = vld [vmem:[%s294 + $0x40] sm:$0xff]
      %v353 = vld [vmem:[%s294 + $0x50] sm:$0xff]
      %v354 = vld [vmem:[%s294 + $0x60] sm:$0xff]
      %v355 = vld [vmem:[%s294 + $0x70] sm:$0xff]
      %vm372 = vcmask 1046528
      %v373 = vrot.slane %v305, 1
      %v374 = vrot.slane %v306, 1
      %v375 = vsel %vm372, %v373, %v374
      %v376 = vrot.slane %v307, 1
      %v377 = vrot.slane %v308, 1
      %v378 = vsel %vm372, %v376, %v377
      %v379 = vrot.slane %v309, 1
      %v380 = vrot.slane %v310, 1
      %v381 = vsel %vm372, %v379, %v380
      %v382 = vrot.slane %v311, 1
      %v383 = vrot.slane %v312, 1
      %v384 = vsel %vm372, %v382, %v383
      %v385 = vrot.slane %v313, 1
      %v386 = vrot.slane %v314, 1
      %v387 = vsel %vm372, %v385, %v386
      %v388 = vrot.slane %v315, 1
      %v389 = vrot.slane %v316, 1
      %v390 = vsel %vm372, %v388, %v389
      %v391 = vrot.slane %v317, 1
      %v392 = vrot.slane %v318, 1
      %v393 = vsel %vm372, %v391, %v392
      %v394 = vrot.slane %v319, 1
      %v395 = vrot.slane %v320, 1
      %v396 = vsel %vm372, %v394, %v395
      %v405 = vmax.f32 %v305, %v375
      %v406 = vmax.f32 %v307, %v378
      %v407 = vmax.f32 %v309, %v381
      %v408 = vmax.f32 %v311, %v384
      %v409 = vmax.f32 %v313, %v387
      %v410 = vmax.f32 %v315, %v390
      %v411 = vmax.f32 %v317, %v393
      %v412 = vmax.f32 %v319, %v396
      %v413 = vmax.f32 %v405, %v307
      %v414 = vmax.f32 %v406, %v309
      %v415 = vmax.f32 %v407, %v311
      %v416 = vmax.f32 %v408, %v313
      %v417 = vmax.f32 %v409, %v315
      %v418 = vmax.f32 %v410, %v317
      %v419 = vmax.f32 %v411, %v319
      %v420 = vmax.f32 %v412, %v321
      %v423 = vrot.slane %v321, 1
      %v424 = vrot.slane %v322, 1
      %v425 = vsel %vm372, %v423, %v424
      %v427 = vmax.f32 %v413, %v378
      %v428 = vmax.f32 %v414, %v381
      %v429 = vmax.f32 %v415, %v384
      %v430 = vmax.f32 %v416, %v387
      %v431 = vmax.f32 %v417, %v390
      %v432 = vmax.f32 %v418, %v393
      %v433 = vmax.f32 %v419, %v396
      %v434 = vmax.f32 %v420, %v425
      %v435 = vmax.f32 %v427, %v323
      %v436 = vmax.f32 %v428, %v324
      %v437 = vmax.f32 %v429, %v325
      %v438 = vmax.f32 %v430, %v326
      %v439 = vmax.f32 %v431, %v327
      %v440 = vmax.f32 %v432, %v328
      %v441 = vmax.f32 %v433, %v329
      %v442 = vmax.f32 %v434, %v330
      %v443 = vmax.f32 %v435, %v324
      %v444 = vmax.f32 %v436, %v325
      %v445 = vmax.f32 %v437, %v326
      %v446 = vmax.f32 %v438, %v327
      %v447 = vmax.f32 %v439, %v328
      %v448 = vmax.f32 %v440, %v329
      %v449 = vmax.f32 %v441, %v330
      %v450 = vmax.f32 %v442, %v331
      %v451 = vmax.f32 %v443, %v332
      %v452 = vmax.f32 %v444, %v334
      %v453 = vmax.f32 %v445, %v336
      %v454 = vmax.f32 %v446, %v338
      %v455 = vmax.f32 %v447, %v340
      %v456 = vmax.f32 %v448, %v342
      %v457 = vmax.f32 %v449, %v344
      %v458 = vmax.f32 %v450, %v346
      %v475 = vrot.slane %v332, 1
      %v476 = vrot.slane %v333, 1
      %v477 = vsel %vm372, %v475, %v476
      %v478 = vrot.slane %v334, 1
      %v479 = vrot.slane %v335, 1
      %v480 = vsel %vm372, %v478, %v479
      %v481 = vrot.slane %v336, 1
      %v482 = vrot.slane %v337, 1
      %v483 = vsel %vm372, %v481, %v482
      %v484 = vrot.slane %v338, 1
      %v485 = vrot.slane %v339, 1
      %v486 = vsel %vm372, %v484, %v485
      %v487 = vrot.slane %v340, 1
      %v488 = vrot.slane %v341, 1
      %v489 = vsel %vm372, %v487, %v488
      %v490 = vrot.slane %v342, 1
      %v491 = vrot.slane %v343, 1
      %v492 = vsel %vm372, %v490, %v491
      %v493 = vrot.slane %v344, 1
      %v494 = vrot.slane %v345, 1
      %v495 = vsel %vm372, %v493, %v494
      %v496 = vrot.slane %v346, 1
      %v497 = vrot.slane %v347, 1
      %v498 = vsel %vm372, %v496, %v497
      %v507 = vmax.f32 %v451, %v477
      %v508 = vmax.f32 %v452, %v480
      %v509 = vmax.f32 %v453, %v483
      %v510 = vmax.f32 %v454, %v486
      %v511 = vmax.f32 %v455, %v489
      %v512 = vmax.f32 %v456, %v492
      %v513 = vmax.f32 %v457, %v495
      %v514 = vmax.f32 %v458, %v498
      %v515 = vmax.f32 %v507, %v348
      %v516 = vmax.f32 %v508, %v349
      %v517 = vmax.f32 %v509, %v350
      %v518 = vmax.f32 %v510, %v351
      %v519 = vmax.f32 %v511, %v352
      %v520 = vmax.f32 %v512, %v353
      %v521 = vmax.f32 %v513, %v354
      %v522 = vmax.f32 %v514, %v355
      %v523 = vld [vmem:[%s299] sm:$0xff]
      %v524 = vld [vmem:[%s299 + $0x8] sm:$0xff]
      %v525 = vld [vmem:[%s299 + $0x10] sm:$0xff]
      %v526 = vld [vmem:[%s299 + $0x18] sm:$0xff]
      %v527 = vld [vmem:[%s299 + $0x20] sm:$0xff]
      %v528 = vld [vmem:[%s299 + $0x28] sm:$0xff]
      %v529 = vld [vmem:[%s299 + $0x30] sm:$0xff]
      %v530 = vld [vmem:[%s299 + $0x38] sm:$0xff]
      %v531 = vadd.f32 %v515, %v523
      %v532 = vadd.f32 %v516, %v524
      %v533 = vadd.f32 %v517, %v525
      %v534 = vadd.f32 %v518, %v526
      %v535 = vadd.f32 %v519, %v527
      %v536 = vadd.f32 %v520, %v528
      %v537 = vadd.f32 %v521, %v529
      %v538 = vadd.f32 %v522, %v530
      %539 = vst [vmem:[%s304] sm:$0xff] %v531
      %540 = vst [vmem:[%s304 + $0x8] sm:$0xff] %v532
      %541 = vst [vmem:[%s304 + $0x10] sm:$0xff] %v533
      %542 = vst [vmem:[%s304 + $0x18] sm:$0xff] %v534
      %543 = vst [vmem:[%s304 + $0x20] sm:$0xff] %v535
      %544 = vst [vmem:[%s304 + $0x28] sm:$0xff] %v536
      %545 = vst [vmem:[%s304 + $0x30] sm:$0xff] %v537
      %546 = vst [vmem:[%s304 + $0x38] sm:$0xff] %v538
      %p547 = scmp.lt.s32.totalorder %s16, 1
      %s548 = scalar_select %p547, %s16, 1
      %s549 = smul.addr %s548, 8
      %s550 = smul.addr %s549, 8
      %s551 = scalar_lea.vmem %s5, %s550
      // Predicated region
      $region41: #{exit_flow.9} parent=39 // pred_check
        %p552 = pneg %p164
      $region42: #{exit_flow.9} parent=39 // pred_check_branch
        %554 = sbr.rel (%p552) target = $region44
      $region43: #{exit_flow.9} parent=39 // pred_region
        _
      $region44: #{exit_flow.9} parent=39 // pred_fallthru
        _
    $region40: #{exit_flow.9} parent=5 // pred_fallthru
      _
    %p555 = scmp.le.s32.totalorder 2, %s11
    // Predicated region
    $region45: #{exit_flow.9} parent=5 // pred_check
      %p556 = pneg %p555
    $region46: #{exit_flow.9} parent=5 // pred_check_branch
      %558 = sbr.rel (%p556) target = $region48
    $region47: #{exit_flow.9} parent=5 // pred_region
      %s559 = ssub.s32 %s11, 2
      // Predicated region
      $region49: #{exit_flow.9} parent=47 // pred_check
        %p560 = pneg %p170
      $region50: #{exit_flow.9} parent=47 // pred_check_branch
        %562 = sbr.rel (%p560) target = $region52
      $region51: #{exit_flow.9} parent=47 // pred_region
        %p563 = scmp.lt.s32.totalorder %s17, 1
        %s564 = scalar_select %p563, %s17, 1
        %s565 = smul.addr %s564, 8
        %s566 = smul.addr %s565, 8
        %s567 = scalar_lea.vmem %s5, %s566
      $region52: #{exit_flow.9} parent=47 // pred_fallthru
        _
    $region48: #{exit_flow.9} parent=5 // pred_fallthru
      _
  $region6: #{exit_flow.9} parent=0 // loop_footer
    %s15 = sadd.s32 1, %s11
  $region7: #{exit_flow.9} parent=0 // loop_footer_branch
    %10 = sbr.rel target = $region3
  $region8: #{exit_flow.9} parent=0 // loop_exit
    _

// kernel: exit_flow.10
$region0: #{exit_flow.10}
  #allocation0 [shape = 'u32[]', space=smem, size = 0x4, offset = 0x4, fixed_abs, tag = 'smem constant byte address 0x4 - core index']
  #allocation1 [shape = 'u32[72,128]{1,0:T(1,128)}', space=vmem, size = 0x9000, scoped, tag = 'internal scratch']
  #allocation2 [shape = 'f32[64,128]{1,0:T(8,128)}', space=vmem, size = 0x8000, scoped, tag = 'scratch operand']
  %s0 = inlined_call_operand.vmem [shape: f32[2,10,10,128], index: 0, kind: input, shape index: {}]
  %s1 = inlined_call_operand.vmem [shape: f32[3,3,128], index: 1, kind: input, shape index: {}]
  %s2 = inlined_call_operand.vmem [shape: f32[128,128], index: 2, kind: input, shape index: {}]
  %s3 = inlined_call_operand.vmem [shape: f32[1,128], index: 3, kind: input, shape index: {}]
  %s4 = inlined_call_operand.vmem [shape: f32[1,128], index: 4, kind: input, shape index: {}]
  %s5 = inlined_call_operand.vmem [shape: f32[2,64,128], index: 5, kind: output, shape index: {}]
  %s6 = sld [smem:[#allocation0]]
  $region57: #{exit_flow.10} parent=0
    _
  %s8 = ssub.s32 1, %s6
  %s9 = scalar_select 0, %s8, %s6
  loop: start=0, step=1, limit=4
  $region2: #{exit_flow.10} parent=0 // loop_pre_header
    _
  $region3: #{exit_flow.10} parent=0 // loop_header
    %s11 = sphi 0, %s15
    %p12 = scmp.ge.s32.totalorder %s11, 4
    %s18 = sphi 0, %s30
    %s19 = sphi 0, %s26
    %s20 = sphi 0, %s18
    %s21 = sphi 0, %s19
    %s22 = sphi 0, %s20
    %s23 = sphi 0, %s21
    %s33 = sphi 0, %s35
    %s36 = sphi 0, %s33
    %s37 = sphi 0, %s36
    %s53 = sphi 0, %s37
    %s57 = sphi 0, %s57
    %s59 = sphi 0, %s57
    %s60 = sphi 0, %s59
    %s74 = sphi 0, %s60
    %s80 = sphi 0, %s82
    %s83 = sphi 0, %s80
    %s84 = sphi 0, %s83
    %s100 = sphi 0, %s84
    %s106 = sphi 0, %s108
    %s109 = sphi 0, %s106
    %s110 = sphi 0, %s109
    %s126 = sphi 0, %s110
    %s132 = sphi 0, %s134
    %s135 = sphi 0, %s132
    %s136 = sphi 0, %s135
    %s152 = sphi 0, %s136
    %s160 = sphi 0, %s162
    %s163 = sphi 0, %s160
    %s164 = sphi 0, %s163
    %s180 = sphi 0, %s164
  $region4: #{exit_flow.10} parent=0 // loop_header_branch
    %14 = sbr.rel (%p12) target = $region8
  $region5: #{exit_flow.10} parent=0 // loop_body
    %s16 = ssub.s32 %s11, 1
    %s17 = ssub.s32 %s11, 2
    %s24 = sadd.s32 1, %s19
    %p25 = scmp.ge.s32.totalorder %s24, 1
    %s26 = scalar_select %p25, 0, %s24
    %s27 = sadd.s32 1, %s18
    %s28 = scalar_select %p25, %s27, %s18
    %p29 = scmp.ge.s32.totalorder %s28, 2
    %s30 = scalar_select %p29, 0, %s28
    %s31 = ssub.s32 %s18, %s30
    %p32 = scmp.eq.s32.totalorder %s31, 0
    %s34 = sadd.s32 %s33, 1
    %s35 = scalar_select %p32, %s33, %s34
    %p38 = pneg %p32
    %p39 = scmp.eq.s32.totalorder %s11, 1
    %p40 = por %p38, %p39
    %p41 = scmp.ne.s32.totalorder %s33, %s36
    %p42 = scmp.eq.s32.totalorder %s11, 0
    %p43 = por %p41, %p42
    %p44 = scmp.ne.s32.totalorder %s33, %s36
    %p45 = scmp.eq.s32.totalorder %s16, 1
    %p46 = por %p44, %p45
    %p47 = scmp.ne.s32.totalorder %s36, %s37
    %p48 = scmp.eq.s32.totalorder %s16, 0
    %p49 = por %p47, %p48
    %p50 = scmp.ne.s32.totalorder %s36, %s37
    %p51 = scmp.eq.s32.totalorder %s17, 1
    %p52 = por %p50, %p51
    %p54 = scmp.ne.s32.totalorder %s37, %s53
    %p55 = scmp.eq.s32.totalorder %s17, 0
    %p56 = por %p54, %p55
    %s58 = sadd.s32 %s57, 1
    %p61 = scmp.eq.s32.totalorder %s11, 1
    %p62 = scmp.ne.s32.totalorder %s57, %s59
    %p63 = scmp.eq.s32.totalorder %s11, 0
    %p64 = por %p62, %p63
    %p65 = scmp.ne.s32.totalorder %s57, %s59
    %p66 = scmp.eq.s32.totalorder %s16, 1
    %p67 = por %p65, %p66
    %p68 = scmp.ne.s32.totalorder %s59, %s60
    %p69 = scmp.eq.s32.totalorder %s16, 0
    %p70 = por %p68, %p69
    %p71 = scmp.ne.s32.totalorder %s59, %s60
    %p72 = scmp.eq.s32.totalorder %s17, 1
    %p73 = por %p71, %p72
    %p75 = scmp.ne.s32.totalorder %s60, %s74
    %p76 = scmp.eq.s32.totalorder %s17, 0
    %p77 = por %p75, %p76
    %s78 = ssub.s32 %s19, %s26
    %p79 = scmp.eq.s32.totalorder %s78, 0
    %s81 = sadd.s32 %s80, 1
    %s82 = scalar_select %p79, %s80, %s81
    %p85 = pneg %p79
    %p86 = scmp.eq.s32.totalorder %s11, 1
    %p87 = por %p85, %p86
    %p88 = scmp.ne.s32.totalorder %s80, %s83
    %p89 = scmp.eq.s32.totalorder %s11, 0
    %p90 = por %p88, %p89
    %p91 = scmp.ne.s32.totalorder %s80, %s83
    %p92 = scmp.eq.s32.totalorder %s16, 1
    %p93 = por %p91, %p92
    %p94 = scmp.ne.s32.totalorder %s83, %s84
    %p95 = scmp.eq.s32.totalorder %s16, 0
    %p96 = por %p94, %p95
    %p97 = scmp.ne.s32.totalorder %s83, %s84
    %p98 = scmp.eq.s32.totalorder %s17, 1
    %p99 = por %p97, %p98
    %p101 = scmp.ne.s32.totalorder %s84, %s100
    %p102 = scmp.eq.s32.totalorder %s17, 0
    %p103 = por %p101, %p102
    %s104 = ssub.s32 %s19, %s26
    %p105 = scmp.eq.s32.totalorder %s104, 0
    %s107 = sadd.s32 %s106, 1
    %s108 = scalar_select %p105, %s106, %s107
    %p111 = pneg %p105
    %p112 = scmp.eq.s32.totalorder %s11, 1
    %p113 = por %p111, %p112
    %p114 = scmp.ne.s32.totalorder %s106, %s109
    %p115 = scmp.eq.s32.totalorder %s11, 0
    %p116 = por %p114, %p115
    %p117 = scmp.ne.s32.totalorder %s106, %s109
    %p118 = scmp.eq.s32.totalorder %s16, 1
    %p119 = por %p117, %p118
    %p120 = scmp.ne.s32.totalorder %s109, %s110
    %p121 = scmp.eq.s32.totalorder %s16, 0
    %p122 = por %p120, %p121
    %p123 = scmp.ne.s32.totalorder %s109, %s110
    %p124 = scmp.eq.s32.totalorder %s17, 1
    %p125 = por %p123, %p124
    %p127 = scmp.ne.s32.totalorder %s110, %s126
    %p128 = scmp.eq.s32.totalorder %s17, 0
    %p129 = por %p127, %p128
    %s130 = ssub.s32 %s19, %s26
    %p131 = scmp.eq.s32.totalorder %s130, 0
    %s133 = sadd.s32 %s132, 1
    %s134 = scalar_select %p131, %s132, %s133
    %p137 = pneg %p131
    %p138 = scmp.eq.s32.totalorder %s11, 1
    %p139 = por %p137, %p138
    %p140 = scmp.ne.s32.totalorder %s132, %s135
    %p141 = scmp.eq.s32.totalorder %s11, 0
    %p142 = por %p140, %p141
    %p143 = scmp.ne.s32.totalorder %s132, %s135
    %p144 = scmp.eq.s32.totalorder %s16, 1
    %p145 = por %p143, %p144
    %p146 = scmp.ne.s32.totalorder %s135, %s136
    %p147 = scmp.eq.s32.totalorder %s16, 0
    %p148 = por %p146, %p147
    %p149 = scmp.ne.s32.totalorder %s135, %s136
    %p150 = scmp.eq.s32.totalorder %s17, 1
    %p151 = por %p149, %p150
    %p153 = scmp.ne.s32.totalorder %s136, %s152
    %p154 = scmp.eq.s32.totalorder %s17, 0
    %p155 = por %p153, %p154
    %s156 = ssub.s32 %s18, %s30
    %s157 = ssub.s32 %s19, %s26
    %s158 = sor.u32 %s156, %s157
    %p159 = scmp.eq.s32.totalorder %s158, 0
    %s161 = sadd.s32 %s160, 1
    %s162 = scalar_select %p159, %s160, %s161
    %p165 = pneg %p159
    %p166 = scmp.eq.s32.totalorder %s11, 1
    %p167 = por %p165, %p166
    %p168 = scmp.ne.s32.totalorder %s160, %s163
    %p169 = scmp.eq.s32.totalorder %s11, 0
    %p170 = por %p168, %p169
    %p171 = scmp.ne.s32.totalorder %s160, %s163
    %p172 = scmp.eq.s32.totalorder %s16, 1
    %p173 = por %p171, %p172
    %p174 = scmp.ne.s32.totalorder %s163, %s164
    %p175 = scmp.eq.s32.totalorder %s16, 0
    %p176 = por %p174, %p175
    %p177 = scmp.ne.s32.totalorder %s163, %s164
    %p178 = scmp.eq.s32.totalorder %s17, 1
    %p179 = por %p177, %p178
    %p181 = scmp.ne.s32.totalorder %s164, %s180
    %p182 = scmp.eq.s32.totalorder %s17, 0
    %p183 = por %p181, %p182
    %p184 = scmp.le.s32.totalorder 1, %s11
    %p185 = scmp.lt.s32.totalorder %s11, 3
    %p186 = pnand %p184, %p185
    %p187 = pneg %p186
    // Predicated region
    $region9: #{exit_flow.10} parent=5 // pred_check
      _
    $region10: #{exit_flow.10} parent=5 // pred_check_branch
      %189 = sbr.rel (%p186) target = $region12
    $region11: #{exit_flow.10} parent=5 // pred_region
      %s190 = ssub.s32 %s11, 1
      // Predicated region
      $region13: #{exit_flow.10} parent=11 // pred_check
        %p191 = pneg %p70
      $region14: #{exit_flow.10} parent=11 // pred_check_branch
        %193 = sbr.rel (%p191) target = $region16
      $region15: #{exit_flow.10} parent=11 // pred_region
        _
      $region16: #{exit_flow.10} parent=11 // pred_fallthru
        _
      // Predicated region
      $region17: #{exit_flow.10} parent=11 // pred_check
        %p194 = pneg %p96
      $region18: #{exit_flow.10} parent=11 // pred_check_branch
        %196 = sbr.rel (%p194) target = $region20
      $region19: #{exit_flow.10} parent=11 // pred_region
        %p197 = scmp.lt.s32.totalorder %s21, 0
        %s198 = scalar_select %p197, %s21, 0
        %s199 = smul.addr %s198, 8
        %s200 = scalar_lea.vmem %s2, %s199
      $region20: #{exit_flow.10} parent=11 // pred_fallthru
        _
      // Predicated region
      $region21: #{exit_flow.10} parent=11 // pred_check
        %p201 = pneg %p122
      $region22: #{exit_flow.10} parent=11 // pred_check_branch
        %203 = sbr.rel (%p201) target = $region24
      $region23: #{exit_flow.10} parent=11 // pred_region
        %p204 = scmp.lt.s32.totalorder %s21, 0
        %s205 = scalar_select %p204, %s21, 0
        %s206 = scalar_lea.vmem %s3, %s205
      $region24: #{exit_flow.10} parent=11 // pred_fallthru
        _
      // Predicated region
      $region25: #{exit_flow.10} parent=11 // pred_check
        %p207 = pneg %p148
      $region26: #{exit_flow.10} parent=11 // pred_check_branch
        %209 = sbr.rel (%p207) target = $region28
      $region27: #{exit_flow.10} parent=11 // pred_region
        %p210 = scmp.lt.s32.totalorder %s21, 0
        %s211 = scalar_select %p210, %s21, 0
        %s212 = scalar_lea.vmem %s4, %s211
      $region28: #{exit_flow.10} parent=11 // pred_fallthru
        _
    $region12: #{exit_flow.10} parent=5 // pred_fallthru
      _
    %p213 = scmp.lt.s32.totalorder %s11, 2
    // Predicated region
    $region29: #{exit_flow.10} parent=5 // pred_check
      %p214 = pneg %p213
    $region30: #{exit_flow.10} parent=5 // pred_check_branch
      %216 = sbr.rel (%p214) target = $region32
    $region31: #{exit_flow.10} parent=5 // pred_region
      // Predicated region
      $region33: #{exit_flow.10} parent=31 // pred_check
        %p217 = pneg %p43
      $region34: #{exit_flow.10} parent=31 // pred_check_branch
        %219 = sbr.rel (%p217) target = $region36
      $region35: #{exit_flow.10} parent=31 // pred_region
        %p220 = scmp.lt.s32.totalorder %s18, 1
        %s221 = scalar_select %p220, %s18, 1
        %s222 = smul.addr %s221, 20
        %s223 = smul.addr %s222, 8
        %s224 = scalar_lea.vmem %s0, %s223
      $region36: #{exit_flow.10} parent=31 // pred_fallthru
        _
    $region32: #{exit_flow.10} parent=5 // pred_fallthru
      _
    %p225 = scmp.le.s32.totalorder 1, %s11
    %p226 = scmp.lt.s32.totalorder %s11, 3
    %p227 = pnand %p225, %p226
    %p228 = pneg %p227
    // Predicated region
    $region37: #{exit_flow.10} parent=5 // pred_check
      _
    $region38: #{exit_flow.10} parent=5 // pred_check_branch
      %230 = sbr.rel (%p227) target = $region40
    $region39: #{exit_flow.10} parent=5 // pred_region
      %s231 = ssub.s32 %s11, 1
      %p232 = scmp.lt.s32.totalorder %s20, 1
      %s233 = scalar_select %p232, %s20, 1
      %s234 = smul.addr %s233, 20
      %s235 = smul.addr %s234, 8
      %s236 = scalar_lea.vmem %s0, %s235
      %p237 = pneg %p49
      %p238 = pneg %p46
      %p239 = pneg %p70
      %p240 = pneg %p67
      %p241 = scmp.lt.s32.totalorder %s21, 0
      %s242 = scalar_select %p241, %s21, 0
      %s243 = smul.addr %s242, 8
      %s244 = scalar_lea.vmem %s2, %s243
      %p245 = pneg %p96
      %p246 = pneg %p93
      %p247 = scmp.lt.s32.totalorder %s21, 0
      %s248 = scalar_select %p247, %s21, 0
      %s249 = scalar_lea.vmem %s3, %s248
      %p250 = pneg %p122
      %p251 = pneg %p119
      %p252 = scmp.lt.s32.totalorder %s21, 0
      %s253 = scalar_select %p252, %s21, 0
      %s254 = scalar_lea.vmem %s4, %s253
      %p255 = pneg %p148
      %p256 = pneg %p145
      %p257 = pneg %p176
      %p258 = pneg %p173
      %p259 = scmp.lt.s32.totalorder %s20, 1
      %s260 = scalar_select %p259, %s20, 1
      %p261 = scmp.lt.s32.totalorder %s21, 0
      %s262 = scalar_select %p261, %s21, 0
      %s263 = smul.addr %s260, 8
      %s264 = sadd.s32 %s262, %s263
      %s265 = smul.addr %s264, 8
      %s266 = scalar_lea.vmem %s5, %s265
      %p267 = scmp.lt.s32.totalorder %s20, 1
      %s268 = scalar_select %p267, %s20, 1
      %s269 = smul.addr %s268, 20
      %s270 = smul.addr %s269, 8
      %s271 = scalar_lea.vmem %s0, %s270
      %p272 = scmp.lt.s32.totalorder %s21, 0
      %s273 = scalar_select %p272, %s21, 0
      %s274 = smul.addr %s273, 8
      %s275 = scalar_lea.vmem %s2, %s274
      %p276 = scmp.lt.s32.totalorder %s21, 0
      %s277 = scalar_select %p276, %s21, 0
      %s278 = scalar_lea.vmem %s3, %s277
      %p279 = scmp.lt.s32.totalorder %s21, 0
      %s280 = scalar_select %p279, %s21, 0
      %s281 = scalar_lea.vmem %s4, %s280
      %p282 = scmp.lt.s32.totalorder %s20, 1
      %s283 = scalar_select %p282, %s20, 1
      %p284 = scmp.lt.s32.totalorder %s21, 0
      %s285 = scalar_select %p284, %s21, 0
      %s286 = smul.addr %s283, 8
      %s287 = sadd.s32 %s285, %s286
      %s288 = smul.addr %s287, 8
      %s289 = scalar_lea.vmem %s5, %s288
      %p290 = scmp.eq.s32.totalorder %s21, 0
      // Predicated region
      $region41: #{exit_flow.10} parent=39 // pred_check
        %p291 = pneg %p290
      $region42: #{exit_flow.10} parent=39 // pred_check_branch
        %293 = sbr.rel (%p291) target = $region44
      $region43: #{exit_flow.10} parent=39 // pred_region
        %v294 = vld [vmem:[%s1] sm:$0x7]
        %v295 = vld [vmem:[%s1 + $0x4] sm:$0x7]
        %v296 = vld [vmem:[%s1 + $0x8] sm:$0x7]
        %v297 = vld [vmem:[%s271] sm:$0xff]
        %v298 = vld [vmem:[%s271 + $0x10] sm:$0xff]
        %v299 = vld [vmem:[%s271 + $0x20] sm:$0xff]
        %v300 = vld [vmem:[%s271 + $0x30] sm:$0xff]
        %v301 = vld [vmem:[%s271 + $0x40] sm:$0xff]
        %v302 = vld [vmem:[%s271 + $0x50] sm:$0xff]
        %v303 = vld [vmem:[%s271 + $0x60] sm:$0xff]
        %v304 = vld [vmem:[%s271 + $0x70] sm:$0xff]
        %v305 = vld [vmem:[%s271 + $0x80] sm:$0xff]
        %v306 = vld [vmem:[%s271 + $0x90] sm:$0xff]
        %v307 = vperm.slane %v294, 0
        %v308 = vmul.f32 %v297, %v307
        %v309 = vmul.f32 %v298, %v307
        %v310 = vmul.f32 %v299, %v307
        %v311 = vmul.f32 %v300, %v307
        %v312 = vmul.f32 %v301, %v307
        %v313 = vmul.f32 %v302, %v307
        %v314 = vmul.f32 %v303, %v307
        %v315 = vmul.f32 %v304, %v307
        %v316 = vadd.f32 %v308, 0.0
        %v317 = vadd.f32 %v309, 0.0
        %v318 = vadd.f32 %v310, 0.0
        %v319 = vadd.f32 %v311, 0.0
        %v320 = vadd.f32 %v312, 0.0
        %v321 = vadd.f32 %v313, 0.0
        %v322 = vadd.f32 %v314, 0.0
        %v323 = vadd.f32 %v315, 0.0
        %v324 = vperm.slane %v295, 0
        %v325 = vmul.f32 %v298, %v324
        %v326 = vmul.f32 %v299, %v324
        %v327 = vmul.f32 %v300, %v324
        %v328 = vmul.f32 %v301, %v324
        %v329 = vmul.f32 %v302, %v324
        %v330 = vmul.f32 %v303, %v324
        %v331 = vmul.f32 %v304, %v324
        %v332 = vmul.f32 %v305, %v324
        %v333 = vadd.f32 %v316, %v325
        %v334 = vadd.f32 %v317, %v326
        %v335 = vadd.f32 %v318, %v327
        %v336 = vadd.f32 %v319, %v328
        %v337 = vadd.f32 %v320, %v329
        %v338 = vadd.f32 %v321, %v330
        %v339 = vadd.f32 %v322, %v331
        %v340 = vadd.f32 %v323, %v332
        %v341 = vperm.slane %v296, 0
        %v342 = vmul.f32 %v299, %v341
        %v343 = vmul.f32 %v300, %v341
        %v344 = vmul.f32 %v301, %v341
        %v345 = vmul.f32 %v302, %v341
        %v346 = vmul.f32 %v303, %v341
        %v347 = vmul.f32 %v304, %v341
        %v348 = vmul.f32 %v305, %v341
        %v349 = vmul.f32 %v306, %v341
        %v350 = vadd.f32 %v333, %v342
        %v351 = vadd.f32 %v334, %v343
        %v352 = vadd.f32 %v335, %v344
        %v353 = vadd.f32 %v336, %v345
        %v354 = vadd.f32 %v337, %v346
        %v355 = vadd.f32 %v338, %v347
        %v356 = vadd.f32 %v339, %v348
        %v357 = vadd.f32 %v340, %v349
        %v358 = vld [vmem:[%s271 + $0x1] sm:$0xff]
        %v359 = vld [vmem:[%s271 + $0x11] sm:$0xff]
        %v360 = vld [vmem:[%s271 + $0x21] sm:$0xff]
        %v361 = vld [vmem:[%s271 + $0x31] sm:$0xff]
        %v362 = vld [vmem:[%s271 + $0x41] sm:$0xff]
        %v363 = vld [vmem:[%s271 + $0x51] sm:$0xff]
        %v364 = vld [vmem:[%s271 + $0x61] sm:$0xff]
        %v365 = vld [vmem:[%s271 + $0x71] sm:$0xff]
        %v366 = vld [vmem:[%s271 + $0x81] sm:$0xff]
        %v367 = vld [vmem:[%s271 + $0x91] sm:$0xff]
        %v368 = vperm.slane %v294, 1
        %v369 = vmul.f32 %v358, %v368
        %v370 = vmul.f32 %v359, %v368
        %v371 = vmul.f32 %v360, %v368
        %v372 = vmul.f32 %v361, %v368
        %v373 = vmul.f32 %v362, %v368
        %v374 = vmul.f32 %v363, %v368
        %v375 = vmul.f32 %v364, %v368
        %v376 = vmul.f32 %v365, %v368
        %v377 = vadd.f32 %v350, %v369
        %v378 = vadd.f32 %v351, %v370
        %v379 = vadd.f32 %v352, %v371
        %v380 = vadd.f32 %v353, %v372
        %v381 = vadd.f32 %v354, %v373
        %v382 = vadd.f32 %v355, %v374
        %v383 = vadd.f32 %v356, %v375
        %v384 = vadd.f32 %v357, %v376
        %v385 = vperm.slane %v295, 1
        %v386 = vmul.f32 %v359, %v385
        %v387 = vmul.f32 %v360, %v385
        %v388 = vmul.f32 %v361, %v385
        %v389 = vmul.f32 %v362, %v385
        %v390 = vmul.f32 %v363, %v385
        %v391 = vmul.f32 %v364, %v385
        %v392 = vmul.f32 %v365, %v385
        %v393 = vmul.f32 %v366, %v385
        %v394 = vadd.f32 %v377, %v386
        %v395 = vadd.f32 %v378, %v387
        %v396 = vadd.f32 %v379, %v388
        %v397 = vadd.f32 %v380, %v389
        %v398 = vadd.f32 %v381, %v390
        %v399 = vadd.f32 %v382, %v391
        %v400 = vadd.f32 %v383, %v392
        %v401 = vadd.f32 %v384, %v393
        %v402 = vperm.slane %v296, 1
        %v403 = vmul.f32 %v360, %v402
        %v404 = vmul.f32 %v361, %v402
        %v405 = vmul.f32 %v362, %v402
        %v406 = vmul.f32 %v363, %v402
        %v407 = vmul.f32 %v364, %v402
        %v408 = vmul.f32 %v365, %v402
        %v409 = vmul.f32 %v366, %v402
        %v410 = vmul.f32 %v367, %v402
        %v411 = vadd.f32 %v394, %v403
        %v412 = vadd.f32 %v395, %v404
        %v413 = vadd.f32 %v396, %v405
        %v414 = vadd.f32 %v397, %v406
        %v415 = vadd.f32 %v398, %v407
        %v416 = vadd.f32 %v399, %v408
        %v417 = vadd.f32 %v400, %v409
        %v418 = vadd.f32 %v401, %v410
        %v419 = vld [vmem:[%s271 + $0x2] sm:$0xff]
        %v420 = vld [vmem:[%s271 + $0x12] sm:$0xff]
        %v421 = vld [vmem:[%s271 + $0x22] sm:$0xff]
        %v422 = vld [vmem:[%s271 + $0x32] sm:$0xff]
        %v423 = vld [vmem:[%s271 + $0x42] sm:$0xff]
        %v424 = vld [vmem:[%s271 + $0x52] sm:$0xff]
        %v425 = vld [vmem:[%s271 + $0x62] sm:$0xff]
        %v426 = vld [vmem:[%s271 + $0x72] sm:$0xff]
        %v427 = vld [vmem:[%s271 + $0x82] sm:$0xff]
        %v428 = vld [vmem:[%s271 + $0x92] sm:$0xff]
        %v429 = vperm.slane %v294, 2
        %v430 = vmul.f32 %v419, %v429
        %v431 = vmul.f32 %v420, %v429
        %v432 = vmul.f32 %v421, %v429
        %v433 = vmul.f32 %v422, %v429
        %v434 = vmul.f32 %v423, %v429
        %v435 = vmul.f32 %v424, %v429
        %v436 = vmul.f32 %v425, %v429
        %v437 = vmul.f32 %v426, %v429
        %v438 = vadd.f32 %v411, %v430
        %v439 = vadd.f32 %v412, %v431
        %v440 = vadd.f32 %v413, %v432
        %v441 = vadd.f32 %v414, %v433
        %v442 = vadd.f32 %v415, %v434
        %v443 = vadd.f32 %v416, %v435
        %v444 = vadd.f32 %v417, %v436
        %v445 = vadd.f32 %v418, %v437
        %v446 = vperm.slane %v295, 2
        %v447 = vmul.f32 %v420, %v446
        %v448 = vmul.f32 %v421, %v446
        %v449 = vmul.f32 %v422, %v446
        %v450 = vmul.f32 %v423, %v446
        %v451 = vmul.f32 %v424, %v446
        %v452 = vmul.f32 %v425, %v446
        %v453 = vmul.f32 %v426, %v446
        %v454 = vmul.f32 %v427, %v446
        %v455 = vadd.f32 %v438, %v447
        %v456 = vadd.f32 %v439, %v448
        %v457 = vadd.f32 %v440, %v449
        %v458 = vadd.f32 %v441, %v450
        %v459 = vadd.f32 %v442, %v451
        %v460 = vadd.f32 %v443, %v452
        %v461 = vadd.f32 %v444, %v453
        %v462 = vadd.f32 %v445, %v454
        %v463 = vperm.slane %v296, 2
        %v464 = vmul.f32 %v421, %v463
        %v465 = vmul.f32 %v422, %v463
        %v466 = vmul.f32 %v423, %v463
        %v467 = vmul.f32 %v424, %v463
        %v468 = vmul.f32 %v425, %v463
        %v469 = vmul.f32 %v426, %v463
        %v470 = vmul.f32 %v427, %v463
        %v471 = vmul.f32 %v428, %v463
        %v472 = vadd.f32 %v455, %v464
        %v473 = vadd.f32 %v456, %v465
        %v474 = vadd.f32 %v457, %v466
        %v475 = vadd.f32 %v458, %v467
        %v476 = vadd.f32 %v459, %v468
        %v477 = vadd.f32 %v460, %v469
        %v478 = vadd.f32 %v461, %v470
        %v479 = vadd.f32 %v462, %v471
        %480 = vst [vmem:[#allocation2] sm:$0xff] %v472
        %481 = vst [vmem:[#allocation2 + $0x8] sm:$0xff] %v473
        %482 = vst [vmem:[#allocation2 + $0x10] sm:$0xff] %v474
        %483 = vst [vmem:[#allocation2 + $0x18] sm:$0xff] %v475
        %484 = vst [vmem:[#allocation2 + $0x20] sm:$0xff] %v476
        %485 = vst [vmem:[#allocation2 + $0x28] sm:$0xff] %v477
        %486 = vst [vmem:[#allocation2 + $0x30] sm:$0xff] %v478
        %487 = vst [vmem:[#allocation2 + $0x38] sm:$0xff] %v479
      $region44: #{exit_flow.10} parent=39 // pred_fallthru
        _
      %v488 = vld [vmem:[#allocation2] sm:$0xff]
      %v489 = vld [vmem:[#allocation2 + $0x8] sm:$0xff]
      %v490 = vld [vmem:[#allocation2 + $0x10] sm:$0xff]
      %v491 = vld [vmem:[#allocation2 + $0x18] sm:$0xff]
      %v492 = vld [vmem:[#allocation2 + $0x20] sm:$0xff]
      %v493 = vld [vmem:[#allocation2 + $0x28] sm:$0xff]
      %v494 = vld [vmem:[#allocation2 + $0x30] sm:$0xff]
      %v495 = vld [vmem:[#allocation2 + $0x38] sm:$0xff]
      %v496 = vld [vmem:[%s275] sm:$0xff]
      %v497 = vld [vmem:[%s275 + $0x8] sm:$0xff]
      %v498 = vld [vmem:[%s275 + $0x10] sm:$0xff]
      %v499 = vld [vmem:[%s275 + $0x18] sm:$0xff]
      %v500 = vld [vmem:[%s275 + $0x20] sm:$0xff]
      %v501 = vld [vmem:[%s275 + $0x28] sm:$0xff]
      %v502 = vld [vmem:[%s275 + $0x30] sm:$0xff]
      %v503 = vld [vmem:[%s275 + $0x38] sm:$0xff]
      %v504 = vld [vmem:[%s275 + $0x40] sm:$0xff]
      %v505 = vld [vmem:[%s275 + $0x48] sm:$0xff]
      %v506 = vld [vmem:[%s275 + $0x50] sm:$0xff]
      %v507 = vld [vmem:[%s275 + $0x58] sm:$0xff]
      %v508 = vld [vmem:[%s275 + $0x60] sm:$0xff]
      %v509 = vld [vmem:[%s275 + $0x68] sm:$0xff]
      %v510 = vld [vmem:[%s275 + $0x70] sm:$0xff]
      %v511 = vld [vmem:[%s275 + $0x78] sm:$0xff]
      %512 = vmatpush.msra.mxu0 %v511
      %513 = vmatpush.msra.mxu0 %v510
      %514 = vmatpush.msra.mxu0 %v509
      %515 = vmatpush.msra.mxu0 %v508
      %516 = vmatpush.msra.mxu0 %v507
      %517 = vmatpush.msra.mxu0 %v506
      %518 = vmatpush.msra.mxu0 %v505
      %519 = vmatpush.msra.mxu0 %v504
      %520 = vmatpush.msra.mxu0 %v503
      %521 = vmatpush.msra.mxu0 %v502
      %522 = vmatpush.msra.mxu0 %v501
      %523 = vmatpush.msra.mxu0 %v500
      %524 = vmatpush.msra.mxu0 %v499
      %525 = vmatpush.msra.mxu0 %v498
      %526 = vmatpush.msra.mxu0 %v497
      %527 = vmatpush.msra.mxu0 %v496
      %528 = vmatmul.f32.gmra.mxu0 %v488
      %v529 = vpop.f32.mrf.mxu0
      %v530 = vadd.f32 0.0, %v529
      %531 = vmatmul.f32.gmra.mxu0 %v489
      %v532 = vpop.f32.mrf.mxu0
      %v533 = vadd.f32 0.0, %v532
      %534 = vmatmul.f32.gmra.mxu0 %v490
      %v535 = vpop.f32.mrf.mxu0
      %v536 = vadd.f32 0.0, %v535
      %537 = vmatmul.f32.gmra.mxu0 %v491
      %v538 = vpop.f32.mrf.mxu0
      %v539 = vadd.f32 0.0, %v538
      %540 = vmatmul.f32.gmra.mxu0 %v492
      %v541 = vpop.f32.mrf.mxu0
      %v542 = vadd.f32 0.0, %v541
      %543 = vmatmul.f32.gmra.mxu0 %v493
      %v544 = vpop.f32.mrf.mxu0
      %v545 = vadd.f32 0.0, %v544
      %546 = vmatmul.f32.gmra.mxu0 %v494
      %v547 = vpop.f32.mrf.mxu0
      %v548 = vadd.f32 0.0, %v547
      %549 = vmatmul.f32.gmra.mxu0 %v495
      %v550 = vpop.f32.mrf.mxu0
      %v551 = vadd.f32 0.0, %v550
      %552 = vdwg.mxu0
      %v553 = vld [vmem:[%s278] sm:$0x1]
      %v555 = vperm.slane %v553, 0
      %v557 = vmul.f32 %v530, %v555
      %v558 = vmul.f32 %v533, %v555
      %v559 = vmul.f32 %v536, %v555
      %v560 = vmul.f32 %v539, %v555
      %v561 = vmul.f32 %v542, %v555
      %v562 = vmul.f32 %v545, %v555
      %v563 = vmul.f32 %v548, %v555
      %v564 = vmul.f32 %v551, %v555
      %v565 = vld [vmem:[%s281] sm:$0x1]
      %v567 = vperm.slane %v565, 0
      %v569 = vadd.f32 %v557, %v567
      %v570 = vadd.f32 %v558, %v567
      %v571 = vadd.f32 %v559, %v567
      %v572 = vadd.f32 %v560, %v567
      %v573 = vadd.f32 %v561, %v567
      %v574 = vadd.f32 %v562, %v567
      %v575 = vadd.f32 %v563, %v567
      %v576 = vadd.f32 %v564, %v567
      %v577 = vmax.f32 %v569, 0.0
      %v578 = vmax.f32 %v570, 0.0
      %v579 = vmax.f32 %v571, 0.0
      %v580 = vmax.f32 %v572, 0.0
      %v581 = vmax.f32 %v573, 0.0
      %v582 = vmax.f32 %v574, 0.0
      %v583 = vmax.f32 %v575, 0.0
      %v584 = vmax.f32 %v576, 0.0
      %585 = vst [vmem:[%s289] sm:$0xff] %v577
      %586 = vst [vmem:[%s289 + $0x8] sm:$0xff] %v578
      %587 = vst [vmem:[%s289 + $0x10] sm:$0xff] %v579
      %588 = vst [vmem:[%s289 + $0x18] sm:$0xff] %v580
      %589 = vst [vmem:[%s289 + $0x20] sm:$0xff] %v581
      %590 = vst [vmem:[%s289 + $0x28] sm:$0xff] %v582
      %591 = vst [vmem:[%s289 + $0x30] sm:$0xff] %v583
      %592 = vst [vmem:[%s289 + $0x38] sm:$0xff] %v584
      %p593 = scmp.lt.s32.totalorder %s20, 1
      %s594 = scalar_select %p593, %s20, 1
      %p595 = scmp.lt.s32.totalorder %s21, 0
      %s596 = scalar_select %p595, %s21, 0
      %s597 = smul.addr %s594, 8
      %s598 = sadd.s32 %s596, %s597
      %s599 = smul.addr %s598, 8
      %s600 = scalar_lea.vmem %s5, %s599
      // Predicated region
      $region45: #{exit_flow.10} parent=39 // pred_check
        %p601 = pneg %p173
      $region46: #{exit_flow.10} parent=39 // pred_check_branch
        %603 = sbr.rel (%p601) target = $region48
      $region47: #{exit_flow.10} parent=39 // pred_region
        _
      $region48: #{exit_flow.10} parent=39 // pred_fallthru
        _
    $region40: #{exit_flow.10} parent=5 // pred_fallthru
      _
    %p604 = scmp.le.s32.totalorder 2, %s11
    // Predicated region
    $region49: #{exit_flow.10} parent=5 // pred_check
      %p605 = pneg %p604
    $region50: #{exit_flow.10} parent=5 // pred_check_branch
      %607 = sbr.rel (%p605) target = $region52
    $region51: #{exit_flow.10} parent=5 // pred_region
      %s608 = ssub.s32 %s11, 2
      // Predicated region
      $region53: #{exit_flow.10} parent=51 // pred_check
        %p609 = pneg %p179
      $region54: #{exit_flow.10} parent=51 // pred_check_branch
        %611 = sbr.rel (%p609) target = $region56
      $region55: #{exit_flow.10} parent=51 // pred_region
        %p612 = scmp.lt.s32.totalorder %s22, 1
        %s613 = scalar_select %p612, %s22, 1
        %p614 = scmp.lt.s32.totalorder %s23, 0
        %s615 = scalar_select %p614, %s23, 0
        %s616 = smul.addr %s613, 8
        %s617 = sadd.s32 %s615, %s616
        %s618 = smul.addr %s617, 8
        %s619 = scalar_lea.vmem %s5, %s618
      $region56: #{exit_flow.10} parent=51 // pred_fallthru
        _
    $region52: #{exit_flow.10} parent=5 // pred_fallthru
      _
  $region6: #{exit_flow.10} parent=0 // loop_footer
    %s15 = sadd.s32 1, %s11
  $region7: #{exit_flow.10} parent=0 // loop_footer_branch
    %10 = sbr.rel target = $region3
  $region8: #{exit_flow.10} parent=0 // loop_exit
    _

// kernel: exit_flow.11
$region0: #{exit_flow.11}
  #allocation0 [shape = 'u32[]', space=smem, size = 0x4, offset = 0x4, fixed_abs, tag = 'smem constant byte address 0x4 - core index']
  #allocation1 [shape = 'u32[72,128]{1,0:T(1,128)}', space=vmem, size = 0x9000, scoped, tag = 'internal scratch']
  #allocation2 [shape = 'f32[64,128]{1,0:T(8,128)}', space=vmem, size = 0x8000, scoped, tag = 'scratch operand']
  %s0 = inlined_call_operand.vmem [shape: f32[2,10,10,128], index: 0, kind: input, shape index: {}]
  %s1 = inlined_call_operand.vmem [shape: f32[3,3,128], index: 1, kind: input, shape index: {}]
  %s2 = inlined_call_operand.vmem [shape: f32[128,128], index: 2, kind: input, shape index: {}]
  %s3 = inlined_call_operand.vmem [shape: f32[1,128], index: 3, kind: input, shape index: {}]
  %s4 = inlined_call_operand.vmem [shape: f32[1,128], index: 4, kind: input, shape index: {}]
  %s5 = inlined_call_operand.vmem [shape: f32[2,1,128], index: 5, kind: output, shape index: {}]
  %s6 = sld [smem:[#allocation0]]
  $region57: #{exit_flow.11} parent=0
    _
  %s8 = ssub.s32 1, %s6
  %s9 = scalar_select 0, %s8, %s6
  loop: start=0, step=1, limit=4
  $region2: #{exit_flow.11} parent=0 // loop_pre_header
    _
  $region3: #{exit_flow.11} parent=0 // loop_header
    %s11 = sphi 0, %s15
    %p12 = scmp.ge.s32.totalorder %s11, 4
    %s18 = sphi 0, %s30
    %s19 = sphi 0, %s26
    %s20 = sphi 0, %s18
    %s21 = sphi 0, %s19
    %s22 = sphi 0, %s20
    %s23 = sphi 0, %s21
    %s33 = sphi 0, %s35
    %s36 = sphi 0, %s33
    %s37 = sphi 0, %s36
    %s53 = sphi 0, %s37
    %s57 = sphi 0, %s57
    %s59 = sphi 0, %s57
    %s60 = sphi 0, %s59
    %s74 = sphi 0, %s60
    %s80 = sphi 0, %s82
    %s83 = sphi 0, %s80
    %s84 = sphi 0, %s83
    %s100 = sphi 0, %s84
    %s106 = sphi 0, %s108
    %s109 = sphi 0, %s106
    %s110 = sphi 0, %s109
    %s126 = sphi 0, %s110
    %s132 = sphi 0, %s134
    %s135 = sphi 0, %s132
    %s136 = sphi 0, %s135
    %s152 = sphi 0, %s136
    %s160 = sphi 0, %s162
    %s163 = sphi 0, %s160
    %s164 = sphi 0, %s163
    %s180 = sphi 0, %s164
  $region4: #{exit_flow.11} parent=0 // loop_header_branch
    %14 = sbr.rel (%p12) target = $region8
  $region5: #{exit_flow.11} parent=0 // loop_body
    %s16 = ssub.s32 %s11, 1
    %s17 = ssub.s32 %s11, 2
    %s24 = sadd.s32 1, %s19
    %p25 = scmp.ge.s32.totalorder %s24, 1
    %s26 = scalar_select %p25, 0, %s24
    %s27 = sadd.s32 1, %s18
    %s28 = scalar_select %p25, %s27, %s18
    %p29 = scmp.ge.s32.totalorder %s28, 2
    %s30 = scalar_select %p29, 0, %s28
    %s31 = ssub.s32 %s18, %s30
    %p32 = scmp.eq.s32.totalorder %s31, 0
    %s34 = sadd.s32 %s33, 1
    %s35 = scalar_select %p32, %s33, %s34
    %p38 = pneg %p32
    %p39 = scmp.eq.s32.totalorder %s11, 1
    %p40 = por %p38, %p39
    %p41 = scmp.ne.s32.totalorder %s33, %s36
    %p42 = scmp.eq.s32.totalorder %s11, 0
    %p43 = por %p41, %p42
    %p44 = scmp.ne.s32.totalorder %s33, %s36
    %p45 = scmp.eq.s32.totalorder %s16, 1
    %p46 = por %p44, %p45
    %p47 = scmp.ne.s32.totalorder %s36, %s37
    %p48 = scmp.eq.s32.totalorder %s16, 0
    %p49 = por %p47, %p48
    %p50 = scmp.ne.s32.totalorder %s36, %s37
    %p51 = scmp.eq.s32.totalorder %s17, 1
    %p52 = por %p50, %p51
    %p54 = scmp.ne.s32.totalorder %s37, %s53
    %p55 = scmp.eq.s32.totalorder %s17, 0
    %p56 = por %p54, %p55
    %s58 = sadd.s32 %s57, 1
    %p61 = scmp.eq.s32.totalorder %s11, 1
    %p62 = scmp.ne.s32.totalorder %s57, %s59
    %p63 = scmp.eq.s32.totalorder %s11, 0
    %p64 = por %p62, %p63
    %p65 = scmp.ne.s32.totalorder %s57, %s59
    %p66 = scmp.eq.s32.totalorder %s16, 1
    %p67 = por %p65, %p66
    %p68 = scmp.ne.s32.totalorder %s59, %s60
    %p69 = scmp.eq.s32.totalorder %s16, 0
    %p70 = por %p68, %p69
    %p71 = scmp.ne.s32.totalorder %s59, %s60
    %p72 = scmp.eq.s32.totalorder %s17, 1
    %p73 = por %p71, %p72
    %p75 = scmp.ne.s32.totalorder %s60, %s74
    %p76 = scmp.eq.s32.totalorder %s17, 0
    %p77 = por %p75, %p76
    %s78 = ssub.s32 %s19, %s26
    %p79 = scmp.eq.s32.totalorder %s78, 0
    %s81 = sadd.s32 %s80, 1
    %s82 = scalar_select %p79, %s80, %s81
    %p85 = pneg %p79
    %p86 = scmp.eq.s32.totalorder %s11, 1
    %p87 = por %p85, %p86
    %p88 = scmp.ne.s32.totalorder %s80, %s83
    %p89 = scmp.eq.s32.totalorder %s11, 0
    %p90 = por %p88, %p89
    %p91 = scmp.ne.s32.totalorder %s80, %s83
    %p92 = scmp.eq.s32.totalorder %s16, 1
    %p93 = por %p91, %p92
    %p94 = scmp.ne.s32.totalorder %s83, %s84
    %p95 = scmp.eq.s32.totalorder %s16, 0
    %p96 = por %p94, %p95
    %p97 = scmp.ne.s32.totalorder %s83, %s84
    %p98 = scmp.eq.s32.totalorder %s17, 1
    %p99 = por %p97, %p98
    %p101 = scmp.ne.s32.totalorder %s84, %s100
    %p102 = scmp.eq.s32.totalorder %s17, 0
    %p103 = por %p101, %p102
    %s104 = ssub.s32 %s19, %s26
    %p105 = scmp.eq.s32.totalorder %s104, 0
    %s107 = sadd.s32 %s106, 1
    %s108 = scalar_select %p105, %s106, %s107
    %p111 = pneg %p105
    %p112 = scmp.eq.s32.totalorder %s11, 1
    %p113 = por %p111, %p112
    %p114 = scmp.ne.s32.totalorder %s106, %s109
    %p115 = scmp.eq.s32.totalorder %s11, 0
    %p116 = por %p114, %p115
    %p117 = scmp.ne.s32.totalorder %s106, %s109
    %p118 = scmp.eq.s32.totalorder %s16, 1
    %p119 = por %p117, %p118
    %p120 = scmp.ne.s32.totalorder %s109, %s110
    %p121 = scmp.eq.s32.totalorder %s16, 0
    %p122 = por %p120, %p121
    %p123 = scmp.ne.s32.totalorder %s109, %s110
    %p124 = scmp.eq.s32.totalorder %s17, 1
    %p125 = por %p123, %p124
    %p127 = scmp.ne.s32.totalorder %s110, %s126
    %p128 = scmp.eq.s32.totalorder %s17, 0
    %p129 = por %p127, %p128
    %s130 = ssub.s32 %s19, %s26
    %p131 = scmp.eq.s32.totalorder %s130, 0
    %s133 = sadd.s32 %s132, 1
    %s134 = scalar_select %p131, %s132, %s133
    %p137 = pneg %p131
    %p138 = scmp.eq.s32.totalorder %s11, 1
    %p139 = por %p137, %p138
    %p140 = scmp.ne.s32.totalorder %s132, %s135
    %p141 = scmp.eq.s32.totalorder %s11, 0
    %p142 = por %p140, %p141
    %p143 = scmp.ne.s32.totalorder %s132, %s135
    %p144 = scmp.eq.s32.totalorder %s16, 1
    %p145 = por %p143, %p144
    %p146 = scmp.ne.s32.totalorder %s135, %s136
    %p147 = scmp.eq.s32.totalorder %s16, 0
    %p148 = por %p146, %p147
    %p149 = scmp.ne.s32.totalorder %s135, %s136
    %p150 = scmp.eq.s32.totalorder %s17, 1
    %p151 = por %p149, %p150
    %p153 = scmp.ne.s32.totalorder %s136, %s152
    %p154 = scmp.eq.s32.totalorder %s17, 0
    %p155 = por %p153, %p154
    %s156 = ssub.s32 %s18, %s30
    %s157 = ssub.s32 %s19, %s26
    %s158 = sor.u32 %s156, %s157
    %p159 = scmp.eq.s32.totalorder %s158, 0
    %s161 = sadd.s32 %s160, 1
    %s162 = scalar_select %p159, %s160, %s161
    %p165 = pneg %p159
    %p166 = scmp.eq.s32.totalorder %s11, 1
    %p167 = por %p165, %p166
    %p168 = scmp.ne.s32.totalorder %s160, %s163
    %p169 = scmp.eq.s32.totalorder %s11, 0
    %p170 = por %p168, %p169
    %p171 = scmp.ne.s32.totalorder %s160, %s163
    %p172 = scmp.eq.s32.totalorder %s16, 1
    %p173 = por %p171, %p172
    %p174 = scmp.ne.s32.totalorder %s163, %s164
    %p175 = scmp.eq.s32.totalorder %s16, 0
    %p176 = por %p174, %p175
    %p177 = scmp.ne.s32.totalorder %s163, %s164
    %p178 = scmp.eq.s32.totalorder %s17, 1
    %p179 = por %p177, %p178
    %p181 = scmp.ne.s32.totalorder %s164, %s180
    %p182 = scmp.eq.s32.totalorder %s17, 0
    %p183 = por %p181, %p182
    %p184 = scmp.le.s32.totalorder 1, %s11
    %p185 = scmp.lt.s32.totalorder %s11, 3
    %p186 = pnand %p184, %p185
    %p187 = pneg %p186
    // Predicated region
    $region9: #{exit_flow.11} parent=5 // pred_check
      _
    $region10: #{exit_flow.11} parent=5 // pred_check_branch
      %189 = sbr.rel (%p186) target = $region12
    $region11: #{exit_flow.11} parent=5 // pred_region
      %s190 = ssub.s32 %s11, 1
      // Predicated region
      $region13: #{exit_flow.11} parent=11 // pred_check
        %p191 = pneg %p70
      $region14: #{exit_flow.11} parent=11 // pred_check_branch
        %193 = sbr.rel (%p191) target = $region16
      $region15: #{exit_flow.11} parent=11 // pred_region
        _
      $region16: #{exit_flow.11} parent=11 // pred_fallthru
        _
      // Predicated region
      $region17: #{exit_flow.11} parent=11 // pred_check
        %p194 = pneg %p96
      $region18: #{exit_flow.11} parent=11 // pred_check_branch
        %196 = sbr.rel (%p194) target = $region20
      $region19: #{exit_flow.11} parent=11 // pred_region
        %p197 = scmp.lt.s32.totalorder %s21, 0
        %s198 = scalar_select %p197, %s21, 0
        %s199 = smul.addr %s198, 8
        %s200 = scalar_lea.vmem %s2, %s199
      $region20: #{exit_flow.11} parent=11 // pred_fallthru
        _
      // Predicated region
      $region21: #{exit_flow.11} parent=11 // pred_check
        %p201 = pneg %p122
      $region22: #{exit_flow.11} parent=11 // pred_check_branch
        %203 = sbr.rel (%p201) target = $region24
      $region23: #{exit_flow.11} parent=11 // pred_region
        %p204 = scmp.lt.s32.totalorder %s21, 0
        %s205 = scalar_select %p204, %s21, 0
        %s206 = scalar_lea.vmem %s3, %s205
      $region24: #{exit_flow.11} parent=11 // pred_fallthru
        _
      // Predicated region
      $region25: #{exit_flow.11} parent=11 // pred_check
        %p207 = pneg %p148
      $region26: #{exit_flow.11} parent=11 // pred_check_branch
        %209 = sbr.rel (%p207) target = $region28
      $region27: #{exit_flow.11} parent=11 // pred_region
        %p210 = scmp.lt.s32.totalorder %s21, 0
        %s211 = scalar_select %p210, %s21, 0
        %s212 = scalar_lea.vmem %s4, %s211
      $region28: #{exit_flow.11} parent=11 // pred_fallthru
        _
    $region12: #{exit_flow.11} parent=5 // pred_fallthru
      _
    %p213 = scmp.lt.s32.totalorder %s11, 2
    // Predicated region
    $region29: #{exit_flow.11} parent=5 // pred_check
      %p214 = pneg %p213
    $region30: #{exit_flow.11} parent=5 // pred_check_branch
      %216 = sbr.rel (%p214) target = $region32
    $region31: #{exit_flow.11} parent=5 // pred_region
      // Predicated region
      $region33: #{exit_flow.11} parent=31 // pred_check
        %p217 = pneg %p43
      $region34: #{exit_flow.11} parent=31 // pred_check_branch
        %219 = sbr.rel (%p217) target = $region36
      $region35: #{exit_flow.11} parent=31 // pred_region
        %p220 = scmp.lt.s32.totalorder %s18, 1
        %s221 = scalar_select %p220, %s18, 1
        %s222 = smul.addr %s221, 20
        %s223 = smul.addr %s222, 8
        %s224 = scalar_lea.vmem %s0, %s223
      $region36: #{exit_flow.11} parent=31 // pred_fallthru
        _
    $region32: #{exit_flow.11} parent=5 // pred_fallthru
      _
    %p225 = scmp.le.s32.totalorder 1, %s11
    %p226 = scmp.lt.s32.totalorder %s11, 3
    %p227 = pnand %p225, %p226
    %p228 = pneg %p227
    // Predicated region
    $region37: #{exit_flow.11} parent=5 // pred_check
      _
    $region38: #{exit_flow.11} parent=5 // pred_check_branch
      %230 = sbr.rel (%p227) target = $region40
    $region39: #{exit_flow.11} parent=5 // pred_region
      %s231 = ssub.s32 %s11, 1
      %p232 = scmp.lt.s32.totalorder %s20, 1
      %s233 = scalar_select %p232, %s20, 1
      %s234 = smul.addr %s233, 20
      %s235 = smul.addr %s234, 8
      %s236 = scalar_lea.vmem %s0, %s235
      %p237 = pneg %p49
      %p238 = pneg %p46
      %p239 = pneg %p70
      %p240 = pneg %p67
      %p241 = scmp.lt.s32.totalorder %s21, 0
      %s242 = scalar_select %p241, %s21, 0
      %s243 = smul.addr %s242, 8
      %s244 = scalar_lea.vmem %s2, %s243
      %p245 = pneg %p96
      %p246 = pneg %p93
      %p247 = scmp.lt.s32.totalorder %s21, 0
      %s248 = scalar_select %p247, %s21, 0
      %s249 = scalar_lea.vmem %s3, %s248
      %p250 = pneg %p122
      %p251 = pneg %p119
      %p252 = scmp.lt.s32.totalorder %s21, 0
      %s253 = scalar_select %p252, %s21, 0
      %s254 = scalar_lea.vmem %s4, %s253
      %p255 = pneg %p148
      %p256 = pneg %p145
      %p257 = pneg %p176
      %p258 = pneg %p173
      %p259 = scmp.lt.s32.totalorder %s20, 1
      %s260 = scalar_select %p259, %s20, 1
      %p261 = scmp.lt.s32.totalorder %s21, 0
      %s262 = scalar_select %p261, %s21, 0
      %s263 = sadd.s32 %s262, %s260
      %s264 = scalar_lea.vmem %s5, %s263
      %p265 = scmp.lt.s32.totalorder %s20, 1
      %s266 = scalar_select %p265, %s20, 1
      %s267 = smul.addr %s266, 20
      %s268 = smul.addr %s267, 8
      %s269 = scalar_lea.vmem %s0, %s268
      %p270 = scmp.lt.s32.totalorder %s21, 0
      %s271 = scalar_select %p270, %s21, 0
      %s272 = smul.addr %s271, 8
      %s273 = scalar_lea.vmem %s2, %s272
      %p274 = scmp.lt.s32.totalorder %s21, 0
      %s275 = scalar_select %p274, %s21, 0
      %s276 = scalar_lea.vmem %s3, %s275
      %p277 = scmp.lt.s32.totalorder %s21, 0
      %s278 = scalar_select %p277, %s21, 0
      %s279 = scalar_lea.vmem %s4, %s278
      %p280 = scmp.lt.s32.totalorder %s20, 1
      %s281 = scalar_select %p280, %s20, 1
      %p282 = scmp.lt.s32.totalorder %s21, 0
      %s283 = scalar_select %p282, %s21, 0
      %s284 = sadd.s32 %s283, %s281
      %s285 = scalar_lea.vmem %s5, %s284
      %p286 = scmp.eq.s32.totalorder %s21, 0
      // Predicated region
      $region41: #{exit_flow.11} parent=39 // pred_check
        %p287 = pneg %p286
      $region42: #{exit_flow.11} parent=39 // pred_check_branch
        %289 = sbr.rel (%p287) target = $region44
      $region43: #{exit_flow.11} parent=39 // pred_region
        %v290 = vld [vmem:[%s1] sm:$0x7]
        %v291 = vld [vmem:[%s1 + $0x4] sm:$0x7]
        %v292 = vld [vmem:[%s1 + $0x8] sm:$0x7]
        %v293 = vld [vmem:[%s269] sm:$0xff]
        %v294 = vld [vmem:[%s269 + $0x10] sm:$0xff]
        %v295 = vld [vmem:[%s269 + $0x20] sm:$0xff]
        %v296 = vld [vmem:[%s269 + $0x30] sm:$0xff]
        %v297 = vld [vmem:[%s269 + $0x40] sm:$0xff]
        %v298 = vld [vmem:[%s269 + $0x50] sm:$0xff]
        %v299 = vld [vmem:[%s269 + $0x60] sm:$0xff]
        %v300 = vld [vmem:[%s269 + $0x70] sm:$0xff]
        %v301 = vld [vmem:[%s269 + $0x80] sm:$0xff]
        %v302 = vld [vmem:[%s269 + $0x90] sm:$0xff]
        %v303 = vperm.slane %v290, 0
        %v304 = vmul.f32 %v293, %v303
        %v305 = vmul.f32 %v294, %v303
        %v306 = vmul.f32 %v295, %v303
        %v307 = vmul.f32 %v296, %v303
        %v308 = vmul.f32 %v297, %v303
        %v309 = vmul.f32 %v298, %v303
        %v310 = vmul.f32 %v299, %v303
        %v311 = vmul.f32 %v300, %v303
        %v312 = vadd.f32 %v304, 0.0
        %v313 = vadd.f32 %v305, 0.0
        %v314 = vadd.f32 %v306, 0.0
        %v315 = vadd.f32 %v307, 0.0
        %v316 = vadd.f32 %v308, 0.0
        %v317 = vadd.f32 %v309, 0.0
        %v318 = vadd.f32 %v310, 0.0
        %v319 = vadd.f32 %v311, 0.0
        %v320 = vperm.slane %v291, 0
        %v321 = vmul.f32 %v294, %v320
        %v322 = vmul.f32 %v295, %v320
        %v323 = vmul.f32 %v296, %v320
        %v324 = vmul.f32 %v297, %v320
        %v325 = vmul.f32 %v298, %v320
        %v326 = vmul.f32 %v299, %v320
        %v327 = vmul.f32 %v300, %v320
        %v328 = vmul.f32 %v301, %v320
        %v329 = vadd.f32 %v312, %v321
        %v330 = vadd.f32 %v313, %v322
        %v331 = vadd.f32 %v314, %v323
        %v332 = vadd.f32 %v315, %v324
        %v333 = vadd.f32 %v316, %v325
        %v334 = vadd.f32 %v317, %v326
        %v335 = vadd.f32 %v318, %v327
        %v336 = vadd.f32 %v319, %v328
        %v337 = vperm.slane %v292, 0
        %v338 = vmul.f32 %v295, %v337
        %v339 = vmul.f32 %v296, %v337
        %v340 = vmul.f32 %v297, %v337
        %v341 = vmul.f32 %v298, %v337
        %v342 = vmul.f32 %v299, %v337
        %v343 = vmul.f32 %v300, %v337
        %v344 = vmul.f32 %v301, %v337
        %v345 = vmul.f32 %v302, %v337
        %v346 = vadd.f32 %v329, %v338
        %v347 = vadd.f32 %v330, %v339
        %v348 = vadd.f32 %v331, %v340
        %v349 = vadd.f32 %v332, %v341
        %v350 = vadd.f32 %v333, %v342
        %v351 = vadd.f32 %v334, %v343
        %v352 = vadd.f32 %v335, %v344
        %v353 = vadd.f32 %v336, %v345
        %v354 = vld [vmem:[%s269 + $0x1] sm:$0xff]
        %v355 = vld [vmem:[%s269 + $0x11] sm:$0xff]
        %v356 = vld [vmem:[%s269 + $0x21] sm:$0xff]
        %v357 = vld [vmem:[%s269 + $0x31] sm:$0xff]
        %v358 = vld [vmem:[%s269 + $0x41] sm:$0xff]
        %v359 = vld [vmem:[%s269 + $0x51] sm:$0xff]
        %v360 = vld [vmem:[%s269 + $0x61] sm:$0xff]
        %v361 = vld [vmem:[%s269 + $0x71] sm:$0xff]
        %v362 = vld [vmem:[%s269 + $0x81] sm:$0xff]
        %v363 = vld [vmem:[%s269 + $0x91] sm:$0xff]
        %v364 = vperm.slane %v290, 1
        %v365 = vmul.f32 %v354, %v364
        %v366 = vmul.f32 %v355, %v364
        %v367 = vmul.f32 %v356, %v364
        %v368 = vmul.f32 %v357, %v364
        %v369 = vmul.f32 %v358, %v364
        %v370 = vmul.f32 %v359, %v364
        %v371 = vmul.f32 %v360, %v364
        %v372 = vmul.f32 %v361, %v364
        %v373 = vadd.f32 %v346, %v365
        %v374 = vadd.f32 %v347, %v366
        %v375 = vadd.f32 %v348, %v367
        %v376 = vadd.f32 %v349, %v368
        %v377 = vadd.f32 %v350, %v369
        %v378 = vadd.f32 %v351, %v370
        %v379 = vadd.f32 %v352, %v371
        %v380 = vadd.f32 %v353, %v372
        %v381 = vperm.slane %v291, 1
        %v382 = vmul.f32 %v355, %v381
        %v383 = vmul.f32 %v356, %v381
        %v384 = vmul.f32 %v357, %v381
        %v385 = vmul.f32 %v358, %v381
        %v386 = vmul.f32 %v359, %v381
        %v387 = vmul.f32 %v360, %v381
        %v388 = vmul.f32 %v361, %v381
        %v389 = vmul.f32 %v362, %v381
        %v390 = vadd.f32 %v373, %v382
        %v391 = vadd.f32 %v374, %v383
        %v392 = vadd.f32 %v375, %v384
        %v393 = vadd.f32 %v376, %v385
        %v394 = vadd.f32 %v377, %v386
        %v395 = vadd.f32 %v378, %v387
        %v396 = vadd.f32 %v379, %v388
        %v397 = vadd.f32 %v380, %v389
        %v398 = vperm.slane %v292, 1
        %v399 = vmul.f32 %v356, %v398
        %v400 = vmul.f32 %v357, %v398
        %v401 = vmul.f32 %v358, %v398
        %v402 = vmul.f32 %v359, %v398
        %v403 = vmul.f32 %v360, %v398
        %v404 = vmul.f32 %v361, %v398
        %v405 = vmul.f32 %v362, %v398
        %v406 = vmul.f32 %v363, %v398
        %v407 = vadd.f32 %v390, %v399
        %v408 = vadd.f32 %v391, %v400
        %v409 = vadd.f32 %v392, %v401
        %v410 = vadd.f32 %v393, %v402
        %v411 = vadd.f32 %v394, %v403
        %v412 = vadd.f32 %v395, %v404
        %v413 = vadd.f32 %v396, %v405
        %v414 = vadd.f32 %v397, %v406
        %v415 = vld [vmem:[%s269 + $0x2] sm:$0xff]
        %v416 = vld [vmem:[%s269 + $0x12] sm:$0xff]
        %v417 = vld [vmem:[%s269 + $0x22] sm:$0xff]
        %v418 = vld [vmem:[%s269 + $0x32] sm:$0xff]
        %v419 = vld [vmem:[%s269 + $0x42] sm:$0xff]
        %v420 = vld [vmem:[%s269 + $0x52] sm:$0xff]
        %v421 = vld [vmem:[%s269 + $0x62] sm:$0xff]
        %v422 = vld [vmem:[%s269 + $0x72] sm:$0xff]
        %v423 = vld [vmem:[%s269 + $0x82] sm:$0xff]
        %v424 = vld [vmem:[%s269 + $0x92] sm:$0xff]
        %v425 = vperm.slane %v290, 2
        %v426 = vmul.f32 %v415, %v425
        %v427 = vmul.f32 %v416, %v425
        %v428 = vmul.f32 %v417, %v425
        %v429 = vmul.f32 %v418, %v425
        %v430 = vmul.f32 %v419, %v425
        %v431 = vmul.f32 %v420, %v425
        %v432 = vmul.f32 %v421, %v425
        %v433 = vmul.f32 %v422, %v425
        %v434 = vadd.f32 %v407, %v426
        %v435 = vadd.f32 %v408, %v427
        %v436 = vadd.f32 %v409, %v428
        %v437 = vadd.f32 %v410, %v429
        %v438 = vadd.f32 %v411, %v430
        %v439 = vadd.f32 %v412, %v431
        %v440 = vadd.f32 %v413, %v432
        %v441 = vadd.f32 %v414, %v433
        %v442 = vperm.slane %v291, 2
        %v443 = vmul.f32 %v416, %v442
        %v444 = vmul.f32 %v417, %v442
        %v445 = vmul.f32 %v418, %v442
        %v446 = vmul.f32 %v419, %v442
        %v447 = vmul.f32 %v420, %v442
        %v448 = vmul.f32 %v421, %v442
        %v449 = vmul.f32 %v422, %v442
        %v450 = vmul.f32 %v423, %v442
        %v451 = vadd.f32 %v434, %v443
        %v452 = vadd.f32 %v435, %v444
        %v453 = vadd.f32 %v436, %v445
        %v454 = vadd.f32 %v437, %v446
        %v455 = vadd.f32 %v438, %v447
        %v456 = vadd.f32 %v439, %v448
        %v457 = vadd.f32 %v440, %v449
        %v458 = vadd.f32 %v441, %v450
        %v459 = vperm.slane %v292, 2
        %v460 = vmul.f32 %v417, %v459
        %v461 = vmul.f32 %v418, %v459
        %v462 = vmul.f32 %v419, %v459
        %v463 = vmul.f32 %v420, %v459
        %v464 = vmul.f32 %v421, %v459
        %v465 = vmul.f32 %v422, %v459
        %v466 = vmul.f32 %v423, %v459
        %v467 = vmul.f32 %v424, %v459
        %v468 = vadd.f32 %v451, %v460
        %v469 = vadd.f32 %v452, %v461
        %v470 = vadd.f32 %v453, %v462
        %v471 = vadd.f32 %v454, %v463
        %v472 = vadd.f32 %v455, %v464
        %v473 = vadd.f32 %v456, %v465
        %v474 = vadd.f32 %v457, %v466
        %v475 = vadd.f32 %v458, %v467
        %476 = vst [vmem:[#allocation2] sm:$0xff] %v468
        %477 = vst [vmem:[#allocation2 + $0x8] sm:$0xff] %v469
        %478 = vst [vmem:[#allocation2 + $0x10] sm:$0xff] %v470
        %479 = vst [vmem:[#allocation2 + $0x18] sm:$0xff] %v471
        %480 = vst [vmem:[#allocation2 + $0x20] sm:$0xff] %v472
        %481 = vst [vmem:[#allocation2 + $0x28] sm:$0xff] %v473
        %482 = vst [vmem:[#allocation2 + $0x30] sm:$0xff] %v474
        %483 = vst [vmem:[#allocation2 + $0x38] sm:$0xff] %v475
      $region44: #{exit_flow.11} parent=39 // pred_fallthru
        _
      %v484 = vld [vmem:[#allocation2] sm:$0xff]
      %v485 = vld [vmem:[#allocation2 + $0x8] sm:$0xff]
      %v486 = vld [vmem:[#allocation2 + $0x10] sm:$0xff]
      %v487 = vld [vmem:[#allocation2 + $0x18] sm:$0xff]
      %v488 = vld [vmem:[#allocation2 + $0x20] sm:$0xff]
      %v489 = vld [vmem:[#allocation2 + $0x28] sm:$0xff]
      %v490 = vld [vmem:[#allocation2 + $0x30] sm:$0xff]
      %v491 = vld [vmem:[#allocation2 + $0x38] sm:$0xff]
      %v492 = vld [vmem:[%s273] sm:$0xff]
      %v493 = vld [vmem:[%s273 + $0x8] sm:$0xff]
      %v494 = vld [vmem:[%s273 + $0x10] sm:$0xff]
      %v495 = vld [vmem:[%s273 + $0x18] sm:$0xff]
      %v496 = vld [vmem:[%s273 + $0x20] sm:$0xff]
      %v497 = vld [vmem:[%s273 + $0x28] sm:$0xff]
      %v498 = vld [vmem:[%s273 + $0x30] sm:$0xff]
      %v499 = vld [vmem:[%s273 + $0x38] sm:$0xff]
      %v500 = vld [vmem:[%s273 + $0x40] sm:$0xff]
      %v501 = vld [vmem:[%s273 + $0x48] sm:$0xff]
      %v502 = vld [vmem:[%s273 + $0x50] sm:$0xff]
      %v503 = vld [vmem:[%s273 + $0x58] sm:$0xff]
      %v504 = vld [vmem:[%s273 + $0x60] sm:$0xff]
      %v505 = vld [vmem:[%s273 + $0x68] sm:$0xff]
      %v506 = vld [vmem:[%s273 + $0x70] sm:$0xff]
      %v507 = vld [vmem:[%s273 + $0x78] sm:$0xff]
      %508 = vmatpush.msra.mxu0 %v507
      %509 = vmatpush.msra.mxu0 %v506
      %510 = vmatpush.msra.mxu0 %v505
      %511 = vmatpush.msra.mxu0 %v504
      %512 = vmatpush.msra.mxu0 %v503
      %513 = vmatpush.msra.mxu0 %v502
      %514 = vmatpush.msra.mxu0 %v501
      %515 = vmatpush.msra.mxu0 %v500
      %516 = vmatpush.msra.mxu0 %v499
      %517 = vmatpush.msra.mxu0 %v498
      %518 = vmatpush.msra.mxu0 %v497
      %519 = vmatpush.msra.mxu0 %v496
      %520 = vmatpush.msra.mxu0 %v495
      %521 = vmatpush.msra.mxu0 %v494
      %522 = vmatpush.msra.mxu0 %v493
      %523 = vmatpush.msra.mxu0 %v492
      %524 = vmatmul.f32.gmra.mxu0 %v484
      %v525 = vpop.f32.mrf.mxu0
      %v526 = vadd.f32 0.0, %v525
      %527 = vmatmul.f32.gmra.mxu0 %v485
      %v528 = vpop.f32.mrf.mxu0
      %v529 = vadd.f32 0.0, %v528
      %530 = vmatmul.f32.gmra.mxu0 %v486
      %v531 = vpop.f32.mrf.mxu0
      %v532 = vadd.f32 0.0, %v531
      %533 = vmatmul.f32.gmra.mxu0 %v487
      %v534 = vpop.f32.mrf.mxu0
      %v535 = vadd.f32 0.0, %v534
      %536 = vmatmul.f32.gmra.mxu0 %v488
      %v537 = vpop.f32.mrf.mxu0
      %v538 = vadd.f32 0.0, %v537
      %539 = vmatmul.f32.gmra.mxu0 %v489
      %v540 = vpop.f32.mrf.mxu0
      %v541 = vadd.f32 0.0, %v540
      %542 = vmatmul.f32.gmra.mxu0 %v490
      %v543 = vpop.f32.mrf.mxu0
      %v544 = vadd.f32 0.0, %v543
      %545 = vmatmul.f32.gmra.mxu0 %v491
      %v546 = vpop.f32.mrf.mxu0
      %v547 = vadd.f32 0.0, %v546
      %548 = vdwg.mxu0
      %v549 = vld [vmem:[%s276] sm:$0x1]
      %v551 = vperm.slane %v549, 0
      %v553 = vmul.f32 %v526, %v551
      %v554 = vmul.f32 %v529, %v551
      %v555 = vmul.f32 %v532, %v551
      %v556 = vmul.f32 %v535, %v551
      %v557 = vmul.f32 %v538, %v551
      %v558 = vmul.f32 %v541, %v551
      %v559 = vmul.f32 %v544, %v551
      %v560 = vmul.f32 %v547, %v551
      %v561 = vld [vmem:[%s279] sm:$0x1]
      %v563 = vperm.slane %v561, 0
      %v565 = vadd.f32 %v553, %v563
      %v566 = vadd.f32 %v554, %v563
      %v567 = vadd.f32 %v555, %v563
      %v568 = vadd.f32 %v556, %v563
      %v569 = vadd.f32 %v557, %v563
      %v570 = vadd.f32 %v558, %v563
      %v571 = vadd.f32 %v559, %v563
      %v572 = vadd.f32 %v560, %v563
      %v573 = vmax.f32 %v565, 0.0
      %v574 = vmax.f32 %v566, 0.0
      %v575 = vmax.f32 %v567, 0.0
      %v576 = vmax.f32 %v568, 0.0
      %v577 = vmax.f32 %v569, 0.0
      %v578 = vmax.f32 %v570, 0.0
      %v579 = vmax.f32 %v571, 0.0
      %v580 = vmax.f32 %v572, 0.0
      %v581 = vadd.f32 %v573, %v574
      %v582 = vadd.f32 %v581, %v575
      %v583 = vadd.f32 %v582, %v576
      %v584 = vadd.f32 %v583, %v577
      %v585 = vadd.f32 %v584, %v578
      %v586 = vadd.f32 %v585, %v579
      %v587 = vadd.f32 %v586, %v580
      %v588 = vrot.slane %v587, 4
      %v589 = vadd.f32 %v587, %v588
      %v590 = vrot.slane %v589, 2
      %v591 = vadd.f32 %v589, %v590
      %v592 = vrot.slane %v591, 1
      %v593 = vadd.f32 %v591, %v592
      %v594 = vrcp.pop 64.0
      %v595 = vmul.f32 64.0, %v594
      %v596 = vsub.f32 1.0, %v595
      %v597 = vmul.f32 %v594, %v596
      %v598 = vadd.f32 %v594, %v597
      %vm599 = vweird.f32 %v594
      %v600 = vsel %vm599, %v594, %v598
      %v601 = vmul.f32 %v593, %v600
      %602 = vst [vmem:[%s285] sm:$0x1] %v601
      %p603 = scmp.lt.s32.totalorder %s20, 1
      %s604 = scalar_select %p603, %s20, 1
      %p605 = scmp.lt.s32.totalorder %s21, 0
      %s606 = scalar_select %p605, %s21, 0
      %s607 = sadd.s32 %s606, %s604
      %s608 = scalar_lea.vmem %s5, %s607
      // Predicated region
      $region45: #{exit_flow.11} parent=39 // pred_check
        %p609 = pneg %p173
      $region46: #{exit_flow.11} parent=39 // pred_check_branch
        %611 = sbr.rel (%p609) target = $region48
      $region47: #{exit_flow.11} parent=39 // pred_region
        _
      $region48: #{exit_flow.11} parent=39 // pred_fallthru
        _
    $region40: #{exit_flow.11} parent=5 // pred_fallthru
      _
    %p612 = scmp.le.s32.totalorder 2, %s11
    // Predicated region
    $region49: #{exit_flow.11} parent=5 // pred_check
      %p613 = pneg %p612
    $region50: #{exit_flow.11} parent=5 // pred_check_branch
      %615 = sbr.rel (%p613) target = $region52
    $region51: #{exit_flow.11} parent=5 // pred_region
      %s616 = ssub.s32 %s11, 2
      // Predicated region
      $region53: #{exit_flow.11} parent=51 // pred_check
        %p617 = pneg %p179
      $region54: #{exit_flow.11} parent=51 // pred_check_branch
        %619 = sbr.rel (%p617) target = $region56
      $region55: #{exit_flow.11} parent=51 // pred_region
        %p620 = scmp.lt.s32.totalorder %s22, 1
        %s621 = scalar_select %p620, %s22, 1
        %p622 = scmp.lt.s32.totalorder %s23, 0
        %s623 = scalar_select %p622, %s23, 0
        %s624 = sadd.s32 %s623, %s621
        %s625 = scalar_lea.vmem %s5, %s624
      $region56: #{exit_flow.11} parent=51 // pred_fallthru
        _
    $region52: #{exit_flow.11} parent=5 // pred_fallthru
      _
  $region6: #{exit_flow.11} parent=0 // loop_footer
    %s15 = sadd.s32 1, %s11
  $region7: #{exit_flow.11} parent=0 // loop_footer_branch
    %10 = sbr.rel target = $region3
  $region8: #{exit_flow.11} parent=0 // loop_exit
    _

</llo_original>
